<compile_context>
chip_gen: v6e
topology: v6e:2x2x1
jax: 0.10.0
libtpu: 0.0.40
codegen_flags: <defaults>
</compile_context>

<pallas_src>
import functools

import jax
import jax.numpy as jnp
from jax.experimental import pallas as pl
from jax.experimental.pallas import tpu as pltpu


def _round_up(x, m):
    return (x + m - 1) // m * m


# ----------------------------- Pallas kernel --------------------------------


def _fused_conv_bn_relu_kernel(
    x_ref, w_ref, mask_ref, params_ref, o_ref, *, tap_offsets, cin_p, q, m_valid, eps
):
    # x_ref:      (Cin_pad, XW)        bf16, zero-padded input, (n,d,h,w) flattened on lanes
    # w_ref:      (Cout, ntaps*Cin_pad) bf16, tap-major columns (dk,hk,wk,ci)
    # mask_ref:   (1, Q)               f32, 1.0 on valid output-anchor columns
    # params_ref: (Cout, 3)            f32, [conv_bias, bn_gamma, bn_beta]
    # o_ref:      (Cout, Q)            f32, lane-dense output slab
    x = x_ref[...]
    w = w_ref[...]

    # Conv3d as shifted-tap matmuls: each tap's patch rows are a static
    # lane-offset slice of the flattened input slab (no im2col matrix ever
    # touches HBM); accumulate in f32 on the MXU.
    acc = jnp.zeros(o_ref.shape, jnp.float32)
    for t, off in enumerate(tap_offsets):
        x_tap = x[:, off:off + q]                       # (Cin_pad, Q)
        w_tap = w[:, t * cin_p:(t + 1) * cin_p]         # (Cout, Cin_pad)
        acc = acc + jnp.dot(w_tap, x_tap, preferred_element_type=jnp.float32)

    params = params_ref[...]
    bias = params[:, 0:1]
    gamma = params[:, 1:2]
    beta = params[:, 2:3]

    # Conv bias (zero-init; exactly cancelled by the training-mode BN mean
    # subtraction, kept for semantic fidelity).
    y = acc + bias

    # Single-pass BatchNorm3d training statistics over the m_valid real output
    # voxels; invalid anchor columns are masked out of both sums.
    mask = mask_ref[...]                                # (1, Q)
    ym = y * mask
    inv_m = 1.0 / m_valid
    mean = jnp.sum(ym, axis=1, keepdims=True) * inv_m
    ex2 = jnp.sum(ym * ym, axis=1, keepdims=True) * inv_m
    var = jnp.maximum(ex2 - mean * mean, 0.0)           # guard f32 cancellation
    scale = gamma * jax.lax.rsqrt(var + eps)

    o_ref[...] = jnp.maximum((y - mean) * scale + beta, 0.0)   # ReLU


# ------------------------------ JAX wrapper ----------------------------------


@functools.partial(
    jax.jit, static_argnames=("ksize", "stride", "padding", "eps", "operand_dtype")
)
def conv_layer_forward(
    x, weight, bias, gamma, beta, *, ksize, stride, padding,
    eps=1e-5, operand_dtype=jnp.bfloat16,
):
    """x: (N, Cin, D, H, W); weight: (Cout, Cin, k, k, k) (PyTorch layouts)."""
    if stride != 1:
        raise NotImplementedError("shifted-tap formulation implemented for stride=1")

    N, Cin, D, H, W = x.shape
    Cout = weight.shape[0]
    k = ksize
    Dp, Hp, Wp = D + 2 * padding, H + 2 * padding, W + 2 * padding
    Do, Ho, Wo = Dp - k + 1, Hp - k + 1, Wp - k + 1
    vol_p = Dp * Hp * Wp
    L = N * vol_p                                 # all flattened anchor positions
    Q = _round_up(L, 128)                         # lane-dense output width
    m_valid = N * Do * Ho * Wo                    # real output voxels (BN divisor)
    cin_p = max(_round_up(Cin, 8), 8)             # pad contraction dim to a sublane tile

    # Tap offsets in the flattened (Dp, Hp, Wp) index space (stride 1).
    tap_offsets = tuple(
        dk * Hp * Wp + hk * Wp + wk
        for dk in range(k) for hk in range(k) for wk in range(k)
    )
    xw = _round_up(Q + tap_offsets[-1], 128)      # slab width: every tap read in bounds

    # Zero-pad spatially, channels -> sublanes, flattened padded volume -> lanes.
    # This (plus the lane/sublane zero padding) is the only wrapper-side data
    # movement: a few KiB instead of a 27x im2col matrix.
    xp = jnp.pad(x, ((0, 0), (0, 0)) + ((padding, padding),) * 3)
    x_slab = jnp.transpose(xp, (1, 0, 2, 3, 4)).reshape(Cin, L)
    x_slab = jnp.pad(x_slab, ((0, cin_p - Cin), (0, xw - L))).astype(operand_dtype)

    # Weight: (Cout, Cin, kd, kh, kw) -> tap-major (Cout, k^3 * Cin_pad).
    w_t = jnp.transpose(weight, (0, 2, 3, 4, 1))                  # (Cout, kd, kh, kw, Cin)
    w_t = jnp.pad(w_t, ((0, 0),) * 4 + ((0, cin_p - Cin),))
    w_km = w_t.reshape(Cout, k * k * k * cin_p).astype(operand_dtype)

    # Validity mask over anchor columns: q -> (n, d, h, w); valid iff it is a
    # real output voxel (excludes padded tail and out-of-range d/h/w anchors).
    q_idx = jnp.arange(Q, dtype=jnp.int32)
    p = q_idx % vol_p
    d_i = p // (Hp * Wp)
    h_i = (p // Wp) % Hp
    w_i = p % Wp
    valid = (q_idx < L) & (d_i < Do) & (h_i < Ho) & (w_i < Wo)
    mask = valid.astype(jnp.float32).reshape(1, Q)

    # Conv bias / BN gamma / BN beta packed into one tiny params array.
    params = jnp.stack(
        [bias.astype(jnp.float32), gamma.astype(jnp.float32), beta.astype(jnp.float32)],
        axis=1,
    )                                                             # (Cout, 3)

    kernel = functools.partial(
        _fused_conv_bn_relu_kernel,
        tap_offsets=tap_offsets, cin_p=cin_p, q=Q, m_valid=m_valid, eps=eps,
    )
    vmem = pltpu.MemorySpace.VMEM
    out_cq = pl.pallas_call(
        kernel,
        out_shape=jax.ShapeDtypeStruct((Cout, Q), jnp.float32),
        in_specs=[
            pl.BlockSpec(memory_space=vmem),   # x_slab  (whole array resident)
            pl.BlockSpec(memory_space=vmem),   # weights
            pl.BlockSpec(memory_space=vmem),   # mask
            pl.BlockSpec(memory_space=vmem),   # packed bias/gamma/beta
        ],
        out_specs=pl.BlockSpec(memory_space=vmem),
    )(x_slab, w_km, mask, params)

    # Epilogue: crop valid anchors and permute back to NCDHW.  Negligible at
    # this size; see TODO at top for folding it into the out BlockSpec at scale.
    out = out_cq[:, :L].reshape(Cout, N, Dp, Hp, Wp)[:, :, :Do, :Ho, :Wo]
    return jnp.transpose(out, (1, 0, 2, 3, 4))


# ------------------------------ reference (pure JAX) -------------------------


def _reference(x, weight, bias, gamma, beta, stride, padding):
    y = jax.lax.conv_general_dilated(
        x, weight,
        window_strides=(stride, stride, stride),
        padding=[(padding, padding)] * 3,
        dimension_numbers=("NCDHW", "OIDHW", "NCDHW"),
    ) + bias.reshape(1, -1, 1, 1, 1)
    mean = jnp.mean(y, axis=(0, 2, 3, 4), keepdims=True)
    var = jnp.mean((y - mean) ** 2, axis=(0, 2, 3, 4), keepdims=True)
    y = (y - mean) * jax.lax.rsqrt(var + 1e-5)
    y = y * gamma.reshape(1, -1, 1, 1, 1) + beta.reshape(1, -1, 1, 1, 1)
    return jnp.maximum(y, 0.0)


# ---------------------------------- main --------------------------------------

if __name__ == "__main__":
    # Small shapes consistent with the module: N=2, Cin=4, D=4, H=8, W=8.
    N, Cin, D, H, W = 2, 4, 4, 8, 8
    Cout, ksize, stride, padding = 8, 3, 1, 1

    key = jax.random.PRNGKey(0)
    kx, kw = jax.random.split(key)
    x = jax.random.normal(kx, (N, Cin, D, H, W), dtype=jnp.float32)

    # Deterministic parameter init mirroring _init_weights:
    fan_in = Cin * ksize * ksize * ksize
    kaiming_std = (2.0 / fan_in) ** 0.5  # kaiming_normal_, fan_in, relu gain
    weight = kaiming_std * jax.random.normal(
        kw, (Cout, Cin, ksize, ksize, ksize), dtype=jnp.float32
    )
    bias = jnp.zeros((Cout,), dtype=jnp.float32)   # Conv3d bias zero-init
    gamma = jnp.ones((Cout,), dtype=jnp.float32)   # BatchNorm3d weight
    beta = jnp.zeros((Cout,), dtype=jnp.float32)   # BatchNorm3d bias

    out = conv_layer_forward(
        x, weight, bias, gamma, beta, ksize=ksize, stride=stride, padding=padding
    )
    out = jax.block_until_ready(out)

    ref = _reference(x, weight, bias, gamma, beta, stride, padding)
    assert out.shape == (N, Cout, D, H, W), out.shape
    # bf16 conv operands with f32 accumulation/BN: expected max error of the
    # unit-variance normalized output is ~2^-9 * sqrt(K) ~ 5e-3; 2e-2 is a
    # comfortable bound (the f32-operand path is bit-tighter than 2e-3).
    err = float(jnp.max(jnp.abs(out - ref)))
    assert err < 2e-2, err
    print("KERNEL_OK")
</pallas_src>

<mosaic_0001>
module attributes {stable_mosaic.version = 11 : i64} {
  func.func @_fused_conv_bn_relu_kernel(%arg0: memref<8x1536xbf16, #tpu.memory_space<vmem>>, %arg1: memref<8x216xbf16, #tpu.memory_space<vmem>>, %arg2: memref<1x1280xf32, #tpu.memory_space<vmem>>, %arg3: memref<8x3xf32, #tpu.memory_space<vmem>>, %arg4: memref<8x1280xf32, #tpu.memory_space<vmem>>) attributes {dimension_semantics = [], scalar_prefetch = 0 : i64, scratch_operands = 0 : i64, tpu.core_type = #tpu.core_type<tc>} {
    %c0 = arith.constant 0 : index
    %c0_0 = arith.constant 0 : index
    %0 = vector.load %arg0[%c0, %c0_0] : memref<8x1536xbf16, #tpu.memory_space<vmem>>, vector<8x1536xbf16>
    %c0_1 = arith.constant 0 : index
    %c0_2 = arith.constant 0 : index
    %1 = vector.load %arg1[%c0_1, %c0_2] : memref<8x216xbf16, #tpu.memory_space<vmem>>, vector<8x216xbf16>
    %cst = arith.constant 0.000000e+00 : f32
    %2 = vector.broadcast %cst : f32 to vector<8x1280xf32>
    %3 = vector.extract_strided_slice %0 {offsets = [0, 0], sizes = [8, 1280], strides = [1, 1]} : vector<8x1536xbf16> to vector<8x1280xbf16>
    %4 = vector.extract_strided_slice %1 {offsets = [0, 0], sizes = [8, 8], strides = [1, 1]} : vector<8x216xbf16> to vector<8x8xbf16>
    %cst_3 = arith.constant dense<0.000000e+00> : vector<8x1280xf32>
    %5 = tpu.matmul %4, %3, %cst_3 {dimension_numbers = #tpu.dot_dimension_numbers<[1], [0], [0], [1], [0, 0, 1, 1], [], []>} : vector<8x8xbf16>, vector<8x1280xbf16>, vector<8x1280xf32> -> vector<8x1280xf32>
    %6 = arith.addf %2, %5 : vector<8x1280xf32>
    %7 = vector.extract_strided_slice %0 {offsets = [0, 1], sizes = [8, 1280], strides = [1, 1]} : vector<8x1536xbf16> to vector<8x1280xbf16>
    %8 = vector.extract_strided_slice %1 {offsets = [0, 8], sizes = [8, 8], strides = [1, 1]} : vector<8x216xbf16> to vector<8x8xbf16>
    %cst_4 = arith.constant dense<0.000000e+00> : vector<8x1280xf32>
    %9 = tpu.matmul %8, %7, %cst_4 {dimension_numbers = #tpu.dot_dimension_numbers<[1], [0], [0], [1], [0, 0, 1, 1], [], []>} : vector<8x8xbf16>, vector<8x1280xbf16>, vector<8x1280xf32> -> vector<8x1280xf32>
    %10 = arith.addf %6, %9 : vector<8x1280xf32>
    %11 = vector.extract_strided_slice %0 {offsets = [0, 2], sizes = [8, 1280], strides = [1, 1]} : vector<8x1536xbf16> to vector<8x1280xbf16>
    %12 = vector.extract_strided_slice %1 {offsets = [0, 16], sizes = [8, 8], strides = [1, 1]} : vector<8x216xbf16> to vector<8x8xbf16>
    %cst_5 = arith.constant dense<0.000000e+00> : vector<8x1280xf32>
    %13 = tpu.matmul %12, %11, %cst_5 {dimension_numbers = #tpu.dot_dimension_numbers<[1], [0], [0], [1], [0, 0, 1, 1], [], []>} : vector<8x8xbf16>, vector<8x1280xbf16>, vector<8x1280xf32> -> vector<8x1280xf32>
    %14 = arith.addf %10, %13 : vector<8x1280xf32>
    %15 = vector.extract_strided_slice %0 {offsets = [0, 10], sizes = [8, 1280], strides = [1, 1]} : vector<8x1536xbf16> to vector<8x1280xbf16>
    %16 = vector.extract_strided_slice %1 {offsets = [0, 24], sizes = [8, 8], strides = [1, 1]} : vector<8x216xbf16> to vector<8x8xbf16>
    %cst_6 = arith.constant dense<0.000000e+00> : vector<8x1280xf32>
    %17 = tpu.matmul %16, %15, %cst_6 {dimension_numbers = #tpu.dot_dimension_numbers<[1], [0], [0], [1], [0, 0, 1, 1], [], []>} : vector<8x8xbf16>, vector<8x1280xbf16>, vector<8x1280xf32> -> vector<8x1280xf32>
    %18 = arith.addf %14, %17 : vector<8x1280xf32>
    %19 = vector.extract_strided_slice %0 {offsets = [0, 11], sizes = [8, 1280], strides = [1, 1]} : vector<8x1536xbf16> to vector<8x1280xbf16>
    %20 = vector.extract_strided_slice %1 {offsets = [0, 32], sizes = [8, 8], strides = [1, 1]} : vector<8x216xbf16> to vector<8x8xbf16>
    %cst_7 = arith.constant dense<0.000000e+00> : vector<8x1280xf32>
    %21 = tpu.matmul %20, %19, %cst_7 {dimension_numbers = #tpu.dot_dimension_numbers<[1], [0], [0], [1], [0, 0, 1, 1], [], []>} : vector<8x8xbf16>, vector<8x1280xbf16>, vector<8x1280xf32> -> vector<8x1280xf32>
    %22 = arith.addf %18, %21 : vector<8x1280xf32>
    %23 = vector.extract_strided_slice %0 {offsets = [0, 12], sizes = [8, 1280], strides = [1, 1]} : vector<8x1536xbf16> to vector<8x1280xbf16>
    %24 = vector.extract_strided_slice %1 {offsets = [0, 40], sizes = [8, 8], strides = [1, 1]} : vector<8x216xbf16> to vector<8x8xbf16>
    %cst_8 = arith.constant dense<0.000000e+00> : vector<8x1280xf32>
    %25 = tpu.matmul %24, %23, %cst_8 {dimension_numbers = #tpu.dot_dimension_numbers<[1], [0], [0], [1], [0, 0, 1, 1], [], []>} : vector<8x8xbf16>, vector<8x1280xbf16>, vector<8x1280xf32> -> vector<8x1280xf32>
    %26 = arith.addf %22, %25 : vector<8x1280xf32>
    %27 = vector.extract_strided_slice %0 {offsets = [0, 20], sizes = [8, 1280], strides = [1, 1]} : vector<8x1536xbf16> to vector<8x1280xbf16>
    %28 = vector.extract_strided_slice %1 {offsets = [0, 48], sizes = [8, 8], strides = [1, 1]} : vector<8x216xbf16> to vector<8x8xbf16>
    %cst_9 = arith.constant dense<0.000000e+00> : vector<8x1280xf32>
    %29 = tpu.matmul %28, %27, %cst_9 {dimension_numbers = #tpu.dot_dimension_numbers<[1], [0], [0], [1], [0, 0, 1, 1], [], []>} : vector<8x8xbf16>, vector<8x1280xbf16>, vector<8x1280xf32> -> vector<8x1280xf32>
    %30 = arith.addf %26, %29 : vector<8x1280xf32>
    %31 = vector.extract_strided_slice %0 {offsets = [0, 21], sizes = [8, 1280], strides = [1, 1]} : vector<8x1536xbf16> to vector<8x1280xbf16>
    %32 = vector.extract_strided_slice %1 {offsets = [0, 56], sizes = [8, 8], strides = [1, 1]} : vector<8x216xbf16> to vector<8x8xbf16>
    %cst_10 = arith.constant dense<0.000000e+00> : vector<8x1280xf32>
    %33 = tpu.matmul %32, %31, %cst_10 {dimension_numbers = #tpu.dot_dimension_numbers<[1], [0], [0], [1], [0, 0, 1, 1], [], []>} : vector<8x8xbf16>, vector<8x1280xbf16>, vector<8x1280xf32> -> vector<8x1280xf32>
    %34 = arith.addf %30, %33 : vector<8x1280xf32>
    %35 = vector.extract_strided_slice %0 {offsets = [0, 22], sizes = [8, 1280], strides = [1, 1]} : vector<8x1536xbf16> to vector<8x1280xbf16>
    %36 = vector.extract_strided_slice %1 {offsets = [0, 64], sizes = [8, 8], strides = [1, 1]} : vector<8x216xbf16> to vector<8x8xbf16>
    %cst_11 = arith.constant dense<0.000000e+00> : vector<8x1280xf32>
    %37 = tpu.matmul %36, %35, %cst_11 {dimension_numbers = #tpu.dot_dimension_numbers<[1], [0], [0], [1], [0, 0, 1, 1], [], []>} : vector<8x8xbf16>, vector<8x1280xbf16>, vector<8x1280xf32> -> vector<8x1280xf32>
    %38 = arith.addf %34, %37 : vector<8x1280xf32>
    %39 = vector.extract_strided_slice %0 {offsets = [0, 100], sizes = [8, 1280], strides = [1, 1]} : vector<8x1536xbf16> to vector<8x1280xbf16>
    %40 = vector.extract_strided_slice %1 {offsets = [0, 72], sizes = [8, 8], strides = [1, 1]} : vector<8x216xbf16> to vector<8x8xbf16>
    %cst_12 = arith.constant dense<0.000000e+00> : vector<8x1280xf32>
    %41 = tpu.matmul %40, %39, %cst_12 {dimension_numbers = #tpu.dot_dimension_numbers<[1], [0], [0], [1], [0, 0, 1, 1], [], []>} : vector<8x8xbf16>, vector<8x1280xbf16>, vector<8x1280xf32> -> vector<8x1280xf32>
    %42 = arith.addf %38, %41 : vector<8x1280xf32>
    %43 = vector.extract_strided_slice %0 {offsets = [0, 101], sizes = [8, 1280], strides = [1, 1]} : vector<8x1536xbf16> to vector<8x1280xbf16>
    %44 = vector.extract_strided_slice %1 {offsets = [0, 80], sizes = [8, 8], strides = [1, 1]} : vector<8x216xbf16> to vector<8x8xbf16>
    %cst_13 = arith.constant dense<0.000000e+00> : vector<8x1280xf32>
    %45 = tpu.matmul %44, %43, %cst_13 {dimension_numbers = #tpu.dot_dimension_numbers<[1], [0], [0], [1], [0, 0, 1, 1], [], []>} : vector<8x8xbf16>, vector<8x1280xbf16>, vector<8x1280xf32> -> vector<8x1280xf32>
    %46 = arith.addf %42, %45 : vector<8x1280xf32>
    %47 = vector.extract_strided_slice %0 {offsets = [0, 102], sizes = [8, 1280], strides = [1, 1]} : vector<8x1536xbf16> to vector<8x1280xbf16>
    %48 = vector.extract_strided_slice %1 {offsets = [0, 88], sizes = [8, 8], strides = [1, 1]} : vector<8x216xbf16> to vector<8x8xbf16>
    %cst_14 = arith.constant dense<0.000000e+00> : vector<8x1280xf32>
    %49 = tpu.matmul %48, %47, %cst_14 {dimension_numbers = #tpu.dot_dimension_numbers<[1], [0], [0], [1], [0, 0, 1, 1], [], []>} : vector<8x8xbf16>, vector<8x1280xbf16>, vector<8x1280xf32> -> vector<8x1280xf32>
    %50 = arith.addf %46, %49 : vector<8x1280xf32>
    %51 = vector.extract_strided_slice %0 {offsets = [0, 110], sizes = [8, 1280], strides = [1, 1]} : vector<8x1536xbf16> to vector<8x1280xbf16>
    %52 = vector.extract_strided_slice %1 {offsets = [0, 96], sizes = [8, 8], strides = [1, 1]} : vector<8x216xbf16> to vector<8x8xbf16>
    %cst_15 = arith.constant dense<0.000000e+00> : vector<8x1280xf32>
    %53 = tpu.matmul %52, %51, %cst_15 {dimension_numbers = #tpu.dot_dimension_numbers<[1], [0], [0], [1], [0, 0, 1, 1], [], []>} : vector<8x8xbf16>, vector<8x1280xbf16>, vector<8x1280xf32> -> vector<8x1280xf32>
    %54 = arith.addf %50, %53 : vector<8x1280xf32>
    %55 = vector.extract_strided_slice %0 {offsets = [0, 111], sizes = [8, 1280], strides = [1, 1]} : vector<8x1536xbf16> to vector<8x1280xbf16>
    %56 = vector.extract_strided_slice %1 {offsets = [0, 104], sizes = [8, 8], strides = [1, 1]} : vector<8x216xbf16> to vector<8x8xbf16>
    %cst_16 = arith.constant dense<0.000000e+00> : vector<8x1280xf32>
    %57 = tpu.matmul %56, %55, %cst_16 {dimension_numbers = #tpu.dot_dimension_numbers<[1], [0], [0], [1], [0, 0, 1, 1], [], []>} : vector<8x8xbf16>, vector<8x1280xbf16>, vector<8x1280xf32> -> vector<8x1280xf32>
    %58 = arith.addf %54, %57 : vector<8x1280xf32>
    %59 = vector.extract_strided_slice %0 {offsets = [0, 112], sizes = [8, 1280], strides = [1, 1]} : vector<8x1536xbf16> to vector<8x1280xbf16>
    %60 = vector.extract_strided_slice %1 {offsets = [0, 112], sizes = [8, 8], strides = [1, 1]} : vector<8x216xbf16> to vector<8x8xbf16>
    %cst_17 = arith.constant dense<0.000000e+00> : vector<8x1280xf32>
    %61 = tpu.matmul %60, %59, %cst_17 {dimension_numbers = #tpu.dot_dimension_numbers<[1], [0], [0], [1], [0, 0, 1, 1], [], []>} : vector<8x8xbf16>, vector<8x1280xbf16>, vector<8x1280xf32> -> vector<8x1280xf32>
    %62 = arith.addf %58, %61 : vector<8x1280xf32>
    %63 = vector.extract_strided_slice %0 {offsets = [0, 120], sizes = [8, 1280], strides = [1, 1]} : vector<8x1536xbf16> to vector<8x1280xbf16>
    %64 = vector.extract_strided_slice %1 {offsets = [0, 120], sizes = [8, 8], strides = [1, 1]} : vector<8x216xbf16> to vector<8x8xbf16>
    %cst_18 = arith.constant dense<0.000000e+00> : vector<8x1280xf32>
    %65 = tpu.matmul %64, %63, %cst_18 {dimension_numbers = #tpu.dot_dimension_numbers<[1], [0], [0], [1], [0, 0, 1, 1], [], []>} : vector<8x8xbf16>, vector<8x1280xbf16>, vector<8x1280xf32> -> vector<8x1280xf32>
    %66 = arith.addf %62, %65 : vector<8x1280xf32>
    %67 = vector.extract_strided_slice %0 {offsets = [0, 121], sizes = [8, 1280], strides = [1, 1]} : vector<8x1536xbf16> to vector<8x1280xbf16>
    %68 = vector.extract_strided_slice %1 {offsets = [0, 128], sizes = [8, 8], strides = [1, 1]} : vector<8x216xbf16> to vector<8x8xbf16>
    %cst_19 = arith.constant dense<0.000000e+00> : vector<8x1280xf32>
    %69 = tpu.matmul %68, %67, %cst_19 {dimension_numbers = #tpu.dot_dimension_numbers<[1], [0], [0], [1], [0, 0, 1, 1], [], []>} : vector<8x8xbf16>, vector<8x1280xbf16>, vector<8x1280xf32> -> vector<8x1280xf32>
    %70 = arith.addf %66, %69 : vector<8x1280xf32>
    %71 = vector.extract_strided_slice %0 {offsets = [0, 122], sizes = [8, 1280], strides = [1, 1]} : vector<8x1536xbf16> to vector<8x1280xbf16>
    %72 = vector.extract_strided_slice %1 {offsets = [0, 136], sizes = [8, 8], strides = [1, 1]} : vector<8x216xbf16> to vector<8x8xbf16>
    %cst_20 = arith.constant dense<0.000000e+00> : vector<8x1280xf32>
    %73 = tpu.matmul %72, %71, %cst_20 {dimension_numbers = #tpu.dot_dimension_numbers<[1], [0], [0], [1], [0, 0, 1, 1], [], []>} : vector<8x8xbf16>, vector<8x1280xbf16>, vector<8x1280xf32> -> vector<8x1280xf32>
    %74 = arith.addf %70, %73 : vector<8x1280xf32>
    %75 = vector.extract_strided_slice %0 {offsets = [0, 200], sizes = [8, 1280], strides = [1, 1]} : vector<8x1536xbf16> to vector<8x1280xbf16>
    %76 = vector.extract_strided_slice %1 {offsets = [0, 144], sizes = [8, 8], strides = [1, 1]} : vector<8x216xbf16> to vector<8x8xbf16>
    %cst_21 = arith.constant dense<0.000000e+00> : vector<8x1280xf32>
    %77 = tpu.matmul %76, %75, %cst_21 {dimension_numbers = #tpu.dot_dimension_numbers<[1], [0], [0], [1], [0, 0, 1, 1], [], []>} : vector<8x8xbf16>, vector<8x1280xbf16>, vector<8x1280xf32> -> vector<8x1280xf32>
    %78 = arith.addf %74, %77 : vector<8x1280xf32>
    %79 = vector.extract_strided_slice %0 {offsets = [0, 201], sizes = [8, 1280], strides = [1, 1]} : vector<8x1536xbf16> to vector<8x1280xbf16>
    %80 = vector.extract_strided_slice %1 {offsets = [0, 152], sizes = [8, 8], strides = [1, 1]} : vector<8x216xbf16> to vector<8x8xbf16>
    %cst_22 = arith.constant dense<0.000000e+00> : vector<8x1280xf32>
    %81 = tpu.matmul %80, %79, %cst_22 {dimension_numbers = #tpu.dot_dimension_numbers<[1], [0], [0], [1], [0, 0, 1, 1], [], []>} : vector<8x8xbf16>, vector<8x1280xbf16>, vector<8x1280xf32> -> vector<8x1280xf32>
    %82 = arith.addf %78, %81 : vector<8x1280xf32>
    %83 = vector.extract_strided_slice %0 {offsets = [0, 202], sizes = [8, 1280], strides = [1, 1]} : vector<8x1536xbf16> to vector<8x1280xbf16>
    %84 = vector.extract_strided_slice %1 {offsets = [0, 160], sizes = [8, 8], strides = [1, 1]} : vector<8x216xbf16> to vector<8x8xbf16>
    %cst_23 = arith.constant dense<0.000000e+00> : vector<8x1280xf32>
    %85 = tpu.matmul %84, %83, %cst_23 {dimension_numbers = #tpu.dot_dimension_numbers<[1], [0], [0], [1], [0, 0, 1, 1], [], []>} : vector<8x8xbf16>, vector<8x1280xbf16>, vector<8x1280xf32> -> vector<8x1280xf32>
    %86 = arith.addf %82, %85 : vector<8x1280xf32>
    %87 = vector.extract_strided_slice %0 {offsets = [0, 210], sizes = [8, 1280], strides = [1, 1]} : vector<8x1536xbf16> to vector<8x1280xbf16>
    %88 = vector.extract_strided_slice %1 {offsets = [0, 168], sizes = [8, 8], strides = [1, 1]} : vector<8x216xbf16> to vector<8x8xbf16>
    %cst_24 = arith.constant dense<0.000000e+00> : vector<8x1280xf32>
    %89 = tpu.matmul %88, %87, %cst_24 {dimension_numbers = #tpu.dot_dimension_numbers<[1], [0], [0], [1], [0, 0, 1, 1], [], []>} : vector<8x8xbf16>, vector<8x1280xbf16>, vector<8x1280xf32> -> vector<8x1280xf32>
    %90 = arith.addf %86, %89 : vector<8x1280xf32>
    %91 = vector.extract_strided_slice %0 {offsets = [0, 211], sizes = [8, 1280], strides = [1, 1]} : vector<8x1536xbf16> to vector<8x1280xbf16>
    %92 = vector.extract_strided_slice %1 {offsets = [0, 176], sizes = [8, 8], strides = [1, 1]} : vector<8x216xbf16> to vector<8x8xbf16>
    %cst_25 = arith.constant dense<0.000000e+00> : vector<8x1280xf32>
    %93 = tpu.matmul %92, %91, %cst_25 {dimension_numbers = #tpu.dot_dimension_numbers<[1], [0], [0], [1], [0, 0, 1, 1], [], []>} : vector<8x8xbf16>, vector<8x1280xbf16>, vector<8x1280xf32> -> vector<8x1280xf32>
    %94 = arith.addf %90, %93 : vector<8x1280xf32>
    %95 = vector.extract_strided_slice %0 {offsets = [0, 212], sizes = [8, 1280], strides = [1, 1]} : vector<8x1536xbf16> to vector<8x1280xbf16>
    %96 = vector.extract_strided_slice %1 {offsets = [0, 184], sizes = [8, 8], strides = [1, 1]} : vector<8x216xbf16> to vector<8x8xbf16>
    %cst_26 = arith.constant dense<0.000000e+00> : vector<8x1280xf32>
    %97 = tpu.matmul %96, %95, %cst_26 {dimension_numbers = #tpu.dot_dimension_numbers<[1], [0], [0], [1], [0, 0, 1, 1], [], []>} : vector<8x8xbf16>, vector<8x1280xbf16>, vector<8x1280xf32> -> vector<8x1280xf32>
    %98 = arith.addf %94, %97 : vector<8x1280xf32>
    %99 = vector.extract_strided_slice %0 {offsets = [0, 220], sizes = [8, 1280], strides = [1, 1]} : vector<8x1536xbf16> to vector<8x1280xbf16>
    %100 = vector.extract_strided_slice %1 {offsets = [0, 192], sizes = [8, 8], strides = [1, 1]} : vector<8x216xbf16> to vector<8x8xbf16>
    %cst_27 = arith.constant dense<0.000000e+00> : vector<8x1280xf32>
    %101 = tpu.matmul %100, %99, %cst_27 {dimension_numbers = #tpu.dot_dimension_numbers<[1], [0], [0], [1], [0, 0, 1, 1], [], []>} : vector<8x8xbf16>, vector<8x1280xbf16>, vector<8x1280xf32> -> vector<8x1280xf32>
    %102 = arith.addf %98, %101 : vector<8x1280xf32>
    %103 = vector.extract_strided_slice %0 {offsets = [0, 221], sizes = [8, 1280], strides = [1, 1]} : vector<8x1536xbf16> to vector<8x1280xbf16>
    %104 = vector.extract_strided_slice %1 {offsets = [0, 200], sizes = [8, 8], strides = [1, 1]} : vector<8x216xbf16> to vector<8x8xbf16>
    %cst_28 = arith.constant dense<0.000000e+00> : vector<8x1280xf32>
    %105 = tpu.matmul %104, %103, %cst_28 {dimension_numbers = #tpu.dot_dimension_numbers<[1], [0], [0], [1], [0, 0, 1, 1], [], []>} : vector<8x8xbf16>, vector<8x1280xbf16>, vector<8x1280xf32> -> vector<8x1280xf32>
    %106 = arith.addf %102, %105 : vector<8x1280xf32>
    %107 = vector.extract_strided_slice %0 {offsets = [0, 222], sizes = [8, 1280], strides = [1, 1]} : vector<8x1536xbf16> to vector<8x1280xbf16>
    %108 = vector.extract_strided_slice %1 {offsets = [0, 208], sizes = [8, 8], strides = [1, 1]} : vector<8x216xbf16> to vector<8x8xbf16>
    %cst_29 = arith.constant dense<0.000000e+00> : vector<8x1280xf32>
    %109 = tpu.matmul %108, %107, %cst_29 {dimension_numbers = #tpu.dot_dimension_numbers<[1], [0], [0], [1], [0, 0, 1, 1], [], []>} : vector<8x8xbf16>, vector<8x1280xbf16>, vector<8x1280xf32> -> vector<8x1280xf32>
    %110 = arith.addf %106, %109 : vector<8x1280xf32>
    %c0_30 = arith.constant 0 : index
    %c0_31 = arith.constant 0 : index
    %111 = vector.load %arg3[%c0_30, %c0_31] : memref<8x3xf32, #tpu.memory_space<vmem>>, vector<8x3xf32>
    %112 = vector.extract_strided_slice %111 {offsets = [0, 0], sizes = [8, 1], strides = [1, 1]} : vector<8x3xf32> to vector<8x1xf32>
    %113 = vector.extract_strided_slice %111 {offsets = [0, 1], sizes = [8, 1], strides = [1, 1]} : vector<8x3xf32> to vector<8x1xf32>
    %114 = vector.extract_strided_slice %111 {offsets = [0, 2], sizes = [8, 1], strides = [1, 1]} : vector<8x3xf32> to vector<8x1xf32>
    %115 = vector.broadcast %112 : vector<8x1xf32> to vector<8x1280xf32>
    %116 = arith.addf %110, %115 : vector<8x1280xf32>
    %c0_32 = arith.constant 0 : index
    %c0_33 = arith.constant 0 : index
    %117 = vector.load %arg2[%c0_32, %c0_33] : memref<1x1280xf32, #tpu.memory_space<vmem>>, vector<1x1280xf32>
    %118 = vector.broadcast %117 : vector<1x1280xf32> to vector<8x1280xf32>
    %119 = arith.mulf %116, %118 : vector<8x1280xf32>
    %cst_34 = arith.constant dense<0.000000e+00> : vector<8xf32>
    %120 = vector.multi_reduction <add>, %119, %cst_34 [1] : vector<8x1280xf32> to vector<8xf32>
    %121 = vector.shape_cast %120 : vector<8xf32> to vector<8x1xf32>
    %cst_35 = arith.constant 0.001953125 : f32
    %122 = vector.broadcast %cst_35 : f32 to vector<8x1xf32>
    %123 = arith.mulf %121, %122 : vector<8x1xf32>
    %124 = arith.mulf %119, %119 : vector<8x1280xf32>
    %cst_36 = arith.constant dense<0.000000e+00> : vector<8xf32>
    %125 = vector.multi_reduction <add>, %124, %cst_36 [1] : vector<8x1280xf32> to vector<8xf32>
    %126 = vector.shape_cast %125 : vector<8xf32> to vector<8x1xf32>
    %cst_37 = arith.constant 0.001953125 : f32
    %127 = vector.broadcast %cst_37 : f32 to vector<8x1xf32>
    %128 = arith.mulf %126, %127 : vector<8x1xf32>
    %129 = arith.mulf %123, %123 : vector<8x1xf32>
    %130 = arith.subf %128, %129 : vector<8x1xf32>
    %cst_38 = arith.constant 0.000000e+00 : f32
    %131 = vector.broadcast %cst_38 : f32 to vector<8x1xf32>
    %132 = arith.maximumf %130, %131 : vector<8x1xf32>
    %cst_39 = arith.constant 9.99999974E-6 : f32
    %133 = vector.broadcast %cst_39 : f32 to vector<8x1xf32>
    %134 = arith.addf %132, %133 : vector<8x1xf32>
    %135 = math.rsqrt %134 : vector<8x1xf32>
    %136 = arith.mulf %113, %135 : vector<8x1xf32>
    %137 = vector.broadcast %123 : vector<8x1xf32> to vector<8x1280xf32>
    %138 = arith.subf %116, %137 : vector<8x1280xf32>
    %139 = vector.broadcast %136 : vector<8x1xf32> to vector<8x1280xf32>
    %140 = arith.mulf %138, %139 : vector<8x1280xf32>
    %141 = vector.broadcast %114 : vector<8x1xf32> to vector<8x1280xf32>
    %142 = arith.addf %140, %141 : vector<8x1280xf32>
    %cst_40 = arith.constant 0.000000e+00 : f32
    %143 = vector.broadcast %cst_40 : f32 to vector<8x1280xf32>
    %144 = arith.maximumf %142, %143 : vector<8x1280xf32>
    %c0_41 = arith.constant 0 : index
    %c0_42 = arith.constant 0 : index
    %145 = vector.load %arg4[%c0_41, %c0_42] : memref<8x1280xf32, #tpu.memory_space<vmem>>, vector<8x1280xf32>
    tpu.vector_store %arg4[%c0_41, %c0_42], %144 {strides = array<i32>} : memref<8x1280xf32, #tpu.memory_space<vmem>>, vector<8x1280xf32>,
    return
  }
}

</mosaic_0001>

<llo_original>
// kernel: conv_layer_forward.1
$region0: #{conv_layer_forward.1}
  #allocation0 [shape = 'u32[]', space=smem, size = 0x4, offset = 0x4, fixed_abs, tag = 'smem constant byte address 0x4 - core index']
  #allocation1 [shape = 'u32[144,128]{1,0:T(1,128)}', space=vmem, size = 0x12000, scoped, tag = 'internal scratch']
  %s0 = inlined_call_operand.vmem [shape: bf16[8,1536], index: 0, kind: input, shape index: {}]
  %s1 = inlined_call_operand.vmem [shape: bf16[8,216], index: 1, kind: input, shape index: {}]
  %s2 = inlined_call_operand.vmem [shape: f32[1,1280], index: 2, kind: input, shape index: {}]
  %s3 = inlined_call_operand.vmem [shape: f32[8,3], index: 3, kind: input, shape index: {}]
  %s4 = inlined_call_operand.vmem [shape: f32[8,1280], index: 4, kind: output, shape index: {}]
  %s5 = sld [smem:[#allocation0]]
  $region26: #{conv_layer_forward.1} parent=0
    _
  %s7 = ssub.s32 1, %s5
  %s8 = scalar_select 0, %s7, %s5
  // Predicated region
  $region2: #{conv_layer_forward.1} parent=0 // pred_check
    _
  $region3: #{conv_layer_forward.1} parent=0 // pred_check_branch
    %10 = sbr.rel (0) target = $region5
  $region4: #{conv_layer_forward.1} parent=0 // pred_region
    _
  $region5: #{conv_layer_forward.1} parent=0 // pred_fallthru
    _
  // Predicated region
  $region6: #{conv_layer_forward.1} parent=0 // pred_check
    _
  $region7: #{conv_layer_forward.1} parent=0 // pred_check_branch
    %12 = sbr.rel (0) target = $region9
  $region8: #{conv_layer_forward.1} parent=0 // pred_region
    _
  $region9: #{conv_layer_forward.1} parent=0 // pred_fallthru
    _
  // Predicated region
  $region10: #{conv_layer_forward.1} parent=0 // pred_check
    _
  $region11: #{conv_layer_forward.1} parent=0 // pred_check_branch
    %14 = sbr.rel (0) target = $region13
  $region12: #{conv_layer_forward.1} parent=0 // pred_region
    _
  $region13: #{conv_layer_forward.1} parent=0 // pred_fallthru
    _
  // Predicated region
  $region14: #{conv_layer_forward.1} parent=0 // pred_check
    _
  $region15: #{conv_layer_forward.1} parent=0 // pred_check_branch
    %16 = sbr.rel (0) target = $region17
  $region16: #{conv_layer_forward.1} parent=0 // pred_region
    _
  $region17: #{conv_layer_forward.1} parent=0 // pred_fallthru
    _
  %v18 = vld [vmem:[%s0] sm:$0xff]
  %v19 = vld [vmem:[%s0 + $0x8] sm:$0xff]
  %v20 = vld [vmem:[%s0 + $0x10] sm:$0xff]
  %v21 = vld [vmem:[%s0 + $0x18] sm:$0xff]
  %v22 = vld [vmem:[%s0 + $0x20] sm:$0xff]
  %v23 = vld [vmem:[%s0 + $0x28] sm:$0xff]
  %v24 = vld [vmem:[%s1] sm:$0xff]
  %v26 = vunpack.c.l.b16 %v24
  %v27 = vpack.c.b16 %v26, %v26
  %28 = vrot.lane.b32.xlu0 %v27, 120
  %v29 = vpop.permute.xlu0 %28
  %v36 = vunpack.c.l.b16 %v18
  %v37 = vunpack.c.h.b16 %v18
  %v38 = vunpack.c.l.b16 %v19
  %v39 = vunpack.c.h.b16 %v19
  %v40 = vunpack.c.l.b16 %v20
  %v41 = vunpack.c.h.b16 %v20
  %v42 = vunpack.c.l.b16 %v21
  %v43 = vunpack.c.h.b16 %v21
  %v44 = vunpack.c.l.b16 %v22
  %v45 = vunpack.c.h.b16 %v22
  %v46 = vunpack.c.l.b16 %v23
  %v47 = vpack.c.b16 %v36, %v36
  %v48 = vpack.c.b16 %v37, %v37
  %v49 = vpack.c.b16 %v38, %v38
  %v50 = vpack.c.b16 %v39, %v39
  %v51 = vpack.c.b16 %v40, %v40
  %v52 = vpack.c.b16 %v41, %v41
  %v53 = vpack.c.b16 %v42, %v42
  %v54 = vpack.c.b16 %v43, %v43
  %v55 = vpack.c.b16 %v44, %v44
  %v56 = vpack.c.b16 %v45, %v45
  %v57 = vpack.c.b16 %v46, %v46
  %58 = vrot.lane.b32.xlu0 %v47, 127
  %v59 = vpop.permute.xlu0 %58
  %60 = vrot.lane.b32.xlu0 %v48, 127
  %v61 = vpop.permute.xlu0 %60
  %62 = vrot.lane.b32.xlu0 %v49, 127
  %v63 = vpop.permute.xlu0 %62
  %64 = vrot.lane.b32.xlu0 %v50, 127
  %v65 = vpop.permute.xlu0 %64
  %66 = vrot.lane.b32.xlu0 %v51, 127
  %v67 = vpop.permute.xlu0 %66
  %68 = vrot.lane.b32.xlu0 %v52, 127
  %v69 = vpop.permute.xlu0 %68
  %70 = vrot.lane.b32.xlu0 %v53, 127
  %v71 = vpop.permute.xlu0 %70
  %72 = vrot.lane.b32.xlu0 %v54, 127
  %v73 = vpop.permute.xlu0 %72
  %74 = vrot.lane.b32.xlu0 %v55, 127
  %v75 = vpop.permute.xlu0 %74
  %76 = vrot.lane.b32.xlu0 %v56, 127
  %v77 = vpop.permute.xlu0 %76
  %78 = vrot.lane.b32.xlu0 %v57, 127
  %v79 = vpop.permute.xlu0 %78
  %vm80 = vcmask 1039360
  %v81 = vsel %vm80, %v59, %v61
  %v82 = vsel %vm80, %v61, %v63
  %v83 = vsel %vm80, %v63, %v65
  %v84 = vsel %vm80, %v65, %v67
  %v85 = vsel %vm80, %v67, %v69
  %v86 = vsel %vm80, %v69, %v71
  %v87 = vsel %vm80, %v71, %v73
  %v88 = vsel %vm80, %v73, %v75
  %v89 = vsel %vm80, %v75, %v77
  %v90 = vsel %vm80, %v77, %v79
  %vm91 = vcmask 64512
  %v93 = vsel %vm91, %v29, 0
  %vm95 = vcmask 1043456
  %v97 = vsel %vm95, %v81, 0
  %v100 = vsel %vm95, %v82, 0
  %v103 = vsel %vm95, %v83, 0
  %v106 = vsel %vm95, %v84, 0
  %v109 = vsel %vm95, %v85, 0
  %v112 = vsel %vm95, %v86, 0
  %v115 = vsel %vm95, %v87, 0
  %v118 = vsel %vm95, %v88, 0
  %v121 = vsel %vm95, %v89, 0
  %v124 = vsel %vm95, %v90, 0
  %126 = vmatprep.subr.bf16.mxu0 0
  %127 = vmatpush1.bf16.msra.mxu0 0
  %128 = vmatprep.subr.bf16.mxu0 0
  %129 = vmatpush1.bf16.msra.mxu0 0
  %130 = vmatprep.subr.bf16.mxu0 0
  %131 = vmatpush1.bf16.msra.mxu0 0
  %132 = vmatprep.subr.bf16.mxu0 0
  %133 = vmatpush1.bf16.msra.mxu0 0
  %134 = vmatprep.subr.bf16.mxu0 0
  %135 = vmatpush1.bf16.msra.mxu0 0
  %136 = vmatprep.subr.bf16.mxu0 0
  %137 = vmatpush1.bf16.msra.mxu0 0
  %138 = vmatprep.subr.bf16.mxu0 0
  %139 = vmatpush1.bf16.msra.mxu0 0
  %140 = vmatprep.subr.bf16.mxu0 %v100
  %141 = vmatpush1.bf16.msra.mxu0 %v97
  %142 = vmatprep.subr.bf16.mxu0 0
  %143 = vmatpush2.bf16.msra.mxu0 0
  %144 = vmatprep.subr.bf16.mxu0 0
  %145 = vmatpush2.bf16.msra.mxu0 0
  %146 = vmatprep.subr.bf16.mxu0 0
  %147 = vmatpush2.bf16.msra.mxu0 0
  %148 = vmatprep.subr.bf16.mxu0 0
  %149 = vmatpush2.bf16.msra.mxu0 0
  %150 = vmatprep.subr.bf16.mxu0 0
  %151 = vmatpush2.bf16.msra.mxu0 0
  %152 = vmatprep.subr.bf16.mxu0 0
  %153 = vmatpush2.bf16.msra.mxu0 0
  %154 = vmatprep.subr.bf16.mxu0 0
  %155 = vmatpush2.bf16.msra.mxu0 0
  %156 = vmatprep.subr.bf16.mxu0 0
  %157 = vmatpush2.bf16.msra.mxu0 0
  %158 = vmatprep.mubr.bf16.mxu0 0
  %159 = vmatmul.mubr.bf16.gmra.mxu0 %v93
  %v160 = vpop.f32.mrf.mxu0
  %v161 = vadd.f32 0.0, %v160
  %v162 = vpop.f32.mrf.mxu0
  %v163 = vadd.f32 0.0, %v162
  %v164 = vpop.f32.mrf.mxu0
  %v165 = vpop.f32.mrf.mxu0
  %166 = vdwg.mxu0
  %167 = vmatprep.subr.bf16.mxu0 0
  %168 = vmatpush1.bf16.msra.mxu0 0
  %169 = vmatprep.subr.bf16.mxu0 0
  %170 = vmatpush1.bf16.msra.mxu0 0
  %171 = vmatprep.subr.bf16.mxu0 0
  %172 = vmatpush1.bf16.msra.mxu0 0
  %173 = vmatprep.subr.bf16.mxu0 0
  %174 = vmatpush1.bf16.msra.mxu0 0
  %175 = vmatprep.subr.bf16.mxu0 0
  %176 = vmatpush1.bf16.msra.mxu0 0
  %177 = vmatprep.subr.bf16.mxu0 0
  %178 = vmatpush1.bf16.msra.mxu0 0
  %179 = vmatprep.subr.bf16.mxu0 0
  %180 = vmatpush1.bf16.msra.mxu0 0
  %181 = vmatprep.subr.bf16.mxu0 %v106
  %182 = vmatpush1.bf16.msra.mxu0 %v103
  %183 = vmatprep.subr.bf16.mxu0 0
  %184 = vmatpush2.bf16.msra.mxu0 0
  %185 = vmatprep.subr.bf16.mxu0 0
  %186 = vmatpush2.bf16.msra.mxu0 0
  %187 = vmatprep.subr.bf16.mxu0 0
  %188 = vmatpush2.bf16.msra.mxu0 0
  %189 = vmatprep.subr.bf16.mxu0 0
  %190 = vmatpush2.bf16.msra.mxu0 0
  %191 = vmatprep.subr.bf16.mxu0 0
  %192 = vmatpush2.bf16.msra.mxu0 0
  %193 = vmatprep.subr.bf16.mxu0 0
  %194 = vmatpush2.bf16.msra.mxu0 0
  %195 = vmatprep.subr.bf16.mxu0 0
  %196 = vmatpush2.bf16.msra.mxu0 0
  %197 = vmatprep.subr.bf16.mxu0 0
  %198 = vmatpush2.bf16.msra.mxu0 0
  %199 = vmatprep.mubr.bf16.mxu0 0
  %200 = vmatmul.mubr.bf16.gmra.mxu0 %v93
  %v201 = vpop.f32.mrf.mxu0
  %v202 = vadd.f32 0.0, %v201
  %v203 = vpop.f32.mrf.mxu0
  %v204 = vadd.f32 0.0, %v203
  %v205 = vpop.f32.mrf.mxu0
  %v206 = vpop.f32.mrf.mxu0
  %207 = vdwg.mxu0
  %208 = vmatprep.subr.bf16.mxu0 0
  %209 = vmatpush1.bf16.msra.mxu0 0
  %210 = vmatprep.subr.bf16.mxu0 0
  %211 = vmatpush1.bf16.msra.mxu0 0
  %212 = vmatprep.subr.bf16.mxu0 0
  %213 = vmatpush1.bf16.msra.mxu0 0
  %214 = vmatprep.subr.bf16.mxu0 0
  %215 = vmatpush1.bf16.msra.mxu0 0
  %216 = vmatprep.subr.bf16.mxu0 0
  %217 = vmatpush1.bf16.msra.mxu0 0
  %218 = vmatprep.subr.bf16.mxu0 0
  %219 = vmatpush1.bf16.msra.mxu0 0
  %220 = vmatprep.subr.bf16.mxu0 0
  %221 = vmatpush1.bf16.msra.mxu0 0
  %222 = vmatprep.subr.bf16.mxu0 %v112
  %223 = vmatpush1.bf16.msra.mxu0 %v109
  %224 = vmatprep.subr.bf16.mxu0 0
  %225 = vmatpush2.bf16.msra.mxu0 0
  %226 = vmatprep.subr.bf16.mxu0 0
  %227 = vmatpush2.bf16.msra.mxu0 0
  %228 = vmatprep.subr.bf16.mxu0 0
  %229 = vmatpush2.bf16.msra.mxu0 0
  %230 = vmatprep.subr.bf16.mxu0 0
  %231 = vmatpush2.bf16.msra.mxu0 0
  %232 = vmatprep.subr.bf16.mxu0 0
  %233 = vmatpush2.bf16.msra.mxu0 0
  %234 = vmatprep.subr.bf16.mxu0 0
  %235 = vmatpush2.bf16.msra.mxu0 0
  %236 = vmatprep.subr.bf16.mxu0 0
  %237 = vmatpush2.bf16.msra.mxu0 0
  %238 = vmatprep.subr.bf16.mxu0 0
  %239 = vmatpush2.bf16.msra.mxu0 0
  %240 = vmatprep.mubr.bf16.mxu0 0
  %241 = vmatmul.mubr.bf16.gmra.mxu0 %v93
  %v242 = vpop.f32.mrf.mxu0
  %v243 = vadd.f32 0.0, %v242
  %v244 = vpop.f32.mrf.mxu0
  %v245 = vadd.f32 0.0, %v244
  %v246 = vpop.f32.mrf.mxu0
  %v247 = vpop.f32.mrf.mxu0
  %248 = vdwg.mxu0
  %249 = vmatprep.subr.bf16.mxu0 0
  %250 = vmatpush1.bf16.msra.mxu0 0
  %251 = vmatprep.subr.bf16.mxu0 0
  %252 = vmatpush1.bf16.msra.mxu0 0
  %253 = vmatprep.subr.bf16.mxu0 0
  %254 = vmatpush1.bf16.msra.mxu0 0
  %255 = vmatprep.subr.bf16.mxu0 0
  %256 = vmatpush1.bf16.msra.mxu0 0
  %257 = vmatprep.subr.bf16.mxu0 0
  %258 = vmatpush1.bf16.msra.mxu0 0
  %259 = vmatprep.subr.bf16.mxu0 0
  %260 = vmatpush1.bf16.msra.mxu0 0
  %261 = vmatprep.subr.bf16.mxu0 0
  %262 = vmatpush1.bf16.msra.mxu0 0
  %263 = vmatprep.subr.bf16.mxu0 %v118
  %264 = vmatpush1.bf16.msra.mxu0 %v115
  %265 = vmatprep.subr.bf16.mxu0 0
  %266 = vmatpush2.bf16.msra.mxu0 0
  %267 = vmatprep.subr.bf16.mxu0 0
  %268 = vmatpush2.bf16.msra.mxu0 0
  %269 = vmatprep.subr.bf16.mxu0 0
  %270 = vmatpush2.bf16.msra.mxu0 0
  %271 = vmatprep.subr.bf16.mxu0 0
  %272 = vmatpush2.bf16.msra.mxu0 0
  %273 = vmatprep.subr.bf16.mxu0 0
  %274 = vmatpush2.bf16.msra.mxu0 0
  %275 = vmatprep.subr.bf16.mxu0 0
  %276 = vmatpush2.bf16.msra.mxu0 0
  %277 = vmatprep.subr.bf16.mxu0 0
  %278 = vmatpush2.bf16.msra.mxu0 0
  %279 = vmatprep.subr.bf16.mxu0 0
  %280 = vmatpush2.bf16.msra.mxu0 0
  %281 = vmatprep.mubr.bf16.mxu0 0
  %282 = vmatmul.mubr.bf16.gmra.mxu0 %v93
  %v283 = vpop.f32.mrf.mxu0
  %v284 = vadd.f32 0.0, %v283
  %v285 = vpop.f32.mrf.mxu0
  %v286 = vadd.f32 0.0, %v285
  %v287 = vpop.f32.mrf.mxu0
  %v288 = vpop.f32.mrf.mxu0
  %289 = vdwg.mxu0
  %290 = vmatprep.subr.bf16.mxu0 0
  %291 = vmatpush1.bf16.msra.mxu0 0
  %292 = vmatprep.subr.bf16.mxu0 0
  %293 = vmatpush1.bf16.msra.mxu0 0
  %294 = vmatprep.subr.bf16.mxu0 0
  %295 = vmatpush1.bf16.msra.mxu0 0
  %296 = vmatprep.subr.bf16.mxu0 0
  %297 = vmatpush1.bf16.msra.mxu0 0
  %298 = vmatprep.subr.bf16.mxu0 0
  %299 = vmatpush1.bf16.msra.mxu0 0
  %300 = vmatprep.subr.bf16.mxu0 0
  %301 = vmatpush1.bf16.msra.mxu0 0
  %302 = vmatprep.subr.bf16.mxu0 0
  %303 = vmatpush1.bf16.msra.mxu0 0
  %304 = vmatprep.subr.bf16.mxu0 %v124
  %305 = vmatpush1.bf16.msra.mxu0 %v121
  %306 = vmatprep.subr.bf16.mxu0 0
  %307 = vmatpush2.bf16.msra.mxu0 0
  %308 = vmatprep.subr.bf16.mxu0 0
  %309 = vmatpush2.bf16.msra.mxu0 0
  %310 = vmatprep.subr.bf16.mxu0 0
  %311 = vmatpush2.bf16.msra.mxu0 0
  %312 = vmatprep.subr.bf16.mxu0 0
  %313 = vmatpush2.bf16.msra.mxu0 0
  %314 = vmatprep.subr.bf16.mxu0 0
  %315 = vmatpush2.bf16.msra.mxu0 0
  %316 = vmatprep.subr.bf16.mxu0 0
  %317 = vmatpush2.bf16.msra.mxu0 0
  %318 = vmatprep.subr.bf16.mxu0 0
  %319 = vmatpush2.bf16.msra.mxu0 0
  %320 = vmatprep.subr.bf16.mxu0 0
  %321 = vmatpush2.bf16.msra.mxu0 0
  %322 = vmatprep.mubr.bf16.mxu0 0
  %323 = vmatmul.mubr.bf16.gmra.mxu0 %v93
  %v324 = vpop.f32.mrf.mxu0
  %v325 = vadd.f32 0.0, %v324
  %v326 = vpop.f32.mrf.mxu0
  %v327 = vadd.f32 0.0, %v326
  %v328 = vpop.f32.mrf.mxu0
  %v329 = vpop.f32.mrf.mxu0
  %330 = vdwg.mxu0
  %v332 = vsel %vm91, %v24, 0
  %v335 = vsel %vm95, %v47, 0
  %v338 = vsel %vm95, %v48, 0
  %v341 = vsel %vm95, %v49, 0
  %v344 = vsel %vm95, %v50, 0
  %v347 = vsel %vm95, %v51, 0
  %v350 = vsel %vm95, %v52, 0
  %v353 = vsel %vm95, %v53, 0
  %v356 = vsel %vm95, %v54, 0
  %v359 = vsel %vm95, %v55, 0
  %v362 = vsel %vm95, %v56, 0
  %364 = vmatprep.subr.bf16.mxu0 0
  %365 = vmatpush1.bf16.msra.mxu0 0
  %366 = vmatprep.subr.bf16.mxu0 0
  %367 = vmatpush1.bf16.msra.mxu0 0
  %368 = vmatprep.subr.bf16.mxu0 0
  %369 = vmatpush1.bf16.msra.mxu0 0
  %370 = vmatprep.subr.bf16.mxu0 0
  %371 = vmatpush1.bf16.msra.mxu0 0
  %372 = vmatprep.subr.bf16.mxu0 0
  %373 = vmatpush1.bf16.msra.mxu0 0
  %374 = vmatprep.subr.bf16.mxu0 0
  %375 = vmatpush1.bf16.msra.mxu0 0
  %376 = vmatprep.subr.bf16.mxu0 0
  %377 = vmatpush1.bf16.msra.mxu0 0
  %378 = vmatprep.subr.bf16.mxu0 %v338
  %379 = vmatpush1.bf16.msra.mxu0 %v335
  %380 = vmatprep.subr.bf16.mxu0 0
  %381 = vmatpush2.bf16.msra.mxu0 0
  %382 = vmatprep.subr.bf16.mxu0 0
  %383 = vmatpush2.bf16.msra.mxu0 0
  %384 = vmatprep.subr.bf16.mxu0 0
  %385 = vmatpush2.bf16.msra.mxu0 0
  %386 = vmatprep.subr.bf16.mxu0 0
  %387 = vmatpush2.bf16.msra.mxu0 0
  %388 = vmatprep.subr.bf16.mxu0 0
  %389 = vmatpush2.bf16.msra.mxu0 0
  %390 = vmatprep.subr.bf16.mxu0 0
  %391 = vmatpush2.bf16.msra.mxu0 0
  %392 = vmatprep.subr.bf16.mxu0 0
  %393 = vmatpush2.bf16.msra.mxu0 0
  %394 = vmatprep.subr.bf16.mxu0 0
  %395 = vmatpush2.bf16.msra.mxu0 0
  %396 = vmatprep.mubr.bf16.mxu0 0
  %397 = vmatmul.mubr.bf16.gmra.mxu0 %v332
  %v398 = vpop.f32.mrf.mxu0
  %v399 = vadd.f32 %v161, %v398
  %v400 = vpop.f32.mrf.mxu0
  %v401 = vadd.f32 %v163, %v400
  %v402 = vpop.f32.mrf.mxu0
  %v403 = vpop.f32.mrf.mxu0
  %404 = vdwg.mxu0
  %405 = vmatprep.subr.bf16.mxu0 0
  %406 = vmatpush1.bf16.msra.mxu0 0
  %407 = vmatprep.subr.bf16.mxu0 0
  %408 = vmatpush1.bf16.msra.mxu0 0
  %409 = vmatprep.subr.bf16.mxu0 0
  %410 = vmatpush1.bf16.msra.mxu0 0
  %411 = vmatprep.subr.bf16.mxu0 0
  %412 = vmatpush1.bf16.msra.mxu0 0
  %413 = vmatprep.subr.bf16.mxu0 0
  %414 = vmatpush1.bf16.msra.mxu0 0
  %415 = vmatprep.subr.bf16.mxu0 0
  %416 = vmatpush1.bf16.msra.mxu0 0
  %417 = vmatprep.subr.bf16.mxu0 0
  %418 = vmatpush1.bf16.msra.mxu0 0
  %419 = vmatprep.subr.bf16.mxu0 %v344
  %420 = vmatpush1.bf16.msra.mxu0 %v341
  %421 = vmatprep.subr.bf16.mxu0 0
  %422 = vmatpush2.bf16.msra.mxu0 0
  %423 = vmatprep.subr.bf16.mxu0 0
  %424 = vmatpush2.bf16.msra.mxu0 0
  %425 = vmatprep.subr.bf16.mxu0 0
  %426 = vmatpush2.bf16.msra.mxu0 0
  %427 = vmatprep.subr.bf16.mxu0 0
  %428 = vmatpush2.bf16.msra.mxu0 0
  %429 = vmatprep.subr.bf16.mxu0 0
  %430 = vmatpush2.bf16.msra.mxu0 0
  %431 = vmatprep.subr.bf16.mxu0 0
  %432 = vmatpush2.bf16.msra.mxu0 0
  %433 = vmatprep.subr.bf16.mxu0 0
  %434 = vmatpush2.bf16.msra.mxu0 0
  %435 = vmatprep.subr.bf16.mxu0 0
  %436 = vmatpush2.bf16.msra.mxu0 0
  %437 = vmatprep.mubr.bf16.mxu0 0
  %438 = vmatmul.mubr.bf16.gmra.mxu0 %v332
  %v439 = vpop.f32.mrf.mxu0
  %v440 = vadd.f32 %v202, %v439
  %v441 = vpop.f32.mrf.mxu0
  %v442 = vadd.f32 %v204, %v441
  %v443 = vpop.f32.mrf.mxu0
  %v444 = vpop.f32.mrf.mxu0
  %445 = vdwg.mxu0
  %446 = vmatprep.subr.bf16.mxu0 0
  %447 = vmatpush1.bf16.msra.mxu0 0
  %448 = vmatprep.subr.bf16.mxu0 0
  %449 = vmatpush1.bf16.msra.mxu0 0
  %450 = vmatprep.subr.bf16.mxu0 0
  %451 = vmatpush1.bf16.msra.mxu0 0
  %452 = vmatprep.subr.bf16.mxu0 0
  %453 = vmatpush1.bf16.msra.mxu0 0
  %454 = vmatprep.subr.bf16.mxu0 0
  %455 = vmatpush1.bf16.msra.mxu0 0
  %456 = vmatprep.subr.bf16.mxu0 0
  %457 = vmatpush1.bf16.msra.mxu0 0
  %458 = vmatprep.subr.bf16.mxu0 0
  %459 = vmatpush1.bf16.msra.mxu0 0
  %460 = vmatprep.subr.bf16.mxu0 %v350
  %461 = vmatpush1.bf16.msra.mxu0 %v347
  %462 = vmatprep.subr.bf16.mxu0 0
  %463 = vmatpush2.bf16.msra.mxu0 0
  %464 = vmatprep.subr.bf16.mxu0 0
  %465 = vmatpush2.bf16.msra.mxu0 0
  %466 = vmatprep.subr.bf16.mxu0 0
  %467 = vmatpush2.bf16.msra.mxu0 0
  %468 = vmatprep.subr.bf16.mxu0 0
  %469 = vmatpush2.bf16.msra.mxu0 0
  %470 = vmatprep.subr.bf16.mxu0 0
  %471 = vmatpush2.bf16.msra.mxu0 0
  %472 = vmatprep.subr.bf16.mxu0 0
  %473 = vmatpush2.bf16.msra.mxu0 0
  %474 = vmatprep.subr.bf16.mxu0 0
  %475 = vmatpush2.bf16.msra.mxu0 0
  %476 = vmatprep.subr.bf16.mxu0 0
  %477 = vmatpush2.bf16.msra.mxu0 0
  %478 = vmatprep.mubr.bf16.mxu0 0
  %479 = vmatmul.mubr.bf16.gmra.mxu0 %v332
  %v480 = vpop.f32.mrf.mxu0
  %v481 = vadd.f32 %v243, %v480
  %v482 = vpop.f32.mrf.mxu0
  %v483 = vadd.f32 %v245, %v482
  %v484 = vpop.f32.mrf.mxu0
  %v485 = vpop.f32.mrf.mxu0
  %486 = vdwg.mxu0
  %487 = vmatprep.subr.bf16.mxu0 0
  %488 = vmatpush1.bf16.msra.mxu0 0
  %489 = vmatprep.subr.bf16.mxu0 0
  %490 = vmatpush1.bf16.msra.mxu0 0
  %491 = vmatprep.subr.bf16.mxu0 0
  %492 = vmatpush1.bf16.msra.mxu0 0
  %493 = vmatprep.subr.bf16.mxu0 0
  %494 = vmatpush1.bf16.msra.mxu0 0
  %495 = vmatprep.subr.bf16.mxu0 0
  %496 = vmatpush1.bf16.msra.mxu0 0
  %497 = vmatprep.subr.bf16.mxu0 0
  %498 = vmatpush1.bf16.msra.mxu0 0
  %499 = vmatprep.subr.bf16.mxu0 0
  %500 = vmatpush1.bf16.msra.mxu0 0
  %501 = vmatprep.subr.bf16.mxu0 %v356
  %502 = vmatpush1.bf16.msra.mxu0 %v353
  %503 = vmatprep.subr.bf16.mxu0 0
  %504 = vmatpush2.bf16.msra.mxu0 0
  %505 = vmatprep.subr.bf16.mxu0 0
  %506 = vmatpush2.bf16.msra.mxu0 0
  %507 = vmatprep.subr.bf16.mxu0 0
  %508 = vmatpush2.bf16.msra.mxu0 0
  %509 = vmatprep.subr.bf16.mxu0 0
  %510 = vmatpush2.bf16.msra.mxu0 0
  %511 = vmatprep.subr.bf16.mxu0 0
  %512 = vmatpush2.bf16.msra.mxu0 0
  %513 = vmatprep.subr.bf16.mxu0 0
  %514 = vmatpush2.bf16.msra.mxu0 0
  %515 = vmatprep.subr.bf16.mxu0 0
  %516 = vmatpush2.bf16.msra.mxu0 0
  %517 = vmatprep.subr.bf16.mxu0 0
  %518 = vmatpush2.bf16.msra.mxu0 0
  %519 = vmatprep.mubr.bf16.mxu0 0
  %520 = vmatmul.mubr.bf16.gmra.mxu0 %v332
  %v521 = vpop.f32.mrf.mxu0
  %v522 = vadd.f32 %v284, %v521
  %v523 = vpop.f32.mrf.mxu0
  %v524 = vadd.f32 %v286, %v523
  %v525 = vpop.f32.mrf.mxu0
  %v526 = vpop.f32.mrf.mxu0
  %527 = vdwg.mxu0
  %528 = vmatprep.subr.bf16.mxu0 0
  %529 = vmatpush1.bf16.msra.mxu0 0
  %530 = vmatprep.subr.bf16.mxu0 0
  %531 = vmatpush1.bf16.msra.mxu0 0
  %532 = vmatprep.subr.bf16.mxu0 0
  %533 = vmatpush1.bf16.msra.mxu0 0
  %534 = vmatprep.subr.bf16.mxu0 0
  %535 = vmatpush1.bf16.msra.mxu0 0
  %536 = vmatprep.subr.bf16.mxu0 0
  %537 = vmatpush1.bf16.msra.mxu0 0
  %538 = vmatprep.subr.bf16.mxu0 0
  %539 = vmatpush1.bf16.msra.mxu0 0
  %540 = vmatprep.subr.bf16.mxu0 0
  %541 = vmatpush1.bf16.msra.mxu0 0
  %542 = vmatprep.subr.bf16.mxu0 %v362
  %543 = vmatpush1.bf16.msra.mxu0 %v359
  %544 = vmatprep.subr.bf16.mxu0 0
  %545 = vmatpush2.bf16.msra.mxu0 0
  %546 = vmatprep.subr.bf16.mxu0 0
  %547 = vmatpush2.bf16.msra.mxu0 0
  %548 = vmatprep.subr.bf16.mxu0 0
  %549 = vmatpush2.bf16.msra.mxu0 0
  %550 = vmatprep.subr.bf16.mxu0 0
  %551 = vmatpush2.bf16.msra.mxu0 0
  %552 = vmatprep.subr.bf16.mxu0 0
  %553 = vmatpush2.bf16.msra.mxu0 0
  %554 = vmatprep.subr.bf16.mxu0 0
  %555 = vmatpush2.bf16.msra.mxu0 0
  %556 = vmatprep.subr.bf16.mxu0 0
  %557 = vmatpush2.bf16.msra.mxu0 0
  %558 = vmatprep.subr.bf16.mxu0 0
  %559 = vmatpush2.bf16.msra.mxu0 0
  %560 = vmatprep.mubr.bf16.mxu0 0
  %561 = vmatmul.mubr.bf16.gmra.mxu0 %v332
  %v562 = vpop.f32.mrf.mxu0
  %v563 = vadd.f32 %v325, %v562
  %v564 = vpop.f32.mrf.mxu0
  %v565 = vadd.f32 %v327, %v564
  %v566 = vpop.f32.mrf.mxu0
  %v567 = vpop.f32.mrf.mxu0
  %568 = vdwg.mxu0
  %569 = vrot.lane.b32.xlu0 %v27, 112
  %v570 = vpop.permute.xlu0 %569
  %571 = vrot.lane.b32.xlu0 %v47, 126
  %v572 = vpop.permute.xlu0 %571
  %573 = vrot.lane.b32.xlu0 %v48, 126
  %v574 = vpop.permute.xlu0 %573
  %575 = vrot.lane.b32.xlu0 %v49, 126
  %v576 = vpop.permute.xlu0 %575
  %577 = vrot.lane.b32.xlu0 %v50, 126
  %v578 = vpop.permute.xlu0 %577
  %579 = vrot.lane.b32.xlu0 %v51, 126
  %v580 = vpop.permute.xlu0 %579
  %581 = vrot.lane.b32.xlu0 %v52, 126
  %v582 = vpop.permute.xlu0 %581
  %583 = vrot.lane.b32.xlu0 %v53, 126
  %v584 = vpop.permute.xlu0 %583
  %585 = vrot.lane.b32.xlu0 %v54, 126
  %v586 = vpop.permute.xlu0 %585
  %587 = vrot.lane.b32.xlu0 %v55, 126
  %v588 = vpop.permute.xlu0 %587
  %589 = vrot.lane.b32.xlu0 %v56, 126
  %v590 = vpop.permute.xlu0 %589
  %591 = vrot.lane.b32.xlu0 %v57, 126
  %v592 = vpop.permute.xlu0 %591
  %vm593 = vcmask 1031168
  %v594 = vsel %vm593, %v572, %v574
  %v595 = vsel %vm593, %v574, %v576
  %v596 = vsel %vm593, %v576, %v578
  %v597 = vsel %vm593, %v578, %v580
  %v598 = vsel %vm593, %v580, %v582
  %v599 = vsel %vm593, %v582, %v584
  %v600 = vsel %vm593, %v584, %v586
  %v601 = vsel %vm593, %v586, %v588
  %v602 = vsel %vm593, %v588, %v590
  %v603 = vsel %vm593, %v590, %v592
  %v605 = vsel %vm91, %v570, 0
  %v608 = vsel %vm95, %v594, 0
  %v611 = vsel %vm95, %v595, 0
  %v614 = vsel %vm95, %v596, 0
  %v617 = vsel %vm95, %v597, 0
  %v620 = vsel %vm95, %v598, 0
  %v623 = vsel %vm95, %v599, 0
  %v626 = vsel %vm95, %v600, 0
  %v629 = vsel %vm95, %v601, 0
  %v632 = vsel %vm95, %v602, 0
  %v635 = vsel %vm95, %v603, 0
  %637 = vmatprep.subr.bf16.mxu0 0
  %638 = vmatpush1.bf16.msra.mxu0 0
  %639 = vmatprep.subr.bf16.mxu0 0
  %640 = vmatpush1.bf16.msra.mxu0 0
  %641 = vmatprep.subr.bf16.mxu0 0
  %642 = vmatpush1.bf16.msra.mxu0 0
  %643 = vmatprep.subr.bf16.mxu0 0
  %644 = vmatpush1.bf16.msra.mxu0 0
  %645 = vmatprep.subr.bf16.mxu0 0
  %646 = vmatpush1.bf16.msra.mxu0 0
  %647 = vmatprep.subr.bf16.mxu0 0
  %648 = vmatpush1.bf16.msra.mxu0 0
  %649 = vmatprep.subr.bf16.mxu0 0
  %650 = vmatpush1.bf16.msra.mxu0 0
  %651 = vmatprep.subr.bf16.mxu0 %v611
  %652 = vmatpush1.bf16.msra.mxu0 %v608
  %653 = vmatprep.subr.bf16.mxu0 0
  %654 = vmatpush2.bf16.msra.mxu0 0
  %655 = vmatprep.subr.bf16.mxu0 0
  %656 = vmatpush2.bf16.msra.mxu0 0
  %657 = vmatprep.subr.bf16.mxu0 0
  %658 = vmatpush2.bf16.msra.mxu0 0
  %659 = vmatprep.subr.bf16.mxu0 0
  %660 = vmatpush2.bf16.msra.mxu0 0
  %661 = vmatprep.subr.bf16.mxu0 0
  %662 = vmatpush2.bf16.msra.mxu0 0
  %663 = vmatprep.subr.bf16.mxu0 0
  %664 = vmatpush2.bf16.msra.mxu0 0
  %665 = vmatprep.subr.bf16.mxu0 0
  %666 = vmatpush2.bf16.msra.mxu0 0
  %667 = vmatprep.subr.bf16.mxu0 0
  %668 = vmatpush2.bf16.msra.mxu0 0
  %669 = vmatprep.mubr.bf16.mxu0 0
  %670 = vmatmul.mubr.bf16.gmra.mxu0 %v605
  %v671 = vpop.f32.mrf.mxu0
  %v672 = vadd.f32 0.0, %v671
  %v673 = vpop.f32.mrf.mxu0
  %v674 = vadd.f32 0.0, %v673
  %v675 = vpop.f32.mrf.mxu0
  %v676 = vpop.f32.mrf.mxu0
  %677 = vdwg.mxu0
  %678 = vmatprep.subr.bf16.mxu0 0
  %679 = vmatpush1.bf16.msra.mxu0 0
  %680 = vmatprep.subr.bf16.mxu0 0
  %681 = vmatpush1.bf16.msra.mxu0 0
  %682 = vmatprep.subr.bf16.mxu0 0
  %683 = vmatpush1.bf16.msra.mxu0 0
  %684 = vmatprep.subr.bf16.mxu0 0
  %685 = vmatpush1.bf16.msra.mxu0 0
  %686 = vmatprep.subr.bf16.mxu0 0
  %687 = vmatpush1.bf16.msra.mxu0 0
  %688 = vmatprep.subr.bf16.mxu0 0
  %689 = vmatpush1.bf16.msra.mxu0 0
  %690 = vmatprep.subr.bf16.mxu0 0
  %691 = vmatpush1.bf16.msra.mxu0 0
  %692 = vmatprep.subr.bf16.mxu0 %v617
  %693 = vmatpush1.bf16.msra.mxu0 %v614
  %694 = vmatprep.subr.bf16.mxu0 0
  %695 = vmatpush2.bf16.msra.mxu0 0
  %696 = vmatprep.subr.bf16.mxu0 0
  %697 = vmatpush2.bf16.msra.mxu0 0
  %698 = vmatprep.subr.bf16.mxu0 0
  %699 = vmatpush2.bf16.msra.mxu0 0
  %700 = vmatprep.subr.bf16.mxu0 0
  %701 = vmatpush2.bf16.msra.mxu0 0
  %702 = vmatprep.subr.bf16.mxu0 0
  %703 = vmatpush2.bf16.msra.mxu0 0
  %704 = vmatprep.subr.bf16.mxu0 0
  %705 = vmatpush2.bf16.msra.mxu0 0
  %706 = vmatprep.subr.bf16.mxu0 0
  %707 = vmatpush2.bf16.msra.mxu0 0
  %708 = vmatprep.subr.bf16.mxu0 0
  %709 = vmatpush2.bf16.msra.mxu0 0
  %710 = vmatprep.mubr.bf16.mxu0 0
  %711 = vmatmul.mubr.bf16.gmra.mxu0 %v605
  %v712 = vpop.f32.mrf.mxu0
  %v713 = vadd.f32 0.0, %v712
  %v714 = vpop.f32.mrf.mxu0
  %v715 = vadd.f32 0.0, %v714
  %v716 = vpop.f32.mrf.mxu0
  %v717 = vpop.f32.mrf.mxu0
  %718 = vdwg.mxu0
  %719 = vmatprep.subr.bf16.mxu0 0
  %720 = vmatpush1.bf16.msra.mxu0 0
  %721 = vmatprep.subr.bf16.mxu0 0
  %722 = vmatpush1.bf16.msra.mxu0 0
  %723 = vmatprep.subr.bf16.mxu0 0
  %724 = vmatpush1.bf16.msra.mxu0 0
  %725 = vmatprep.subr.bf16.mxu0 0
  %726 = vmatpush1.bf16.msra.mxu0 0
  %727 = vmatprep.subr.bf16.mxu0 0
  %728 = vmatpush1.bf16.msra.mxu0 0
  %729 = vmatprep.subr.bf16.mxu0 0
  %730 = vmatpush1.bf16.msra.mxu0 0
  %731 = vmatprep.subr.bf16.mxu0 0
  %732 = vmatpush1.bf16.msra.mxu0 0
  %733 = vmatprep.subr.bf16.mxu0 %v623
  %734 = vmatpush1.bf16.msra.mxu0 %v620
  %735 = vmatprep.subr.bf16.mxu0 0
  %736 = vmatpush2.bf16.msra.mxu0 0
  %737 = vmatprep.subr.bf16.mxu0 0
  %738 = vmatpush2.bf16.msra.mxu0 0
  %739 = vmatprep.subr.bf16.mxu0 0
  %740 = vmatpush2.bf16.msra.mxu0 0
  %741 = vmatprep.subr.bf16.mxu0 0
  %742 = vmatpush2.bf16.msra.mxu0 0
  %743 = vmatprep.subr.bf16.mxu0 0
  %744 = vmatpush2.bf16.msra.mxu0 0
  %745 = vmatprep.subr.bf16.mxu0 0
  %746 = vmatpush2.bf16.msra.mxu0 0
  %747 = vmatprep.subr.bf16.mxu0 0
  %748 = vmatpush2.bf16.msra.mxu0 0
  %749 = vmatprep.subr.bf16.mxu0 0
  %750 = vmatpush2.bf16.msra.mxu0 0
  %751 = vmatprep.mubr.bf16.mxu0 0
  %752 = vmatmul.mubr.bf16.gmra.mxu0 %v605
  %v753 = vpop.f32.mrf.mxu0
  %v754 = vadd.f32 0.0, %v753
  %v755 = vpop.f32.mrf.mxu0
  %v756 = vadd.f32 0.0, %v755
  %v757 = vpop.f32.mrf.mxu0
  %v758 = vpop.f32.mrf.mxu0
  %759 = vdwg.mxu0
  %760 = vmatprep.subr.bf16.mxu0 0
  %761 = vmatpush1.bf16.msra.mxu0 0
  %762 = vmatprep.subr.bf16.mxu0 0
  %763 = vmatpush1.bf16.msra.mxu0 0
  %764 = vmatprep.subr.bf16.mxu0 0
  %765 = vmatpush1.bf16.msra.mxu0 0
  %766 = vmatprep.subr.bf16.mxu0 0
  %767 = vmatpush1.bf16.msra.mxu0 0
  %768 = vmatprep.subr.bf16.mxu0 0
  %769 = vmatpush1.bf16.msra.mxu0 0
  %770 = vmatprep.subr.bf16.mxu0 0
  %771 = vmatpush1.bf16.msra.mxu0 0
  %772 = vmatprep.subr.bf16.mxu0 0
  %773 = vmatpush1.bf16.msra.mxu0 0
  %774 = vmatprep.subr.bf16.mxu0 %v629
  %775 = vmatpush1.bf16.msra.mxu0 %v626
  %776 = vmatprep.subr.bf16.mxu0 0
  %777 = vmatpush2.bf16.msra.mxu0 0
  %778 = vmatprep.subr.bf16.mxu0 0
  %779 = vmatpush2.bf16.msra.mxu0 0
  %780 = vmatprep.subr.bf16.mxu0 0
  %781 = vmatpush2.bf16.msra.mxu0 0
  %782 = vmatprep.subr.bf16.mxu0 0
  %783 = vmatpush2.bf16.msra.mxu0 0
  %784 = vmatprep.subr.bf16.mxu0 0
  %785 = vmatpush2.bf16.msra.mxu0 0
  %786 = vmatprep.subr.bf16.mxu0 0
  %787 = vmatpush2.bf16.msra.mxu0 0
  %788 = vmatprep.subr.bf16.mxu0 0
  %789 = vmatpush2.bf16.msra.mxu0 0
  %790 = vmatprep.subr.bf16.mxu0 0
  %791 = vmatpush2.bf16.msra.mxu0 0
  %792 = vmatprep.mubr.bf16.mxu0 0
  %793 = vmatmul.mubr.bf16.gmra.mxu0 %v605
  %v794 = vpop.f32.mrf.mxu0
  %v795 = vadd.f32 0.0, %v794
  %v796 = vpop.f32.mrf.mxu0
  %v797 = vadd.f32 0.0, %v796
  %v798 = vpop.f32.mrf.mxu0
  %v799 = vpop.f32.mrf.mxu0
  %800 = vdwg.mxu0
  %801 = vmatprep.subr.bf16.mxu0 0
  %802 = vmatpush1.bf16.msra.mxu0 0
  %803 = vmatprep.subr.bf16.mxu0 0
  %804 = vmatpush1.bf16.msra.mxu0 0
  %805 = vmatprep.subr.bf16.mxu0 0
  %806 = vmatpush1.bf16.msra.mxu0 0
  %807 = vmatprep.subr.bf16.mxu0 0
  %808 = vmatpush1.bf16.msra.mxu0 0
  %809 = vmatprep.subr.bf16.mxu0 0
  %810 = vmatpush1.bf16.msra.mxu0 0
  %811 = vmatprep.subr.bf16.mxu0 0
  %812 = vmatpush1.bf16.msra.mxu0 0
  %813 = vmatprep.subr.bf16.mxu0 0
  %814 = vmatpush1.bf16.msra.mxu0 0
  %815 = vmatprep.subr.bf16.mxu0 %v635
  %816 = vmatpush1.bf16.msra.mxu0 %v632
  %817 = vmatprep.subr.bf16.mxu0 0
  %818 = vmatpush2.bf16.msra.mxu0 0
  %819 = vmatprep.subr.bf16.mxu0 0
  %820 = vmatpush2.bf16.msra.mxu0 0
  %821 = vmatprep.subr.bf16.mxu0 0
  %822 = vmatpush2.bf16.msra.mxu0 0
  %823 = vmatprep.subr.bf16.mxu0 0
  %824 = vmatpush2.bf16.msra.mxu0 0
  %825 = vmatprep.subr.bf16.mxu0 0
  %826 = vmatpush2.bf16.msra.mxu0 0
  %827 = vmatprep.subr.bf16.mxu0 0
  %828 = vmatpush2.bf16.msra.mxu0 0
  %829 = vmatprep.subr.bf16.mxu0 0
  %830 = vmatpush2.bf16.msra.mxu0 0
  %831 = vmatprep.subr.bf16.mxu0 0
  %832 = vmatpush2.bf16.msra.mxu0 0
  %833 = vmatprep.mubr.bf16.mxu0 0
  %834 = vmatmul.mubr.bf16.gmra.mxu0 %v605
  %v835 = vpop.f32.mrf.mxu0
  %v836 = vadd.f32 0.0, %v835
  %v837 = vpop.f32.mrf.mxu0
  %v838 = vadd.f32 0.0, %v837
  %v839 = vpop.f32.mrf.mxu0
  %v840 = vpop.f32.mrf.mxu0
  %841 = vdwg.mxu0
  %v842 = vadd.f32 %v399, %v672
  %v843 = vadd.f32 %v401, %v674
  %v844 = vadd.f32 %v440, %v713
  %v845 = vadd.f32 %v442, %v715
  %v846 = vadd.f32 %v481, %v754
  %v847 = vadd.f32 %v483, %v756
  %v848 = vadd.f32 %v522, %v795
  %v849 = vadd.f32 %v524, %v797
  %v850 = vadd.f32 %v563, %v836
  %v851 = vadd.f32 %v565, %v838
  %852 = vrot.lane.b32.xlu0 %v27, 104
  %v853 = vpop.permute.xlu0 %852
  %854 = vrot.lane.b32.xlu0 %v47, 118
  %v855 = vpop.permute.xlu0 %854
  %856 = vrot.lane.b32.xlu0 %v48, 118
  %v857 = vpop.permute.xlu0 %856
  %858 = vrot.lane.b32.xlu0 %v49, 118
  %v859 = vpop.permute.xlu0 %858
  %860 = vrot.lane.b32.xlu0 %v50, 118
  %v861 = vpop.permute.xlu0 %860
  %862 = vrot.lane.b32.xlu0 %v51, 118
  %v863 = vpop.permute.xlu0 %862
  %864 = vrot.lane.b32.xlu0 %v52, 118
  %v865 = vpop.permute.xlu0 %864
  %866 = vrot.lane.b32.xlu0 %v53, 118
  %v867 = vpop.permute.xlu0 %866
  %868 = vrot.lane.b32.xlu0 %v54, 118
  %v869 = vpop.permute.xlu0 %868
  %870 = vrot.lane.b32.xlu0 %v55, 118
  %v871 = vpop.permute.xlu0 %870
  %872 = vrot.lane.b32.xlu0 %v56, 118
  %v873 = vpop.permute.xlu0 %872
  %874 = vrot.lane.b32.xlu0 %v57, 118
  %v875 = vpop.permute.xlu0 %874
  %vm876 = vcmask 965632
  %v877 = vsel %vm876, %v855, %v857
  %v878 = vsel %vm876, %v857, %v859
  %v879 = vsel %vm876, %v859, %v861
  %v880 = vsel %vm876, %v861, %v863
  %v881 = vsel %vm876, %v863, %v865
  %v882 = vsel %vm876, %v865, %v867
  %v883 = vsel %vm876, %v867, %v869
  %v884 = vsel %vm876, %v869, %v871
  %v885 = vsel %vm876, %v871, %v873
  %v886 = vsel %vm876, %v873, %v875
  %v888 = vsel %vm91, %v853, 0
  %v891 = vsel %vm95, %v877, 0
  %v894 = vsel %vm95, %v878, 0
  %v897 = vsel %vm95, %v879, 0
  %v900 = vsel %vm95, %v880, 0
  %v903 = vsel %vm95, %v881, 0
  %v906 = vsel %vm95, %v882, 0
  %v909 = vsel %vm95, %v883, 0
  %v912 = vsel %vm95, %v884, 0
  %v915 = vsel %vm95, %v885, 0
  %v918 = vsel %vm95, %v886, 0
  %920 = vmatprep.subr.bf16.mxu0 0
  %921 = vmatpush1.bf16.msra.mxu0 0
  %922 = vmatprep.subr.bf16.mxu0 0
  %923 = vmatpush1.bf16.msra.mxu0 0
  %924 = vmatprep.subr.bf16.mxu0 0
  %925 = vmatpush1.bf16.msra.mxu0 0
  %926 = vmatprep.subr.bf16.mxu0 0
  %927 = vmatpush1.bf16.msra.mxu0 0
  %928 = vmatprep.subr.bf16.mxu0 0
  %929 = vmatpush1.bf16.msra.mxu0 0
  %930 = vmatprep.subr.bf16.mxu0 0
  %931 = vmatpush1.bf16.msra.mxu0 0
  %932 = vmatprep.subr.bf16.mxu0 0
  %933 = vmatpush1.bf16.msra.mxu0 0
  %934 = vmatprep.subr.bf16.mxu0 %v894
  %935 = vmatpush1.bf16.msra.mxu0 %v891
  %936 = vmatprep.subr.bf16.mxu0 0
  %937 = vmatpush2.bf16.msra.mxu0 0
  %938 = vmatprep.subr.bf16.mxu0 0
  %939 = vmatpush2.bf16.msra.mxu0 0
  %940 = vmatprep.subr.bf16.mxu0 0
  %941 = vmatpush2.bf16.msra.mxu0 0
  %942 = vmatprep.subr.bf16.mxu0 0
  %943 = vmatpush2.bf16.msra.mxu0 0
  %944 = vmatprep.subr.bf16.mxu0 0
  %945 = vmatpush2.bf16.msra.mxu0 0
  %946 = vmatprep.subr.bf16.mxu0 0
  %947 = vmatpush2.bf16.msra.mxu0 0
  %948 = vmatprep.subr.bf16.mxu0 0
  %949 = vmatpush2.bf16.msra.mxu0 0
  %950 = vmatprep.subr.bf16.mxu0 0
  %951 = vmatpush2.bf16.msra.mxu0 0
  %952 = vmatprep.mubr.bf16.mxu0 0
  %953 = vmatmul.mubr.bf16.gmra.mxu0 %v888
  %v954 = vpop.f32.mrf.mxu0
  %v955 = vadd.f32 0.0, %v954
  %v956 = vpop.f32.mrf.mxu0
  %v957 = vadd.f32 0.0, %v956
  %v958 = vpop.f32.mrf.mxu0
  %v959 = vpop.f32.mrf.mxu0
  %960 = vdwg.mxu0
  %961 = vmatprep.subr.bf16.mxu0 0
  %962 = vmatpush1.bf16.msra.mxu0 0
  %963 = vmatprep.subr.bf16.mxu0 0
  %964 = vmatpush1.bf16.msra.mxu0 0
  %965 = vmatprep.subr.bf16.mxu0 0
  %966 = vmatpush1.bf16.msra.mxu0 0
  %967 = vmatprep.subr.bf16.mxu0 0
  %968 = vmatpush1.bf16.msra.mxu0 0
  %969 = vmatprep.subr.bf16.mxu0 0
  %970 = vmatpush1.bf16.msra.mxu0 0
  %971 = vmatprep.subr.bf16.mxu0 0
  %972 = vmatpush1.bf16.msra.mxu0 0
  %973 = vmatprep.subr.bf16.mxu0 0
  %974 = vmatpush1.bf16.msra.mxu0 0
  %975 = vmatprep.subr.bf16.mxu0 %v900
  %976 = vmatpush1.bf16.msra.mxu0 %v897
  %977 = vmatprep.subr.bf16.mxu0 0
  %978 = vmatpush2.bf16.msra.mxu0 0
  %979 = vmatprep.subr.bf16.mxu0 0
  %980 = vmatpush2.bf16.msra.mxu0 0
  %981 = vmatprep.subr.bf16.mxu0 0
  %982 = vmatpush2.bf16.msra.mxu0 0
  %983 = vmatprep.subr.bf16.mxu0 0
  %984 = vmatpush2.bf16.msra.mxu0 0
  %985 = vmatprep.subr.bf16.mxu0 0
  %986 = vmatpush2.bf16.msra.mxu0 0
  %987 = vmatprep.subr.bf16.mxu0 0
  %988 = vmatpush2.bf16.msra.mxu0 0
  %989 = vmatprep.subr.bf16.mxu0 0
  %990 = vmatpush2.bf16.msra.mxu0 0
  %991 = vmatprep.subr.bf16.mxu0 0
  %992 = vmatpush2.bf16.msra.mxu0 0
  %993 = vmatprep.mubr.bf16.mxu0 0
  %994 = vmatmul.mubr.bf16.gmra.mxu0 %v888
  %v995 = vpop.f32.mrf.mxu0
  %v996 = vadd.f32 0.0, %v995
  %v997 = vpop.f32.mrf.mxu0
  %v998 = vadd.f32 0.0, %v997
  %v999 = vpop.f32.mrf.mxu0
  %v1000 = vpop.f32.mrf.mxu0
  %1001 = vdwg.mxu0
  %1002 = vmatprep.subr.bf16.mxu0 0
  %1003 = vmatpush1.bf16.msra.mxu0 0
  %1004 = vmatprep.subr.bf16.mxu0 0
  %1005 = vmatpush1.bf16.msra.mxu0 0
  %1006 = vmatprep.subr.bf16.mxu0 0
  %1007 = vmatpush1.bf16.msra.mxu0 0
  %1008 = vmatprep.subr.bf16.mxu0 0
  %1009 = vmatpush1.bf16.msra.mxu0 0
  %1010 = vmatprep.subr.bf16.mxu0 0
  %1011 = vmatpush1.bf16.msra.mxu0 0
  %1012 = vmatprep.subr.bf16.mxu0 0
  %1013 = vmatpush1.bf16.msra.mxu0 0
  %1014 = vmatprep.subr.bf16.mxu0 0
  %1015 = vmatpush1.bf16.msra.mxu0 0
  %1016 = vmatprep.subr.bf16.mxu0 %v906
  %1017 = vmatpush1.bf16.msra.mxu0 %v903
  %1018 = vmatprep.subr.bf16.mxu0 0
  %1019 = vmatpush2.bf16.msra.mxu0 0
  %1020 = vmatprep.subr.bf16.mxu0 0
  %1021 = vmatpush2.bf16.msra.mxu0 0
  %1022 = vmatprep.subr.bf16.mxu0 0
  %1023 = vmatpush2.bf16.msra.mxu0 0
  %1024 = vmatprep.subr.bf16.mxu0 0
  %1025 = vmatpush2.bf16.msra.mxu0 0
  %1026 = vmatprep.subr.bf16.mxu0 0
  %1027 = vmatpush2.bf16.msra.mxu0 0
  %1028 = vmatprep.subr.bf16.mxu0 0
  %1029 = vmatpush2.bf16.msra.mxu0 0
  %1030 = vmatprep.subr.bf16.mxu0 0
  %1031 = vmatpush2.bf16.msra.mxu0 0
  %1032 = vmatprep.subr.bf16.mxu0 0
  %1033 = vmatpush2.bf16.msra.mxu0 0
  %1034 = vmatprep.mubr.bf16.mxu0 0
  %1035 = vmatmul.mubr.bf16.gmra.mxu0 %v888
  %v1036 = vpop.f32.mrf.mxu0
  %v1037 = vadd.f32 0.0, %v1036
  %v1038 = vpop.f32.mrf.mxu0
  %v1039 = vadd.f32 0.0, %v1038
  %v1040 = vpop.f32.mrf.mxu0
  %v1041 = vpop.f32.mrf.mxu0
  %1042 = vdwg.mxu0
  %1043 = vmatprep.subr.bf16.mxu0 0
  %1044 = vmatpush1.bf16.msra.mxu0 0
  %1045 = vmatprep.subr.bf16.mxu0 0
  %1046 = vmatpush1.bf16.msra.mxu0 0
  %1047 = vmatprep.subr.bf16.mxu0 0
  %1048 = vmatpush1.bf16.msra.mxu0 0
  %1049 = vmatprep.subr.bf16.mxu0 0
  %1050 = vmatpush1.bf16.msra.mxu0 0
  %1051 = vmatprep.subr.bf16.mxu0 0
  %1052 = vmatpush1.bf16.msra.mxu0 0
  %1053 = vmatprep.subr.bf16.mxu0 0
  %1054 = vmatpush1.bf16.msra.mxu0 0
  %1055 = vmatprep.subr.bf16.mxu0 0
  %1056 = vmatpush1.bf16.msra.mxu0 0
  %1057 = vmatprep.subr.bf16.mxu0 %v912
  %1058 = vmatpush1.bf16.msra.mxu0 %v909
  %1059 = vmatprep.subr.bf16.mxu0 0
  %1060 = vmatpush2.bf16.msra.mxu0 0
  %1061 = vmatprep.subr.bf16.mxu0 0
  %1062 = vmatpush2.bf16.msra.mxu0 0
  %1063 = vmatprep.subr.bf16.mxu0 0
  %1064 = vmatpush2.bf16.msra.mxu0 0
  %1065 = vmatprep.subr.bf16.mxu0 0
  %1066 = vmatpush2.bf16.msra.mxu0 0
  %1067 = vmatprep.subr.bf16.mxu0 0
  %1068 = vmatpush2.bf16.msra.mxu0 0
  %1069 = vmatprep.subr.bf16.mxu0 0
  %1070 = vmatpush2.bf16.msra.mxu0 0
  %1071 = vmatprep.subr.bf16.mxu0 0
  %1072 = vmatpush2.bf16.msra.mxu0 0
  %1073 = vmatprep.subr.bf16.mxu0 0
  %1074 = vmatpush2.bf16.msra.mxu0 0
  %1075 = vmatprep.mubr.bf16.mxu0 0
  %1076 = vmatmul.mubr.bf16.gmra.mxu0 %v888
  %v1077 = vpop.f32.mrf.mxu0
  %v1078 = vadd.f32 0.0, %v1077
  %v1079 = vpop.f32.mrf.mxu0
  %v1080 = vadd.f32 0.0, %v1079
  %v1081 = vpop.f32.mrf.mxu0
  %v1082 = vpop.f32.mrf.mxu0
  %1083 = vdwg.mxu0
  %1084 = vmatprep.subr.bf16.mxu0 0
  %1085 = vmatpush1.bf16.msra.mxu0 0
  %1086 = vmatprep.subr.bf16.mxu0 0
  %1087 = vmatpush1.bf16.msra.mxu0 0
  %1088 = vmatprep.subr.bf16.mxu0 0
  %1089 = vmatpush1.bf16.msra.mxu0 0
  %1090 = vmatprep.subr.bf16.mxu0 0
  %1091 = vmatpush1.bf16.msra.mxu0 0
  %1092 = vmatprep.subr.bf16.mxu0 0
  %1093 = vmatpush1.bf16.msra.mxu0 0
  %1094 = vmatprep.subr.bf16.mxu0 0
  %1095 = vmatpush1.bf16.msra.mxu0 0
  %1096 = vmatprep.subr.bf16.mxu0 0
  %1097 = vmatpush1.bf16.msra.mxu0 0
  %1098 = vmatprep.subr.bf16.mxu0 %v918
  %1099 = vmatpush1.bf16.msra.mxu0 %v915
  %1100 = vmatprep.subr.bf16.mxu0 0
  %1101 = vmatpush2.bf16.msra.mxu0 0
  %1102 = vmatprep.subr.bf16.mxu0 0
  %1103 = vmatpush2.bf16.msra.mxu0 0
  %1104 = vmatprep.subr.bf16.mxu0 0
  %1105 = vmatpush2.bf16.msra.mxu0 0
  %1106 = vmatprep.subr.bf16.mxu0 0
  %1107 = vmatpush2.bf16.msra.mxu0 0
  %1108 = vmatprep.subr.bf16.mxu0 0
  %1109 = vmatpush2.bf16.msra.mxu0 0
  %1110 = vmatprep.subr.bf16.mxu0 0
  %1111 = vmatpush2.bf16.msra.mxu0 0
  %1112 = vmatprep.subr.bf16.mxu0 0
  %1113 = vmatpush2.bf16.msra.mxu0 0
  %1114 = vmatprep.subr.bf16.mxu0 0
  %1115 = vmatpush2.bf16.msra.mxu0 0
  %1116 = vmatprep.mubr.bf16.mxu0 0
  %1117 = vmatmul.mubr.bf16.gmra.mxu0 %v888
  %v1118 = vpop.f32.mrf.mxu0
  %v1119 = vadd.f32 0.0, %v1118
  %v1120 = vpop.f32.mrf.mxu0
  %v1121 = vadd.f32 0.0, %v1120
  %v1122 = vpop.f32.mrf.mxu0
  %v1123 = vpop.f32.mrf.mxu0
  %1124 = vdwg.mxu0
  %v1125 = vadd.f32 %v842, %v955
  %v1126 = vadd.f32 %v843, %v957
  %v1127 = vadd.f32 %v844, %v996
  %v1128 = vadd.f32 %v845, %v998
  %v1129 = vadd.f32 %v846, %v1037
  %v1130 = vadd.f32 %v847, %v1039
  %v1131 = vadd.f32 %v848, %v1078
  %v1132 = vadd.f32 %v849, %v1080
  %v1133 = vadd.f32 %v850, %v1119
  %v1134 = vadd.f32 %v851, %v1121
  %1135 = vrot.lane.b32.xlu0 %v27, 96
  %v1136 = vpop.permute.xlu0 %1135
  %1137 = vrot.lane.b32.xlu0 %v47, 117
  %v1138 = vpop.permute.xlu0 %1137
  %1139 = vrot.lane.b32.xlu0 %v48, 117
  %v1140 = vpop.permute.xlu0 %1139
  %1141 = vrot.lane.b32.xlu0 %v49, 117
  %v1142 = vpop.permute.xlu0 %1141
  %1143 = vrot.lane.b32.xlu0 %v50, 117
  %v1144 = vpop.permute.xlu0 %1143
  %1145 = vrot.lane.b32.xlu0 %v51, 117
  %v1146 = vpop.permute.xlu0 %1145
  %1147 = vrot.lane.b32.xlu0 %v52, 117
  %v1148 = vpop.permute.xlu0 %1147
  %1149 = vrot.lane.b32.xlu0 %v53, 117
  %v1150 = vpop.permute.xlu0 %1149
  %1151 = vrot.lane.b32.xlu0 %v54, 117
  %v1152 = vpop.permute.xlu0 %1151
  %1153 = vrot.lane.b32.xlu0 %v55, 117
  %v1154 = vpop.permute.xlu0 %1153
  %1155 = vrot.lane.b32.xlu0 %v56, 117
  %v1156 = vpop.permute.xlu0 %1155
  %1157 = vrot.lane.b32.xlu0 %v57, 117
  %v1158 = vpop.permute.xlu0 %1157
  %vm1159 = vcmask 957440
  %v1160 = vsel %vm1159, %v1138, %v1140
  %v1161 = vsel %vm1159, %v1140, %v1142
  %v1162 = vsel %vm1159, %v1142, %v1144
  %v1163 = vsel %vm1159, %v1144, %v1146
  %v1164 = vsel %vm1159, %v1146, %v1148
  %v1165 = vsel %vm1159, %v1148, %v1150
  %v1166 = vsel %vm1159, %v1150, %v1152
  %v1167 = vsel %vm1159, %v1152, %v1154
  %v1168 = vsel %vm1159, %v1154, %v1156
  %v1169 = vsel %vm1159, %v1156, %v1158
  %v1171 = vsel %vm91, %v1136, 0
  %v1174 = vsel %vm95, %v1160, 0
  %v1177 = vsel %vm95, %v1161, 0
  %v1180 = vsel %vm95, %v1162, 0
  %v1183 = vsel %vm95, %v1163, 0
  %v1186 = vsel %vm95, %v1164, 0
  %v1189 = vsel %vm95, %v1165, 0
  %v1192 = vsel %vm95, %v1166, 0
  %v1195 = vsel %vm95, %v1167, 0
  %v1198 = vsel %vm95, %v1168, 0
  %v1201 = vsel %vm95, %v1169, 0
  %1203 = vmatprep.subr.bf16.mxu0 0
  %1204 = vmatpush1.bf16.msra.mxu0 0
  %1205 = vmatprep.subr.bf16.mxu0 0
  %1206 = vmatpush1.bf16.msra.mxu0 0
  %1207 = vmatprep.subr.bf16.mxu0 0
  %1208 = vmatpush1.bf16.msra.mxu0 0
  %1209 = vmatprep.subr.bf16.mxu0 0
  %1210 = vmatpush1.bf16.msra.mxu0 0
  %1211 = vmatprep.subr.bf16.mxu0 0
  %1212 = vmatpush1.bf16.msra.mxu0 0
  %1213 = vmatprep.subr.bf16.mxu0 0
  %1214 = vmatpush1.bf16.msra.mxu0 0
  %1215 = vmatprep.subr.bf16.mxu0 0
  %1216 = vmatpush1.bf16.msra.mxu0 0
  %1217 = vmatprep.subr.bf16.mxu0 %v1177
  %1218 = vmatpush1.bf16.msra.mxu0 %v1174
  %1219 = vmatprep.subr.bf16.mxu0 0
  %1220 = vmatpush2.bf16.msra.mxu0 0
  %1221 = vmatprep.subr.bf16.mxu0 0
  %1222 = vmatpush2.bf16.msra.mxu0 0
  %1223 = vmatprep.subr.bf16.mxu0 0
  %1224 = vmatpush2.bf16.msra.mxu0 0
  %1225 = vmatprep.subr.bf16.mxu0 0
  %1226 = vmatpush2.bf16.msra.mxu0 0
  %1227 = vmatprep.subr.bf16.mxu0 0
  %1228 = vmatpush2.bf16.msra.mxu0 0
  %1229 = vmatprep.subr.bf16.mxu0 0
  %1230 = vmatpush2.bf16.msra.mxu0 0
  %1231 = vmatprep.subr.bf16.mxu0 0
  %1232 = vmatpush2.bf16.msra.mxu0 0
  %1233 = vmatprep.subr.bf16.mxu0 0
  %1234 = vmatpush2.bf16.msra.mxu0 0
  %1235 = vmatprep.mubr.bf16.mxu0 0
  %1236 = vmatmul.mubr.bf16.gmra.mxu0 %v1171
  %v1237 = vpop.f32.mrf.mxu0
  %v1238 = vadd.f32 0.0, %v1237
  %v1239 = vpop.f32.mrf.mxu0
  %v1240 = vadd.f32 0.0, %v1239
  %v1241 = vpop.f32.mrf.mxu0
  %v1242 = vpop.f32.mrf.mxu0
  %1243 = vdwg.mxu0
  %1244 = vmatprep.subr.bf16.mxu0 0
  %1245 = vmatpush1.bf16.msra.mxu0 0
  %1246 = vmatprep.subr.bf16.mxu0 0
  %1247 = vmatpush1.bf16.msra.mxu0 0
  %1248 = vmatprep.subr.bf16.mxu0 0
  %1249 = vmatpush1.bf16.msra.mxu0 0
  %1250 = vmatprep.subr.bf16.mxu0 0
  %1251 = vmatpush1.bf16.msra.mxu0 0
  %1252 = vmatprep.subr.bf16.mxu0 0
  %1253 = vmatpush1.bf16.msra.mxu0 0
  %1254 = vmatprep.subr.bf16.mxu0 0
  %1255 = vmatpush1.bf16.msra.mxu0 0
  %1256 = vmatprep.subr.bf16.mxu0 0
  %1257 = vmatpush1.bf16.msra.mxu0 0
  %1258 = vmatprep.subr.bf16.mxu0 %v1183
  %1259 = vmatpush1.bf16.msra.mxu0 %v1180
  %1260 = vmatprep.subr.bf16.mxu0 0
  %1261 = vmatpush2.bf16.msra.mxu0 0
  %1262 = vmatprep.subr.bf16.mxu0 0
  %1263 = vmatpush2.bf16.msra.mxu0 0
  %1264 = vmatprep.subr.bf16.mxu0 0
  %1265 = vmatpush2.bf16.msra.mxu0 0
  %1266 = vmatprep.subr.bf16.mxu0 0
  %1267 = vmatpush2.bf16.msra.mxu0 0
  %1268 = vmatprep.subr.bf16.mxu0 0
  %1269 = vmatpush2.bf16.msra.mxu0 0
  %1270 = vmatprep.subr.bf16.mxu0 0
  %1271 = vmatpush2.bf16.msra.mxu0 0
  %1272 = vmatprep.subr.bf16.mxu0 0
  %1273 = vmatpush2.bf16.msra.mxu0 0
  %1274 = vmatprep.subr.bf16.mxu0 0
  %1275 = vmatpush2.bf16.msra.mxu0 0
  %1276 = vmatprep.mubr.bf16.mxu0 0
  %1277 = vmatmul.mubr.bf16.gmra.mxu0 %v1171
  %v1278 = vpop.f32.mrf.mxu0
  %v1279 = vadd.f32 0.0, %v1278
  %v1280 = vpop.f32.mrf.mxu0
  %v1281 = vadd.f32 0.0, %v1280
  %v1282 = vpop.f32.mrf.mxu0
  %v1283 = vpop.f32.mrf.mxu0
  %1284 = vdwg.mxu0
  %1285 = vmatprep.subr.bf16.mxu0 0
  %1286 = vmatpush1.bf16.msra.mxu0 0
  %1287 = vmatprep.subr.bf16.mxu0 0
  %1288 = vmatpush1.bf16.msra.mxu0 0
  %1289 = vmatprep.subr.bf16.mxu0 0
  %1290 = vmatpush1.bf16.msra.mxu0 0
  %1291 = vmatprep.subr.bf16.mxu0 0
  %1292 = vmatpush1.bf16.msra.mxu0 0
  %1293 = vmatprep.subr.bf16.mxu0 0
  %1294 = vmatpush1.bf16.msra.mxu0 0
  %1295 = vmatprep.subr.bf16.mxu0 0
  %1296 = vmatpush1.bf16.msra.mxu0 0
  %1297 = vmatprep.subr.bf16.mxu0 0
  %1298 = vmatpush1.bf16.msra.mxu0 0
  %1299 = vmatprep.subr.bf16.mxu0 %v1189
  %1300 = vmatpush1.bf16.msra.mxu0 %v1186
  %1301 = vmatprep.subr.bf16.mxu0 0
  %1302 = vmatpush2.bf16.msra.mxu0 0
  %1303 = vmatprep.subr.bf16.mxu0 0
  %1304 = vmatpush2.bf16.msra.mxu0 0
  %1305 = vmatprep.subr.bf16.mxu0 0
  %1306 = vmatpush2.bf16.msra.mxu0 0
  %1307 = vmatprep.subr.bf16.mxu0 0
  %1308 = vmatpush2.bf16.msra.mxu0 0
  %1309 = vmatprep.subr.bf16.mxu0 0
  %1310 = vmatpush2.bf16.msra.mxu0 0
  %1311 = vmatprep.subr.bf16.mxu0 0
  %1312 = vmatpush2.bf16.msra.mxu0 0
  %1313 = vmatprep.subr.bf16.mxu0 0
  %1314 = vmatpush2.bf16.msra.mxu0 0
  %1315 = vmatprep.subr.bf16.mxu0 0
  %1316 = vmatpush2.bf16.msra.mxu0 0
  %1317 = vmatprep.mubr.bf16.mxu0 0
  %1318 = vmatmul.mubr.bf16.gmra.mxu0 %v1171
  %v1319 = vpop.f32.mrf.mxu0
  %v1320 = vadd.f32 0.0, %v1319
  %v1321 = vpop.f32.mrf.mxu0
  %v1322 = vadd.f32 0.0, %v1321
  %v1323 = vpop.f32.mrf.mxu0
  %v1324 = vpop.f32.mrf.mxu0
  %1325 = vdwg.mxu0
  %1326 = vmatprep.subr.bf16.mxu0 0
  %1327 = vmatpush1.bf16.msra.mxu0 0
  %1328 = vmatprep.subr.bf16.mxu0 0
  %1329 = vmatpush1.bf16.msra.mxu0 0
  %1330 = vmatprep.subr.bf16.mxu0 0
  %1331 = vmatpush1.bf16.msra.mxu0 0
  %1332 = vmatprep.subr.bf16.mxu0 0
  %1333 = vmatpush1.bf16.msra.mxu0 0
  %1334 = vmatprep.subr.bf16.mxu0 0
  %1335 = vmatpush1.bf16.msra.mxu0 0
  %1336 = vmatprep.subr.bf16.mxu0 0
  %1337 = vmatpush1.bf16.msra.mxu0 0
  %1338 = vmatprep.subr.bf16.mxu0 0
  %1339 = vmatpush1.bf16.msra.mxu0 0
  %1340 = vmatprep.subr.bf16.mxu0 %v1195
  %1341 = vmatpush1.bf16.msra.mxu0 %v1192
  %1342 = vmatprep.subr.bf16.mxu0 0
  %1343 = vmatpush2.bf16.msra.mxu0 0
  %1344 = vmatprep.subr.bf16.mxu0 0
  %1345 = vmatpush2.bf16.msra.mxu0 0
  %1346 = vmatprep.subr.bf16.mxu0 0
  %1347 = vmatpush2.bf16.msra.mxu0 0
  %1348 = vmatprep.subr.bf16.mxu0 0
  %1349 = vmatpush2.bf16.msra.mxu0 0
  %1350 = vmatprep.subr.bf16.mxu0 0
  %1351 = vmatpush2.bf16.msra.mxu0 0
  %1352 = vmatprep.subr.bf16.mxu0 0
  %1353 = vmatpush2.bf16.msra.mxu0 0
  %1354 = vmatprep.subr.bf16.mxu0 0
  %1355 = vmatpush2.bf16.msra.mxu0 0
  %1356 = vmatprep.subr.bf16.mxu0 0
  %1357 = vmatpush2.bf16.msra.mxu0 0
  %1358 = vmatprep.mubr.bf16.mxu0 0
  %1359 = vmatmul.mubr.bf16.gmra.mxu0 %v1171
  %v1360 = vpop.f32.mrf.mxu0
  %v1361 = vadd.f32 0.0, %v1360
  %v1362 = vpop.f32.mrf.mxu0
  %v1363 = vadd.f32 0.0, %v1362
  %v1364 = vpop.f32.mrf.mxu0
  %v1365 = vpop.f32.mrf.mxu0
  %1366 = vdwg.mxu0
  %1367 = vmatprep.subr.bf16.mxu0 0
  %1368 = vmatpush1.bf16.msra.mxu0 0
  %1369 = vmatprep.subr.bf16.mxu0 0
  %1370 = vmatpush1.bf16.msra.mxu0 0
  %1371 = vmatprep.subr.bf16.mxu0 0
  %1372 = vmatpush1.bf16.msra.mxu0 0
  %1373 = vmatprep.subr.bf16.mxu0 0
  %1374 = vmatpush1.bf16.msra.mxu0 0
  %1375 = vmatprep.subr.bf16.mxu0 0
  %1376 = vmatpush1.bf16.msra.mxu0 0
  %1377 = vmatprep.subr.bf16.mxu0 0
  %1378 = vmatpush1.bf16.msra.mxu0 0
  %1379 = vmatprep.subr.bf16.mxu0 0
  %1380 = vmatpush1.bf16.msra.mxu0 0
  %1381 = vmatprep.subr.bf16.mxu0 %v1201
  %1382 = vmatpush1.bf16.msra.mxu0 %v1198
  %1383 = vmatprep.subr.bf16.mxu0 0
  %1384 = vmatpush2.bf16.msra.mxu0 0
  %1385 = vmatprep.subr.bf16.mxu0 0
  %1386 = vmatpush2.bf16.msra.mxu0 0
  %1387 = vmatprep.subr.bf16.mxu0 0
  %1388 = vmatpush2.bf16.msra.mxu0 0
  %1389 = vmatprep.subr.bf16.mxu0 0
  %1390 = vmatpush2.bf16.msra.mxu0 0
  %1391 = vmatprep.subr.bf16.mxu0 0
  %1392 = vmatpush2.bf16.msra.mxu0 0
  %1393 = vmatprep.subr.bf16.mxu0 0
  %1394 = vmatpush2.bf16.msra.mxu0 0
  %1395 = vmatprep.subr.bf16.mxu0 0
  %1396 = vmatpush2.bf16.msra.mxu0 0
  %1397 = vmatprep.subr.bf16.mxu0 0
  %1398 = vmatpush2.bf16.msra.mxu0 0
  %1399 = vmatprep.mubr.bf16.mxu0 0
  %1400 = vmatmul.mubr.bf16.gmra.mxu0 %v1171
  %v1401 = vpop.f32.mrf.mxu0
  %v1402 = vadd.f32 0.0, %v1401
  %v1403 = vpop.f32.mrf.mxu0
  %v1404 = vadd.f32 0.0, %v1403
  %v1405 = vpop.f32.mrf.mxu0
  %v1406 = vpop.f32.mrf.mxu0
  %1407 = vdwg.mxu0
  %v1408 = vadd.f32 %v1125, %v1238
  %v1409 = vadd.f32 %v1126, %v1240
  %v1410 = vadd.f32 %v1127, %v1279
  %v1411 = vadd.f32 %v1128, %v1281
  %v1412 = vadd.f32 %v1129, %v1320
  %v1413 = vadd.f32 %v1130, %v1322
  %v1414 = vadd.f32 %v1131, %v1361
  %v1415 = vadd.f32 %v1132, %v1363
  %v1416 = vadd.f32 %v1133, %v1402
  %v1417 = vadd.f32 %v1134, %v1404
  %1418 = vrot.lane.b32.xlu0 %v27, 88
  %v1419 = vpop.permute.xlu0 %1418
  %1420 = vrot.lane.b32.xlu0 %v47, 116
  %v1421 = vpop.permute.xlu0 %1420
  %1422 = vrot.lane.b32.xlu0 %v48, 116
  %v1423 = vpop.permute.xlu0 %1422
  %1424 = vrot.lane.b32.xlu0 %v49, 116
  %v1425 = vpop.permute.xlu0 %1424
  %1426 = vrot.lane.b32.xlu0 %v50, 116
  %v1427 = vpop.permute.xlu0 %1426
  %1428 = vrot.lane.b32.xlu0 %v51, 116
  %v1429 = vpop.permute.xlu0 %1428
  %1430 = vrot.lane.b32.xlu0 %v52, 116
  %v1431 = vpop.permute.xlu0 %1430
  %1432 = vrot.lane.b32.xlu0 %v53, 116
  %v1433 = vpop.permute.xlu0 %1432
  %1434 = vrot.lane.b32.xlu0 %v54, 116
  %v1435 = vpop.permute.xlu0 %1434
  %1436 = vrot.lane.b32.xlu0 %v55, 116
  %v1437 = vpop.permute.xlu0 %1436
  %1438 = vrot.lane.b32.xlu0 %v56, 116
  %v1439 = vpop.permute.xlu0 %1438
  %1440 = vrot.lane.b32.xlu0 %v57, 116
  %v1441 = vpop.permute.xlu0 %1440
  %vm1442 = vcmask 949248
  %v1443 = vsel %vm1442, %v1421, %v1423
  %v1444 = vsel %vm1442, %v1423, %v1425
  %v1445 = vsel %vm1442, %v1425, %v1427
  %v1446 = vsel %vm1442, %v1427, %v1429
  %v1447 = vsel %vm1442, %v1429, %v1431
  %v1448 = vsel %vm1442, %v1431, %v1433
  %v1449 = vsel %vm1442, %v1433, %v1435
  %v1450 = vsel %vm1442, %v1435, %v1437
  %v1451 = vsel %vm1442, %v1437, %v1439
  %v1452 = vsel %vm1442, %v1439, %v1441
  %v1454 = vsel %vm91, %v1419, 0
  %v1457 = vsel %vm95, %v1443, 0
  %v1460 = vsel %vm95, %v1444, 0
  %v1463 = vsel %vm95, %v1445, 0
  %v1466 = vsel %vm95, %v1446, 0
  %v1469 = vsel %vm95, %v1447, 0
  %v1472 = vsel %vm95, %v1448, 0
  %v1475 = vsel %vm95, %v1449, 0
  %v1478 = vsel %vm95, %v1450, 0
  %v1481 = vsel %vm95, %v1451, 0
  %v1484 = vsel %vm95, %v1452, 0
  %1486 = vmatprep.subr.bf16.mxu0 0
  %1487 = vmatpush1.bf16.msra.mxu0 0
  %1488 = vmatprep.subr.bf16.mxu0 0
  %1489 = vmatpush1.bf16.msra.mxu0 0
  %1490 = vmatprep.subr.bf16.mxu0 0
  %1491 = vmatpush1.bf16.msra.mxu0 0
  %1492 = vmatprep.subr.bf16.mxu0 0
  %1493 = vmatpush1.bf16.msra.mxu0 0
  %1494 = vmatprep.subr.bf16.mxu0 0
  %1495 = vmatpush1.bf16.msra.mxu0 0
  %1496 = vmatprep.subr.bf16.mxu0 0
  %1497 = vmatpush1.bf16.msra.mxu0 0
  %1498 = vmatprep.subr.bf16.mxu0 0
  %1499 = vmatpush1.bf16.msra.mxu0 0
  %1500 = vmatprep.subr.bf16.mxu0 %v1460
  %1501 = vmatpush1.bf16.msra.mxu0 %v1457
  %1502 = vmatprep.subr.bf16.mxu0 0
  %1503 = vmatpush2.bf16.msra.mxu0 0
  %1504 = vmatprep.subr.bf16.mxu0 0
  %1505 = vmatpush2.bf16.msra.mxu0 0
  %1506 = vmatprep.subr.bf16.mxu0 0
  %1507 = vmatpush2.bf16.msra.mxu0 0
  %1508 = vmatprep.subr.bf16.mxu0 0
  %1509 = vmatpush2.bf16.msra.mxu0 0
  %1510 = vmatprep.subr.bf16.mxu0 0
  %1511 = vmatpush2.bf16.msra.mxu0 0
  %1512 = vmatprep.subr.bf16.mxu0 0
  %1513 = vmatpush2.bf16.msra.mxu0 0
  %1514 = vmatprep.subr.bf16.mxu0 0
  %1515 = vmatpush2.bf16.msra.mxu0 0
  %1516 = vmatprep.subr.bf16.mxu0 0
  %1517 = vmatpush2.bf16.msra.mxu0 0
  %1518 = vmatprep.mubr.bf16.mxu0 0
  %1519 = vmatmul.mubr.bf16.gmra.mxu0 %v1454
  %v1520 = vpop.f32.mrf.mxu0
  %v1521 = vadd.f32 0.0, %v1520
  %v1522 = vpop.f32.mrf.mxu0
  %v1523 = vadd.f32 0.0, %v1522
  %v1524 = vpop.f32.mrf.mxu0
  %v1525 = vpop.f32.mrf.mxu0
  %1526 = vdwg.mxu0
  %1527 = vmatprep.subr.bf16.mxu0 0
  %1528 = vmatpush1.bf16.msra.mxu0 0
  %1529 = vmatprep.subr.bf16.mxu0 0
  %1530 = vmatpush1.bf16.msra.mxu0 0
  %1531 = vmatprep.subr.bf16.mxu0 0
  %1532 = vmatpush1.bf16.msra.mxu0 0
  %1533 = vmatprep.subr.bf16.mxu0 0
  %1534 = vmatpush1.bf16.msra.mxu0 0
  %1535 = vmatprep.subr.bf16.mxu0 0
  %1536 = vmatpush1.bf16.msra.mxu0 0
  %1537 = vmatprep.subr.bf16.mxu0 0
  %1538 = vmatpush1.bf16.msra.mxu0 0
  %1539 = vmatprep.subr.bf16.mxu0 0
  %1540 = vmatpush1.bf16.msra.mxu0 0
  %1541 = vmatprep.subr.bf16.mxu0 %v1466
  %1542 = vmatpush1.bf16.msra.mxu0 %v1463
  %1543 = vmatprep.subr.bf16.mxu0 0
  %1544 = vmatpush2.bf16.msra.mxu0 0
  %1545 = vmatprep.subr.bf16.mxu0 0
  %1546 = vmatpush2.bf16.msra.mxu0 0
  %1547 = vmatprep.subr.bf16.mxu0 0
  %1548 = vmatpush2.bf16.msra.mxu0 0
  %1549 = vmatprep.subr.bf16.mxu0 0
  %1550 = vmatpush2.bf16.msra.mxu0 0
  %1551 = vmatprep.subr.bf16.mxu0 0
  %1552 = vmatpush2.bf16.msra.mxu0 0
  %1553 = vmatprep.subr.bf16.mxu0 0
  %1554 = vmatpush2.bf16.msra.mxu0 0
  %1555 = vmatprep.subr.bf16.mxu0 0
  %1556 = vmatpush2.bf16.msra.mxu0 0
  %1557 = vmatprep.subr.bf16.mxu0 0
  %1558 = vmatpush2.bf16.msra.mxu0 0
  %1559 = vmatprep.mubr.bf16.mxu0 0
  %1560 = vmatmul.mubr.bf16.gmra.mxu0 %v1454
  %v1561 = vpop.f32.mrf.mxu0
  %v1562 = vadd.f32 0.0, %v1561
  %v1563 = vpop.f32.mrf.mxu0
  %v1564 = vadd.f32 0.0, %v1563
  %v1565 = vpop.f32.mrf.mxu0
  %v1566 = vpop.f32.mrf.mxu0
  %1567 = vdwg.mxu0
  %1568 = vmatprep.subr.bf16.mxu0 0
  %1569 = vmatpush1.bf16.msra.mxu0 0
  %1570 = vmatprep.subr.bf16.mxu0 0
  %1571 = vmatpush1.bf16.msra.mxu0 0
  %1572 = vmatprep.subr.bf16.mxu0 0
  %1573 = vmatpush1.bf16.msra.mxu0 0
  %1574 = vmatprep.subr.bf16.mxu0 0
  %1575 = vmatpush1.bf16.msra.mxu0 0
  %1576 = vmatprep.subr.bf16.mxu0 0
  %1577 = vmatpush1.bf16.msra.mxu0 0
  %1578 = vmatprep.subr.bf16.mxu0 0
  %1579 = vmatpush1.bf16.msra.mxu0 0
  %1580 = vmatprep.subr.bf16.mxu0 0
  %1581 = vmatpush1.bf16.msra.mxu0 0
  %1582 = vmatprep.subr.bf16.mxu0 %v1472
  %1583 = vmatpush1.bf16.msra.mxu0 %v1469
  %1584 = vmatprep.subr.bf16.mxu0 0
  %1585 = vmatpush2.bf16.msra.mxu0 0
  %1586 = vmatprep.subr.bf16.mxu0 0
  %1587 = vmatpush2.bf16.msra.mxu0 0
  %1588 = vmatprep.subr.bf16.mxu0 0
  %1589 = vmatpush2.bf16.msra.mxu0 0
  %1590 = vmatprep.subr.bf16.mxu0 0
  %1591 = vmatpush2.bf16.msra.mxu0 0
  %1592 = vmatprep.subr.bf16.mxu0 0
  %1593 = vmatpush2.bf16.msra.mxu0 0
  %1594 = vmatprep.subr.bf16.mxu0 0
  %1595 = vmatpush2.bf16.msra.mxu0 0
  %1596 = vmatprep.subr.bf16.mxu0 0
  %1597 = vmatpush2.bf16.msra.mxu0 0
  %1598 = vmatprep.subr.bf16.mxu0 0
  %1599 = vmatpush2.bf16.msra.mxu0 0
  %1600 = vmatprep.mubr.bf16.mxu0 0
  %1601 = vmatmul.mubr.bf16.gmra.mxu0 %v1454
  %v1602 = vpop.f32.mrf.mxu0
  %v1603 = vadd.f32 0.0, %v1602
  %v1604 = vpop.f32.mrf.mxu0
  %v1605 = vadd.f32 0.0, %v1604
  %v1606 = vpop.f32.mrf.mxu0
  %v1607 = vpop.f32.mrf.mxu0
  %1608 = vdwg.mxu0
  %1609 = vmatprep.subr.bf16.mxu0 0
  %1610 = vmatpush1.bf16.msra.mxu0 0
  %1611 = vmatprep.subr.bf16.mxu0 0
  %1612 = vmatpush1.bf16.msra.mxu0 0
  %1613 = vmatprep.subr.bf16.mxu0 0
  %1614 = vmatpush1.bf16.msra.mxu0 0
  %1615 = vmatprep.subr.bf16.mxu0 0
  %1616 = vmatpush1.bf16.msra.mxu0 0
  %1617 = vmatprep.subr.bf16.mxu0 0
  %1618 = vmatpush1.bf16.msra.mxu0 0
  %1619 = vmatprep.subr.bf16.mxu0 0
  %1620 = vmatpush1.bf16.msra.mxu0 0
  %1621 = vmatprep.subr.bf16.mxu0 0
  %1622 = vmatpush1.bf16.msra.mxu0 0
  %1623 = vmatprep.subr.bf16.mxu0 %v1478
  %1624 = vmatpush1.bf16.msra.mxu0 %v1475
  %1625 = vmatprep.subr.bf16.mxu0 0
  %1626 = vmatpush2.bf16.msra.mxu0 0
  %1627 = vmatprep.subr.bf16.mxu0 0
  %1628 = vmatpush2.bf16.msra.mxu0 0
  %1629 = vmatprep.subr.bf16.mxu0 0
  %1630 = vmatpush2.bf16.msra.mxu0 0
  %1631 = vmatprep.subr.bf16.mxu0 0
  %1632 = vmatpush2.bf16.msra.mxu0 0
  %1633 = vmatprep.subr.bf16.mxu0 0
  %1634 = vmatpush2.bf16.msra.mxu0 0
  %1635 = vmatprep.subr.bf16.mxu0 0
  %1636 = vmatpush2.bf16.msra.mxu0 0
  %1637 = vmatprep.subr.bf16.mxu0 0
  %1638 = vmatpush2.bf16.msra.mxu0 0
  %1639 = vmatprep.subr.bf16.mxu0 0
  %1640 = vmatpush2.bf16.msra.mxu0 0
  %1641 = vmatprep.mubr.bf16.mxu0 0
  %1642 = vmatmul.mubr.bf16.gmra.mxu0 %v1454
  %v1643 = vpop.f32.mrf.mxu0
  %v1644 = vadd.f32 0.0, %v1643
  %v1645 = vpop.f32.mrf.mxu0
  %v1646 = vadd.f32 0.0, %v1645
  %v1647 = vpop.f32.mrf.mxu0
  %v1648 = vpop.f32.mrf.mxu0
  %1649 = vdwg.mxu0
  %1650 = vmatprep.subr.bf16.mxu0 0
  %1651 = vmatpush1.bf16.msra.mxu0 0
  %1652 = vmatprep.subr.bf16.mxu0 0
  %1653 = vmatpush1.bf16.msra.mxu0 0
  %1654 = vmatprep.subr.bf16.mxu0 0
  %1655 = vmatpush1.bf16.msra.mxu0 0
  %1656 = vmatprep.subr.bf16.mxu0 0
  %1657 = vmatpush1.bf16.msra.mxu0 0
  %1658 = vmatprep.subr.bf16.mxu0 0
  %1659 = vmatpush1.bf16.msra.mxu0 0
  %1660 = vmatprep.subr.bf16.mxu0 0
  %1661 = vmatpush1.bf16.msra.mxu0 0
  %1662 = vmatprep.subr.bf16.mxu0 0
  %1663 = vmatpush1.bf16.msra.mxu0 0
  %1664 = vmatprep.subr.bf16.mxu0 %v1484
  %1665 = vmatpush1.bf16.msra.mxu0 %v1481
  %1666 = vmatprep.subr.bf16.mxu0 0
  %1667 = vmatpush2.bf16.msra.mxu0 0
  %1668 = vmatprep.subr.bf16.mxu0 0
  %1669 = vmatpush2.bf16.msra.mxu0 0
  %1670 = vmatprep.subr.bf16.mxu0 0
  %1671 = vmatpush2.bf16.msra.mxu0 0
  %1672 = vmatprep.subr.bf16.mxu0 0
  %1673 = vmatpush2.bf16.msra.mxu0 0
  %1674 = vmatprep.subr.bf16.mxu0 0
  %1675 = vmatpush2.bf16.msra.mxu0 0
  %1676 = vmatprep.subr.bf16.mxu0 0
  %1677 = vmatpush2.bf16.msra.mxu0 0
  %1678 = vmatprep.subr.bf16.mxu0 0
  %1679 = vmatpush2.bf16.msra.mxu0 0
  %1680 = vmatprep.subr.bf16.mxu0 0
  %1681 = vmatpush2.bf16.msra.mxu0 0
  %1682 = vmatprep.mubr.bf16.mxu0 0
  %1683 = vmatmul.mubr.bf16.gmra.mxu0 %v1454
  %v1684 = vpop.f32.mrf.mxu0
  %v1685 = vadd.f32 0.0, %v1684
  %v1686 = vpop.f32.mrf.mxu0
  %v1687 = vadd.f32 0.0, %v1686
  %v1688 = vpop.f32.mrf.mxu0
  %v1689 = vpop.f32.mrf.mxu0
  %1690 = vdwg.mxu0
  %v1691 = vadd.f32 %v1408, %v1521
  %v1692 = vadd.f32 %v1409, %v1523
  %v1693 = vadd.f32 %v1410, %v1562
  %v1694 = vadd.f32 %v1411, %v1564
  %v1695 = vadd.f32 %v1412, %v1603
  %v1696 = vadd.f32 %v1413, %v1605
  %v1697 = vadd.f32 %v1414, %v1644
  %v1698 = vadd.f32 %v1415, %v1646
  %v1699 = vadd.f32 %v1416, %v1685
  %v1700 = vadd.f32 %v1417, %v1687
  %1701 = vrot.lane.b32.xlu0 %v27, 80
  %v1702 = vpop.permute.xlu0 %1701
  %1703 = vrot.lane.b32.xlu0 %v47, 108
  %v1704 = vpop.permute.xlu0 %1703
  %1705 = vrot.lane.b32.xlu0 %v48, 108
  %v1706 = vpop.permute.xlu0 %1705
  %1707 = vrot.lane.b32.xlu0 %v49, 108
  %v1708 = vpop.permute.xlu0 %1707
  %1709 = vrot.lane.b32.xlu0 %v50, 108
  %v1710 = vpop.permute.xlu0 %1709
  %1711 = vrot.lane.b32.xlu0 %v51, 108
  %v1712 = vpop.permute.xlu0 %1711
  %1713 = vrot.lane.b32.xlu0 %v52, 108
  %v1714 = vpop.permute.xlu0 %1713
  %1715 = vrot.lane.b32.xlu0 %v53, 108
  %v1716 = vpop.permute.xlu0 %1715
  %1717 = vrot.lane.b32.xlu0 %v54, 108
  %v1718 = vpop.permute.xlu0 %1717
  %1719 = vrot.lane.b32.xlu0 %v55, 108
  %v1720 = vpop.permute.xlu0 %1719
  %1721 = vrot.lane.b32.xlu0 %v56, 108
  %v1722 = vpop.permute.xlu0 %1721
  %1723 = vrot.lane.b32.xlu0 %v57, 108
  %v1724 = vpop.permute.xlu0 %1723
  %vm1725 = vcmask 883712
  %v1726 = vsel %vm1725, %v1704, %v1706
  %v1727 = vsel %vm1725, %v1706, %v1708
  %v1728 = vsel %vm1725, %v1708, %v1710
  %v1729 = vsel %vm1725, %v1710, %v1712
  %v1730 = vsel %vm1725, %v1712, %v1714
  %v1731 = vsel %vm1725, %v1714, %v1716
  %v1732 = vsel %vm1725, %v1716, %v1718
  %v1733 = vsel %vm1725, %v1718, %v1720
  %v1734 = vsel %vm1725, %v1720, %v1722
  %v1735 = vsel %vm1725, %v1722, %v1724
  %v1737 = vsel %vm91, %v1702, 0
  %v1740 = vsel %vm95, %v1726, 0
  %v1743 = vsel %vm95, %v1727, 0
  %v1746 = vsel %vm95, %v1728, 0
  %v1749 = vsel %vm95, %v1729, 0
  %v1752 = vsel %vm95, %v1730, 0
  %v1755 = vsel %vm95, %v1731, 0
  %v1758 = vsel %vm95, %v1732, 0
  %v1761 = vsel %vm95, %v1733, 0
  %v1764 = vsel %vm95, %v1734, 0
  %v1767 = vsel %vm95, %v1735, 0
  %1769 = vmatprep.subr.bf16.mxu0 0
  %1770 = vmatpush1.bf16.msra.mxu0 0
  %1771 = vmatprep.subr.bf16.mxu0 0
  %1772 = vmatpush1.bf16.msra.mxu0 0
  %1773 = vmatprep.subr.bf16.mxu0 0
  %1774 = vmatpush1.bf16.msra.mxu0 0
  %1775 = vmatprep.subr.bf16.mxu0 0
  %1776 = vmatpush1.bf16.msra.mxu0 0
  %1777 = vmatprep.subr.bf16.mxu0 0
  %1778 = vmatpush1.bf16.msra.mxu0 0
  %1779 = vmatprep.subr.bf16.mxu0 0
  %1780 = vmatpush1.bf16.msra.mxu0 0
  %1781 = vmatprep.subr.bf16.mxu0 0
  %1782 = vmatpush1.bf16.msra.mxu0 0
  %1783 = vmatprep.subr.bf16.mxu0 %v1743
  %1784 = vmatpush1.bf16.msra.mxu0 %v1740
  %1785 = vmatprep.subr.bf16.mxu0 0
  %1786 = vmatpush2.bf16.msra.mxu0 0
  %1787 = vmatprep.subr.bf16.mxu0 0
  %1788 = vmatpush2.bf16.msra.mxu0 0
  %1789 = vmatprep.subr.bf16.mxu0 0
  %1790 = vmatpush2.bf16.msra.mxu0 0
  %1791 = vmatprep.subr.bf16.mxu0 0
  %1792 = vmatpush2.bf16.msra.mxu0 0
  %1793 = vmatprep.subr.bf16.mxu0 0
  %1794 = vmatpush2.bf16.msra.mxu0 0
  %1795 = vmatprep.subr.bf16.mxu0 0
  %1796 = vmatpush2.bf16.msra.mxu0 0
  %1797 = vmatprep.subr.bf16.mxu0 0
  %1798 = vmatpush2.bf16.msra.mxu0 0
  %1799 = vmatprep.subr.bf16.mxu0 0
  %1800 = vmatpush2.bf16.msra.mxu0 0
  %1801 = vmatprep.mubr.bf16.mxu0 0
  %1802 = vmatmul.mubr.bf16.gmra.mxu0 %v1737
  %v1803 = vpop.f32.mrf.mxu0
  %v1804 = vadd.f32 0.0, %v1803
  %v1805 = vpop.f32.mrf.mxu0
  %v1806 = vadd.f32 0.0, %v1805
  %v1807 = vpop.f32.mrf.mxu0
  %v1808 = vpop.f32.mrf.mxu0
  %1809 = vdwg.mxu0
  %1810 = vmatprep.subr.bf16.mxu0 0
  %1811 = vmatpush1.bf16.msra.mxu0 0
  %1812 = vmatprep.subr.bf16.mxu0 0
  %1813 = vmatpush1.bf16.msra.mxu0 0
  %1814 = vmatprep.subr.bf16.mxu0 0
  %1815 = vmatpush1.bf16.msra.mxu0 0
  %1816 = vmatprep.subr.bf16.mxu0 0
  %1817 = vmatpush1.bf16.msra.mxu0 0
  %1818 = vmatprep.subr.bf16.mxu0 0
  %1819 = vmatpush1.bf16.msra.mxu0 0
  %1820 = vmatprep.subr.bf16.mxu0 0
  %1821 = vmatpush1.bf16.msra.mxu0 0
  %1822 = vmatprep.subr.bf16.mxu0 0
  %1823 = vmatpush1.bf16.msra.mxu0 0
  %1824 = vmatprep.subr.bf16.mxu0 %v1749
  %1825 = vmatpush1.bf16.msra.mxu0 %v1746
  %1826 = vmatprep.subr.bf16.mxu0 0
  %1827 = vmatpush2.bf16.msra.mxu0 0
  %1828 = vmatprep.subr.bf16.mxu0 0
  %1829 = vmatpush2.bf16.msra.mxu0 0
  %1830 = vmatprep.subr.bf16.mxu0 0
  %1831 = vmatpush2.bf16.msra.mxu0 0
  %1832 = vmatprep.subr.bf16.mxu0 0
  %1833 = vmatpush2.bf16.msra.mxu0 0
  %1834 = vmatprep.subr.bf16.mxu0 0
  %1835 = vmatpush2.bf16.msra.mxu0 0
  %1836 = vmatprep.subr.bf16.mxu0 0
  %1837 = vmatpush2.bf16.msra.mxu0 0
  %1838 = vmatprep.subr.bf16.mxu0 0
  %1839 = vmatpush2.bf16.msra.mxu0 0
  %1840 = vmatprep.subr.bf16.mxu0 0
  %1841 = vmatpush2.bf16.msra.mxu0 0
  %1842 = vmatprep.mubr.bf16.mxu0 0
  %1843 = vmatmul.mubr.bf16.gmra.mxu0 %v1737
  %v1844 = vpop.f32.mrf.mxu0
  %v1845 = vadd.f32 0.0, %v1844
  %v1846 = vpop.f32.mrf.mxu0
  %v1847 = vadd.f32 0.0, %v1846
  %v1848 = vpop.f32.mrf.mxu0
  %v1849 = vpop.f32.mrf.mxu0
  %1850 = vdwg.mxu0
  %1851 = vmatprep.subr.bf16.mxu0 0
  %1852 = vmatpush1.bf16.msra.mxu0 0
  %1853 = vmatprep.subr.bf16.mxu0 0
  %1854 = vmatpush1.bf16.msra.mxu0 0
  %1855 = vmatprep.subr.bf16.mxu0 0
  %1856 = vmatpush1.bf16.msra.mxu0 0
  %1857 = vmatprep.subr.bf16.mxu0 0
  %1858 = vmatpush1.bf16.msra.mxu0 0
  %1859 = vmatprep.subr.bf16.mxu0 0
  %1860 = vmatpush1.bf16.msra.mxu0 0
  %1861 = vmatprep.subr.bf16.mxu0 0
  %1862 = vmatpush1.bf16.msra.mxu0 0
  %1863 = vmatprep.subr.bf16.mxu0 0
  %1864 = vmatpush1.bf16.msra.mxu0 0
  %1865 = vmatprep.subr.bf16.mxu0 %v1755
  %1866 = vmatpush1.bf16.msra.mxu0 %v1752
  %1867 = vmatprep.subr.bf16.mxu0 0
  %1868 = vmatpush2.bf16.msra.mxu0 0
  %1869 = vmatprep.subr.bf16.mxu0 0
  %1870 = vmatpush2.bf16.msra.mxu0 0
  %1871 = vmatprep.subr.bf16.mxu0 0
  %1872 = vmatpush2.bf16.msra.mxu0 0
  %1873 = vmatprep.subr.bf16.mxu0 0
  %1874 = vmatpush2.bf16.msra.mxu0 0
  %1875 = vmatprep.subr.bf16.mxu0 0
  %1876 = vmatpush2.bf16.msra.mxu0 0
  %1877 = vmatprep.subr.bf16.mxu0 0
  %1878 = vmatpush2.bf16.msra.mxu0 0
  %1879 = vmatprep.subr.bf16.mxu0 0
  %1880 = vmatpush2.bf16.msra.mxu0 0
  %1881 = vmatprep.subr.bf16.mxu0 0
  %1882 = vmatpush2.bf16.msra.mxu0 0
  %1883 = vmatprep.mubr.bf16.mxu0 0
  %1884 = vmatmul.mubr.bf16.gmra.mxu0 %v1737
  %v1885 = vpop.f32.mrf.mxu0
  %v1886 = vadd.f32 0.0, %v1885
  %v1887 = vpop.f32.mrf.mxu0
  %v1888 = vadd.f32 0.0, %v1887
  %v1889 = vpop.f32.mrf.mxu0
  %v1890 = vpop.f32.mrf.mxu0
  %1891 = vdwg.mxu0
  %1892 = vmatprep.subr.bf16.mxu0 0
  %1893 = vmatpush1.bf16.msra.mxu0 0
  %1894 = vmatprep.subr.bf16.mxu0 0
  %1895 = vmatpush1.bf16.msra.mxu0 0
  %1896 = vmatprep.subr.bf16.mxu0 0
  %1897 = vmatpush1.bf16.msra.mxu0 0
  %1898 = vmatprep.subr.bf16.mxu0 0
  %1899 = vmatpush1.bf16.msra.mxu0 0
  %1900 = vmatprep.subr.bf16.mxu0 0
  %1901 = vmatpush1.bf16.msra.mxu0 0
  %1902 = vmatprep.subr.bf16.mxu0 0
  %1903 = vmatpush1.bf16.msra.mxu0 0
  %1904 = vmatprep.subr.bf16.mxu0 0
  %1905 = vmatpush1.bf16.msra.mxu0 0
  %1906 = vmatprep.subr.bf16.mxu0 %v1761
  %1907 = vmatpush1.bf16.msra.mxu0 %v1758
  %1908 = vmatprep.subr.bf16.mxu0 0
  %1909 = vmatpush2.bf16.msra.mxu0 0
  %1910 = vmatprep.subr.bf16.mxu0 0
  %1911 = vmatpush2.bf16.msra.mxu0 0
  %1912 = vmatprep.subr.bf16.mxu0 0
  %1913 = vmatpush2.bf16.msra.mxu0 0
  %1914 = vmatprep.subr.bf16.mxu0 0
  %1915 = vmatpush2.bf16.msra.mxu0 0
  %1916 = vmatprep.subr.bf16.mxu0 0
  %1917 = vmatpush2.bf16.msra.mxu0 0
  %1918 = vmatprep.subr.bf16.mxu0 0
  %1919 = vmatpush2.bf16.msra.mxu0 0
  %1920 = vmatprep.subr.bf16.mxu0 0
  %1921 = vmatpush2.bf16.msra.mxu0 0
  %1922 = vmatprep.subr.bf16.mxu0 0
  %1923 = vmatpush2.bf16.msra.mxu0 0
  %1924 = vmatprep.mubr.bf16.mxu0 0
  %1925 = vmatmul.mubr.bf16.gmra.mxu0 %v1737
  %v1926 = vpop.f32.mrf.mxu0
  %v1927 = vadd.f32 0.0, %v1926
  %v1928 = vpop.f32.mrf.mxu0
  %v1929 = vadd.f32 0.0, %v1928
  %v1930 = vpop.f32.mrf.mxu0
  %v1931 = vpop.f32.mrf.mxu0
  %1932 = vdwg.mxu0
  %1933 = vmatprep.subr.bf16.mxu0 0
  %1934 = vmatpush1.bf16.msra.mxu0 0
  %1935 = vmatprep.subr.bf16.mxu0 0
  %1936 = vmatpush1.bf16.msra.mxu0 0
  %1937 = vmatprep.subr.bf16.mxu0 0
  %1938 = vmatpush1.bf16.msra.mxu0 0
  %1939 = vmatprep.subr.bf16.mxu0 0
  %1940 = vmatpush1.bf16.msra.mxu0 0
  %1941 = vmatprep.subr.bf16.mxu0 0
  %1942 = vmatpush1.bf16.msra.mxu0 0
  %1943 = vmatprep.subr.bf16.mxu0 0
  %1944 = vmatpush1.bf16.msra.mxu0 0
  %1945 = vmatprep.subr.bf16.mxu0 0
  %1946 = vmatpush1.bf16.msra.mxu0 0
  %1947 = vmatprep.subr.bf16.mxu0 %v1767
  %1948 = vmatpush1.bf16.msra.mxu0 %v1764
  %1949 = vmatprep.subr.bf16.mxu0 0
  %1950 = vmatpush2.bf16.msra.mxu0 0
  %1951 = vmatprep.subr.bf16.mxu0 0
  %1952 = vmatpush2.bf16.msra.mxu0 0
  %1953 = vmatprep.subr.bf16.mxu0 0
  %1954 = vmatpush2.bf16.msra.mxu0 0
  %1955 = vmatprep.subr.bf16.mxu0 0
  %1956 = vmatpush2.bf16.msra.mxu0 0
  %1957 = vmatprep.subr.bf16.mxu0 0
  %1958 = vmatpush2.bf16.msra.mxu0 0
  %1959 = vmatprep.subr.bf16.mxu0 0
  %1960 = vmatpush2.bf16.msra.mxu0 0
  %1961 = vmatprep.subr.bf16.mxu0 0
  %1962 = vmatpush2.bf16.msra.mxu0 0
  %1963 = vmatprep.subr.bf16.mxu0 0
  %1964 = vmatpush2.bf16.msra.mxu0 0
  %1965 = vmatprep.mubr.bf16.mxu0 0
  %1966 = vmatmul.mubr.bf16.gmra.mxu0 %v1737
  %v1967 = vpop.f32.mrf.mxu0
  %v1968 = vadd.f32 0.0, %v1967
  %v1969 = vpop.f32.mrf.mxu0
  %v1970 = vadd.f32 0.0, %v1969
  %v1971 = vpop.f32.mrf.mxu0
  %v1972 = vpop.f32.mrf.mxu0
  %1973 = vdwg.mxu0
  %v1974 = vadd.f32 %v1691, %v1804
  %v1975 = vadd.f32 %v1692, %v1806
  %v1976 = vadd.f32 %v1693, %v1845
  %v1977 = vadd.f32 %v1694, %v1847
  %v1978 = vadd.f32 %v1695, %v1886
  %v1979 = vadd.f32 %v1696, %v1888
  %v1980 = vadd.f32 %v1697, %v1927
  %v1981 = vadd.f32 %v1698, %v1929
  %v1982 = vadd.f32 %v1699, %v1968
  %v1983 = vadd.f32 %v1700, %v1970
  %1984 = vrot.lane.b32.xlu0 %v27, 72
  %v1985 = vpop.permute.xlu0 %1984
  %1986 = vrot.lane.b32.xlu0 %v47, 107
  %v1987 = vpop.permute.xlu0 %1986
  %1988 = vrot.lane.b32.xlu0 %v48, 107
  %v1989 = vpop.permute.xlu0 %1988
  %1990 = vrot.lane.b32.xlu0 %v49, 107
  %v1991 = vpop.permute.xlu0 %1990
  %1992 = vrot.lane.b32.xlu0 %v50, 107
  %v1993 = vpop.permute.xlu0 %1992
  %1994 = vrot.lane.b32.xlu0 %v51, 107
  %v1995 = vpop.permute.xlu0 %1994
  %1996 = vrot.lane.b32.xlu0 %v52, 107
  %v1997 = vpop.permute.xlu0 %1996
  %1998 = vrot.lane.b32.xlu0 %v53, 107
  %v1999 = vpop.permute.xlu0 %1998
  %2000 = vrot.lane.b32.xlu0 %v54, 107
  %v2001 = vpop.permute.xlu0 %2000
  %2002 = vrot.lane.b32.xlu0 %v55, 107
  %v2003 = vpop.permute.xlu0 %2002
  %2004 = vrot.lane.b32.xlu0 %v56, 107
  %v2005 = vpop.permute.xlu0 %2004
  %2006 = vrot.lane.b32.xlu0 %v57, 107
  %v2007 = vpop.permute.xlu0 %2006
  %vm2008 = vcmask 875520
  %v2009 = vsel %vm2008, %v1987, %v1989
  %v2010 = vsel %vm2008, %v1989, %v1991
  %v2011 = vsel %vm2008, %v1991, %v1993
  %v2012 = vsel %vm2008, %v1993, %v1995
  %v2013 = vsel %vm2008, %v1995, %v1997
  %v2014 = vsel %vm2008, %v1997, %v1999
  %v2015 = vsel %vm2008, %v1999, %v2001
  %v2016 = vsel %vm2008, %v2001, %v2003
  %v2017 = vsel %vm2008, %v2003, %v2005
  %v2018 = vsel %vm2008, %v2005, %v2007
  %v2020 = vsel %vm91, %v1985, 0
  %v2023 = vsel %vm95, %v2009, 0
  %v2026 = vsel %vm95, %v2010, 0
  %v2029 = vsel %vm95, %v2011, 0
  %v2032 = vsel %vm95, %v2012, 0
  %v2035 = vsel %vm95, %v2013, 0
  %v2038 = vsel %vm95, %v2014, 0
  %v2041 = vsel %vm95, %v2015, 0
  %v2044 = vsel %vm95, %v2016, 0
  %v2047 = vsel %vm95, %v2017, 0
  %v2050 = vsel %vm95, %v2018, 0
  %2052 = vmatprep.subr.bf16.mxu0 0
  %2053 = vmatpush1.bf16.msra.mxu0 0
  %2054 = vmatprep.subr.bf16.mxu0 0
  %2055 = vmatpush1.bf16.msra.mxu0 0
  %2056 = vmatprep.subr.bf16.mxu0 0
  %2057 = vmatpush1.bf16.msra.mxu0 0
  %2058 = vmatprep.subr.bf16.mxu0 0
  %2059 = vmatpush1.bf16.msra.mxu0 0
  %2060 = vmatprep.subr.bf16.mxu0 0
  %2061 = vmatpush1.bf16.msra.mxu0 0
  %2062 = vmatprep.subr.bf16.mxu0 0
  %2063 = vmatpush1.bf16.msra.mxu0 0
  %2064 = vmatprep.subr.bf16.mxu0 0
  %2065 = vmatpush1.bf16.msra.mxu0 0
  %2066 = vmatprep.subr.bf16.mxu0 %v2026
  %2067 = vmatpush1.bf16.msra.mxu0 %v2023
  %2068 = vmatprep.subr.bf16.mxu0 0
  %2069 = vmatpush2.bf16.msra.mxu0 0
  %2070 = vmatprep.subr.bf16.mxu0 0
  %2071 = vmatpush2.bf16.msra.mxu0 0
  %2072 = vmatprep.subr.bf16.mxu0 0
  %2073 = vmatpush2.bf16.msra.mxu0 0
  %2074 = vmatprep.subr.bf16.mxu0 0
  %2075 = vmatpush2.bf16.msra.mxu0 0
  %2076 = vmatprep.subr.bf16.mxu0 0
  %2077 = vmatpush2.bf16.msra.mxu0 0
  %2078 = vmatprep.subr.bf16.mxu0 0
  %2079 = vmatpush2.bf16.msra.mxu0 0
  %2080 = vmatprep.subr.bf16.mxu0 0
  %2081 = vmatpush2.bf16.msra.mxu0 0
  %2082 = vmatprep.subr.bf16.mxu0 0
  %2083 = vmatpush2.bf16.msra.mxu0 0
  %2084 = vmatprep.mubr.bf16.mxu0 0
  %2085 = vmatmul.mubr.bf16.gmra.mxu0 %v2020
  %v2086 = vpop.f32.mrf.mxu0
  %v2087 = vadd.f32 0.0, %v2086
  %v2088 = vpop.f32.mrf.mxu0
  %v2089 = vadd.f32 0.0, %v2088
  %v2090 = vpop.f32.mrf.mxu0
  %v2091 = vpop.f32.mrf.mxu0
  %2092 = vdwg.mxu0
  %2093 = vmatprep.subr.bf16.mxu0 0
  %2094 = vmatpush1.bf16.msra.mxu0 0
  %2095 = vmatprep.subr.bf16.mxu0 0
  %2096 = vmatpush1.bf16.msra.mxu0 0
  %2097 = vmatprep.subr.bf16.mxu0 0
  %2098 = vmatpush1.bf16.msra.mxu0 0
  %2099 = vmatprep.subr.bf16.mxu0 0
  %2100 = vmatpush1.bf16.msra.mxu0 0
  %2101 = vmatprep.subr.bf16.mxu0 0
  %2102 = vmatpush1.bf16.msra.mxu0 0
  %2103 = vmatprep.subr.bf16.mxu0 0
  %2104 = vmatpush1.bf16.msra.mxu0 0
  %2105 = vmatprep.subr.bf16.mxu0 0
  %2106 = vmatpush1.bf16.msra.mxu0 0
  %2107 = vmatprep.subr.bf16.mxu0 %v2032
  %2108 = vmatpush1.bf16.msra.mxu0 %v2029
  %2109 = vmatprep.subr.bf16.mxu0 0
  %2110 = vmatpush2.bf16.msra.mxu0 0
  %2111 = vmatprep.subr.bf16.mxu0 0
  %2112 = vmatpush2.bf16.msra.mxu0 0
  %2113 = vmatprep.subr.bf16.mxu0 0
  %2114 = vmatpush2.bf16.msra.mxu0 0
  %2115 = vmatprep.subr.bf16.mxu0 0
  %2116 = vmatpush2.bf16.msra.mxu0 0
  %2117 = vmatprep.subr.bf16.mxu0 0
  %2118 = vmatpush2.bf16.msra.mxu0 0
  %2119 = vmatprep.subr.bf16.mxu0 0
  %2120 = vmatpush2.bf16.msra.mxu0 0
  %2121 = vmatprep.subr.bf16.mxu0 0
  %2122 = vmatpush2.bf16.msra.mxu0 0
  %2123 = vmatprep.subr.bf16.mxu0 0
  %2124 = vmatpush2.bf16.msra.mxu0 0
  %2125 = vmatprep.mubr.bf16.mxu0 0
  %2126 = vmatmul.mubr.bf16.gmra.mxu0 %v2020
  %v2127 = vpop.f32.mrf.mxu0
  %v2128 = vadd.f32 0.0, %v2127
  %v2129 = vpop.f32.mrf.mxu0
  %v2130 = vadd.f32 0.0, %v2129
  %v2131 = vpop.f32.mrf.mxu0
  %v2132 = vpop.f32.mrf.mxu0
  %2133 = vdwg.mxu0
  %2134 = vmatprep.subr.bf16.mxu0 0
  %2135 = vmatpush1.bf16.msra.mxu0 0
  %2136 = vmatprep.subr.bf16.mxu0 0
  %2137 = vmatpush1.bf16.msra.mxu0 0
  %2138 = vmatprep.subr.bf16.mxu0 0
  %2139 = vmatpush1.bf16.msra.mxu0 0
  %2140 = vmatprep.subr.bf16.mxu0 0
  %2141 = vmatpush1.bf16.msra.mxu0 0
  %2142 = vmatprep.subr.bf16.mxu0 0
  %2143 = vmatpush1.bf16.msra.mxu0 0
  %2144 = vmatprep.subr.bf16.mxu0 0
  %2145 = vmatpush1.bf16.msra.mxu0 0
  %2146 = vmatprep.subr.bf16.mxu0 0
  %2147 = vmatpush1.bf16.msra.mxu0 0
  %2148 = vmatprep.subr.bf16.mxu0 %v2038
  %2149 = vmatpush1.bf16.msra.mxu0 %v2035
  %2150 = vmatprep.subr.bf16.mxu0 0
  %2151 = vmatpush2.bf16.msra.mxu0 0
  %2152 = vmatprep.subr.bf16.mxu0 0
  %2153 = vmatpush2.bf16.msra.mxu0 0
  %2154 = vmatprep.subr.bf16.mxu0 0
  %2155 = vmatpush2.bf16.msra.mxu0 0
  %2156 = vmatprep.subr.bf16.mxu0 0
  %2157 = vmatpush2.bf16.msra.mxu0 0
  %2158 = vmatprep.subr.bf16.mxu0 0
  %2159 = vmatpush2.bf16.msra.mxu0 0
  %2160 = vmatprep.subr.bf16.mxu0 0
  %2161 = vmatpush2.bf16.msra.mxu0 0
  %2162 = vmatprep.subr.bf16.mxu0 0
  %2163 = vmatpush2.bf16.msra.mxu0 0
  %2164 = vmatprep.subr.bf16.mxu0 0
  %2165 = vmatpush2.bf16.msra.mxu0 0
  %2166 = vmatprep.mubr.bf16.mxu0 0
  %2167 = vmatmul.mubr.bf16.gmra.mxu0 %v2020
  %v2168 = vpop.f32.mrf.mxu0
  %v2169 = vadd.f32 0.0, %v2168
  %v2170 = vpop.f32.mrf.mxu0
  %v2171 = vadd.f32 0.0, %v2170
  %v2172 = vpop.f32.mrf.mxu0
  %v2173 = vpop.f32.mrf.mxu0
  %2174 = vdwg.mxu0
  %2175 = vmatprep.subr.bf16.mxu0 0
  %2176 = vmatpush1.bf16.msra.mxu0 0
  %2177 = vmatprep.subr.bf16.mxu0 0
  %2178 = vmatpush1.bf16.msra.mxu0 0
  %2179 = vmatprep.subr.bf16.mxu0 0
  %2180 = vmatpush1.bf16.msra.mxu0 0
  %2181 = vmatprep.subr.bf16.mxu0 0
  %2182 = vmatpush1.bf16.msra.mxu0 0
  %2183 = vmatprep.subr.bf16.mxu0 0
  %2184 = vmatpush1.bf16.msra.mxu0 0
  %2185 = vmatprep.subr.bf16.mxu0 0
  %2186 = vmatpush1.bf16.msra.mxu0 0
  %2187 = vmatprep.subr.bf16.mxu0 0
  %2188 = vmatpush1.bf16.msra.mxu0 0
  %2189 = vmatprep.subr.bf16.mxu0 %v2044
  %2190 = vmatpush1.bf16.msra.mxu0 %v2041
  %2191 = vmatprep.subr.bf16.mxu0 0
  %2192 = vmatpush2.bf16.msra.mxu0 0
  %2193 = vmatprep.subr.bf16.mxu0 0
  %2194 = vmatpush2.bf16.msra.mxu0 0
  %2195 = vmatprep.subr.bf16.mxu0 0
  %2196 = vmatpush2.bf16.msra.mxu0 0
  %2197 = vmatprep.subr.bf16.mxu0 0
  %2198 = vmatpush2.bf16.msra.mxu0 0
  %2199 = vmatprep.subr.bf16.mxu0 0
  %2200 = vmatpush2.bf16.msra.mxu0 0
  %2201 = vmatprep.subr.bf16.mxu0 0
  %2202 = vmatpush2.bf16.msra.mxu0 0
  %2203 = vmatprep.subr.bf16.mxu0 0
  %2204 = vmatpush2.bf16.msra.mxu0 0
  %2205 = vmatprep.subr.bf16.mxu0 0
  %2206 = vmatpush2.bf16.msra.mxu0 0
  %2207 = vmatprep.mubr.bf16.mxu0 0
  %2208 = vmatmul.mubr.bf16.gmra.mxu0 %v2020
  %v2209 = vpop.f32.mrf.mxu0
  %v2210 = vadd.f32 0.0, %v2209
  %v2211 = vpop.f32.mrf.mxu0
  %v2212 = vadd.f32 0.0, %v2211
  %v2213 = vpop.f32.mrf.mxu0
  %v2214 = vpop.f32.mrf.mxu0
  %2215 = vdwg.mxu0
  %2216 = vmatprep.subr.bf16.mxu0 0
  %2217 = vmatpush1.bf16.msra.mxu0 0
  %2218 = vmatprep.subr.bf16.mxu0 0
  %2219 = vmatpush1.bf16.msra.mxu0 0
  %2220 = vmatprep.subr.bf16.mxu0 0
  %2221 = vmatpush1.bf16.msra.mxu0 0
  %2222 = vmatprep.subr.bf16.mxu0 0
  %2223 = vmatpush1.bf16.msra.mxu0 0
  %2224 = vmatprep.subr.bf16.mxu0 0
  %2225 = vmatpush1.bf16.msra.mxu0 0
  %2226 = vmatprep.subr.bf16.mxu0 0
  %2227 = vmatpush1.bf16.msra.mxu0 0
  %2228 = vmatprep.subr.bf16.mxu0 0
  %2229 = vmatpush1.bf16.msra.mxu0 0
  %2230 = vmatprep.subr.bf16.mxu0 %v2050
  %2231 = vmatpush1.bf16.msra.mxu0 %v2047
  %2232 = vmatprep.subr.bf16.mxu0 0
  %2233 = vmatpush2.bf16.msra.mxu0 0
  %2234 = vmatprep.subr.bf16.mxu0 0
  %2235 = vmatpush2.bf16.msra.mxu0 0
  %2236 = vmatprep.subr.bf16.mxu0 0
  %2237 = vmatpush2.bf16.msra.mxu0 0
  %2238 = vmatprep.subr.bf16.mxu0 0
  %2239 = vmatpush2.bf16.msra.mxu0 0
  %2240 = vmatprep.subr.bf16.mxu0 0
  %2241 = vmatpush2.bf16.msra.mxu0 0
  %2242 = vmatprep.subr.bf16.mxu0 0
  %2243 = vmatpush2.bf16.msra.mxu0 0
  %2244 = vmatprep.subr.bf16.mxu0 0
  %2245 = vmatpush2.bf16.msra.mxu0 0
  %2246 = vmatprep.subr.bf16.mxu0 0
  %2247 = vmatpush2.bf16.msra.mxu0 0
  %2248 = vmatprep.mubr.bf16.mxu0 0
  %2249 = vmatmul.mubr.bf16.gmra.mxu0 %v2020
  %v2250 = vpop.f32.mrf.mxu0
  %v2251 = vadd.f32 0.0, %v2250
  %v2252 = vpop.f32.mrf.mxu0
  %v2253 = vadd.f32 0.0, %v2252
  %v2254 = vpop.f32.mrf.mxu0
  %v2255 = vpop.f32.mrf.mxu0
  %2256 = vdwg.mxu0
  %v2257 = vadd.f32 %v1974, %v2087
  %v2258 = vadd.f32 %v1975, %v2089
  %v2259 = vadd.f32 %v1976, %v2128
  %v2260 = vadd.f32 %v1977, %v2130
  %v2261 = vadd.f32 %v1978, %v2169
  %v2262 = vadd.f32 %v1979, %v2171
  %v2263 = vadd.f32 %v1980, %v2210
  %v2264 = vadd.f32 %v1981, %v2212
  %v2265 = vadd.f32 %v1982, %v2251
  %v2266 = vadd.f32 %v1983, %v2253
  %2267 = vrot.lane.b32.xlu0 %v27, 64
  %v2268 = vpop.permute.xlu0 %2267
  %2269 = vrot.lane.b32.xlu0 %v47, 106
  %v2270 = vpop.permute.xlu0 %2269
  %2271 = vrot.lane.b32.xlu0 %v48, 106
  %v2272 = vpop.permute.xlu0 %2271
  %2273 = vrot.lane.b32.xlu0 %v49, 106
  %v2274 = vpop.permute.xlu0 %2273
  %2275 = vrot.lane.b32.xlu0 %v50, 106
  %v2276 = vpop.permute.xlu0 %2275
  %2277 = vrot.lane.b32.xlu0 %v51, 106
  %v2278 = vpop.permute.xlu0 %2277
  %2279 = vrot.lane.b32.xlu0 %v52, 106
  %v2280 = vpop.permute.xlu0 %2279
  %2281 = vrot.lane.b32.xlu0 %v53, 106
  %v2282 = vpop.permute.xlu0 %2281
  %2283 = vrot.lane.b32.xlu0 %v54, 106
  %v2284 = vpop.permute.xlu0 %2283
  %2285 = vrot.lane.b32.xlu0 %v55, 106
  %v2286 = vpop.permute.xlu0 %2285
  %2287 = vrot.lane.b32.xlu0 %v56, 106
  %v2288 = vpop.permute.xlu0 %2287
  %2289 = vrot.lane.b32.xlu0 %v57, 106
  %v2290 = vpop.permute.xlu0 %2289
  %vm2291 = vcmask 867328
  %v2292 = vsel %vm2291, %v2270, %v2272
  %v2293 = vsel %vm2291, %v2272, %v2274
  %v2294 = vsel %vm2291, %v2274, %v2276
  %v2295 = vsel %vm2291, %v2276, %v2278
  %v2296 = vsel %vm2291, %v2278, %v2280
  %v2297 = vsel %vm2291, %v2280, %v2282
  %v2298 = vsel %vm2291, %v2282, %v2284
  %v2299 = vsel %vm2291, %v2284, %v2286
  %v2300 = vsel %vm2291, %v2286, %v2288
  %v2301 = vsel %vm2291, %v2288, %v2290
  %v2303 = vsel %vm91, %v2268, 0
  %v2306 = vsel %vm95, %v2292, 0
  %v2309 = vsel %vm95, %v2293, 0
  %v2312 = vsel %vm95, %v2294, 0
  %v2315 = vsel %vm95, %v2295, 0
  %v2318 = vsel %vm95, %v2296, 0
  %v2321 = vsel %vm95, %v2297, 0
  %v2324 = vsel %vm95, %v2298, 0
  %v2327 = vsel %vm95, %v2299, 0
  %v2330 = vsel %vm95, %v2300, 0
  %v2333 = vsel %vm95, %v2301, 0
  %2335 = vmatprep.subr.bf16.mxu0 0
  %2336 = vmatpush1.bf16.msra.mxu0 0
  %2337 = vmatprep.subr.bf16.mxu0 0
  %2338 = vmatpush1.bf16.msra.mxu0 0
  %2339 = vmatprep.subr.bf16.mxu0 0
  %2340 = vmatpush1.bf16.msra.mxu0 0
  %2341 = vmatprep.subr.bf16.mxu0 0
  %2342 = vmatpush1.bf16.msra.mxu0 0
  %2343 = vmatprep.subr.bf16.mxu0 0
  %2344 = vmatpush1.bf16.msra.mxu0 0
  %2345 = vmatprep.subr.bf16.mxu0 0
  %2346 = vmatpush1.bf16.msra.mxu0 0
  %2347 = vmatprep.subr.bf16.mxu0 0
  %2348 = vmatpush1.bf16.msra.mxu0 0
  %2349 = vmatprep.subr.bf16.mxu0 %v2309
  %2350 = vmatpush1.bf16.msra.mxu0 %v2306
  %2351 = vmatprep.subr.bf16.mxu0 0
  %2352 = vmatpush2.bf16.msra.mxu0 0
  %2353 = vmatprep.subr.bf16.mxu0 0
  %2354 = vmatpush2.bf16.msra.mxu0 0
  %2355 = vmatprep.subr.bf16.mxu0 0
  %2356 = vmatpush2.bf16.msra.mxu0 0
  %2357 = vmatprep.subr.bf16.mxu0 0
  %2358 = vmatpush2.bf16.msra.mxu0 0
  %2359 = vmatprep.subr.bf16.mxu0 0
  %2360 = vmatpush2.bf16.msra.mxu0 0
  %2361 = vmatprep.subr.bf16.mxu0 0
  %2362 = vmatpush2.bf16.msra.mxu0 0
  %2363 = vmatprep.subr.bf16.mxu0 0
  %2364 = vmatpush2.bf16.msra.mxu0 0
  %2365 = vmatprep.subr.bf16.mxu0 0
  %2366 = vmatpush2.bf16.msra.mxu0 0
  %2367 = vmatprep.mubr.bf16.mxu0 0
  %2368 = vmatmul.mubr.bf16.gmra.mxu0 %v2303
  %v2369 = vpop.f32.mrf.mxu0
  %v2370 = vadd.f32 0.0, %v2369
  %v2371 = vpop.f32.mrf.mxu0
  %v2372 = vadd.f32 0.0, %v2371
  %v2373 = vpop.f32.mrf.mxu0
  %v2374 = vpop.f32.mrf.mxu0
  %2375 = vdwg.mxu0
  %2376 = vmatprep.subr.bf16.mxu0 0
  %2377 = vmatpush1.bf16.msra.mxu0 0
  %2378 = vmatprep.subr.bf16.mxu0 0
  %2379 = vmatpush1.bf16.msra.mxu0 0
  %2380 = vmatprep.subr.bf16.mxu0 0
  %2381 = vmatpush1.bf16.msra.mxu0 0
  %2382 = vmatprep.subr.bf16.mxu0 0
  %2383 = vmatpush1.bf16.msra.mxu0 0
  %2384 = vmatprep.subr.bf16.mxu0 0
  %2385 = vmatpush1.bf16.msra.mxu0 0
  %2386 = vmatprep.subr.bf16.mxu0 0
  %2387 = vmatpush1.bf16.msra.mxu0 0
  %2388 = vmatprep.subr.bf16.mxu0 0
  %2389 = vmatpush1.bf16.msra.mxu0 0
  %2390 = vmatprep.subr.bf16.mxu0 %v2315
  %2391 = vmatpush1.bf16.msra.mxu0 %v2312
  %2392 = vmatprep.subr.bf16.mxu0 0
  %2393 = vmatpush2.bf16.msra.mxu0 0
  %2394 = vmatprep.subr.bf16.mxu0 0
  %2395 = vmatpush2.bf16.msra.mxu0 0
  %2396 = vmatprep.subr.bf16.mxu0 0
  %2397 = vmatpush2.bf16.msra.mxu0 0
  %2398 = vmatprep.subr.bf16.mxu0 0
  %2399 = vmatpush2.bf16.msra.mxu0 0
  %2400 = vmatprep.subr.bf16.mxu0 0
  %2401 = vmatpush2.bf16.msra.mxu0 0
  %2402 = vmatprep.subr.bf16.mxu0 0
  %2403 = vmatpush2.bf16.msra.mxu0 0
  %2404 = vmatprep.subr.bf16.mxu0 0
  %2405 = vmatpush2.bf16.msra.mxu0 0
  %2406 = vmatprep.subr.bf16.mxu0 0
  %2407 = vmatpush2.bf16.msra.mxu0 0
  %2408 = vmatprep.mubr.bf16.mxu0 0
  %2409 = vmatmul.mubr.bf16.gmra.mxu0 %v2303
  %v2410 = vpop.f32.mrf.mxu0
  %v2411 = vadd.f32 0.0, %v2410
  %v2412 = vpop.f32.mrf.mxu0
  %v2413 = vadd.f32 0.0, %v2412
  %v2414 = vpop.f32.mrf.mxu0
  %v2415 = vpop.f32.mrf.mxu0
  %2416 = vdwg.mxu0
  %2417 = vmatprep.subr.bf16.mxu0 0
  %2418 = vmatpush1.bf16.msra.mxu0 0
  %2419 = vmatprep.subr.bf16.mxu0 0
  %2420 = vmatpush1.bf16.msra.mxu0 0
  %2421 = vmatprep.subr.bf16.mxu0 0
  %2422 = vmatpush1.bf16.msra.mxu0 0
  %2423 = vmatprep.subr.bf16.mxu0 0
  %2424 = vmatpush1.bf16.msra.mxu0 0
  %2425 = vmatprep.subr.bf16.mxu0 0
  %2426 = vmatpush1.bf16.msra.mxu0 0
  %2427 = vmatprep.subr.bf16.mxu0 0
  %2428 = vmatpush1.bf16.msra.mxu0 0
  %2429 = vmatprep.subr.bf16.mxu0 0
  %2430 = vmatpush1.bf16.msra.mxu0 0
  %2431 = vmatprep.subr.bf16.mxu0 %v2321
  %2432 = vmatpush1.bf16.msra.mxu0 %v2318
  %2433 = vmatprep.subr.bf16.mxu0 0
  %2434 = vmatpush2.bf16.msra.mxu0 0
  %2435 = vmatprep.subr.bf16.mxu0 0
  %2436 = vmatpush2.bf16.msra.mxu0 0
  %2437 = vmatprep.subr.bf16.mxu0 0
  %2438 = vmatpush2.bf16.msra.mxu0 0
  %2439 = vmatprep.subr.bf16.mxu0 0
  %2440 = vmatpush2.bf16.msra.mxu0 0
  %2441 = vmatprep.subr.bf16.mxu0 0
  %2442 = vmatpush2.bf16.msra.mxu0 0
  %2443 = vmatprep.subr.bf16.mxu0 0
  %2444 = vmatpush2.bf16.msra.mxu0 0
  %2445 = vmatprep.subr.bf16.mxu0 0
  %2446 = vmatpush2.bf16.msra.mxu0 0
  %2447 = vmatprep.subr.bf16.mxu0 0
  %2448 = vmatpush2.bf16.msra.mxu0 0
  %2449 = vmatprep.mubr.bf16.mxu0 0
  %2450 = vmatmul.mubr.bf16.gmra.mxu0 %v2303
  %v2451 = vpop.f32.mrf.mxu0
  %v2452 = vadd.f32 0.0, %v2451
  %v2453 = vpop.f32.mrf.mxu0
  %v2454 = vadd.f32 0.0, %v2453
  %v2455 = vpop.f32.mrf.mxu0
  %v2456 = vpop.f32.mrf.mxu0
  %2457 = vdwg.mxu0
  %2458 = vmatprep.subr.bf16.mxu0 0
  %2459 = vmatpush1.bf16.msra.mxu0 0
  %2460 = vmatprep.subr.bf16.mxu0 0
  %2461 = vmatpush1.bf16.msra.mxu0 0
  %2462 = vmatprep.subr.bf16.mxu0 0
  %2463 = vmatpush1.bf16.msra.mxu0 0
  %2464 = vmatprep.subr.bf16.mxu0 0
  %2465 = vmatpush1.bf16.msra.mxu0 0
  %2466 = vmatprep.subr.bf16.mxu0 0
  %2467 = vmatpush1.bf16.msra.mxu0 0
  %2468 = vmatprep.subr.bf16.mxu0 0
  %2469 = vmatpush1.bf16.msra.mxu0 0
  %2470 = vmatprep.subr.bf16.mxu0 0
  %2471 = vmatpush1.bf16.msra.mxu0 0
  %2472 = vmatprep.subr.bf16.mxu0 %v2327
  %2473 = vmatpush1.bf16.msra.mxu0 %v2324
  %2474 = vmatprep.subr.bf16.mxu0 0
  %2475 = vmatpush2.bf16.msra.mxu0 0
  %2476 = vmatprep.subr.bf16.mxu0 0
  %2477 = vmatpush2.bf16.msra.mxu0 0
  %2478 = vmatprep.subr.bf16.mxu0 0
  %2479 = vmatpush2.bf16.msra.mxu0 0
  %2480 = vmatprep.subr.bf16.mxu0 0
  %2481 = vmatpush2.bf16.msra.mxu0 0
  %2482 = vmatprep.subr.bf16.mxu0 0
  %2483 = vmatpush2.bf16.msra.mxu0 0
  %2484 = vmatprep.subr.bf16.mxu0 0
  %2485 = vmatpush2.bf16.msra.mxu0 0
  %2486 = vmatprep.subr.bf16.mxu0 0
  %2487 = vmatpush2.bf16.msra.mxu0 0
  %2488 = vmatprep.subr.bf16.mxu0 0
  %2489 = vmatpush2.bf16.msra.mxu0 0
  %2490 = vmatprep.mubr.bf16.mxu0 0
  %2491 = vmatmul.mubr.bf16.gmra.mxu0 %v2303
  %v2492 = vpop.f32.mrf.mxu0
  %v2493 = vadd.f32 0.0, %v2492
  %v2494 = vpop.f32.mrf.mxu0
  %v2495 = vadd.f32 0.0, %v2494
  %v2496 = vpop.f32.mrf.mxu0
  %v2497 = vpop.f32.mrf.mxu0
  %2498 = vdwg.mxu0
  %2499 = vmatprep.subr.bf16.mxu0 0
  %2500 = vmatpush1.bf16.msra.mxu0 0
  %2501 = vmatprep.subr.bf16.mxu0 0
  %2502 = vmatpush1.bf16.msra.mxu0 0
  %2503 = vmatprep.subr.bf16.mxu0 0
  %2504 = vmatpush1.bf16.msra.mxu0 0
  %2505 = vmatprep.subr.bf16.mxu0 0
  %2506 = vmatpush1.bf16.msra.mxu0 0
  %2507 = vmatprep.subr.bf16.mxu0 0
  %2508 = vmatpush1.bf16.msra.mxu0 0
  %2509 = vmatprep.subr.bf16.mxu0 0
  %2510 = vmatpush1.bf16.msra.mxu0 0
  %2511 = vmatprep.subr.bf16.mxu0 0
  %2512 = vmatpush1.bf16.msra.mxu0 0
  %2513 = vmatprep.subr.bf16.mxu0 %v2333
  %2514 = vmatpush1.bf16.msra.mxu0 %v2330
  %2515 = vmatprep.subr.bf16.mxu0 0
  %2516 = vmatpush2.bf16.msra.mxu0 0
  %2517 = vmatprep.subr.bf16.mxu0 0
  %2518 = vmatpush2.bf16.msra.mxu0 0
  %2519 = vmatprep.subr.bf16.mxu0 0
  %2520 = vmatpush2.bf16.msra.mxu0 0
  %2521 = vmatprep.subr.bf16.mxu0 0
  %2522 = vmatpush2.bf16.msra.mxu0 0
  %2523 = vmatprep.subr.bf16.mxu0 0
  %2524 = vmatpush2.bf16.msra.mxu0 0
  %2525 = vmatprep.subr.bf16.mxu0 0
  %2526 = vmatpush2.bf16.msra.mxu0 0
  %2527 = vmatprep.subr.bf16.mxu0 0
  %2528 = vmatpush2.bf16.msra.mxu0 0
  %2529 = vmatprep.subr.bf16.mxu0 0
  %2530 = vmatpush2.bf16.msra.mxu0 0
  %2531 = vmatprep.mubr.bf16.mxu0 0
  %2532 = vmatmul.mubr.bf16.gmra.mxu0 %v2303
  %v2533 = vpop.f32.mrf.mxu0
  %v2534 = vadd.f32 0.0, %v2533
  %v2535 = vpop.f32.mrf.mxu0
  %v2536 = vadd.f32 0.0, %v2535
  %v2537 = vpop.f32.mrf.mxu0
  %v2538 = vpop.f32.mrf.mxu0
  %2539 = vdwg.mxu0
  %v2540 = vadd.f32 %v2257, %v2370
  %v2541 = vadd.f32 %v2258, %v2372
  %v2542 = vadd.f32 %v2259, %v2411
  %v2543 = vadd.f32 %v2260, %v2413
  %v2544 = vadd.f32 %v2261, %v2452
  %v2545 = vadd.f32 %v2262, %v2454
  %v2546 = vadd.f32 %v2263, %v2493
  %v2547 = vadd.f32 %v2264, %v2495
  %v2548 = vadd.f32 %v2265, %v2534
  %v2549 = vadd.f32 %v2266, %v2536
  %2550 = vrot.lane.b32.xlu0 %v27, 56
  %v2551 = vpop.permute.xlu0 %2550
  %2552 = vrot.lane.b32.xlu0 %v47, 28
  %v2553 = vpop.permute.xlu0 %2552
  %2554 = vrot.lane.b32.xlu0 %v48, 28
  %v2555 = vpop.permute.xlu0 %2554
  %2556 = vrot.lane.b32.xlu0 %v49, 28
  %v2557 = vpop.permute.xlu0 %2556
  %2558 = vrot.lane.b32.xlu0 %v50, 28
  %v2559 = vpop.permute.xlu0 %2558
  %2560 = vrot.lane.b32.xlu0 %v51, 28
  %v2561 = vpop.permute.xlu0 %2560
  %2562 = vrot.lane.b32.xlu0 %v52, 28
  %v2563 = vpop.permute.xlu0 %2562
  %2564 = vrot.lane.b32.xlu0 %v53, 28
  %v2565 = vpop.permute.xlu0 %2564
  %2566 = vrot.lane.b32.xlu0 %v54, 28
  %v2567 = vpop.permute.xlu0 %2566
  %2568 = vrot.lane.b32.xlu0 %v55, 28
  %v2569 = vpop.permute.xlu0 %2568
  %2570 = vrot.lane.b32.xlu0 %v56, 28
  %v2571 = vpop.permute.xlu0 %2570
  %2572 = vrot.lane.b32.xlu0 %v57, 28
  %v2573 = vpop.permute.xlu0 %2572
  %vm2574 = vcmask 228352
  %v2575 = vsel %vm2574, %v2553, %v2555
  %v2576 = vsel %vm2574, %v2555, %v2557
  %v2577 = vsel %vm2574, %v2557, %v2559
  %v2578 = vsel %vm2574, %v2559, %v2561
  %v2579 = vsel %vm2574, %v2561, %v2563
  %v2580 = vsel %vm2574, %v2563, %v2565
  %v2581 = vsel %vm2574, %v2565, %v2567
  %v2582 = vsel %vm2574, %v2567, %v2569
  %v2583 = vsel %vm2574, %v2569, %v2571
  %v2584 = vsel %vm2574, %v2571, %v2573
  %v2586 = vsel %vm91, %v2551, 0
  %v2589 = vsel %vm95, %v2575, 0
  %v2592 = vsel %vm95, %v2576, 0
  %v2595 = vsel %vm95, %v2577, 0
  %v2598 = vsel %vm95, %v2578, 0
  %v2601 = vsel %vm95, %v2579, 0
  %v2604 = vsel %vm95, %v2580, 0
  %v2607 = vsel %vm95, %v2581, 0
  %v2610 = vsel %vm95, %v2582, 0
  %v2613 = vsel %vm95, %v2583, 0
  %v2616 = vsel %vm95, %v2584, 0
  %2618 = vmatprep.subr.bf16.mxu0 0
  %2619 = vmatpush1.bf16.msra.mxu0 0
  %2620 = vmatprep.subr.bf16.mxu0 0
  %2621 = vmatpush1.bf16.msra.mxu0 0
  %2622 = vmatprep.subr.bf16.mxu0 0
  %2623 = vmatpush1.bf16.msra.mxu0 0
  %2624 = vmatprep.subr.bf16.mxu0 0
  %2625 = vmatpush1.bf16.msra.mxu0 0
  %2626 = vmatprep.subr.bf16.mxu0 0
  %2627 = vmatpush1.bf16.msra.mxu0 0
  %2628 = vmatprep.subr.bf16.mxu0 0
  %2629 = vmatpush1.bf16.msra.mxu0 0
  %2630 = vmatprep.subr.bf16.mxu0 0
  %2631 = vmatpush1.bf16.msra.mxu0 0
  %2632 = vmatprep.subr.bf16.mxu0 %v2592
  %2633 = vmatpush1.bf16.msra.mxu0 %v2589
  %2634 = vmatprep.subr.bf16.mxu0 0
  %2635 = vmatpush2.bf16.msra.mxu0 0
  %2636 = vmatprep.subr.bf16.mxu0 0
  %2637 = vmatpush2.bf16.msra.mxu0 0
  %2638 = vmatprep.subr.bf16.mxu0 0
  %2639 = vmatpush2.bf16.msra.mxu0 0
  %2640 = vmatprep.subr.bf16.mxu0 0
  %2641 = vmatpush2.bf16.msra.mxu0 0
  %2642 = vmatprep.subr.bf16.mxu0 0
  %2643 = vmatpush2.bf16.msra.mxu0 0
  %2644 = vmatprep.subr.bf16.mxu0 0
  %2645 = vmatpush2.bf16.msra.mxu0 0
  %2646 = vmatprep.subr.bf16.mxu0 0
  %2647 = vmatpush2.bf16.msra.mxu0 0
  %2648 = vmatprep.subr.bf16.mxu0 0
  %2649 = vmatpush2.bf16.msra.mxu0 0
  %2650 = vmatprep.mubr.bf16.mxu0 0
  %2651 = vmatmul.mubr.bf16.gmra.mxu0 %v2586
  %v2652 = vpop.f32.mrf.mxu0
  %v2653 = vadd.f32 0.0, %v2652
  %v2654 = vpop.f32.mrf.mxu0
  %v2655 = vadd.f32 0.0, %v2654
  %v2656 = vpop.f32.mrf.mxu0
  %v2657 = vpop.f32.mrf.mxu0
  %2658 = vdwg.mxu0
  %2659 = vmatprep.subr.bf16.mxu0 0
  %2660 = vmatpush1.bf16.msra.mxu0 0
  %2661 = vmatprep.subr.bf16.mxu0 0
  %2662 = vmatpush1.bf16.msra.mxu0 0
  %2663 = vmatprep.subr.bf16.mxu0 0
  %2664 = vmatpush1.bf16.msra.mxu0 0
  %2665 = vmatprep.subr.bf16.mxu0 0
  %2666 = vmatpush1.bf16.msra.mxu0 0
  %2667 = vmatprep.subr.bf16.mxu0 0
  %2668 = vmatpush1.bf16.msra.mxu0 0
  %2669 = vmatprep.subr.bf16.mxu0 0
  %2670 = vmatpush1.bf16.msra.mxu0 0
  %2671 = vmatprep.subr.bf16.mxu0 0
  %2672 = vmatpush1.bf16.msra.mxu0 0
  %2673 = vmatprep.subr.bf16.mxu0 %v2598
  %2674 = vmatpush1.bf16.msra.mxu0 %v2595
  %2675 = vmatprep.subr.bf16.mxu0 0
  %2676 = vmatpush2.bf16.msra.mxu0 0
  %2677 = vmatprep.subr.bf16.mxu0 0
  %2678 = vmatpush2.bf16.msra.mxu0 0
  %2679 = vmatprep.subr.bf16.mxu0 0
  %2680 = vmatpush2.bf16.msra.mxu0 0
  %2681 = vmatprep.subr.bf16.mxu0 0
  %2682 = vmatpush2.bf16.msra.mxu0 0
  %2683 = vmatprep.subr.bf16.mxu0 0
  %2684 = vmatpush2.bf16.msra.mxu0 0
  %2685 = vmatprep.subr.bf16.mxu0 0
  %2686 = vmatpush2.bf16.msra.mxu0 0
  %2687 = vmatprep.subr.bf16.mxu0 0
  %2688 = vmatpush2.bf16.msra.mxu0 0
  %2689 = vmatprep.subr.bf16.mxu0 0
  %2690 = vmatpush2.bf16.msra.mxu0 0
  %2691 = vmatprep.mubr.bf16.mxu0 0
  %2692 = vmatmul.mubr.bf16.gmra.mxu0 %v2586
  %v2693 = vpop.f32.mrf.mxu0
  %v2694 = vadd.f32 0.0, %v2693
  %v2695 = vpop.f32.mrf.mxu0
  %v2696 = vadd.f32 0.0, %v2695
  %v2697 = vpop.f32.mrf.mxu0
  %v2698 = vpop.f32.mrf.mxu0
  %2699 = vdwg.mxu0
  %2700 = vmatprep.subr.bf16.mxu0 0
  %2701 = vmatpush1.bf16.msra.mxu0 0
  %2702 = vmatprep.subr.bf16.mxu0 0
  %2703 = vmatpush1.bf16.msra.mxu0 0
  %2704 = vmatprep.subr.bf16.mxu0 0
  %2705 = vmatpush1.bf16.msra.mxu0 0
  %2706 = vmatprep.subr.bf16.mxu0 0
  %2707 = vmatpush1.bf16.msra.mxu0 0
  %2708 = vmatprep.subr.bf16.mxu0 0
  %2709 = vmatpush1.bf16.msra.mxu0 0
  %2710 = vmatprep.subr.bf16.mxu0 0
  %2711 = vmatpush1.bf16.msra.mxu0 0
  %2712 = vmatprep.subr.bf16.mxu0 0
  %2713 = vmatpush1.bf16.msra.mxu0 0
  %2714 = vmatprep.subr.bf16.mxu0 %v2604
  %2715 = vmatpush1.bf16.msra.mxu0 %v2601
  %2716 = vmatprep.subr.bf16.mxu0 0
  %2717 = vmatpush2.bf16.msra.mxu0 0
  %2718 = vmatprep.subr.bf16.mxu0 0
  %2719 = vmatpush2.bf16.msra.mxu0 0
  %2720 = vmatprep.subr.bf16.mxu0 0
  %2721 = vmatpush2.bf16.msra.mxu0 0
  %2722 = vmatprep.subr.bf16.mxu0 0
  %2723 = vmatpush2.bf16.msra.mxu0 0
  %2724 = vmatprep.subr.bf16.mxu0 0
  %2725 = vmatpush2.bf16.msra.mxu0 0
  %2726 = vmatprep.subr.bf16.mxu0 0
  %2727 = vmatpush2.bf16.msra.mxu0 0
  %2728 = vmatprep.subr.bf16.mxu0 0
  %2729 = vmatpush2.bf16.msra.mxu0 0
  %2730 = vmatprep.subr.bf16.mxu0 0
  %2731 = vmatpush2.bf16.msra.mxu0 0
  %2732 = vmatprep.mubr.bf16.mxu0 0
  %2733 = vmatmul.mubr.bf16.gmra.mxu0 %v2586
  %v2734 = vpop.f32.mrf.mxu0
  %v2735 = vadd.f32 0.0, %v2734
  %v2736 = vpop.f32.mrf.mxu0
  %v2737 = vadd.f32 0.0, %v2736
  %v2738 = vpop.f32.mrf.mxu0
  %v2739 = vpop.f32.mrf.mxu0
  %2740 = vdwg.mxu0
  %2741 = vmatprep.subr.bf16.mxu0 0
  %2742 = vmatpush1.bf16.msra.mxu0 0
  %2743 = vmatprep.subr.bf16.mxu0 0
  %2744 = vmatpush1.bf16.msra.mxu0 0
  %2745 = vmatprep.subr.bf16.mxu0 0
  %2746 = vmatpush1.bf16.msra.mxu0 0
  %2747 = vmatprep.subr.bf16.mxu0 0
  %2748 = vmatpush1.bf16.msra.mxu0 0
  %2749 = vmatprep.subr.bf16.mxu0 0
  %2750 = vmatpush1.bf16.msra.mxu0 0
  %2751 = vmatprep.subr.bf16.mxu0 0
  %2752 = vmatpush1.bf16.msra.mxu0 0
  %2753 = vmatprep.subr.bf16.mxu0 0
  %2754 = vmatpush1.bf16.msra.mxu0 0
  %2755 = vmatprep.subr.bf16.mxu0 %v2610
  %2756 = vmatpush1.bf16.msra.mxu0 %v2607
  %2757 = vmatprep.subr.bf16.mxu0 0
  %2758 = vmatpush2.bf16.msra.mxu0 0
  %2759 = vmatprep.subr.bf16.mxu0 0
  %2760 = vmatpush2.bf16.msra.mxu0 0
  %2761 = vmatprep.subr.bf16.mxu0 0
  %2762 = vmatpush2.bf16.msra.mxu0 0
  %2763 = vmatprep.subr.bf16.mxu0 0
  %2764 = vmatpush2.bf16.msra.mxu0 0
  %2765 = vmatprep.subr.bf16.mxu0 0
  %2766 = vmatpush2.bf16.msra.mxu0 0
  %2767 = vmatprep.subr.bf16.mxu0 0
  %2768 = vmatpush2.bf16.msra.mxu0 0
  %2769 = vmatprep.subr.bf16.mxu0 0
  %2770 = vmatpush2.bf16.msra.mxu0 0
  %2771 = vmatprep.subr.bf16.mxu0 0
  %2772 = vmatpush2.bf16.msra.mxu0 0
  %2773 = vmatprep.mubr.bf16.mxu0 0
  %2774 = vmatmul.mubr.bf16.gmra.mxu0 %v2586
  %v2775 = vpop.f32.mrf.mxu0
  %v2776 = vadd.f32 0.0, %v2775
  %v2777 = vpop.f32.mrf.mxu0
  %v2778 = vadd.f32 0.0, %v2777
  %v2779 = vpop.f32.mrf.mxu0
  %v2780 = vpop.f32.mrf.mxu0
  %2781 = vdwg.mxu0
  %2782 = vmatprep.subr.bf16.mxu0 0
  %2783 = vmatpush1.bf16.msra.mxu0 0
  %2784 = vmatprep.subr.bf16.mxu0 0
  %2785 = vmatpush1.bf16.msra.mxu0 0
  %2786 = vmatprep.subr.bf16.mxu0 0
  %2787 = vmatpush1.bf16.msra.mxu0 0
  %2788 = vmatprep.subr.bf16.mxu0 0
  %2789 = vmatpush1.bf16.msra.mxu0 0
  %2790 = vmatprep.subr.bf16.mxu0 0
  %2791 = vmatpush1.bf16.msra.mxu0 0
  %2792 = vmatprep.subr.bf16.mxu0 0
  %2793 = vmatpush1.bf16.msra.mxu0 0
  %2794 = vmatprep.subr.bf16.mxu0 0
  %2795 = vmatpush1.bf16.msra.mxu0 0
  %2796 = vmatprep.subr.bf16.mxu0 %v2616
  %2797 = vmatpush1.bf16.msra.mxu0 %v2613
  %2798 = vmatprep.subr.bf16.mxu0 0
  %2799 = vmatpush2.bf16.msra.mxu0 0
  %2800 = vmatprep.subr.bf16.mxu0 0
  %2801 = vmatpush2.bf16.msra.mxu0 0
  %2802 = vmatprep.subr.bf16.mxu0 0
  %2803 = vmatpush2.bf16.msra.mxu0 0
  %2804 = vmatprep.subr.bf16.mxu0 0
  %2805 = vmatpush2.bf16.msra.mxu0 0
  %2806 = vmatprep.subr.bf16.mxu0 0
  %2807 = vmatpush2.bf16.msra.mxu0 0
  %2808 = vmatprep.subr.bf16.mxu0 0
  %2809 = vmatpush2.bf16.msra.mxu0 0
  %2810 = vmatprep.subr.bf16.mxu0 0
  %2811 = vmatpush2.bf16.msra.mxu0 0
  %2812 = vmatprep.subr.bf16.mxu0 0
  %2813 = vmatpush2.bf16.msra.mxu0 0
  %2814 = vmatprep.mubr.bf16.mxu0 0
  %2815 = vmatmul.mubr.bf16.gmra.mxu0 %v2586
  %v2816 = vpop.f32.mrf.mxu0
  %v2817 = vadd.f32 0.0, %v2816
  %v2818 = vpop.f32.mrf.mxu0
  %v2819 = vadd.f32 0.0, %v2818
  %v2820 = vpop.f32.mrf.mxu0
  %v2821 = vpop.f32.mrf.mxu0
  %2822 = vdwg.mxu0
  %v2823 = vadd.f32 %v2540, %v2653
  %v2824 = vadd.f32 %v2541, %v2655
  %v2825 = vadd.f32 %v2542, %v2694
  %v2826 = vadd.f32 %v2543, %v2696
  %v2827 = vadd.f32 %v2544, %v2735
  %v2828 = vadd.f32 %v2545, %v2737
  %v2829 = vadd.f32 %v2546, %v2776
  %v2830 = vadd.f32 %v2547, %v2778
  %v2831 = vadd.f32 %v2548, %v2817
  %v2832 = vadd.f32 %v2549, %v2819
  %2833 = vrot.lane.b32.xlu0 %v27, 48
  %v2834 = vpop.permute.xlu0 %2833
  %2835 = vrot.lane.b32.xlu0 %v47, 27
  %v2836 = vpop.permute.xlu0 %2835
  %2837 = vrot.lane.b32.xlu0 %v48, 27
  %v2838 = vpop.permute.xlu0 %2837
  %2839 = vrot.lane.b32.xlu0 %v49, 27
  %v2840 = vpop.permute.xlu0 %2839
  %2841 = vrot.lane.b32.xlu0 %v50, 27
  %v2842 = vpop.permute.xlu0 %2841
  %2843 = vrot.lane.b32.xlu0 %v51, 27
  %v2844 = vpop.permute.xlu0 %2843
  %2845 = vrot.lane.b32.xlu0 %v52, 27
  %v2846 = vpop.permute.xlu0 %2845
  %2847 = vrot.lane.b32.xlu0 %v53, 27
  %v2848 = vpop.permute.xlu0 %2847
  %2849 = vrot.lane.b32.xlu0 %v54, 27
  %v2850 = vpop.permute.xlu0 %2849
  %2851 = vrot.lane.b32.xlu0 %v55, 27
  %v2852 = vpop.permute.xlu0 %2851
  %2853 = vrot.lane.b32.xlu0 %v56, 27
  %v2854 = vpop.permute.xlu0 %2853
  %2855 = vrot.lane.b32.xlu0 %v57, 27
  %v2856 = vpop.permute.xlu0 %2855
  %vm2857 = vcmask 220160
  %v2858 = vsel %vm2857, %v2836, %v2838
  %v2859 = vsel %vm2857, %v2838, %v2840
  %v2860 = vsel %vm2857, %v2840, %v2842
  %v2861 = vsel %vm2857, %v2842, %v2844
  %v2862 = vsel %vm2857, %v2844, %v2846
  %v2863 = vsel %vm2857, %v2846, %v2848
  %v2864 = vsel %vm2857, %v2848, %v2850
  %v2865 = vsel %vm2857, %v2850, %v2852
  %v2866 = vsel %vm2857, %v2852, %v2854
  %v2867 = vsel %vm2857, %v2854, %v2856
  %v2869 = vsel %vm91, %v2834, 0
  %v2872 = vsel %vm95, %v2858, 0
  %v2875 = vsel %vm95, %v2859, 0
  %v2878 = vsel %vm95, %v2860, 0
  %v2881 = vsel %vm95, %v2861, 0
  %v2884 = vsel %vm95, %v2862, 0
  %v2887 = vsel %vm95, %v2863, 0
  %v2890 = vsel %vm95, %v2864, 0
  %v2893 = vsel %vm95, %v2865, 0
  %v2896 = vsel %vm95, %v2866, 0
  %v2899 = vsel %vm95, %v2867, 0
  %2901 = vmatprep.subr.bf16.mxu0 0
  %2902 = vmatpush1.bf16.msra.mxu0 0
  %2903 = vmatprep.subr.bf16.mxu0 0
  %2904 = vmatpush1.bf16.msra.mxu0 0
  %2905 = vmatprep.subr.bf16.mxu0 0
  %2906 = vmatpush1.bf16.msra.mxu0 0
  %2907 = vmatprep.subr.bf16.mxu0 0
  %2908 = vmatpush1.bf16.msra.mxu0 0
  %2909 = vmatprep.subr.bf16.mxu0 0
  %2910 = vmatpush1.bf16.msra.mxu0 0
  %2911 = vmatprep.subr.bf16.mxu0 0
  %2912 = vmatpush1.bf16.msra.mxu0 0
  %2913 = vmatprep.subr.bf16.mxu0 0
  %2914 = vmatpush1.bf16.msra.mxu0 0
  %2915 = vmatprep.subr.bf16.mxu0 %v2875
  %2916 = vmatpush1.bf16.msra.mxu0 %v2872
  %2917 = vmatprep.subr.bf16.mxu0 0
  %2918 = vmatpush2.bf16.msra.mxu0 0
  %2919 = vmatprep.subr.bf16.mxu0 0
  %2920 = vmatpush2.bf16.msra.mxu0 0
  %2921 = vmatprep.subr.bf16.mxu0 0
  %2922 = vmatpush2.bf16.msra.mxu0 0
  %2923 = vmatprep.subr.bf16.mxu0 0
  %2924 = vmatpush2.bf16.msra.mxu0 0
  %2925 = vmatprep.subr.bf16.mxu0 0
  %2926 = vmatpush2.bf16.msra.mxu0 0
  %2927 = vmatprep.subr.bf16.mxu0 0
  %2928 = vmatpush2.bf16.msra.mxu0 0
  %2929 = vmatprep.subr.bf16.mxu0 0
  %2930 = vmatpush2.bf16.msra.mxu0 0
  %2931 = vmatprep.subr.bf16.mxu0 0
  %2932 = vmatpush2.bf16.msra.mxu0 0
  %2933 = vmatprep.mubr.bf16.mxu0 0
  %2934 = vmatmul.mubr.bf16.gmra.mxu0 %v2869
  %v2935 = vpop.f32.mrf.mxu0
  %v2936 = vadd.f32 0.0, %v2935
  %v2937 = vpop.f32.mrf.mxu0
  %v2938 = vadd.f32 0.0, %v2937
  %v2939 = vpop.f32.mrf.mxu0
  %v2940 = vpop.f32.mrf.mxu0
  %2941 = vdwg.mxu0
  %2942 = vmatprep.subr.bf16.mxu0 0
  %2943 = vmatpush1.bf16.msra.mxu0 0
  %2944 = vmatprep.subr.bf16.mxu0 0
  %2945 = vmatpush1.bf16.msra.mxu0 0
  %2946 = vmatprep.subr.bf16.mxu0 0
  %2947 = vmatpush1.bf16.msra.mxu0 0
  %2948 = vmatprep.subr.bf16.mxu0 0
  %2949 = vmatpush1.bf16.msra.mxu0 0
  %2950 = vmatprep.subr.bf16.mxu0 0
  %2951 = vmatpush1.bf16.msra.mxu0 0
  %2952 = vmatprep.subr.bf16.mxu0 0
  %2953 = vmatpush1.bf16.msra.mxu0 0
  %2954 = vmatprep.subr.bf16.mxu0 0
  %2955 = vmatpush1.bf16.msra.mxu0 0
  %2956 = vmatprep.subr.bf16.mxu0 %v2881
  %2957 = vmatpush1.bf16.msra.mxu0 %v2878
  %2958 = vmatprep.subr.bf16.mxu0 0
  %2959 = vmatpush2.bf16.msra.mxu0 0
  %2960 = vmatprep.subr.bf16.mxu0 0
  %2961 = vmatpush2.bf16.msra.mxu0 0
  %2962 = vmatprep.subr.bf16.mxu0 0
  %2963 = vmatpush2.bf16.msra.mxu0 0
  %2964 = vmatprep.subr.bf16.mxu0 0
  %2965 = vmatpush2.bf16.msra.mxu0 0
  %2966 = vmatprep.subr.bf16.mxu0 0
  %2967 = vmatpush2.bf16.msra.mxu0 0
  %2968 = vmatprep.subr.bf16.mxu0 0
  %2969 = vmatpush2.bf16.msra.mxu0 0
  %2970 = vmatprep.subr.bf16.mxu0 0
  %2971 = vmatpush2.bf16.msra.mxu0 0
  %2972 = vmatprep.subr.bf16.mxu0 0
  %2973 = vmatpush2.bf16.msra.mxu0 0
  %2974 = vmatprep.mubr.bf16.mxu0 0
  %2975 = vmatmul.mubr.bf16.gmra.mxu0 %v2869
  %v2976 = vpop.f32.mrf.mxu0
  %v2977 = vadd.f32 0.0, %v2976
  %v2978 = vpop.f32.mrf.mxu0
  %v2979 = vadd.f32 0.0, %v2978
  %v2980 = vpop.f32.mrf.mxu0
  %v2981 = vpop.f32.mrf.mxu0
  %2982 = vdwg.mxu0
  %2983 = vmatprep.subr.bf16.mxu0 0
  %2984 = vmatpush1.bf16.msra.mxu0 0
  %2985 = vmatprep.subr.bf16.mxu0 0
  %2986 = vmatpush1.bf16.msra.mxu0 0
  %2987 = vmatprep.subr.bf16.mxu0 0
  %2988 = vmatpush1.bf16.msra.mxu0 0
  %2989 = vmatprep.subr.bf16.mxu0 0
  %2990 = vmatpush1.bf16.msra.mxu0 0
  %2991 = vmatprep.subr.bf16.mxu0 0
  %2992 = vmatpush1.bf16.msra.mxu0 0
  %2993 = vmatprep.subr.bf16.mxu0 0
  %2994 = vmatpush1.bf16.msra.mxu0 0
  %2995 = vmatprep.subr.bf16.mxu0 0
  %2996 = vmatpush1.bf16.msra.mxu0 0
  %2997 = vmatprep.subr.bf16.mxu0 %v2887
  %2998 = vmatpush1.bf16.msra.mxu0 %v2884
  %2999 = vmatprep.subr.bf16.mxu0 0
  %3000 = vmatpush2.bf16.msra.mxu0 0
  %3001 = vmatprep.subr.bf16.mxu0 0
  %3002 = vmatpush2.bf16.msra.mxu0 0
  %3003 = vmatprep.subr.bf16.mxu0 0
  %3004 = vmatpush2.bf16.msra.mxu0 0
  %3005 = vmatprep.subr.bf16.mxu0 0
  %3006 = vmatpush2.bf16.msra.mxu0 0
  %3007 = vmatprep.subr.bf16.mxu0 0
  %3008 = vmatpush2.bf16.msra.mxu0 0
  %3009 = vmatprep.subr.bf16.mxu0 0
  %3010 = vmatpush2.bf16.msra.mxu0 0
  %3011 = vmatprep.subr.bf16.mxu0 0
  %3012 = vmatpush2.bf16.msra.mxu0 0
  %3013 = vmatprep.subr.bf16.mxu0 0
  %3014 = vmatpush2.bf16.msra.mxu0 0
  %3015 = vmatprep.mubr.bf16.mxu0 0
  %3016 = vmatmul.mubr.bf16.gmra.mxu0 %v2869
  %v3017 = vpop.f32.mrf.mxu0
  %v3018 = vadd.f32 0.0, %v3017
  %v3019 = vpop.f32.mrf.mxu0
  %v3020 = vadd.f32 0.0, %v3019
  %v3021 = vpop.f32.mrf.mxu0
  %v3022 = vpop.f32.mrf.mxu0
  %3023 = vdwg.mxu0
  %3024 = vmatprep.subr.bf16.mxu0 0
  %3025 = vmatpush1.bf16.msra.mxu0 0
  %3026 = vmatprep.subr.bf16.mxu0 0
  %3027 = vmatpush1.bf16.msra.mxu0 0
  %3028 = vmatprep.subr.bf16.mxu0 0
  %3029 = vmatpush1.bf16.msra.mxu0 0
  %3030 = vmatprep.subr.bf16.mxu0 0
  %3031 = vmatpush1.bf16.msra.mxu0 0
  %3032 = vmatprep.subr.bf16.mxu0 0
  %3033 = vmatpush1.bf16.msra.mxu0 0
  %3034 = vmatprep.subr.bf16.mxu0 0
  %3035 = vmatpush1.bf16.msra.mxu0 0
  %3036 = vmatprep.subr.bf16.mxu0 0
  %3037 = vmatpush1.bf16.msra.mxu0 0
  %3038 = vmatprep.subr.bf16.mxu0 %v2893
  %3039 = vmatpush1.bf16.msra.mxu0 %v2890
  %3040 = vmatprep.subr.bf16.mxu0 0
  %3041 = vmatpush2.bf16.msra.mxu0 0
  %3042 = vmatprep.subr.bf16.mxu0 0
  %3043 = vmatpush2.bf16.msra.mxu0 0
  %3044 = vmatprep.subr.bf16.mxu0 0
  %3045 = vmatpush2.bf16.msra.mxu0 0
  %3046 = vmatprep.subr.bf16.mxu0 0
  %3047 = vmatpush2.bf16.msra.mxu0 0
  %3048 = vmatprep.subr.bf16.mxu0 0
  %3049 = vmatpush2.bf16.msra.mxu0 0
  %3050 = vmatprep.subr.bf16.mxu0 0
  %3051 = vmatpush2.bf16.msra.mxu0 0
  %3052 = vmatprep.subr.bf16.mxu0 0
  %3053 = vmatpush2.bf16.msra.mxu0 0
  %3054 = vmatprep.subr.bf16.mxu0 0
  %3055 = vmatpush2.bf16.msra.mxu0 0
  %3056 = vmatprep.mubr.bf16.mxu0 0
  %3057 = vmatmul.mubr.bf16.gmra.mxu0 %v2869
  %v3058 = vpop.f32.mrf.mxu0
  %v3059 = vadd.f32 0.0, %v3058
  %v3060 = vpop.f32.mrf.mxu0
  %v3061 = vadd.f32 0.0, %v3060
  %v3062 = vpop.f32.mrf.mxu0
  %v3063 = vpop.f32.mrf.mxu0
  %3064 = vdwg.mxu0
  %3065 = vmatprep.subr.bf16.mxu0 0
  %3066 = vmatpush1.bf16.msra.mxu0 0
  %3067 = vmatprep.subr.bf16.mxu0 0
  %3068 = vmatpush1.bf16.msra.mxu0 0
  %3069 = vmatprep.subr.bf16.mxu0 0
  %3070 = vmatpush1.bf16.msra.mxu0 0
  %3071 = vmatprep.subr.bf16.mxu0 0
  %3072 = vmatpush1.bf16.msra.mxu0 0
  %3073 = vmatprep.subr.bf16.mxu0 0
  %3074 = vmatpush1.bf16.msra.mxu0 0
  %3075 = vmatprep.subr.bf16.mxu0 0
  %3076 = vmatpush1.bf16.msra.mxu0 0
  %3077 = vmatprep.subr.bf16.mxu0 0
  %3078 = vmatpush1.bf16.msra.mxu0 0
  %3079 = vmatprep.subr.bf16.mxu0 %v2899
  %3080 = vmatpush1.bf16.msra.mxu0 %v2896
  %3081 = vmatprep.subr.bf16.mxu0 0
  %3082 = vmatpush2.bf16.msra.mxu0 0
  %3083 = vmatprep.subr.bf16.mxu0 0
  %3084 = vmatpush2.bf16.msra.mxu0 0
  %3085 = vmatprep.subr.bf16.mxu0 0
  %3086 = vmatpush2.bf16.msra.mxu0 0
  %3087 = vmatprep.subr.bf16.mxu0 0
  %3088 = vmatpush2.bf16.msra.mxu0 0
  %3089 = vmatprep.subr.bf16.mxu0 0
  %3090 = vmatpush2.bf16.msra.mxu0 0
  %3091 = vmatprep.subr.bf16.mxu0 0
  %3092 = vmatpush2.bf16.msra.mxu0 0
  %3093 = vmatprep.subr.bf16.mxu0 0
  %3094 = vmatpush2.bf16.msra.mxu0 0
  %3095 = vmatprep.subr.bf16.mxu0 0
  %3096 = vmatpush2.bf16.msra.mxu0 0
  %3097 = vmatprep.mubr.bf16.mxu0 0
  %3098 = vmatmul.mubr.bf16.gmra.mxu0 %v2869
  %v3099 = vpop.f32.mrf.mxu0
  %v3100 = vadd.f32 0.0, %v3099
  %v3101 = vpop.f32.mrf.mxu0
  %v3102 = vadd.f32 0.0, %v3101
  %v3103 = vpop.f32.mrf.mxu0
  %v3104 = vpop.f32.mrf.mxu0
  %3105 = vdwg.mxu0
  %v3106 = vadd.f32 %v2823, %v2936
  %v3107 = vadd.f32 %v2824, %v2938
  %v3108 = vadd.f32 %v2825, %v2977
  %v3109 = vadd.f32 %v2826, %v2979
  %v3110 = vadd.f32 %v2827, %v3018
  %v3111 = vadd.f32 %v2828, %v3020
  %v3112 = vadd.f32 %v2829, %v3059
  %v3113 = vadd.f32 %v2830, %v3061
  %v3114 = vadd.f32 %v2831, %v3100
  %v3115 = vadd.f32 %v2832, %v3102
  %3116 = vrot.lane.b32.xlu0 %v27, 40
  %v3117 = vpop.permute.xlu0 %3116
  %3118 = vrot.lane.b32.xlu0 %v47, 26
  %v3119 = vpop.permute.xlu0 %3118
  %3120 = vrot.lane.b32.xlu0 %v48, 26
  %v3121 = vpop.permute.xlu0 %3120
  %3122 = vrot.lane.b32.xlu0 %v49, 26
  %v3123 = vpop.permute.xlu0 %3122
  %3124 = vrot.lane.b32.xlu0 %v50, 26
  %v3125 = vpop.permute.xlu0 %3124
  %3126 = vrot.lane.b32.xlu0 %v51, 26
  %v3127 = vpop.permute.xlu0 %3126
  %3128 = vrot.lane.b32.xlu0 %v52, 26
  %v3129 = vpop.permute.xlu0 %3128
  %3130 = vrot.lane.b32.xlu0 %v53, 26
  %v3131 = vpop.permute.xlu0 %3130
  %3132 = vrot.lane.b32.xlu0 %v54, 26
  %v3133 = vpop.permute.xlu0 %3132
  %3134 = vrot.lane.b32.xlu0 %v55, 26
  %v3135 = vpop.permute.xlu0 %3134
  %3136 = vrot.lane.b32.xlu0 %v56, 26
  %v3137 = vpop.permute.xlu0 %3136
  %3138 = vrot.lane.b32.xlu0 %v57, 26
  %v3139 = vpop.permute.xlu0 %3138
  %vm3140 = vcmask 211968
  %v3141 = vsel %vm3140, %v3119, %v3121
  %v3142 = vsel %vm3140, %v3121, %v3123
  %v3143 = vsel %vm3140, %v3123, %v3125
  %v3144 = vsel %vm3140, %v3125, %v3127
  %v3145 = vsel %vm3140, %v3127, %v3129
  %v3146 = vsel %vm3140, %v3129, %v3131
  %v3147 = vsel %vm3140, %v3131, %v3133
  %v3148 = vsel %vm3140, %v3133, %v3135
  %v3149 = vsel %vm3140, %v3135, %v3137
  %v3150 = vsel %vm3140, %v3137, %v3139
  %v3152 = vsel %vm91, %v3117, 0
  %v3155 = vsel %vm95, %v3141, 0
  %v3158 = vsel %vm95, %v3142, 0
  %v3161 = vsel %vm95, %v3143, 0
  %v3164 = vsel %vm95, %v3144, 0
  %v3167 = vsel %vm95, %v3145, 0
  %v3170 = vsel %vm95, %v3146, 0
  %v3173 = vsel %vm95, %v3147, 0
  %v3176 = vsel %vm95, %v3148, 0
  %v3179 = vsel %vm95, %v3149, 0
  %v3182 = vsel %vm95, %v3150, 0
  %3184 = vmatprep.subr.bf16.mxu0 0
  %3185 = vmatpush1.bf16.msra.mxu0 0
  %3186 = vmatprep.subr.bf16.mxu0 0
  %3187 = vmatpush1.bf16.msra.mxu0 0
  %3188 = vmatprep.subr.bf16.mxu0 0
  %3189 = vmatpush1.bf16.msra.mxu0 0
  %3190 = vmatprep.subr.bf16.mxu0 0
  %3191 = vmatpush1.bf16.msra.mxu0 0
  %3192 = vmatprep.subr.bf16.mxu0 0
  %3193 = vmatpush1.bf16.msra.mxu0 0
  %3194 = vmatprep.subr.bf16.mxu0 0
  %3195 = vmatpush1.bf16.msra.mxu0 0
  %3196 = vmatprep.subr.bf16.mxu0 0
  %3197 = vmatpush1.bf16.msra.mxu0 0
  %3198 = vmatprep.subr.bf16.mxu0 %v3158
  %3199 = vmatpush1.bf16.msra.mxu0 %v3155
  %3200 = vmatprep.subr.bf16.mxu0 0
  %3201 = vmatpush2.bf16.msra.mxu0 0
  %3202 = vmatprep.subr.bf16.mxu0 0
  %3203 = vmatpush2.bf16.msra.mxu0 0
  %3204 = vmatprep.subr.bf16.mxu0 0
  %3205 = vmatpush2.bf16.msra.mxu0 0
  %3206 = vmatprep.subr.bf16.mxu0 0
  %3207 = vmatpush2.bf16.msra.mxu0 0
  %3208 = vmatprep.subr.bf16.mxu0 0
  %3209 = vmatpush2.bf16.msra.mxu0 0
  %3210 = vmatprep.subr.bf16.mxu0 0
  %3211 = vmatpush2.bf16.msra.mxu0 0
  %3212 = vmatprep.subr.bf16.mxu0 0
  %3213 = vmatpush2.bf16.msra.mxu0 0
  %3214 = vmatprep.subr.bf16.mxu0 0
  %3215 = vmatpush2.bf16.msra.mxu0 0
  %3216 = vmatprep.mubr.bf16.mxu0 0
  %3217 = vmatmul.mubr.bf16.gmra.mxu0 %v3152
  %v3218 = vpop.f32.mrf.mxu0
  %v3219 = vadd.f32 0.0, %v3218
  %v3220 = vpop.f32.mrf.mxu0
  %v3221 = vadd.f32 0.0, %v3220
  %v3222 = vpop.f32.mrf.mxu0
  %v3223 = vpop.f32.mrf.mxu0
  %3224 = vdwg.mxu0
  %3225 = vmatprep.subr.bf16.mxu0 0
  %3226 = vmatpush1.bf16.msra.mxu0 0
  %3227 = vmatprep.subr.bf16.mxu0 0
  %3228 = vmatpush1.bf16.msra.mxu0 0
  %3229 = vmatprep.subr.bf16.mxu0 0
  %3230 = vmatpush1.bf16.msra.mxu0 0
  %3231 = vmatprep.subr.bf16.mxu0 0
  %3232 = vmatpush1.bf16.msra.mxu0 0
  %3233 = vmatprep.subr.bf16.mxu0 0
  %3234 = vmatpush1.bf16.msra.mxu0 0
  %3235 = vmatprep.subr.bf16.mxu0 0
  %3236 = vmatpush1.bf16.msra.mxu0 0
  %3237 = vmatprep.subr.bf16.mxu0 0
  %3238 = vmatpush1.bf16.msra.mxu0 0
  %3239 = vmatprep.subr.bf16.mxu0 %v3164
  %3240 = vmatpush1.bf16.msra.mxu0 %v3161
  %3241 = vmatprep.subr.bf16.mxu0 0
  %3242 = vmatpush2.bf16.msra.mxu0 0
  %3243 = vmatprep.subr.bf16.mxu0 0
  %3244 = vmatpush2.bf16.msra.mxu0 0
  %3245 = vmatprep.subr.bf16.mxu0 0
  %3246 = vmatpush2.bf16.msra.mxu0 0
  %3247 = vmatprep.subr.bf16.mxu0 0
  %3248 = vmatpush2.bf16.msra.mxu0 0
  %3249 = vmatprep.subr.bf16.mxu0 0
  %3250 = vmatpush2.bf16.msra.mxu0 0
  %3251 = vmatprep.subr.bf16.mxu0 0
  %3252 = vmatpush2.bf16.msra.mxu0 0
  %3253 = vmatprep.subr.bf16.mxu0 0
  %3254 = vmatpush2.bf16.msra.mxu0 0
  %3255 = vmatprep.subr.bf16.mxu0 0
  %3256 = vmatpush2.bf16.msra.mxu0 0
  %3257 = vmatprep.mubr.bf16.mxu0 0
  %3258 = vmatmul.mubr.bf16.gmra.mxu0 %v3152
  %v3259 = vpop.f32.mrf.mxu0
  %v3260 = vadd.f32 0.0, %v3259
  %v3261 = vpop.f32.mrf.mxu0
  %v3262 = vadd.f32 0.0, %v3261
  %v3263 = vpop.f32.mrf.mxu0
  %v3264 = vpop.f32.mrf.mxu0
  %3265 = vdwg.mxu0
  %3266 = vmatprep.subr.bf16.mxu0 0
  %3267 = vmatpush1.bf16.msra.mxu0 0
  %3268 = vmatprep.subr.bf16.mxu0 0
  %3269 = vmatpush1.bf16.msra.mxu0 0
  %3270 = vmatprep.subr.bf16.mxu0 0
  %3271 = vmatpush1.bf16.msra.mxu0 0
  %3272 = vmatprep.subr.bf16.mxu0 0
  %3273 = vmatpush1.bf16.msra.mxu0 0
  %3274 = vmatprep.subr.bf16.mxu0 0
  %3275 = vmatpush1.bf16.msra.mxu0 0
  %3276 = vmatprep.subr.bf16.mxu0 0
  %3277 = vmatpush1.bf16.msra.mxu0 0
  %3278 = vmatprep.subr.bf16.mxu0 0
  %3279 = vmatpush1.bf16.msra.mxu0 0
  %3280 = vmatprep.subr.bf16.mxu0 %v3170
  %3281 = vmatpush1.bf16.msra.mxu0 %v3167
  %3282 = vmatprep.subr.bf16.mxu0 0
  %3283 = vmatpush2.bf16.msra.mxu0 0
  %3284 = vmatprep.subr.bf16.mxu0 0
  %3285 = vmatpush2.bf16.msra.mxu0 0
  %3286 = vmatprep.subr.bf16.mxu0 0
  %3287 = vmatpush2.bf16.msra.mxu0 0
  %3288 = vmatprep.subr.bf16.mxu0 0
  %3289 = vmatpush2.bf16.msra.mxu0 0
  %3290 = vmatprep.subr.bf16.mxu0 0
  %3291 = vmatpush2.bf16.msra.mxu0 0
  %3292 = vmatprep.subr.bf16.mxu0 0
  %3293 = vmatpush2.bf16.msra.mxu0 0
  %3294 = vmatprep.subr.bf16.mxu0 0
  %3295 = vmatpush2.bf16.msra.mxu0 0
  %3296 = vmatprep.subr.bf16.mxu0 0
  %3297 = vmatpush2.bf16.msra.mxu0 0
  %3298 = vmatprep.mubr.bf16.mxu0 0
  %3299 = vmatmul.mubr.bf16.gmra.mxu0 %v3152
  %v3300 = vpop.f32.mrf.mxu0
  %v3301 = vadd.f32 0.0, %v3300
  %v3302 = vpop.f32.mrf.mxu0
  %v3303 = vadd.f32 0.0, %v3302
  %v3304 = vpop.f32.mrf.mxu0
  %v3305 = vpop.f32.mrf.mxu0
  %3306 = vdwg.mxu0
  %3307 = vmatprep.subr.bf16.mxu0 0
  %3308 = vmatpush1.bf16.msra.mxu0 0
  %3309 = vmatprep.subr.bf16.mxu0 0
  %3310 = vmatpush1.bf16.msra.mxu0 0
  %3311 = vmatprep.subr.bf16.mxu0 0
  %3312 = vmatpush1.bf16.msra.mxu0 0
  %3313 = vmatprep.subr.bf16.mxu0 0
  %3314 = vmatpush1.bf16.msra.mxu0 0
  %3315 = vmatprep.subr.bf16.mxu0 0
  %3316 = vmatpush1.bf16.msra.mxu0 0
  %3317 = vmatprep.subr.bf16.mxu0 0
  %3318 = vmatpush1.bf16.msra.mxu0 0
  %3319 = vmatprep.subr.bf16.mxu0 0
  %3320 = vmatpush1.bf16.msra.mxu0 0
  %3321 = vmatprep.subr.bf16.mxu0 %v3176
  %3322 = vmatpush1.bf16.msra.mxu0 %v3173
  %3323 = vmatprep.subr.bf16.mxu0 0
  %3324 = vmatpush2.bf16.msra.mxu0 0
  %3325 = vmatprep.subr.bf16.mxu0 0
  %3326 = vmatpush2.bf16.msra.mxu0 0
  %3327 = vmatprep.subr.bf16.mxu0 0
  %3328 = vmatpush2.bf16.msra.mxu0 0
  %3329 = vmatprep.subr.bf16.mxu0 0
  %3330 = vmatpush2.bf16.msra.mxu0 0
  %3331 = vmatprep.subr.bf16.mxu0 0
  %3332 = vmatpush2.bf16.msra.mxu0 0
  %3333 = vmatprep.subr.bf16.mxu0 0
  %3334 = vmatpush2.bf16.msra.mxu0 0
  %3335 = vmatprep.subr.bf16.mxu0 0
  %3336 = vmatpush2.bf16.msra.mxu0 0
  %3337 = vmatprep.subr.bf16.mxu0 0
  %3338 = vmatpush2.bf16.msra.mxu0 0
  %3339 = vmatprep.mubr.bf16.mxu0 0
  %3340 = vmatmul.mubr.bf16.gmra.mxu0 %v3152
  %v3341 = vpop.f32.mrf.mxu0
  %v3342 = vadd.f32 0.0, %v3341
  %v3343 = vpop.f32.mrf.mxu0
  %v3344 = vadd.f32 0.0, %v3343
  %v3345 = vpop.f32.mrf.mxu0
  %v3346 = vpop.f32.mrf.mxu0
  %3347 = vdwg.mxu0
  %3348 = vmatprep.subr.bf16.mxu0 0
  %3349 = vmatpush1.bf16.msra.mxu0 0
  %3350 = vmatprep.subr.bf16.mxu0 0
  %3351 = vmatpush1.bf16.msra.mxu0 0
  %3352 = vmatprep.subr.bf16.mxu0 0
  %3353 = vmatpush1.bf16.msra.mxu0 0
  %3354 = vmatprep.subr.bf16.mxu0 0
  %3355 = vmatpush1.bf16.msra.mxu0 0
  %3356 = vmatprep.subr.bf16.mxu0 0
  %3357 = vmatpush1.bf16.msra.mxu0 0
  %3358 = vmatprep.subr.bf16.mxu0 0
  %3359 = vmatpush1.bf16.msra.mxu0 0
  %3360 = vmatprep.subr.bf16.mxu0 0
  %3361 = vmatpush1.bf16.msra.mxu0 0
  %3362 = vmatprep.subr.bf16.mxu0 %v3182
  %3363 = vmatpush1.bf16.msra.mxu0 %v3179
  %3364 = vmatprep.subr.bf16.mxu0 0
  %3365 = vmatpush2.bf16.msra.mxu0 0
  %3366 = vmatprep.subr.bf16.mxu0 0
  %3367 = vmatpush2.bf16.msra.mxu0 0
  %3368 = vmatprep.subr.bf16.mxu0 0
  %3369 = vmatpush2.bf16.msra.mxu0 0
  %3370 = vmatprep.subr.bf16.mxu0 0
  %3371 = vmatpush2.bf16.msra.mxu0 0
  %3372 = vmatprep.subr.bf16.mxu0 0
  %3373 = vmatpush2.bf16.msra.mxu0 0
  %3374 = vmatprep.subr.bf16.mxu0 0
  %3375 = vmatpush2.bf16.msra.mxu0 0
  %3376 = vmatprep.subr.bf16.mxu0 0
  %3377 = vmatpush2.bf16.msra.mxu0 0
  %3378 = vmatprep.subr.bf16.mxu0 0
  %3379 = vmatpush2.bf16.msra.mxu0 0
  %3380 = vmatprep.mubr.bf16.mxu0 0
  %3381 = vmatmul.mubr.bf16.gmra.mxu0 %v3152
  %v3382 = vpop.f32.mrf.mxu0
  %v3383 = vadd.f32 0.0, %v3382
  %v3384 = vpop.f32.mrf.mxu0
  %v3385 = vadd.f32 0.0, %v3384
  %v3386 = vpop.f32.mrf.mxu0
  %v3387 = vpop.f32.mrf.mxu0
  %3388 = vdwg.mxu0
  %v3389 = vadd.f32 %v3106, %v3219
  %v3390 = vadd.f32 %v3107, %v3221
  %v3391 = vadd.f32 %v3108, %v3260
  %v3392 = vadd.f32 %v3109, %v3262
  %v3393 = vadd.f32 %v3110, %v3301
  %v3394 = vadd.f32 %v3111, %v3303
  %v3395 = vadd.f32 %v3112, %v3342
  %v3396 = vadd.f32 %v3113, %v3344
  %v3397 = vadd.f32 %v3114, %v3383
  %v3398 = vadd.f32 %v3115, %v3385
  %3399 = vrot.lane.b32.xlu0 %v27, 32
  %v3400 = vpop.permute.xlu0 %3399
  %3401 = vrot.lane.b32.xlu0 %v47, 18
  %v3402 = vpop.permute.xlu0 %3401
  %3403 = vrot.lane.b32.xlu0 %v48, 18
  %v3404 = vpop.permute.xlu0 %3403
  %3405 = vrot.lane.b32.xlu0 %v49, 18
  %v3406 = vpop.permute.xlu0 %3405
  %3407 = vrot.lane.b32.xlu0 %v50, 18
  %v3408 = vpop.permute.xlu0 %3407
  %3409 = vrot.lane.b32.xlu0 %v51, 18
  %v3410 = vpop.permute.xlu0 %3409
  %3411 = vrot.lane.b32.xlu0 %v52, 18
  %v3412 = vpop.permute.xlu0 %3411
  %3413 = vrot.lane.b32.xlu0 %v53, 18
  %v3414 = vpop.permute.xlu0 %3413
  %3415 = vrot.lane.b32.xlu0 %v54, 18
  %v3416 = vpop.permute.xlu0 %3415
  %3417 = vrot.lane.b32.xlu0 %v55, 18
  %v3418 = vpop.permute.xlu0 %3417
  %3419 = vrot.lane.b32.xlu0 %v56, 18
  %v3420 = vpop.permute.xlu0 %3419
  %3421 = vrot.lane.b32.xlu0 %v57, 18
  %v3422 = vpop.permute.xlu0 %3421
  %vm3423 = vcmask 146432
  %v3424 = vsel %vm3423, %v3402, %v3404
  %v3425 = vsel %vm3423, %v3404, %v3406
  %v3426 = vsel %vm3423, %v3406, %v3408
  %v3427 = vsel %vm3423, %v3408, %v3410
  %v3428 = vsel %vm3423, %v3410, %v3412
  %v3429 = vsel %vm3423, %v3412, %v3414
  %v3430 = vsel %vm3423, %v3414, %v3416
  %v3431 = vsel %vm3423, %v3416, %v3418
  %v3432 = vsel %vm3423, %v3418, %v3420
  %v3433 = vsel %vm3423, %v3420, %v3422
  %v3435 = vsel %vm91, %v3400, 0
  %v3438 = vsel %vm95, %v3424, 0
  %v3441 = vsel %vm95, %v3425, 0
  %v3444 = vsel %vm95, %v3426, 0
  %v3447 = vsel %vm95, %v3427, 0
  %v3450 = vsel %vm95, %v3428, 0
  %v3453 = vsel %vm95, %v3429, 0
  %v3456 = vsel %vm95, %v3430, 0
  %v3459 = vsel %vm95, %v3431, 0
  %v3462 = vsel %vm95, %v3432, 0
  %v3465 = vsel %vm95, %v3433, 0
  %3467 = vmatprep.subr.bf16.mxu0 0
  %3468 = vmatpush1.bf16.msra.mxu0 0
  %3469 = vmatprep.subr.bf16.mxu0 0
  %3470 = vmatpush1.bf16.msra.mxu0 0
  %3471 = vmatprep.subr.bf16.mxu0 0
  %3472 = vmatpush1.bf16.msra.mxu0 0
  %3473 = vmatprep.subr.bf16.mxu0 0
  %3474 = vmatpush1.bf16.msra.mxu0 0
  %3475 = vmatprep.subr.bf16.mxu0 0
  %3476 = vmatpush1.bf16.msra.mxu0 0
  %3477 = vmatprep.subr.bf16.mxu0 0
  %3478 = vmatpush1.bf16.msra.mxu0 0
  %3479 = vmatprep.subr.bf16.mxu0 0
  %3480 = vmatpush1.bf16.msra.mxu0 0
  %3481 = vmatprep.subr.bf16.mxu0 %v3441
  %3482 = vmatpush1.bf16.msra.mxu0 %v3438
  %3483 = vmatprep.subr.bf16.mxu0 0
  %3484 = vmatpush2.bf16.msra.mxu0 0
  %3485 = vmatprep.subr.bf16.mxu0 0
  %3486 = vmatpush2.bf16.msra.mxu0 0
  %3487 = vmatprep.subr.bf16.mxu0 0
  %3488 = vmatpush2.bf16.msra.mxu0 0
  %3489 = vmatprep.subr.bf16.mxu0 0
  %3490 = vmatpush2.bf16.msra.mxu0 0
  %3491 = vmatprep.subr.bf16.mxu0 0
  %3492 = vmatpush2.bf16.msra.mxu0 0
  %3493 = vmatprep.subr.bf16.mxu0 0
  %3494 = vmatpush2.bf16.msra.mxu0 0
  %3495 = vmatprep.subr.bf16.mxu0 0
  %3496 = vmatpush2.bf16.msra.mxu0 0
  %3497 = vmatprep.subr.bf16.mxu0 0
  %3498 = vmatpush2.bf16.msra.mxu0 0
  %3499 = vmatprep.mubr.bf16.mxu0 0
  %3500 = vmatmul.mubr.bf16.gmra.mxu0 %v3435
  %v3501 = vpop.f32.mrf.mxu0
  %v3502 = vadd.f32 0.0, %v3501
  %v3503 = vpop.f32.mrf.mxu0
  %v3504 = vadd.f32 0.0, %v3503
  %v3505 = vpop.f32.mrf.mxu0
  %v3506 = vpop.f32.mrf.mxu0
  %3507 = vdwg.mxu0
  %3508 = vmatprep.subr.bf16.mxu0 0
  %3509 = vmatpush1.bf16.msra.mxu0 0
  %3510 = vmatprep.subr.bf16.mxu0 0
  %3511 = vmatpush1.bf16.msra.mxu0 0
  %3512 = vmatprep.subr.bf16.mxu0 0
  %3513 = vmatpush1.bf16.msra.mxu0 0
  %3514 = vmatprep.subr.bf16.mxu0 0
  %3515 = vmatpush1.bf16.msra.mxu0 0
  %3516 = vmatprep.subr.bf16.mxu0 0
  %3517 = vmatpush1.bf16.msra.mxu0 0
  %3518 = vmatprep.subr.bf16.mxu0 0
  %3519 = vmatpush1.bf16.msra.mxu0 0
  %3520 = vmatprep.subr.bf16.mxu0 0
  %3521 = vmatpush1.bf16.msra.mxu0 0
  %3522 = vmatprep.subr.bf16.mxu0 %v3447
  %3523 = vmatpush1.bf16.msra.mxu0 %v3444
  %3524 = vmatprep.subr.bf16.mxu0 0
  %3525 = vmatpush2.bf16.msra.mxu0 0
  %3526 = vmatprep.subr.bf16.mxu0 0
  %3527 = vmatpush2.bf16.msra.mxu0 0
  %3528 = vmatprep.subr.bf16.mxu0 0
  %3529 = vmatpush2.bf16.msra.mxu0 0
  %3530 = vmatprep.subr.bf16.mxu0 0
  %3531 = vmatpush2.bf16.msra.mxu0 0
  %3532 = vmatprep.subr.bf16.mxu0 0
  %3533 = vmatpush2.bf16.msra.mxu0 0
  %3534 = vmatprep.subr.bf16.mxu0 0
  %3535 = vmatpush2.bf16.msra.mxu0 0
  %3536 = vmatprep.subr.bf16.mxu0 0
  %3537 = vmatpush2.bf16.msra.mxu0 0
  %3538 = vmatprep.subr.bf16.mxu0 0
  %3539 = vmatpush2.bf16.msra.mxu0 0
  %3540 = vmatprep.mubr.bf16.mxu0 0
  %3541 = vmatmul.mubr.bf16.gmra.mxu0 %v3435
  %v3542 = vpop.f32.mrf.mxu0
  %v3543 = vadd.f32 0.0, %v3542
  %v3544 = vpop.f32.mrf.mxu0
  %v3545 = vadd.f32 0.0, %v3544
  %v3546 = vpop.f32.mrf.mxu0
  %v3547 = vpop.f32.mrf.mxu0
  %3548 = vdwg.mxu0
  %3549 = vmatprep.subr.bf16.mxu0 0
  %3550 = vmatpush1.bf16.msra.mxu0 0
  %3551 = vmatprep.subr.bf16.mxu0 0
  %3552 = vmatpush1.bf16.msra.mxu0 0
  %3553 = vmatprep.subr.bf16.mxu0 0
  %3554 = vmatpush1.bf16.msra.mxu0 0
  %3555 = vmatprep.subr.bf16.mxu0 0
  %3556 = vmatpush1.bf16.msra.mxu0 0
  %3557 = vmatprep.subr.bf16.mxu0 0
  %3558 = vmatpush1.bf16.msra.mxu0 0
  %3559 = vmatprep.subr.bf16.mxu0 0
  %3560 = vmatpush1.bf16.msra.mxu0 0
  %3561 = vmatprep.subr.bf16.mxu0 0
  %3562 = vmatpush1.bf16.msra.mxu0 0
  %3563 = vmatprep.subr.bf16.mxu0 %v3453
  %3564 = vmatpush1.bf16.msra.mxu0 %v3450
  %3565 = vmatprep.subr.bf16.mxu0 0
  %3566 = vmatpush2.bf16.msra.mxu0 0
  %3567 = vmatprep.subr.bf16.mxu0 0
  %3568 = vmatpush2.bf16.msra.mxu0 0
  %3569 = vmatprep.subr.bf16.mxu0 0
  %3570 = vmatpush2.bf16.msra.mxu0 0
  %3571 = vmatprep.subr.bf16.mxu0 0
  %3572 = vmatpush2.bf16.msra.mxu0 0
  %3573 = vmatprep.subr.bf16.mxu0 0
  %3574 = vmatpush2.bf16.msra.mxu0 0
  %3575 = vmatprep.subr.bf16.mxu0 0
  %3576 = vmatpush2.bf16.msra.mxu0 0
  %3577 = vmatprep.subr.bf16.mxu0 0
  %3578 = vmatpush2.bf16.msra.mxu0 0
  %3579 = vmatprep.subr.bf16.mxu0 0
  %3580 = vmatpush2.bf16.msra.mxu0 0
  %3581 = vmatprep.mubr.bf16.mxu0 0
  %3582 = vmatmul.mubr.bf16.gmra.mxu0 %v3435
  %v3583 = vpop.f32.mrf.mxu0
  %v3584 = vadd.f32 0.0, %v3583
  %v3585 = vpop.f32.mrf.mxu0
  %v3586 = vadd.f32 0.0, %v3585
  %v3587 = vpop.f32.mrf.mxu0
  %v3588 = vpop.f32.mrf.mxu0
  %3589 = vdwg.mxu0
  %3590 = vmatprep.subr.bf16.mxu0 0
  %3591 = vmatpush1.bf16.msra.mxu0 0
  %3592 = vmatprep.subr.bf16.mxu0 0
  %3593 = vmatpush1.bf16.msra.mxu0 0
  %3594 = vmatprep.subr.bf16.mxu0 0
  %3595 = vmatpush1.bf16.msra.mxu0 0
  %3596 = vmatprep.subr.bf16.mxu0 0
  %3597 = vmatpush1.bf16.msra.mxu0 0
  %3598 = vmatprep.subr.bf16.mxu0 0
  %3599 = vmatpush1.bf16.msra.mxu0 0
  %3600 = vmatprep.subr.bf16.mxu0 0
  %3601 = vmatpush1.bf16.msra.mxu0 0
  %3602 = vmatprep.subr.bf16.mxu0 0
  %3603 = vmatpush1.bf16.msra.mxu0 0
  %3604 = vmatprep.subr.bf16.mxu0 %v3459
  %3605 = vmatpush1.bf16.msra.mxu0 %v3456
  %3606 = vmatprep.subr.bf16.mxu0 0
  %3607 = vmatpush2.bf16.msra.mxu0 0
  %3608 = vmatprep.subr.bf16.mxu0 0
  %3609 = vmatpush2.bf16.msra.mxu0 0
  %3610 = vmatprep.subr.bf16.mxu0 0
  %3611 = vmatpush2.bf16.msra.mxu0 0
  %3612 = vmatprep.subr.bf16.mxu0 0
  %3613 = vmatpush2.bf16.msra.mxu0 0
  %3614 = vmatprep.subr.bf16.mxu0 0
  %3615 = vmatpush2.bf16.msra.mxu0 0
  %3616 = vmatprep.subr.bf16.mxu0 0
  %3617 = vmatpush2.bf16.msra.mxu0 0
  %3618 = vmatprep.subr.bf16.mxu0 0
  %3619 = vmatpush2.bf16.msra.mxu0 0
  %3620 = vmatprep.subr.bf16.mxu0 0
  %3621 = vmatpush2.bf16.msra.mxu0 0
  %3622 = vmatprep.mubr.bf16.mxu0 0
  %3623 = vmatmul.mubr.bf16.gmra.mxu0 %v3435
  %v3624 = vpop.f32.mrf.mxu0
  %v3625 = vadd.f32 0.0, %v3624
  %v3626 = vpop.f32.mrf.mxu0
  %v3627 = vadd.f32 0.0, %v3626
  %v3628 = vpop.f32.mrf.mxu0
  %v3629 = vpop.f32.mrf.mxu0
  %3630 = vdwg.mxu0
  %3631 = vmatprep.subr.bf16.mxu0 0
  %3632 = vmatpush1.bf16.msra.mxu0 0
  %3633 = vmatprep.subr.bf16.mxu0 0
  %3634 = vmatpush1.bf16.msra.mxu0 0
  %3635 = vmatprep.subr.bf16.mxu0 0
  %3636 = vmatpush1.bf16.msra.mxu0 0
  %3637 = vmatprep.subr.bf16.mxu0 0
  %3638 = vmatpush1.bf16.msra.mxu0 0
  %3639 = vmatprep.subr.bf16.mxu0 0
  %3640 = vmatpush1.bf16.msra.mxu0 0
  %3641 = vmatprep.subr.bf16.mxu0 0
  %3642 = vmatpush1.bf16.msra.mxu0 0
  %3643 = vmatprep.subr.bf16.mxu0 0
  %3644 = vmatpush1.bf16.msra.mxu0 0
  %3645 = vmatprep.subr.bf16.mxu0 %v3465
  %3646 = vmatpush1.bf16.msra.mxu0 %v3462
  %3647 = vmatprep.subr.bf16.mxu0 0
  %3648 = vmatpush2.bf16.msra.mxu0 0
  %3649 = vmatprep.subr.bf16.mxu0 0
  %3650 = vmatpush2.bf16.msra.mxu0 0
  %3651 = vmatprep.subr.bf16.mxu0 0
  %3652 = vmatpush2.bf16.msra.mxu0 0
  %3653 = vmatprep.subr.bf16.mxu0 0
  %3654 = vmatpush2.bf16.msra.mxu0 0
  %3655 = vmatprep.subr.bf16.mxu0 0
  %3656 = vmatpush2.bf16.msra.mxu0 0
  %3657 = vmatprep.subr.bf16.mxu0 0
  %3658 = vmatpush2.bf16.msra.mxu0 0
  %3659 = vmatprep.subr.bf16.mxu0 0
  %3660 = vmatpush2.bf16.msra.mxu0 0
  %3661 = vmatprep.subr.bf16.mxu0 0
  %3662 = vmatpush2.bf16.msra.mxu0 0
  %3663 = vmatprep.mubr.bf16.mxu0 0
  %3664 = vmatmul.mubr.bf16.gmra.mxu0 %v3435
  %v3665 = vpop.f32.mrf.mxu0
  %v3666 = vadd.f32 0.0, %v3665
  %v3667 = vpop.f32.mrf.mxu0
  %v3668 = vadd.f32 0.0, %v3667
  %v3669 = vpop.f32.mrf.mxu0
  %v3670 = vpop.f32.mrf.mxu0
  %3671 = vdwg.mxu0
  %v3672 = vadd.f32 %v3389, %v3502
  %v3673 = vadd.f32 %v3390, %v3504
  %v3674 = vadd.f32 %v3391, %v3543
  %v3675 = vadd.f32 %v3392, %v3545
  %v3676 = vadd.f32 %v3393, %v3584
  %v3677 = vadd.f32 %v3394, %v3586
  %v3678 = vadd.f32 %v3395, %v3625
  %v3679 = vadd.f32 %v3396, %v3627
  %v3680 = vadd.f32 %v3397, %v3666
  %v3681 = vadd.f32 %v3398, %v3668
  %3682 = vrot.lane.b32.xlu0 %v27, 24
  %v3683 = vpop.permute.xlu0 %3682
  %3684 = vrot.lane.b32.xlu0 %v47, 17
  %v3685 = vpop.permute.xlu0 %3684
  %3686 = vrot.lane.b32.xlu0 %v48, 17
  %v3687 = vpop.permute.xlu0 %3686
  %3688 = vrot.lane.b32.xlu0 %v49, 17
  %v3689 = vpop.permute.xlu0 %3688
  %3690 = vrot.lane.b32.xlu0 %v50, 17
  %v3691 = vpop.permute.xlu0 %3690
  %3692 = vrot.lane.b32.xlu0 %v51, 17
  %v3693 = vpop.permute.xlu0 %3692
  %3694 = vrot.lane.b32.xlu0 %v52, 17
  %v3695 = vpop.permute.xlu0 %3694
  %3696 = vrot.lane.b32.xlu0 %v53, 17
  %v3697 = vpop.permute.xlu0 %3696
  %3698 = vrot.lane.b32.xlu0 %v54, 17
  %v3699 = vpop.permute.xlu0 %3698
  %3700 = vrot.lane.b32.xlu0 %v55, 17
  %v3701 = vpop.permute.xlu0 %3700
  %3702 = vrot.lane.b32.xlu0 %v56, 17
  %v3703 = vpop.permute.xlu0 %3702
  %3704 = vrot.lane.b32.xlu0 %v57, 17
  %v3705 = vpop.permute.xlu0 %3704
  %vm3706 = vcmask 138240
  %v3707 = vsel %vm3706, %v3685, %v3687
  %v3708 = vsel %vm3706, %v3687, %v3689
  %v3709 = vsel %vm3706, %v3689, %v3691
  %v3710 = vsel %vm3706, %v3691, %v3693
  %v3711 = vsel %vm3706, %v3693, %v3695
  %v3712 = vsel %vm3706, %v3695, %v3697
  %v3713 = vsel %vm3706, %v3697, %v3699
  %v3714 = vsel %vm3706, %v3699, %v3701
  %v3715 = vsel %vm3706, %v3701, %v3703
  %v3716 = vsel %vm3706, %v3703, %v3705
  %v3718 = vsel %vm91, %v3683, 0
  %v3721 = vsel %vm95, %v3707, 0
  %v3724 = vsel %vm95, %v3708, 0
  %v3727 = vsel %vm95, %v3709, 0
  %v3730 = vsel %vm95, %v3710, 0
  %v3733 = vsel %vm95, %v3711, 0
  %v3736 = vsel %vm95, %v3712, 0
  %v3739 = vsel %vm95, %v3713, 0
  %v3742 = vsel %vm95, %v3714, 0
  %v3745 = vsel %vm95, %v3715, 0
  %v3748 = vsel %vm95, %v3716, 0
  %3750 = vmatprep.subr.bf16.mxu0 0
  %3751 = vmatpush1.bf16.msra.mxu0 0
  %3752 = vmatprep.subr.bf16.mxu0 0
  %3753 = vmatpush1.bf16.msra.mxu0 0
  %3754 = vmatprep.subr.bf16.mxu0 0
  %3755 = vmatpush1.bf16.msra.mxu0 0
  %3756 = vmatprep.subr.bf16.mxu0 0
  %3757 = vmatpush1.bf16.msra.mxu0 0
  %3758 = vmatprep.subr.bf16.mxu0 0
  %3759 = vmatpush1.bf16.msra.mxu0 0
  %3760 = vmatprep.subr.bf16.mxu0 0
  %3761 = vmatpush1.bf16.msra.mxu0 0
  %3762 = vmatprep.subr.bf16.mxu0 0
  %3763 = vmatpush1.bf16.msra.mxu0 0
  %3764 = vmatprep.subr.bf16.mxu0 %v3724
  %3765 = vmatpush1.bf16.msra.mxu0 %v3721
  %3766 = vmatprep.subr.bf16.mxu0 0
  %3767 = vmatpush2.bf16.msra.mxu0 0
  %3768 = vmatprep.subr.bf16.mxu0 0
  %3769 = vmatpush2.bf16.msra.mxu0 0
  %3770 = vmatprep.subr.bf16.mxu0 0
  %3771 = vmatpush2.bf16.msra.mxu0 0
  %3772 = vmatprep.subr.bf16.mxu0 0
  %3773 = vmatpush2.bf16.msra.mxu0 0
  %3774 = vmatprep.subr.bf16.mxu0 0
  %3775 = vmatpush2.bf16.msra.mxu0 0
  %3776 = vmatprep.subr.bf16.mxu0 0
  %3777 = vmatpush2.bf16.msra.mxu0 0
  %3778 = vmatprep.subr.bf16.mxu0 0
  %3779 = vmatpush2.bf16.msra.mxu0 0
  %3780 = vmatprep.subr.bf16.mxu0 0
  %3781 = vmatpush2.bf16.msra.mxu0 0
  %3782 = vmatprep.mubr.bf16.mxu0 0
  %3783 = vmatmul.mubr.bf16.gmra.mxu0 %v3718
  %v3784 = vpop.f32.mrf.mxu0
  %v3785 = vadd.f32 0.0, %v3784
  %v3786 = vpop.f32.mrf.mxu0
  %v3787 = vadd.f32 0.0, %v3786
  %v3788 = vpop.f32.mrf.mxu0
  %v3789 = vpop.f32.mrf.mxu0
  %3790 = vdwg.mxu0
  %3791 = vmatprep.subr.bf16.mxu0 0
  %3792 = vmatpush1.bf16.msra.mxu0 0
  %3793 = vmatprep.subr.bf16.mxu0 0
  %3794 = vmatpush1.bf16.msra.mxu0 0
  %3795 = vmatprep.subr.bf16.mxu0 0
  %3796 = vmatpush1.bf16.msra.mxu0 0
  %3797 = vmatprep.subr.bf16.mxu0 0
  %3798 = vmatpush1.bf16.msra.mxu0 0
  %3799 = vmatprep.subr.bf16.mxu0 0
  %3800 = vmatpush1.bf16.msra.mxu0 0
  %3801 = vmatprep.subr.bf16.mxu0 0
  %3802 = vmatpush1.bf16.msra.mxu0 0
  %3803 = vmatprep.subr.bf16.mxu0 0
  %3804 = vmatpush1.bf16.msra.mxu0 0
  %3805 = vmatprep.subr.bf16.mxu0 %v3730
  %3806 = vmatpush1.bf16.msra.mxu0 %v3727
  %3807 = vmatprep.subr.bf16.mxu0 0
  %3808 = vmatpush2.bf16.msra.mxu0 0
  %3809 = vmatprep.subr.bf16.mxu0 0
  %3810 = vmatpush2.bf16.msra.mxu0 0
  %3811 = vmatprep.subr.bf16.mxu0 0
  %3812 = vmatpush2.bf16.msra.mxu0 0
  %3813 = vmatprep.subr.bf16.mxu0 0
  %3814 = vmatpush2.bf16.msra.mxu0 0
  %3815 = vmatprep.subr.bf16.mxu0 0
  %3816 = vmatpush2.bf16.msra.mxu0 0
  %3817 = vmatprep.subr.bf16.mxu0 0
  %3818 = vmatpush2.bf16.msra.mxu0 0
  %3819 = vmatprep.subr.bf16.mxu0 0
  %3820 = vmatpush2.bf16.msra.mxu0 0
  %3821 = vmatprep.subr.bf16.mxu0 0
  %3822 = vmatpush2.bf16.msra.mxu0 0
  %3823 = vmatprep.mubr.bf16.mxu0 0
  %3824 = vmatmul.mubr.bf16.gmra.mxu0 %v3718
  %v3825 = vpop.f32.mrf.mxu0
  %v3826 = vadd.f32 0.0, %v3825
  %v3827 = vpop.f32.mrf.mxu0
  %v3828 = vadd.f32 0.0, %v3827
  %v3829 = vpop.f32.mrf.mxu0
  %v3830 = vpop.f32.mrf.mxu0
  %3831 = vdwg.mxu0
  %3832 = vmatprep.subr.bf16.mxu0 0
  %3833 = vmatpush1.bf16.msra.mxu0 0
  %3834 = vmatprep.subr.bf16.mxu0 0
  %3835 = vmatpush1.bf16.msra.mxu0 0
  %3836 = vmatprep.subr.bf16.mxu0 0
  %3837 = vmatpush1.bf16.msra.mxu0 0
  %3838 = vmatprep.subr.bf16.mxu0 0
  %3839 = vmatpush1.bf16.msra.mxu0 0
  %3840 = vmatprep.subr.bf16.mxu0 0
  %3841 = vmatpush1.bf16.msra.mxu0 0
  %3842 = vmatprep.subr.bf16.mxu0 0
  %3843 = vmatpush1.bf16.msra.mxu0 0
  %3844 = vmatprep.subr.bf16.mxu0 0
  %3845 = vmatpush1.bf16.msra.mxu0 0
  %3846 = vmatprep.subr.bf16.mxu0 %v3736
  %3847 = vmatpush1.bf16.msra.mxu0 %v3733
  %3848 = vmatprep.subr.bf16.mxu0 0
  %3849 = vmatpush2.bf16.msra.mxu0 0
  %3850 = vmatprep.subr.bf16.mxu0 0
  %3851 = vmatpush2.bf16.msra.mxu0 0
  %3852 = vmatprep.subr.bf16.mxu0 0
  %3853 = vmatpush2.bf16.msra.mxu0 0
  %3854 = vmatprep.subr.bf16.mxu0 0
  %3855 = vmatpush2.bf16.msra.mxu0 0
  %3856 = vmatprep.subr.bf16.mxu0 0
  %3857 = vmatpush2.bf16.msra.mxu0 0
  %3858 = vmatprep.subr.bf16.mxu0 0
  %3859 = vmatpush2.bf16.msra.mxu0 0
  %3860 = vmatprep.subr.bf16.mxu0 0
  %3861 = vmatpush2.bf16.msra.mxu0 0
  %3862 = vmatprep.subr.bf16.mxu0 0
  %3863 = vmatpush2.bf16.msra.mxu0 0
  %3864 = vmatprep.mubr.bf16.mxu0 0
  %3865 = vmatmul.mubr.bf16.gmra.mxu0 %v3718
  %v3866 = vpop.f32.mrf.mxu0
  %v3867 = vadd.f32 0.0, %v3866
  %v3868 = vpop.f32.mrf.mxu0
  %v3869 = vadd.f32 0.0, %v3868
  %v3870 = vpop.f32.mrf.mxu0
  %v3871 = vpop.f32.mrf.mxu0
  %3872 = vdwg.mxu0
  %3873 = vmatprep.subr.bf16.mxu0 0
  %3874 = vmatpush1.bf16.msra.mxu0 0
  %3875 = vmatprep.subr.bf16.mxu0 0
  %3876 = vmatpush1.bf16.msra.mxu0 0
  %3877 = vmatprep.subr.bf16.mxu0 0
  %3878 = vmatpush1.bf16.msra.mxu0 0
  %3879 = vmatprep.subr.bf16.mxu0 0
  %3880 = vmatpush1.bf16.msra.mxu0 0
  %3881 = vmatprep.subr.bf16.mxu0 0
  %3882 = vmatpush1.bf16.msra.mxu0 0
  %3883 = vmatprep.subr.bf16.mxu0 0
  %3884 = vmatpush1.bf16.msra.mxu0 0
  %3885 = vmatprep.subr.bf16.mxu0 0
  %3886 = vmatpush1.bf16.msra.mxu0 0
  %3887 = vmatprep.subr.bf16.mxu0 %v3742
  %3888 = vmatpush1.bf16.msra.mxu0 %v3739
  %3889 = vmatprep.subr.bf16.mxu0 0
  %3890 = vmatpush2.bf16.msra.mxu0 0
  %3891 = vmatprep.subr.bf16.mxu0 0
  %3892 = vmatpush2.bf16.msra.mxu0 0
  %3893 = vmatprep.subr.bf16.mxu0 0
  %3894 = vmatpush2.bf16.msra.mxu0 0
  %3895 = vmatprep.subr.bf16.mxu0 0
  %3896 = vmatpush2.bf16.msra.mxu0 0
  %3897 = vmatprep.subr.bf16.mxu0 0
  %3898 = vmatpush2.bf16.msra.mxu0 0
  %3899 = vmatprep.subr.bf16.mxu0 0
  %3900 = vmatpush2.bf16.msra.mxu0 0
  %3901 = vmatprep.subr.bf16.mxu0 0
  %3902 = vmatpush2.bf16.msra.mxu0 0
  %3903 = vmatprep.subr.bf16.mxu0 0
  %3904 = vmatpush2.bf16.msra.mxu0 0
  %3905 = vmatprep.mubr.bf16.mxu0 0
  %3906 = vmatmul.mubr.bf16.gmra.mxu0 %v3718
  %v3907 = vpop.f32.mrf.mxu0
  %v3908 = vadd.f32 0.0, %v3907
  %v3909 = vpop.f32.mrf.mxu0
  %v3910 = vadd.f32 0.0, %v3909
  %v3911 = vpop.f32.mrf.mxu0
  %v3912 = vpop.f32.mrf.mxu0
  %3913 = vdwg.mxu0
  %3914 = vmatprep.subr.bf16.mxu0 0
  %3915 = vmatpush1.bf16.msra.mxu0 0
  %3916 = vmatprep.subr.bf16.mxu0 0
  %3917 = vmatpush1.bf16.msra.mxu0 0
  %3918 = vmatprep.subr.bf16.mxu0 0
  %3919 = vmatpush1.bf16.msra.mxu0 0
  %3920 = vmatprep.subr.bf16.mxu0 0
  %3921 = vmatpush1.bf16.msra.mxu0 0
  %3922 = vmatprep.subr.bf16.mxu0 0
  %3923 = vmatpush1.bf16.msra.mxu0 0
  %3924 = vmatprep.subr.bf16.mxu0 0
  %3925 = vmatpush1.bf16.msra.mxu0 0
  %3926 = vmatprep.subr.bf16.mxu0 0
  %3927 = vmatpush1.bf16.msra.mxu0 0
  %3928 = vmatprep.subr.bf16.mxu0 %v3748
  %3929 = vmatpush1.bf16.msra.mxu0 %v3745
  %3930 = vmatprep.subr.bf16.mxu0 0
  %3931 = vmatpush2.bf16.msra.mxu0 0
  %3932 = vmatprep.subr.bf16.mxu0 0
  %3933 = vmatpush2.bf16.msra.mxu0 0
  %3934 = vmatprep.subr.bf16.mxu0 0
  %3935 = vmatpush2.bf16.msra.mxu0 0
  %3936 = vmatprep.subr.bf16.mxu0 0
  %3937 = vmatpush2.bf16.msra.mxu0 0
  %3938 = vmatprep.subr.bf16.mxu0 0
  %3939 = vmatpush2.bf16.msra.mxu0 0
  %3940 = vmatprep.subr.bf16.mxu0 0
  %3941 = vmatpush2.bf16.msra.mxu0 0
  %3942 = vmatprep.subr.bf16.mxu0 0
  %3943 = vmatpush2.bf16.msra.mxu0 0
  %3944 = vmatprep.subr.bf16.mxu0 0
  %3945 = vmatpush2.bf16.msra.mxu0 0
  %3946 = vmatprep.mubr.bf16.mxu0 0
  %3947 = vmatmul.mubr.bf16.gmra.mxu0 %v3718
  %v3948 = vpop.f32.mrf.mxu0
  %v3949 = vadd.f32 0.0, %v3948
  %v3950 = vpop.f32.mrf.mxu0
  %v3951 = vadd.f32 0.0, %v3950
  %v3952 = vpop.f32.mrf.mxu0
  %v3953 = vpop.f32.mrf.mxu0
  %3954 = vdwg.mxu0
  %v3955 = vadd.f32 %v3672, %v3785
  %v3956 = vadd.f32 %v3673, %v3787
  %v3957 = vadd.f32 %v3674, %v3826
  %v3958 = vadd.f32 %v3675, %v3828
  %v3959 = vadd.f32 %v3676, %v3867
  %v3960 = vadd.f32 %v3677, %v3869
  %v3961 = vadd.f32 %v3678, %v3908
  %v3962 = vadd.f32 %v3679, %v3910
  %v3963 = vadd.f32 %v3680, %v3949
  %v3964 = vadd.f32 %v3681, %v3951
  %3965 = vrot.lane.b32.xlu0 %v27, 16
  %v3966 = vpop.permute.xlu0 %3965
  %3967 = vrot.lane.b32.xlu0 %v47, 16
  %v3968 = vpop.permute.xlu0 %3967
  %3969 = vrot.lane.b32.xlu0 %v48, 16
  %v3970 = vpop.permute.xlu0 %3969
  %3971 = vrot.lane.b32.xlu0 %v49, 16
  %v3972 = vpop.permute.xlu0 %3971
  %3973 = vrot.lane.b32.xlu0 %v50, 16
  %v3974 = vpop.permute.xlu0 %3973
  %3975 = vrot.lane.b32.xlu0 %v51, 16
  %v3976 = vpop.permute.xlu0 %3975
  %3977 = vrot.lane.b32.xlu0 %v52, 16
  %v3978 = vpop.permute.xlu0 %3977
  %3979 = vrot.lane.b32.xlu0 %v53, 16
  %v3980 = vpop.permute.xlu0 %3979
  %3981 = vrot.lane.b32.xlu0 %v54, 16
  %v3982 = vpop.permute.xlu0 %3981
  %3983 = vrot.lane.b32.xlu0 %v55, 16
  %v3984 = vpop.permute.xlu0 %3983
  %3985 = vrot.lane.b32.xlu0 %v56, 16
  %v3986 = vpop.permute.xlu0 %3985
  %3987 = vrot.lane.b32.xlu0 %v57, 16
  %v3988 = vpop.permute.xlu0 %3987
  %vm3989 = vcmask 130048
  %v3990 = vsel %vm3989, %v3968, %v3970
  %v3991 = vsel %vm3989, %v3970, %v3972
  %v3992 = vsel %vm3989, %v3972, %v3974
  %v3993 = vsel %vm3989, %v3974, %v3976
  %v3994 = vsel %vm3989, %v3976, %v3978
  %v3995 = vsel %vm3989, %v3978, %v3980
  %v3996 = vsel %vm3989, %v3980, %v3982
  %v3997 = vsel %vm3989, %v3982, %v3984
  %v3998 = vsel %vm3989, %v3984, %v3986
  %v3999 = vsel %vm3989, %v3986, %v3988
  %v4001 = vsel %vm91, %v3966, 0
  %v4004 = vsel %vm95, %v3990, 0
  %v4007 = vsel %vm95, %v3991, 0
  %v4010 = vsel %vm95, %v3992, 0
  %v4013 = vsel %vm95, %v3993, 0
  %v4016 = vsel %vm95, %v3994, 0
  %v4019 = vsel %vm95, %v3995, 0
  %v4022 = vsel %vm95, %v3996, 0
  %v4025 = vsel %vm95, %v3997, 0
  %v4028 = vsel %vm95, %v3998, 0
  %v4031 = vsel %vm95, %v3999, 0
  %4033 = vmatprep.subr.bf16.mxu0 0
  %4034 = vmatpush1.bf16.msra.mxu0 0
  %4035 = vmatprep.subr.bf16.mxu0 0
  %4036 = vmatpush1.bf16.msra.mxu0 0
  %4037 = vmatprep.subr.bf16.mxu0 0
  %4038 = vmatpush1.bf16.msra.mxu0 0
  %4039 = vmatprep.subr.bf16.mxu0 0
  %4040 = vmatpush1.bf16.msra.mxu0 0
  %4041 = vmatprep.subr.bf16.mxu0 0
  %4042 = vmatpush1.bf16.msra.mxu0 0
  %4043 = vmatprep.subr.bf16.mxu0 0
  %4044 = vmatpush1.bf16.msra.mxu0 0
  %4045 = vmatprep.subr.bf16.mxu0 0
  %4046 = vmatpush1.bf16.msra.mxu0 0
  %4047 = vmatprep.subr.bf16.mxu0 %v4007
  %4048 = vmatpush1.bf16.msra.mxu0 %v4004
  %4049 = vmatprep.subr.bf16.mxu0 0
  %4050 = vmatpush2.bf16.msra.mxu0 0
  %4051 = vmatprep.subr.bf16.mxu0 0
  %4052 = vmatpush2.bf16.msra.mxu0 0
  %4053 = vmatprep.subr.bf16.mxu0 0
  %4054 = vmatpush2.bf16.msra.mxu0 0
  %4055 = vmatprep.subr.bf16.mxu0 0
  %4056 = vmatpush2.bf16.msra.mxu0 0
  %4057 = vmatprep.subr.bf16.mxu0 0
  %4058 = vmatpush2.bf16.msra.mxu0 0
  %4059 = vmatprep.subr.bf16.mxu0 0
  %4060 = vmatpush2.bf16.msra.mxu0 0
  %4061 = vmatprep.subr.bf16.mxu0 0
  %4062 = vmatpush2.bf16.msra.mxu0 0
  %4063 = vmatprep.subr.bf16.mxu0 0
  %4064 = vmatpush2.bf16.msra.mxu0 0
  %4065 = vmatprep.mubr.bf16.mxu0 0
  %4066 = vmatmul.mubr.bf16.gmra.mxu0 %v4001
  %v4067 = vpop.f32.mrf.mxu0
  %v4068 = vadd.f32 0.0, %v4067
  %v4069 = vpop.f32.mrf.mxu0
  %v4070 = vadd.f32 0.0, %v4069
  %v4071 = vpop.f32.mrf.mxu0
  %v4072 = vpop.f32.mrf.mxu0
  %4073 = vdwg.mxu0
  %4074 = vmatprep.subr.bf16.mxu0 0
  %4075 = vmatpush1.bf16.msra.mxu0 0
  %4076 = vmatprep.subr.bf16.mxu0 0
  %4077 = vmatpush1.bf16.msra.mxu0 0
  %4078 = vmatprep.subr.bf16.mxu0 0
  %4079 = vmatpush1.bf16.msra.mxu0 0
  %4080 = vmatprep.subr.bf16.mxu0 0
  %4081 = vmatpush1.bf16.msra.mxu0 0
  %4082 = vmatprep.subr.bf16.mxu0 0
  %4083 = vmatpush1.bf16.msra.mxu0 0
  %4084 = vmatprep.subr.bf16.mxu0 0
  %4085 = vmatpush1.bf16.msra.mxu0 0
  %4086 = vmatprep.subr.bf16.mxu0 0
  %4087 = vmatpush1.bf16.msra.mxu0 0
  %4088 = vmatprep.subr.bf16.mxu0 %v4013
  %4089 = vmatpush1.bf16.msra.mxu0 %v4010
  %4090 = vmatprep.subr.bf16.mxu0 0
  %4091 = vmatpush2.bf16.msra.mxu0 0
  %4092 = vmatprep.subr.bf16.mxu0 0
  %4093 = vmatpush2.bf16.msra.mxu0 0
  %4094 = vmatprep.subr.bf16.mxu0 0
  %4095 = vmatpush2.bf16.msra.mxu0 0
  %4096 = vmatprep.subr.bf16.mxu0 0
  %4097 = vmatpush2.bf16.msra.mxu0 0
  %4098 = vmatprep.subr.bf16.mxu0 0
  %4099 = vmatpush2.bf16.msra.mxu0 0
  %4100 = vmatprep.subr.bf16.mxu0 0
  %4101 = vmatpush2.bf16.msra.mxu0 0
  %4102 = vmatprep.subr.bf16.mxu0 0
  %4103 = vmatpush2.bf16.msra.mxu0 0
  %4104 = vmatprep.subr.bf16.mxu0 0
  %4105 = vmatpush2.bf16.msra.mxu0 0
  %4106 = vmatprep.mubr.bf16.mxu0 0
  %4107 = vmatmul.mubr.bf16.gmra.mxu0 %v4001
  %v4108 = vpop.f32.mrf.mxu0
  %v4109 = vadd.f32 0.0, %v4108
  %v4110 = vpop.f32.mrf.mxu0
  %v4111 = vadd.f32 0.0, %v4110
  %v4112 = vpop.f32.mrf.mxu0
  %v4113 = vpop.f32.mrf.mxu0
  %4114 = vdwg.mxu0
  %4115 = vmatprep.subr.bf16.mxu0 0
  %4116 = vmatpush1.bf16.msra.mxu0 0
  %4117 = vmatprep.subr.bf16.mxu0 0
  %4118 = vmatpush1.bf16.msra.mxu0 0
  %4119 = vmatprep.subr.bf16.mxu0 0
  %4120 = vmatpush1.bf16.msra.mxu0 0
  %4121 = vmatprep.subr.bf16.mxu0 0
  %4122 = vmatpush1.bf16.msra.mxu0 0
  %4123 = vmatprep.subr.bf16.mxu0 0
  %4124 = vmatpush1.bf16.msra.mxu0 0
  %4125 = vmatprep.subr.bf16.mxu0 0
  %4126 = vmatpush1.bf16.msra.mxu0 0
  %4127 = vmatprep.subr.bf16.mxu0 0
  %4128 = vmatpush1.bf16.msra.mxu0 0
  %4129 = vmatprep.subr.bf16.mxu0 %v4019
  %4130 = vmatpush1.bf16.msra.mxu0 %v4016
  %4131 = vmatprep.subr.bf16.mxu0 0
  %4132 = vmatpush2.bf16.msra.mxu0 0
  %4133 = vmatprep.subr.bf16.mxu0 0
  %4134 = vmatpush2.bf16.msra.mxu0 0
  %4135 = vmatprep.subr.bf16.mxu0 0
  %4136 = vmatpush2.bf16.msra.mxu0 0
  %4137 = vmatprep.subr.bf16.mxu0 0
  %4138 = vmatpush2.bf16.msra.mxu0 0
  %4139 = vmatprep.subr.bf16.mxu0 0
  %4140 = vmatpush2.bf16.msra.mxu0 0
  %4141 = vmatprep.subr.bf16.mxu0 0
  %4142 = vmatpush2.bf16.msra.mxu0 0
  %4143 = vmatprep.subr.bf16.mxu0 0
  %4144 = vmatpush2.bf16.msra.mxu0 0
  %4145 = vmatprep.subr.bf16.mxu0 0
  %4146 = vmatpush2.bf16.msra.mxu0 0
  %4147 = vmatprep.mubr.bf16.mxu0 0
  %4148 = vmatmul.mubr.bf16.gmra.mxu0 %v4001
  %v4149 = vpop.f32.mrf.mxu0
  %v4150 = vadd.f32 0.0, %v4149
  %v4151 = vpop.f32.mrf.mxu0
  %v4152 = vadd.f32 0.0, %v4151
  %v4153 = vpop.f32.mrf.mxu0
  %v4154 = vpop.f32.mrf.mxu0
  %4155 = vdwg.mxu0
  %4156 = vmatprep.subr.bf16.mxu0 0
  %4157 = vmatpush1.bf16.msra.mxu0 0
  %4158 = vmatprep.subr.bf16.mxu0 0
  %4159 = vmatpush1.bf16.msra.mxu0 0
  %4160 = vmatprep.subr.bf16.mxu0 0
  %4161 = vmatpush1.bf16.msra.mxu0 0
  %4162 = vmatprep.subr.bf16.mxu0 0
  %4163 = vmatpush1.bf16.msra.mxu0 0
  %4164 = vmatprep.subr.bf16.mxu0 0
  %4165 = vmatpush1.bf16.msra.mxu0 0
  %4166 = vmatprep.subr.bf16.mxu0 0
  %4167 = vmatpush1.bf16.msra.mxu0 0
  %4168 = vmatprep.subr.bf16.mxu0 0
  %4169 = vmatpush1.bf16.msra.mxu0 0
  %4170 = vmatprep.subr.bf16.mxu0 %v4025
  %4171 = vmatpush1.bf16.msra.mxu0 %v4022
  %4172 = vmatprep.subr.bf16.mxu0 0
  %4173 = vmatpush2.bf16.msra.mxu0 0
  %4174 = vmatprep.subr.bf16.mxu0 0
  %4175 = vmatpush2.bf16.msra.mxu0 0
  %4176 = vmatprep.subr.bf16.mxu0 0
  %4177 = vmatpush2.bf16.msra.mxu0 0
  %4178 = vmatprep.subr.bf16.mxu0 0
  %4179 = vmatpush2.bf16.msra.mxu0 0
  %4180 = vmatprep.subr.bf16.mxu0 0
  %4181 = vmatpush2.bf16.msra.mxu0 0
  %4182 = vmatprep.subr.bf16.mxu0 0
  %4183 = vmatpush2.bf16.msra.mxu0 0
  %4184 = vmatprep.subr.bf16.mxu0 0
  %4185 = vmatpush2.bf16.msra.mxu0 0
  %4186 = vmatprep.subr.bf16.mxu0 0
  %4187 = vmatpush2.bf16.msra.mxu0 0
  %4188 = vmatprep.mubr.bf16.mxu0 0
  %4189 = vmatmul.mubr.bf16.gmra.mxu0 %v4001
  %v4190 = vpop.f32.mrf.mxu0
  %v4191 = vadd.f32 0.0, %v4190
  %v4192 = vpop.f32.mrf.mxu0
  %v4193 = vadd.f32 0.0, %v4192
  %v4194 = vpop.f32.mrf.mxu0
  %v4195 = vpop.f32.mrf.mxu0
  %4196 = vdwg.mxu0
  %4197 = vmatprep.subr.bf16.mxu0 0
  %4198 = vmatpush1.bf16.msra.mxu0 0
  %4199 = vmatprep.subr.bf16.mxu0 0
  %4200 = vmatpush1.bf16.msra.mxu0 0
  %4201 = vmatprep.subr.bf16.mxu0 0
  %4202 = vmatpush1.bf16.msra.mxu0 0
  %4203 = vmatprep.subr.bf16.mxu0 0
  %4204 = vmatpush1.bf16.msra.mxu0 0
  %4205 = vmatprep.subr.bf16.mxu0 0
  %4206 = vmatpush1.bf16.msra.mxu0 0
  %4207 = vmatprep.subr.bf16.mxu0 0
  %4208 = vmatpush1.bf16.msra.mxu0 0
  %4209 = vmatprep.subr.bf16.mxu0 0
  %4210 = vmatpush1.bf16.msra.mxu0 0
  %4211 = vmatprep.subr.bf16.mxu0 %v4031
  %4212 = vmatpush1.bf16.msra.mxu0 %v4028
  %4213 = vmatprep.subr.bf16.mxu0 0
  %4214 = vmatpush2.bf16.msra.mxu0 0
  %4215 = vmatprep.subr.bf16.mxu0 0
  %4216 = vmatpush2.bf16.msra.mxu0 0
  %4217 = vmatprep.subr.bf16.mxu0 0
  %4218 = vmatpush2.bf16.msra.mxu0 0
  %4219 = vmatprep.subr.bf16.mxu0 0
  %4220 = vmatpush2.bf16.msra.mxu0 0
  %4221 = vmatprep.subr.bf16.mxu0 0
  %4222 = vmatpush2.bf16.msra.mxu0 0
  %4223 = vmatprep.subr.bf16.mxu0 0
  %4224 = vmatpush2.bf16.msra.mxu0 0
  %4225 = vmatprep.subr.bf16.mxu0 0
  %4226 = vmatpush2.bf16.msra.mxu0 0
  %4227 = vmatprep.subr.bf16.mxu0 0
  %4228 = vmatpush2.bf16.msra.mxu0 0
  %4229 = vmatprep.mubr.bf16.mxu0 0
  %4230 = vmatmul.mubr.bf16.gmra.mxu0 %v4001
  %v4231 = vpop.f32.mrf.mxu0
  %v4232 = vadd.f32 0.0, %v4231
  %v4233 = vpop.f32.mrf.mxu0
  %v4234 = vadd.f32 0.0, %v4233
  %v4235 = vpop.f32.mrf.mxu0
  %v4236 = vpop.f32.mrf.mxu0
  %4237 = vdwg.mxu0
  %v4238 = vadd.f32 %v3955, %v4068
  %v4239 = vadd.f32 %v3956, %v4070
  %v4240 = vadd.f32 %v3957, %v4109
  %v4241 = vadd.f32 %v3958, %v4111
  %v4242 = vadd.f32 %v3959, %v4150
  %v4243 = vadd.f32 %v3960, %v4152
  %v4244 = vadd.f32 %v3961, %v4191
  %v4245 = vadd.f32 %v3962, %v4193
  %v4246 = vadd.f32 %v3963, %v4232
  %v4247 = vadd.f32 %v3964, %v4234
  %4248 = vrot.lane.b32.xlu0 %v27, 8
  %v4249 = vpop.permute.xlu0 %4248
  %4250 = vrot.lane.b32.xlu0 %v47, 8
  %v4251 = vpop.permute.xlu0 %4250
  %4252 = vrot.lane.b32.xlu0 %v48, 8
  %v4253 = vpop.permute.xlu0 %4252
  %4254 = vrot.lane.b32.xlu0 %v49, 8
  %v4255 = vpop.permute.xlu0 %4254
  %4256 = vrot.lane.b32.xlu0 %v50, 8
  %v4257 = vpop.permute.xlu0 %4256
  %4258 = vrot.lane.b32.xlu0 %v51, 8
  %v4259 = vpop.permute.xlu0 %4258
  %4260 = vrot.lane.b32.xlu0 %v52, 8
  %v4261 = vpop.permute.xlu0 %4260
  %4262 = vrot.lane.b32.xlu0 %v53, 8
  %v4263 = vpop.permute.xlu0 %4262
  %4264 = vrot.lane.b32.xlu0 %v54, 8
  %v4265 = vpop.permute.xlu0 %4264
  %4266 = vrot.lane.b32.xlu0 %v55, 8
  %v4267 = vpop.permute.xlu0 %4266
  %4268 = vrot.lane.b32.xlu0 %v56, 8
  %v4269 = vpop.permute.xlu0 %4268
  %4270 = vrot.lane.b32.xlu0 %v57, 8
  %v4271 = vpop.permute.xlu0 %4270
  %vm4272 = vcmask 64512
  %v4273 = vsel %vm4272, %v4251, %v4253
  %v4274 = vsel %vm4272, %v4253, %v4255
  %v4275 = vsel %vm4272, %v4255, %v4257
  %v4276 = vsel %vm4272, %v4257, %v4259
  %v4277 = vsel %vm4272, %v4259, %v4261
  %v4278 = vsel %vm4272, %v4261, %v4263
  %v4279 = vsel %vm4272, %v4263, %v4265
  %v4280 = vsel %vm4272, %v4265, %v4267
  %v4281 = vsel %vm4272, %v4267, %v4269
  %v4282 = vsel %vm4272, %v4269, %v4271
  %v4284 = vsel %vm91, %v4249, 0
  %v4287 = vsel %vm95, %v4273, 0
  %v4290 = vsel %vm95, %v4274, 0
  %v4293 = vsel %vm95, %v4275, 0
  %v4296 = vsel %vm95, %v4276, 0
  %v4299 = vsel %vm95, %v4277, 0
  %v4302 = vsel %vm95, %v4278, 0
  %v4305 = vsel %vm95, %v4279, 0
  %v4308 = vsel %vm95, %v4280, 0
  %v4311 = vsel %vm95, %v4281, 0
  %v4314 = vsel %vm95, %v4282, 0
  %4316 = vmatprep.subr.bf16.mxu0 0
  %4317 = vmatpush1.bf16.msra.mxu0 0
  %4318 = vmatprep.subr.bf16.mxu0 0
  %4319 = vmatpush1.bf16.msra.mxu0 0
  %4320 = vmatprep.subr.bf16.mxu0 0
  %4321 = vmatpush1.bf16.msra.mxu0 0
  %4322 = vmatprep.subr.bf16.mxu0 0
  %4323 = vmatpush1.bf16.msra.mxu0 0
  %4324 = vmatprep.subr.bf16.mxu0 0
  %4325 = vmatpush1.bf16.msra.mxu0 0
  %4326 = vmatprep.subr.bf16.mxu0 0
  %4327 = vmatpush1.bf16.msra.mxu0 0
  %4328 = vmatprep.subr.bf16.mxu0 0
  %4329 = vmatpush1.bf16.msra.mxu0 0
  %4330 = vmatprep.subr.bf16.mxu0 %v4290
  %4331 = vmatpush1.bf16.msra.mxu0 %v4287
  %4332 = vmatprep.subr.bf16.mxu0 0
  %4333 = vmatpush2.bf16.msra.mxu0 0
  %4334 = vmatprep.subr.bf16.mxu0 0
  %4335 = vmatpush2.bf16.msra.mxu0 0
  %4336 = vmatprep.subr.bf16.mxu0 0
  %4337 = vmatpush2.bf16.msra.mxu0 0
  %4338 = vmatprep.subr.bf16.mxu0 0
  %4339 = vmatpush2.bf16.msra.mxu0 0
  %4340 = vmatprep.subr.bf16.mxu0 0
  %4341 = vmatpush2.bf16.msra.mxu0 0
  %4342 = vmatprep.subr.bf16.mxu0 0
  %4343 = vmatpush2.bf16.msra.mxu0 0
  %4344 = vmatprep.subr.bf16.mxu0 0
  %4345 = vmatpush2.bf16.msra.mxu0 0
  %4346 = vmatprep.subr.bf16.mxu0 0
  %4347 = vmatpush2.bf16.msra.mxu0 0
  %4348 = vmatprep.mubr.bf16.mxu0 0
  %4349 = vmatmul.mubr.bf16.gmra.mxu0 %v4284
  %v4350 = vpop.f32.mrf.mxu0
  %v4351 = vadd.f32 0.0, %v4350
  %v4352 = vpop.f32.mrf.mxu0
  %v4353 = vadd.f32 0.0, %v4352
  %v4354 = vpop.f32.mrf.mxu0
  %v4355 = vpop.f32.mrf.mxu0
  %4356 = vdwg.mxu0
  %4357 = vmatprep.subr.bf16.mxu0 0
  %4358 = vmatpush1.bf16.msra.mxu0 0
  %4359 = vmatprep.subr.bf16.mxu0 0
  %4360 = vmatpush1.bf16.msra.mxu0 0
  %4361 = vmatprep.subr.bf16.mxu0 0
  %4362 = vmatpush1.bf16.msra.mxu0 0
  %4363 = vmatprep.subr.bf16.mxu0 0
  %4364 = vmatpush1.bf16.msra.mxu0 0
  %4365 = vmatprep.subr.bf16.mxu0 0
  %4366 = vmatpush1.bf16.msra.mxu0 0
  %4367 = vmatprep.subr.bf16.mxu0 0
  %4368 = vmatpush1.bf16.msra.mxu0 0
  %4369 = vmatprep.subr.bf16.mxu0 0
  %4370 = vmatpush1.bf16.msra.mxu0 0
  %4371 = vmatprep.subr.bf16.mxu0 %v4296
  %4372 = vmatpush1.bf16.msra.mxu0 %v4293
  %4373 = vmatprep.subr.bf16.mxu0 0
  %4374 = vmatpush2.bf16.msra.mxu0 0
  %4375 = vmatprep.subr.bf16.mxu0 0
  %4376 = vmatpush2.bf16.msra.mxu0 0
  %4377 = vmatprep.subr.bf16.mxu0 0
  %4378 = vmatpush2.bf16.msra.mxu0 0
  %4379 = vmatprep.subr.bf16.mxu0 0
  %4380 = vmatpush2.bf16.msra.mxu0 0
  %4381 = vmatprep.subr.bf16.mxu0 0
  %4382 = vmatpush2.bf16.msra.mxu0 0
  %4383 = vmatprep.subr.bf16.mxu0 0
  %4384 = vmatpush2.bf16.msra.mxu0 0
  %4385 = vmatprep.subr.bf16.mxu0 0
  %4386 = vmatpush2.bf16.msra.mxu0 0
  %4387 = vmatprep.subr.bf16.mxu0 0
  %4388 = vmatpush2.bf16.msra.mxu0 0
  %4389 = vmatprep.mubr.bf16.mxu0 0
  %4390 = vmatmul.mubr.bf16.gmra.mxu0 %v4284
  %v4391 = vpop.f32.mrf.mxu0
  %v4392 = vadd.f32 0.0, %v4391
  %v4393 = vpop.f32.mrf.mxu0
  %v4394 = vadd.f32 0.0, %v4393
  %v4395 = vpop.f32.mrf.mxu0
  %v4396 = vpop.f32.mrf.mxu0
  %4397 = vdwg.mxu0
  %4398 = vmatprep.subr.bf16.mxu0 0
  %4399 = vmatpush1.bf16.msra.mxu0 0
  %4400 = vmatprep.subr.bf16.mxu0 0
  %4401 = vmatpush1.bf16.msra.mxu0 0
  %4402 = vmatprep.subr.bf16.mxu0 0
  %4403 = vmatpush1.bf16.msra.mxu0 0
  %4404 = vmatprep.subr.bf16.mxu0 0
  %4405 = vmatpush1.bf16.msra.mxu0 0
  %4406 = vmatprep.subr.bf16.mxu0 0
  %4407 = vmatpush1.bf16.msra.mxu0 0
  %4408 = vmatprep.subr.bf16.mxu0 0
  %4409 = vmatpush1.bf16.msra.mxu0 0
  %4410 = vmatprep.subr.bf16.mxu0 0
  %4411 = vmatpush1.bf16.msra.mxu0 0
  %4412 = vmatprep.subr.bf16.mxu0 %v4302
  %4413 = vmatpush1.bf16.msra.mxu0 %v4299
  %4414 = vmatprep.subr.bf16.mxu0 0
  %4415 = vmatpush2.bf16.msra.mxu0 0
  %4416 = vmatprep.subr.bf16.mxu0 0
  %4417 = vmatpush2.bf16.msra.mxu0 0
  %4418 = vmatprep.subr.bf16.mxu0 0
  %4419 = vmatpush2.bf16.msra.mxu0 0
  %4420 = vmatprep.subr.bf16.mxu0 0
  %4421 = vmatpush2.bf16.msra.mxu0 0
  %4422 = vmatprep.subr.bf16.mxu0 0
  %4423 = vmatpush2.bf16.msra.mxu0 0
  %4424 = vmatprep.subr.bf16.mxu0 0
  %4425 = vmatpush2.bf16.msra.mxu0 0
  %4426 = vmatprep.subr.bf16.mxu0 0
  %4427 = vmatpush2.bf16.msra.mxu0 0
  %4428 = vmatprep.subr.bf16.mxu0 0
  %4429 = vmatpush2.bf16.msra.mxu0 0
  %4430 = vmatprep.mubr.bf16.mxu0 0
  %4431 = vmatmul.mubr.bf16.gmra.mxu0 %v4284
  %v4432 = vpop.f32.mrf.mxu0
  %v4433 = vadd.f32 0.0, %v4432
  %v4434 = vpop.f32.mrf.mxu0
  %v4435 = vadd.f32 0.0, %v4434
  %v4436 = vpop.f32.mrf.mxu0
  %v4437 = vpop.f32.mrf.mxu0
  %4438 = vdwg.mxu0
  %4439 = vmatprep.subr.bf16.mxu0 0
  %4440 = vmatpush1.bf16.msra.mxu0 0
  %4441 = vmatprep.subr.bf16.mxu0 0
  %4442 = vmatpush1.bf16.msra.mxu0 0
  %4443 = vmatprep.subr.bf16.mxu0 0
  %4444 = vmatpush1.bf16.msra.mxu0 0
  %4445 = vmatprep.subr.bf16.mxu0 0
  %4446 = vmatpush1.bf16.msra.mxu0 0
  %4447 = vmatprep.subr.bf16.mxu0 0
  %4448 = vmatpush1.bf16.msra.mxu0 0
  %4449 = vmatprep.subr.bf16.mxu0 0
  %4450 = vmatpush1.bf16.msra.mxu0 0
  %4451 = vmatprep.subr.bf16.mxu0 0
  %4452 = vmatpush1.bf16.msra.mxu0 0
  %4453 = vmatprep.subr.bf16.mxu0 %v4308
  %4454 = vmatpush1.bf16.msra.mxu0 %v4305
  %4455 = vmatprep.subr.bf16.mxu0 0
  %4456 = vmatpush2.bf16.msra.mxu0 0
  %4457 = vmatprep.subr.bf16.mxu0 0
  %4458 = vmatpush2.bf16.msra.mxu0 0
  %4459 = vmatprep.subr.bf16.mxu0 0
  %4460 = vmatpush2.bf16.msra.mxu0 0
  %4461 = vmatprep.subr.bf16.mxu0 0
  %4462 = vmatpush2.bf16.msra.mxu0 0
  %4463 = vmatprep.subr.bf16.mxu0 0
  %4464 = vmatpush2.bf16.msra.mxu0 0
  %4465 = vmatprep.subr.bf16.mxu0 0
  %4466 = vmatpush2.bf16.msra.mxu0 0
  %4467 = vmatprep.subr.bf16.mxu0 0
  %4468 = vmatpush2.bf16.msra.mxu0 0
  %4469 = vmatprep.subr.bf16.mxu0 0
  %4470 = vmatpush2.bf16.msra.mxu0 0
  %4471 = vmatprep.mubr.bf16.mxu0 0
  %4472 = vmatmul.mubr.bf16.gmra.mxu0 %v4284
  %v4473 = vpop.f32.mrf.mxu0
  %v4474 = vadd.f32 0.0, %v4473
  %v4475 = vpop.f32.mrf.mxu0
  %v4476 = vadd.f32 0.0, %v4475
  %v4477 = vpop.f32.mrf.mxu0
  %v4478 = vpop.f32.mrf.mxu0
  %4479 = vdwg.mxu0
  %4480 = vmatprep.subr.bf16.mxu0 0
  %4481 = vmatpush1.bf16.msra.mxu0 0
  %4482 = vmatprep.subr.bf16.mxu0 0
  %4483 = vmatpush1.bf16.msra.mxu0 0
  %4484 = vmatprep.subr.bf16.mxu0 0
  %4485 = vmatpush1.bf16.msra.mxu0 0
  %4486 = vmatprep.subr.bf16.mxu0 0
  %4487 = vmatpush1.bf16.msra.mxu0 0
  %4488 = vmatprep.subr.bf16.mxu0 0
  %4489 = vmatpush1.bf16.msra.mxu0 0
  %4490 = vmatprep.subr.bf16.mxu0 0
  %4491 = vmatpush1.bf16.msra.mxu0 0
  %4492 = vmatprep.subr.bf16.mxu0 0
  %4493 = vmatpush1.bf16.msra.mxu0 0
  %4494 = vmatprep.subr.bf16.mxu0 %v4314
  %4495 = vmatpush1.bf16.msra.mxu0 %v4311
  %4496 = vmatprep.subr.bf16.mxu0 0
  %4497 = vmatpush2.bf16.msra.mxu0 0
  %4498 = vmatprep.subr.bf16.mxu0 0
  %4499 = vmatpush2.bf16.msra.mxu0 0
  %4500 = vmatprep.subr.bf16.mxu0 0
  %4501 = vmatpush2.bf16.msra.mxu0 0
  %4502 = vmatprep.subr.bf16.mxu0 0
  %4503 = vmatpush2.bf16.msra.mxu0 0
  %4504 = vmatprep.subr.bf16.mxu0 0
  %4505 = vmatpush2.bf16.msra.mxu0 0
  %4506 = vmatprep.subr.bf16.mxu0 0
  %4507 = vmatpush2.bf16.msra.mxu0 0
  %4508 = vmatprep.subr.bf16.mxu0 0
  %4509 = vmatpush2.bf16.msra.mxu0 0
  %4510 = vmatprep.subr.bf16.mxu0 0
  %4511 = vmatpush2.bf16.msra.mxu0 0
  %4512 = vmatprep.mubr.bf16.mxu0 0
  %4513 = vmatmul.mubr.bf16.gmra.mxu0 %v4284
  %v4514 = vpop.f32.mrf.mxu0
  %v4515 = vadd.f32 0.0, %v4514
  %v4516 = vpop.f32.mrf.mxu0
  %v4517 = vadd.f32 0.0, %v4516
  %v4518 = vpop.f32.mrf.mxu0
  %v4519 = vpop.f32.mrf.mxu0
  %4520 = vdwg.mxu0
  %v4521 = vadd.f32 %v4238, %v4351
  %v4522 = vadd.f32 %v4239, %v4353
  %v4523 = vadd.f32 %v4240, %v4392
  %v4524 = vadd.f32 %v4241, %v4394
  %v4525 = vadd.f32 %v4242, %v4433
  %v4526 = vadd.f32 %v4243, %v4435
  %v4527 = vadd.f32 %v4244, %v4474
  %v4528 = vadd.f32 %v4245, %v4476
  %v4529 = vadd.f32 %v4246, %v4515
  %v4530 = vadd.f32 %v4247, %v4517
  %v4531 = vunpack.c.h.b16 %v24
  %v4532 = vpack.c.b16 %v4531, %v4531
  %4533 = vrot.lane.b32.xlu0 %v47, 7
  %v4534 = vpop.permute.xlu0 %4533
  %4535 = vrot.lane.b32.xlu0 %v48, 7
  %v4536 = vpop.permute.xlu0 %4535
  %4537 = vrot.lane.b32.xlu0 %v49, 7
  %v4538 = vpop.permute.xlu0 %4537
  %4539 = vrot.lane.b32.xlu0 %v50, 7
  %v4540 = vpop.permute.xlu0 %4539
  %4541 = vrot.lane.b32.xlu0 %v51, 7
  %v4542 = vpop.permute.xlu0 %4541
  %4543 = vrot.lane.b32.xlu0 %v52, 7
  %v4544 = vpop.permute.xlu0 %4543
  %4545 = vrot.lane.b32.xlu0 %v53, 7
  %v4546 = vpop.permute.xlu0 %4545
  %4547 = vrot.lane.b32.xlu0 %v54, 7
  %v4548 = vpop.permute.xlu0 %4547
  %4549 = vrot.lane.b32.xlu0 %v55, 7
  %v4550 = vpop.permute.xlu0 %4549
  %4551 = vrot.lane.b32.xlu0 %v56, 7
  %v4552 = vpop.permute.xlu0 %4551
  %4553 = vrot.lane.b32.xlu0 %v57, 7
  %v4554 = vpop.permute.xlu0 %4553
  %vm4555 = vcmask 56320
  %v4556 = vsel %vm4555, %v4534, %v4536
  %v4557 = vsel %vm4555, %v4536, %v4538
  %v4558 = vsel %vm4555, %v4538, %v4540
  %v4559 = vsel %vm4555, %v4540, %v4542
  %v4560 = vsel %vm4555, %v4542, %v4544
  %v4561 = vsel %vm4555, %v4544, %v4546
  %v4562 = vsel %vm4555, %v4546, %v4548
  %v4563 = vsel %vm4555, %v4548, %v4550
  %v4564 = vsel %vm4555, %v4550, %v4552
  %v4565 = vsel %vm4555, %v4552, %v4554
  %v4567 = vsel %vm91, %v4532, 0
  %v4570 = vsel %vm95, %v4556, 0
  %v4573 = vsel %vm95, %v4557, 0
  %v4576 = vsel %vm95, %v4558, 0
  %v4579 = vsel %vm95, %v4559, 0
  %v4582 = vsel %vm95, %v4560, 0
  %v4585 = vsel %vm95, %v4561, 0
  %v4588 = vsel %vm95, %v4562, 0
  %v4591 = vsel %vm95, %v4563, 0
  %v4594 = vsel %vm95, %v4564, 0
  %v4597 = vsel %vm95, %v4565, 0
  %4599 = vmatprep.subr.bf16.mxu0 0
  %4600 = vmatpush1.bf16.msra.mxu0 0
  %4601 = vmatprep.subr.bf16.mxu0 0
  %4602 = vmatpush1.bf16.msra.mxu0 0
  %4603 = vmatprep.subr.bf16.mxu0 0
  %4604 = vmatpush1.bf16.msra.mxu0 0
  %4605 = vmatprep.subr.bf16.mxu0 0
  %4606 = vmatpush1.bf16.msra.mxu0 0
  %4607 = vmatprep.subr.bf16.mxu0 0
  %4608 = vmatpush1.bf16.msra.mxu0 0
  %4609 = vmatprep.subr.bf16.mxu0 0
  %4610 = vmatpush1.bf16.msra.mxu0 0
  %4611 = vmatprep.subr.bf16.mxu0 0
  %4612 = vmatpush1.bf16.msra.mxu0 0
  %4613 = vmatprep.subr.bf16.mxu0 %v4573
  %4614 = vmatpush1.bf16.msra.mxu0 %v4570
  %4615 = vmatprep.subr.bf16.mxu0 0
  %4616 = vmatpush2.bf16.msra.mxu0 0
  %4617 = vmatprep.subr.bf16.mxu0 0
  %4618 = vmatpush2.bf16.msra.mxu0 0
  %4619 = vmatprep.subr.bf16.mxu0 0
  %4620 = vmatpush2.bf16.msra.mxu0 0
  %4621 = vmatprep.subr.bf16.mxu0 0
  %4622 = vmatpush2.bf16.msra.mxu0 0
  %4623 = vmatprep.subr.bf16.mxu0 0
  %4624 = vmatpush2.bf16.msra.mxu0 0
  %4625 = vmatprep.subr.bf16.mxu0 0
  %4626 = vmatpush2.bf16.msra.mxu0 0
  %4627 = vmatprep.subr.bf16.mxu0 0
  %4628 = vmatpush2.bf16.msra.mxu0 0
  %4629 = vmatprep.subr.bf16.mxu0 0
  %4630 = vmatpush2.bf16.msra.mxu0 0
  %4631 = vmatprep.mubr.bf16.mxu0 0
  %4632 = vmatmul.mubr.bf16.gmra.mxu0 %v4567
  %v4633 = vpop.f32.mrf.mxu0
  %v4634 = vadd.f32 0.0, %v4633
  %v4635 = vpop.f32.mrf.mxu0
  %v4636 = vadd.f32 0.0, %v4635
  %v4637 = vpop.f32.mrf.mxu0
  %v4638 = vpop.f32.mrf.mxu0
  %4639 = vdwg.mxu0
  %4640 = vmatprep.subr.bf16.mxu0 0
  %4641 = vmatpush1.bf16.msra.mxu0 0
  %4642 = vmatprep.subr.bf16.mxu0 0
  %4643 = vmatpush1.bf16.msra.mxu0 0
  %4644 = vmatprep.subr.bf16.mxu0 0
  %4645 = vmatpush1.bf16.msra.mxu0 0
  %4646 = vmatprep.subr.bf16.mxu0 0
  %4647 = vmatpush1.bf16.msra.mxu0 0
  %4648 = vmatprep.subr.bf16.mxu0 0
  %4649 = vmatpush1.bf16.msra.mxu0 0
  %4650 = vmatprep.subr.bf16.mxu0 0
  %4651 = vmatpush1.bf16.msra.mxu0 0
  %4652 = vmatprep.subr.bf16.mxu0 0
  %4653 = vmatpush1.bf16.msra.mxu0 0
  %4654 = vmatprep.subr.bf16.mxu0 %v4579
  %4655 = vmatpush1.bf16.msra.mxu0 %v4576
  %4656 = vmatprep.subr.bf16.mxu0 0
  %4657 = vmatpush2.bf16.msra.mxu0 0
  %4658 = vmatprep.subr.bf16.mxu0 0
  %4659 = vmatpush2.bf16.msra.mxu0 0
  %4660 = vmatprep.subr.bf16.mxu0 0
  %4661 = vmatpush2.bf16.msra.mxu0 0
  %4662 = vmatprep.subr.bf16.mxu0 0
  %4663 = vmatpush2.bf16.msra.mxu0 0
  %4664 = vmatprep.subr.bf16.mxu0 0
  %4665 = vmatpush2.bf16.msra.mxu0 0
  %4666 = vmatprep.subr.bf16.mxu0 0
  %4667 = vmatpush2.bf16.msra.mxu0 0
  %4668 = vmatprep.subr.bf16.mxu0 0
  %4669 = vmatpush2.bf16.msra.mxu0 0
  %4670 = vmatprep.subr.bf16.mxu0 0
  %4671 = vmatpush2.bf16.msra.mxu0 0
  %4672 = vmatprep.mubr.bf16.mxu0 0
  %4673 = vmatmul.mubr.bf16.gmra.mxu0 %v4567
  %v4674 = vpop.f32.mrf.mxu0
  %v4675 = vadd.f32 0.0, %v4674
  %v4676 = vpop.f32.mrf.mxu0
  %v4677 = vadd.f32 0.0, %v4676
  %v4678 = vpop.f32.mrf.mxu0
  %v4679 = vpop.f32.mrf.mxu0
  %4680 = vdwg.mxu0
  %4681 = vmatprep.subr.bf16.mxu0 0
  %4682 = vmatpush1.bf16.msra.mxu0 0
  %4683 = vmatprep.subr.bf16.mxu0 0
  %4684 = vmatpush1.bf16.msra.mxu0 0
  %4685 = vmatprep.subr.bf16.mxu0 0
  %4686 = vmatpush1.bf16.msra.mxu0 0
  %4687 = vmatprep.subr.bf16.mxu0 0
  %4688 = vmatpush1.bf16.msra.mxu0 0
  %4689 = vmatprep.subr.bf16.mxu0 0
  %4690 = vmatpush1.bf16.msra.mxu0 0
  %4691 = vmatprep.subr.bf16.mxu0 0
  %4692 = vmatpush1.bf16.msra.mxu0 0
  %4693 = vmatprep.subr.bf16.mxu0 0
  %4694 = vmatpush1.bf16.msra.mxu0 0
  %4695 = vmatprep.subr.bf16.mxu0 %v4585
  %4696 = vmatpush1.bf16.msra.mxu0 %v4582
  %4697 = vmatprep.subr.bf16.mxu0 0
  %4698 = vmatpush2.bf16.msra.mxu0 0
  %4699 = vmatprep.subr.bf16.mxu0 0
  %4700 = vmatpush2.bf16.msra.mxu0 0
  %4701 = vmatprep.subr.bf16.mxu0 0
  %4702 = vmatpush2.bf16.msra.mxu0 0
  %4703 = vmatprep.subr.bf16.mxu0 0
  %4704 = vmatpush2.bf16.msra.mxu0 0
  %4705 = vmatprep.subr.bf16.mxu0 0
  %4706 = vmatpush2.bf16.msra.mxu0 0
  %4707 = vmatprep.subr.bf16.mxu0 0
  %4708 = vmatpush2.bf16.msra.mxu0 0
  %4709 = vmatprep.subr.bf16.mxu0 0
  %4710 = vmatpush2.bf16.msra.mxu0 0
  %4711 = vmatprep.subr.bf16.mxu0 0
  %4712 = vmatpush2.bf16.msra.mxu0 0
  %4713 = vmatprep.mubr.bf16.mxu0 0
  %4714 = vmatmul.mubr.bf16.gmra.mxu0 %v4567
  %v4715 = vpop.f32.mrf.mxu0
  %v4716 = vadd.f32 0.0, %v4715
  %v4717 = vpop.f32.mrf.mxu0
  %v4718 = vadd.f32 0.0, %v4717
  %v4719 = vpop.f32.mrf.mxu0
  %v4720 = vpop.f32.mrf.mxu0
  %4721 = vdwg.mxu0
  %4722 = vmatprep.subr.bf16.mxu0 0
  %4723 = vmatpush1.bf16.msra.mxu0 0
  %4724 = vmatprep.subr.bf16.mxu0 0
  %4725 = vmatpush1.bf16.msra.mxu0 0
  %4726 = vmatprep.subr.bf16.mxu0 0
  %4727 = vmatpush1.bf16.msra.mxu0 0
  %4728 = vmatprep.subr.bf16.mxu0 0
  %4729 = vmatpush1.bf16.msra.mxu0 0
  %4730 = vmatprep.subr.bf16.mxu0 0
  %4731 = vmatpush1.bf16.msra.mxu0 0
  %4732 = vmatprep.subr.bf16.mxu0 0
  %4733 = vmatpush1.bf16.msra.mxu0 0
  %4734 = vmatprep.subr.bf16.mxu0 0
  %4735 = vmatpush1.bf16.msra.mxu0 0
  %4736 = vmatprep.subr.bf16.mxu0 %v4591
  %4737 = vmatpush1.bf16.msra.mxu0 %v4588
  %4738 = vmatprep.subr.bf16.mxu0 0
  %4739 = vmatpush2.bf16.msra.mxu0 0
  %4740 = vmatprep.subr.bf16.mxu0 0
  %4741 = vmatpush2.bf16.msra.mxu0 0
  %4742 = vmatprep.subr.bf16.mxu0 0
  %4743 = vmatpush2.bf16.msra.mxu0 0
  %4744 = vmatprep.subr.bf16.mxu0 0
  %4745 = vmatpush2.bf16.msra.mxu0 0
  %4746 = vmatprep.subr.bf16.mxu0 0
  %4747 = vmatpush2.bf16.msra.mxu0 0
  %4748 = vmatprep.subr.bf16.mxu0 0
  %4749 = vmatpush2.bf16.msra.mxu0 0
  %4750 = vmatprep.subr.bf16.mxu0 0
  %4751 = vmatpush2.bf16.msra.mxu0 0
  %4752 = vmatprep.subr.bf16.mxu0 0
  %4753 = vmatpush2.bf16.msra.mxu0 0
  %4754 = vmatprep.mubr.bf16.mxu0 0
  %4755 = vmatmul.mubr.bf16.gmra.mxu0 %v4567
  %v4756 = vpop.f32.mrf.mxu0
  %v4757 = vadd.f32 0.0, %v4756
  %v4758 = vpop.f32.mrf.mxu0
  %v4759 = vadd.f32 0.0, %v4758
  %v4760 = vpop.f32.mrf.mxu0
  %v4761 = vpop.f32.mrf.mxu0
  %4762 = vdwg.mxu0
  %4763 = vmatprep.subr.bf16.mxu0 0
  %4764 = vmatpush1.bf16.msra.mxu0 0
  %4765 = vmatprep.subr.bf16.mxu0 0
  %4766 = vmatpush1.bf16.msra.mxu0 0
  %4767 = vmatprep.subr.bf16.mxu0 0
  %4768 = vmatpush1.bf16.msra.mxu0 0
  %4769 = vmatprep.subr.bf16.mxu0 0
  %4770 = vmatpush1.bf16.msra.mxu0 0
  %4771 = vmatprep.subr.bf16.mxu0 0
  %4772 = vmatpush1.bf16.msra.mxu0 0
  %4773 = vmatprep.subr.bf16.mxu0 0
  %4774 = vmatpush1.bf16.msra.mxu0 0
  %4775 = vmatprep.subr.bf16.mxu0 0
  %4776 = vmatpush1.bf16.msra.mxu0 0
  %4777 = vmatprep.subr.bf16.mxu0 %v4597
  %4778 = vmatpush1.bf16.msra.mxu0 %v4594
  %4779 = vmatprep.subr.bf16.mxu0 0
  %4780 = vmatpush2.bf16.msra.mxu0 0
  %4781 = vmatprep.subr.bf16.mxu0 0
  %4782 = vmatpush2.bf16.msra.mxu0 0
  %4783 = vmatprep.subr.bf16.mxu0 0
  %4784 = vmatpush2.bf16.msra.mxu0 0
  %4785 = vmatprep.subr.bf16.mxu0 0
  %4786 = vmatpush2.bf16.msra.mxu0 0
  %4787 = vmatprep.subr.bf16.mxu0 0
  %4788 = vmatpush2.bf16.msra.mxu0 0
  %4789 = vmatprep.subr.bf16.mxu0 0
  %4790 = vmatpush2.bf16.msra.mxu0 0
  %4791 = vmatprep.subr.bf16.mxu0 0
  %4792 = vmatpush2.bf16.msra.mxu0 0
  %4793 = vmatprep.subr.bf16.mxu0 0
  %4794 = vmatpush2.bf16.msra.mxu0 0
  %4795 = vmatprep.mubr.bf16.mxu0 0
  %4796 = vmatmul.mubr.bf16.gmra.mxu0 %v4567
  %v4797 = vpop.f32.mrf.mxu0
  %v4798 = vadd.f32 0.0, %v4797
  %v4799 = vpop.f32.mrf.mxu0
  %v4800 = vadd.f32 0.0, %v4799
  %v4801 = vpop.f32.mrf.mxu0
  %v4802 = vpop.f32.mrf.mxu0
  %4803 = vdwg.mxu0
  %v4804 = vadd.f32 %v4521, %v4634
  %v4805 = vadd.f32 %v4522, %v4636
  %v4806 = vadd.f32 %v4523, %v4675
  %v4807 = vadd.f32 %v4524, %v4677
  %v4808 = vadd.f32 %v4525, %v4716
  %v4809 = vadd.f32 %v4526, %v4718
  %v4810 = vadd.f32 %v4527, %v4757
  %v4811 = vadd.f32 %v4528, %v4759
  %v4812 = vadd.f32 %v4529, %v4798
  %v4813 = vadd.f32 %v4530, %v4800
  %4814 = vrot.lane.b32.xlu0 %v4532, 120
  %v4815 = vpop.permute.xlu0 %4814
  %4816 = vrot.lane.b32.xlu0 %v47, 6
  %v4817 = vpop.permute.xlu0 %4816
  %4818 = vrot.lane.b32.xlu0 %v48, 6
  %v4819 = vpop.permute.xlu0 %4818
  %4820 = vrot.lane.b32.xlu0 %v49, 6
  %v4821 = vpop.permute.xlu0 %4820
  %4822 = vrot.lane.b32.xlu0 %v50, 6
  %v4823 = vpop.permute.xlu0 %4822
  %4824 = vrot.lane.b32.xlu0 %v51, 6
  %v4825 = vpop.permute.xlu0 %4824
  %4826 = vrot.lane.b32.xlu0 %v52, 6
  %v4827 = vpop.permute.xlu0 %4826
  %4828 = vrot.lane.b32.xlu0 %v53, 6
  %v4829 = vpop.permute.xlu0 %4828
  %4830 = vrot.lane.b32.xlu0 %v54, 6
  %v4831 = vpop.permute.xlu0 %4830
  %4832 = vrot.lane.b32.xlu0 %v55, 6
  %v4833 = vpop.permute.xlu0 %4832
  %4834 = vrot.lane.b32.xlu0 %v56, 6
  %v4835 = vpop.permute.xlu0 %4834
  %4836 = vrot.lane.b32.xlu0 %v57, 6
  %v4837 = vpop.permute.xlu0 %4836
  %vm4838 = vcmask 48128
  %v4839 = vsel %vm4838, %v4817, %v4819
  %v4840 = vsel %vm4838, %v4819, %v4821
  %v4841 = vsel %vm4838, %v4821, %v4823
  %v4842 = vsel %vm4838, %v4823, %v4825
  %v4843 = vsel %vm4838, %v4825, %v4827
  %v4844 = vsel %vm4838, %v4827, %v4829
  %v4845 = vsel %vm4838, %v4829, %v4831
  %v4846 = vsel %vm4838, %v4831, %v4833
  %v4847 = vsel %vm4838, %v4833, %v4835
  %v4848 = vsel %vm4838, %v4835, %v4837
  %v4850 = vsel %vm91, %v4815, 0
  %v4853 = vsel %vm95, %v4839, 0
  %v4856 = vsel %vm95, %v4840, 0
  %v4859 = vsel %vm95, %v4841, 0
  %v4862 = vsel %vm95, %v4842, 0
  %v4865 = vsel %vm95, %v4843, 0
  %v4868 = vsel %vm95, %v4844, 0
  %v4871 = vsel %vm95, %v4845, 0
  %v4874 = vsel %vm95, %v4846, 0
  %v4877 = vsel %vm95, %v4847, 0
  %v4880 = vsel %vm95, %v4848, 0
  %4882 = vmatprep.subr.bf16.mxu0 0
  %4883 = vmatpush1.bf16.msra.mxu0 0
  %4884 = vmatprep.subr.bf16.mxu0 0
  %4885 = vmatpush1.bf16.msra.mxu0 0
  %4886 = vmatprep.subr.bf16.mxu0 0
  %4887 = vmatpush1.bf16.msra.mxu0 0
  %4888 = vmatprep.subr.bf16.mxu0 0
  %4889 = vmatpush1.bf16.msra.mxu0 0
  %4890 = vmatprep.subr.bf16.mxu0 0
  %4891 = vmatpush1.bf16.msra.mxu0 0
  %4892 = vmatprep.subr.bf16.mxu0 0
  %4893 = vmatpush1.bf16.msra.mxu0 0
  %4894 = vmatprep.subr.bf16.mxu0 0
  %4895 = vmatpush1.bf16.msra.mxu0 0
  %4896 = vmatprep.subr.bf16.mxu0 %v4856
  %4897 = vmatpush1.bf16.msra.mxu0 %v4853
  %4898 = vmatprep.subr.bf16.mxu0 0
  %4899 = vmatpush2.bf16.msra.mxu0 0
  %4900 = vmatprep.subr.bf16.mxu0 0
  %4901 = vmatpush2.bf16.msra.mxu0 0
  %4902 = vmatprep.subr.bf16.mxu0 0
  %4903 = vmatpush2.bf16.msra.mxu0 0
  %4904 = vmatprep.subr.bf16.mxu0 0
  %4905 = vmatpush2.bf16.msra.mxu0 0
  %4906 = vmatprep.subr.bf16.mxu0 0
  %4907 = vmatpush2.bf16.msra.mxu0 0
  %4908 = vmatprep.subr.bf16.mxu0 0
  %4909 = vmatpush2.bf16.msra.mxu0 0
  %4910 = vmatprep.subr.bf16.mxu0 0
  %4911 = vmatpush2.bf16.msra.mxu0 0
  %4912 = vmatprep.subr.bf16.mxu0 0
  %4913 = vmatpush2.bf16.msra.mxu0 0
  %4914 = vmatprep.mubr.bf16.mxu0 0
  %4915 = vmatmul.mubr.bf16.gmra.mxu0 %v4850
  %v4916 = vpop.f32.mrf.mxu0
  %v4917 = vadd.f32 0.0, %v4916
  %v4918 = vpop.f32.mrf.mxu0
  %v4919 = vadd.f32 0.0, %v4918
  %v4920 = vpop.f32.mrf.mxu0
  %v4921 = vpop.f32.mrf.mxu0
  %4922 = vdwg.mxu0
  %4923 = vmatprep.subr.bf16.mxu0 0
  %4924 = vmatpush1.bf16.msra.mxu0 0
  %4925 = vmatprep.subr.bf16.mxu0 0
  %4926 = vmatpush1.bf16.msra.mxu0 0
  %4927 = vmatprep.subr.bf16.mxu0 0
  %4928 = vmatpush1.bf16.msra.mxu0 0
  %4929 = vmatprep.subr.bf16.mxu0 0
  %4930 = vmatpush1.bf16.msra.mxu0 0
  %4931 = vmatprep.subr.bf16.mxu0 0
  %4932 = vmatpush1.bf16.msra.mxu0 0
  %4933 = vmatprep.subr.bf16.mxu0 0
  %4934 = vmatpush1.bf16.msra.mxu0 0
  %4935 = vmatprep.subr.bf16.mxu0 0
  %4936 = vmatpush1.bf16.msra.mxu0 0
  %4937 = vmatprep.subr.bf16.mxu0 %v4862
  %4938 = vmatpush1.bf16.msra.mxu0 %v4859
  %4939 = vmatprep.subr.bf16.mxu0 0
  %4940 = vmatpush2.bf16.msra.mxu0 0
  %4941 = vmatprep.subr.bf16.mxu0 0
  %4942 = vmatpush2.bf16.msra.mxu0 0
  %4943 = vmatprep.subr.bf16.mxu0 0
  %4944 = vmatpush2.bf16.msra.mxu0 0
  %4945 = vmatprep.subr.bf16.mxu0 0
  %4946 = vmatpush2.bf16.msra.mxu0 0
  %4947 = vmatprep.subr.bf16.mxu0 0
  %4948 = vmatpush2.bf16.msra.mxu0 0
  %4949 = vmatprep.subr.bf16.mxu0 0
  %4950 = vmatpush2.bf16.msra.mxu0 0
  %4951 = vmatprep.subr.bf16.mxu0 0
  %4952 = vmatpush2.bf16.msra.mxu0 0
  %4953 = vmatprep.subr.bf16.mxu0 0
  %4954 = vmatpush2.bf16.msra.mxu0 0
  %4955 = vmatprep.mubr.bf16.mxu0 0
  %4956 = vmatmul.mubr.bf16.gmra.mxu0 %v4850
  %v4957 = vpop.f32.mrf.mxu0
  %v4958 = vadd.f32 0.0, %v4957
  %v4959 = vpop.f32.mrf.mxu0
  %v4960 = vadd.f32 0.0, %v4959
  %v4961 = vpop.f32.mrf.mxu0
  %v4962 = vpop.f32.mrf.mxu0
  %4963 = vdwg.mxu0
  %4964 = vmatprep.subr.bf16.mxu0 0
  %4965 = vmatpush1.bf16.msra.mxu0 0
  %4966 = vmatprep.subr.bf16.mxu0 0
  %4967 = vmatpush1.bf16.msra.mxu0 0
  %4968 = vmatprep.subr.bf16.mxu0 0
  %4969 = vmatpush1.bf16.msra.mxu0 0
  %4970 = vmatprep.subr.bf16.mxu0 0
  %4971 = vmatpush1.bf16.msra.mxu0 0
  %4972 = vmatprep.subr.bf16.mxu0 0
  %4973 = vmatpush1.bf16.msra.mxu0 0
  %4974 = vmatprep.subr.bf16.mxu0 0
  %4975 = vmatpush1.bf16.msra.mxu0 0
  %4976 = vmatprep.subr.bf16.mxu0 0
  %4977 = vmatpush1.bf16.msra.mxu0 0
  %4978 = vmatprep.subr.bf16.mxu0 %v4868
  %4979 = vmatpush1.bf16.msra.mxu0 %v4865
  %4980 = vmatprep.subr.bf16.mxu0 0
  %4981 = vmatpush2.bf16.msra.mxu0 0
  %4982 = vmatprep.subr.bf16.mxu0 0
  %4983 = vmatpush2.bf16.msra.mxu0 0
  %4984 = vmatprep.subr.bf16.mxu0 0
  %4985 = vmatpush2.bf16.msra.mxu0 0
  %4986 = vmatprep.subr.bf16.mxu0 0
  %4987 = vmatpush2.bf16.msra.mxu0 0
  %4988 = vmatprep.subr.bf16.mxu0 0
  %4989 = vmatpush2.bf16.msra.mxu0 0
  %4990 = vmatprep.subr.bf16.mxu0 0
  %4991 = vmatpush2.bf16.msra.mxu0 0
  %4992 = vmatprep.subr.bf16.mxu0 0
  %4993 = vmatpush2.bf16.msra.mxu0 0
  %4994 = vmatprep.subr.bf16.mxu0 0
  %4995 = vmatpush2.bf16.msra.mxu0 0
  %4996 = vmatprep.mubr.bf16.mxu0 0
  %4997 = vmatmul.mubr.bf16.gmra.mxu0 %v4850
  %v4998 = vpop.f32.mrf.mxu0
  %v4999 = vadd.f32 0.0, %v4998
  %v5000 = vpop.f32.mrf.mxu0
  %v5001 = vadd.f32 0.0, %v5000
  %v5002 = vpop.f32.mrf.mxu0
  %v5003 = vpop.f32.mrf.mxu0
  %5004 = vdwg.mxu0
  %5005 = vmatprep.subr.bf16.mxu0 0
  %5006 = vmatpush1.bf16.msra.mxu0 0
  %5007 = vmatprep.subr.bf16.mxu0 0
  %5008 = vmatpush1.bf16.msra.mxu0 0
  %5009 = vmatprep.subr.bf16.mxu0 0
  %5010 = vmatpush1.bf16.msra.mxu0 0
  %5011 = vmatprep.subr.bf16.mxu0 0
  %5012 = vmatpush1.bf16.msra.mxu0 0
  %5013 = vmatprep.subr.bf16.mxu0 0
  %5014 = vmatpush1.bf16.msra.mxu0 0
  %5015 = vmatprep.subr.bf16.mxu0 0
  %5016 = vmatpush1.bf16.msra.mxu0 0
  %5017 = vmatprep.subr.bf16.mxu0 0
  %5018 = vmatpush1.bf16.msra.mxu0 0
  %5019 = vmatprep.subr.bf16.mxu0 %v4874
  %5020 = vmatpush1.bf16.msra.mxu0 %v4871
  %5021 = vmatprep.subr.bf16.mxu0 0
  %5022 = vmatpush2.bf16.msra.mxu0 0
  %5023 = vmatprep.subr.bf16.mxu0 0
  %5024 = vmatpush2.bf16.msra.mxu0 0
  %5025 = vmatprep.subr.bf16.mxu0 0
  %5026 = vmatpush2.bf16.msra.mxu0 0
  %5027 = vmatprep.subr.bf16.mxu0 0
  %5028 = vmatpush2.bf16.msra.mxu0 0
  %5029 = vmatprep.subr.bf16.mxu0 0
  %5030 = vmatpush2.bf16.msra.mxu0 0
  %5031 = vmatprep.subr.bf16.mxu0 0
  %5032 = vmatpush2.bf16.msra.mxu0 0
  %5033 = vmatprep.subr.bf16.mxu0 0
  %5034 = vmatpush2.bf16.msra.mxu0 0
  %5035 = vmatprep.subr.bf16.mxu0 0
  %5036 = vmatpush2.bf16.msra.mxu0 0
  %5037 = vmatprep.mubr.bf16.mxu0 0
  %5038 = vmatmul.mubr.bf16.gmra.mxu0 %v4850
  %v5039 = vpop.f32.mrf.mxu0
  %v5040 = vadd.f32 0.0, %v5039
  %v5041 = vpop.f32.mrf.mxu0
  %v5042 = vadd.f32 0.0, %v5041
  %v5043 = vpop.f32.mrf.mxu0
  %v5044 = vpop.f32.mrf.mxu0
  %5045 = vdwg.mxu0
  %5046 = vmatprep.subr.bf16.mxu0 0
  %5047 = vmatpush1.bf16.msra.mxu0 0
  %5048 = vmatprep.subr.bf16.mxu0 0
  %5049 = vmatpush1.bf16.msra.mxu0 0
  %5050 = vmatprep.subr.bf16.mxu0 0
  %5051 = vmatpush1.bf16.msra.mxu0 0
  %5052 = vmatprep.subr.bf16.mxu0 0
  %5053 = vmatpush1.bf16.msra.mxu0 0
  %5054 = vmatprep.subr.bf16.mxu0 0
  %5055 = vmatpush1.bf16.msra.mxu0 0
  %5056 = vmatprep.subr.bf16.mxu0 0
  %5057 = vmatpush1.bf16.msra.mxu0 0
  %5058 = vmatprep.subr.bf16.mxu0 0
  %5059 = vmatpush1.bf16.msra.mxu0 0
  %5060 = vmatprep.subr.bf16.mxu0 %v4880
  %5061 = vmatpush1.bf16.msra.mxu0 %v4877
  %5062 = vmatprep.subr.bf16.mxu0 0
  %5063 = vmatpush2.bf16.msra.mxu0 0
  %5064 = vmatprep.subr.bf16.mxu0 0
  %5065 = vmatpush2.bf16.msra.mxu0 0
  %5066 = vmatprep.subr.bf16.mxu0 0
  %5067 = vmatpush2.bf16.msra.mxu0 0
  %5068 = vmatprep.subr.bf16.mxu0 0
  %5069 = vmatpush2.bf16.msra.mxu0 0
  %5070 = vmatprep.subr.bf16.mxu0 0
  %5071 = vmatpush2.bf16.msra.mxu0 0
  %5072 = vmatprep.subr.bf16.mxu0 0
  %5073 = vmatpush2.bf16.msra.mxu0 0
  %5074 = vmatprep.subr.bf16.mxu0 0
  %5075 = vmatpush2.bf16.msra.mxu0 0
  %5076 = vmatprep.subr.bf16.mxu0 0
  %5077 = vmatpush2.bf16.msra.mxu0 0
  %5078 = vmatprep.mubr.bf16.mxu0 0
  %5079 = vmatmul.mubr.bf16.gmra.mxu0 %v4850
  %v5080 = vpop.f32.mrf.mxu0
  %v5081 = vadd.f32 0.0, %v5080
  %v5082 = vpop.f32.mrf.mxu0
  %v5083 = vadd.f32 0.0, %v5082
  %v5084 = vpop.f32.mrf.mxu0
  %v5085 = vpop.f32.mrf.mxu0
  %5086 = vdwg.mxu0
  %v5087 = vadd.f32 %v4804, %v4917
  %v5088 = vadd.f32 %v4805, %v4919
  %v5089 = vadd.f32 %v4806, %v4958
  %v5090 = vadd.f32 %v4807, %v4960
  %v5091 = vadd.f32 %v4808, %v4999
  %v5092 = vadd.f32 %v4809, %v5001
  %v5093 = vadd.f32 %v4810, %v5040
  %v5094 = vadd.f32 %v4811, %v5042
  %v5095 = vadd.f32 %v4812, %v5081
  %v5096 = vadd.f32 %v4813, %v5083
  %5097 = vrot.lane.b32.xlu0 %v4532, 112
  %v5098 = vpop.permute.xlu0 %5097
  %v5099 = vunpack.c.h.b16 %v23
  %v5100 = vpack.c.b16 %v5099, %v5099
  %5101 = vrot.lane.b32.xlu0 %v48, 56
  %v5102 = vpop.permute.xlu0 %5101
  %5103 = vrot.lane.b32.xlu0 %v49, 56
  %v5104 = vpop.permute.xlu0 %5103
  %5105 = vrot.lane.b32.xlu0 %v50, 56
  %v5106 = vpop.permute.xlu0 %5105
  %5107 = vrot.lane.b32.xlu0 %v51, 56
  %v5108 = vpop.permute.xlu0 %5107
  %5109 = vrot.lane.b32.xlu0 %v52, 56
  %v5110 = vpop.permute.xlu0 %5109
  %5111 = vrot.lane.b32.xlu0 %v53, 56
  %v5112 = vpop.permute.xlu0 %5111
  %5113 = vrot.lane.b32.xlu0 %v54, 56
  %v5114 = vpop.permute.xlu0 %5113
  %5115 = vrot.lane.b32.xlu0 %v55, 56
  %v5116 = vpop.permute.xlu0 %5115
  %5117 = vrot.lane.b32.xlu0 %v56, 56
  %v5118 = vpop.permute.xlu0 %5117
  %5119 = vrot.lane.b32.xlu0 %v57, 56
  %v5120 = vpop.permute.xlu0 %5119
  %5121 = vrot.lane.b32.xlu0 %v5100, 56
  %v5122 = vpop.permute.xlu0 %5121
  %vm5123 = vcmask 457728
  %v5124 = vsel %vm5123, %v5102, %v5104
  %v5125 = vsel %vm5123, %v5104, %v5106
  %v5126 = vsel %vm5123, %v5106, %v5108
  %v5127 = vsel %vm5123, %v5108, %v5110
  %v5128 = vsel %vm5123, %v5110, %v5112
  %v5129 = vsel %vm5123, %v5112, %v5114
  %v5130 = vsel %vm5123, %v5114, %v5116
  %v5131 = vsel %vm5123, %v5116, %v5118
  %v5132 = vsel %vm5123, %v5118, %v5120
  %v5133 = vsel %vm5123, %v5120, %v5122
  %v5135 = vsel %vm91, %v5098, 0
  %v5138 = vsel %vm95, %v5124, 0
  %v5141 = vsel %vm95, %v5125, 0
  %v5144 = vsel %vm95, %v5126, 0
  %v5147 = vsel %vm95, %v5127, 0
  %v5150 = vsel %vm95, %v5128, 0
  %v5153 = vsel %vm95, %v5129, 0
  %v5156 = vsel %vm95, %v5130, 0
  %v5159 = vsel %vm95, %v5131, 0
  %v5162 = vsel %vm95, %v5132, 0
  %v5165 = vsel %vm95, %v5133, 0
  %5167 = vmatprep.subr.bf16.mxu0 0
  %5168 = vmatpush1.bf16.msra.mxu0 0
  %5169 = vmatprep.subr.bf16.mxu0 0
  %5170 = vmatpush1.bf16.msra.mxu0 0
  %5171 = vmatprep.subr.bf16.mxu0 0
  %5172 = vmatpush1.bf16.msra.mxu0 0
  %5173 = vmatprep.subr.bf16.mxu0 0
  %5174 = vmatpush1.bf16.msra.mxu0 0
  %5175 = vmatprep.subr.bf16.mxu0 0
  %5176 = vmatpush1.bf16.msra.mxu0 0
  %5177 = vmatprep.subr.bf16.mxu0 0
  %5178 = vmatpush1.bf16.msra.mxu0 0
  %5179 = vmatprep.subr.bf16.mxu0 0
  %5180 = vmatpush1.bf16.msra.mxu0 0
  %5181 = vmatprep.subr.bf16.mxu0 %v5141
  %5182 = vmatpush1.bf16.msra.mxu0 %v5138
  %5183 = vmatprep.subr.bf16.mxu0 0
  %5184 = vmatpush2.bf16.msra.mxu0 0
  %5185 = vmatprep.subr.bf16.mxu0 0
  %5186 = vmatpush2.bf16.msra.mxu0 0
  %5187 = vmatprep.subr.bf16.mxu0 0
  %5188 = vmatpush2.bf16.msra.mxu0 0
  %5189 = vmatprep.subr.bf16.mxu0 0
  %5190 = vmatpush2.bf16.msra.mxu0 0
  %5191 = vmatprep.subr.bf16.mxu0 0
  %5192 = vmatpush2.bf16.msra.mxu0 0
  %5193 = vmatprep.subr.bf16.mxu0 0
  %5194 = vmatpush2.bf16.msra.mxu0 0
  %5195 = vmatprep.subr.bf16.mxu0 0
  %5196 = vmatpush2.bf16.msra.mxu0 0
  %5197 = vmatprep.subr.bf16.mxu0 0
  %5198 = vmatpush2.bf16.msra.mxu0 0
  %5199 = vmatprep.mubr.bf16.mxu0 0
  %5200 = vmatmul.mubr.bf16.gmra.mxu0 %v5135
  %v5201 = vpop.f32.mrf.mxu0
  %v5202 = vadd.f32 0.0, %v5201
  %v5203 = vpop.f32.mrf.mxu0
  %v5204 = vadd.f32 0.0, %v5203
  %v5205 = vpop.f32.mrf.mxu0
  %v5206 = vpop.f32.mrf.mxu0
  %5207 = vdwg.mxu0
  %5208 = vmatprep.subr.bf16.mxu0 0
  %5209 = vmatpush1.bf16.msra.mxu0 0
  %5210 = vmatprep.subr.bf16.mxu0 0
  %5211 = vmatpush1.bf16.msra.mxu0 0
  %5212 = vmatprep.subr.bf16.mxu0 0
  %5213 = vmatpush1.bf16.msra.mxu0 0
  %5214 = vmatprep.subr.bf16.mxu0 0
  %5215 = vmatpush1.bf16.msra.mxu0 0
  %5216 = vmatprep.subr.bf16.mxu0 0
  %5217 = vmatpush1.bf16.msra.mxu0 0
  %5218 = vmatprep.subr.bf16.mxu0 0
  %5219 = vmatpush1.bf16.msra.mxu0 0
  %5220 = vmatprep.subr.bf16.mxu0 0
  %5221 = vmatpush1.bf16.msra.mxu0 0
  %5222 = vmatprep.subr.bf16.mxu0 %v5147
  %5223 = vmatpush1.bf16.msra.mxu0 %v5144
  %5224 = vmatprep.subr.bf16.mxu0 0
  %5225 = vmatpush2.bf16.msra.mxu0 0
  %5226 = vmatprep.subr.bf16.mxu0 0
  %5227 = vmatpush2.bf16.msra.mxu0 0
  %5228 = vmatprep.subr.bf16.mxu0 0
  %5229 = vmatpush2.bf16.msra.mxu0 0
  %5230 = vmatprep.subr.bf16.mxu0 0
  %5231 = vmatpush2.bf16.msra.mxu0 0
  %5232 = vmatprep.subr.bf16.mxu0 0
  %5233 = vmatpush2.bf16.msra.mxu0 0
  %5234 = vmatprep.subr.bf16.mxu0 0
  %5235 = vmatpush2.bf16.msra.mxu0 0
  %5236 = vmatprep.subr.bf16.mxu0 0
  %5237 = vmatpush2.bf16.msra.mxu0 0
  %5238 = vmatprep.subr.bf16.mxu0 0
  %5239 = vmatpush2.bf16.msra.mxu0 0
  %5240 = vmatprep.mubr.bf16.mxu0 0
  %5241 = vmatmul.mubr.bf16.gmra.mxu0 %v5135
  %v5242 = vpop.f32.mrf.mxu0
  %v5243 = vadd.f32 0.0, %v5242
  %v5244 = vpop.f32.mrf.mxu0
  %v5245 = vadd.f32 0.0, %v5244
  %v5246 = vpop.f32.mrf.mxu0
  %v5247 = vpop.f32.mrf.mxu0
  %5248 = vdwg.mxu0
  %5249 = vmatprep.subr.bf16.mxu0 0
  %5250 = vmatpush1.bf16.msra.mxu0 0
  %5251 = vmatprep.subr.bf16.mxu0 0
  %5252 = vmatpush1.bf16.msra.mxu0 0
  %5253 = vmatprep.subr.bf16.mxu0 0
  %5254 = vmatpush1.bf16.msra.mxu0 0
  %5255 = vmatprep.subr.bf16.mxu0 0
  %5256 = vmatpush1.bf16.msra.mxu0 0
  %5257 = vmatprep.subr.bf16.mxu0 0
  %5258 = vmatpush1.bf16.msra.mxu0 0
  %5259 = vmatprep.subr.bf16.mxu0 0
  %5260 = vmatpush1.bf16.msra.mxu0 0
  %5261 = vmatprep.subr.bf16.mxu0 0
  %5262 = vmatpush1.bf16.msra.mxu0 0
  %5263 = vmatprep.subr.bf16.mxu0 %v5153
  %5264 = vmatpush1.bf16.msra.mxu0 %v5150
  %5265 = vmatprep.subr.bf16.mxu0 0
  %5266 = vmatpush2.bf16.msra.mxu0 0
  %5267 = vmatprep.subr.bf16.mxu0 0
  %5268 = vmatpush2.bf16.msra.mxu0 0
  %5269 = vmatprep.subr.bf16.mxu0 0
  %5270 = vmatpush2.bf16.msra.mxu0 0
  %5271 = vmatprep.subr.bf16.mxu0 0
  %5272 = vmatpush2.bf16.msra.mxu0 0
  %5273 = vmatprep.subr.bf16.mxu0 0
  %5274 = vmatpush2.bf16.msra.mxu0 0
  %5275 = vmatprep.subr.bf16.mxu0 0
  %5276 = vmatpush2.bf16.msra.mxu0 0
  %5277 = vmatprep.subr.bf16.mxu0 0
  %5278 = vmatpush2.bf16.msra.mxu0 0
  %5279 = vmatprep.subr.bf16.mxu0 0
  %5280 = vmatpush2.bf16.msra.mxu0 0
  %5281 = vmatprep.mubr.bf16.mxu0 0
  %5282 = vmatmul.mubr.bf16.gmra.mxu0 %v5135
  %v5283 = vpop.f32.mrf.mxu0
  %v5284 = vadd.f32 0.0, %v5283
  %v5285 = vpop.f32.mrf.mxu0
  %v5286 = vadd.f32 0.0, %v5285
  %v5287 = vpop.f32.mrf.mxu0
  %v5288 = vpop.f32.mrf.mxu0
  %5289 = vdwg.mxu0
  %5290 = vmatprep.subr.bf16.mxu0 0
  %5291 = vmatpush1.bf16.msra.mxu0 0
  %5292 = vmatprep.subr.bf16.mxu0 0
  %5293 = vmatpush1.bf16.msra.mxu0 0
  %5294 = vmatprep.subr.bf16.mxu0 0
  %5295 = vmatpush1.bf16.msra.mxu0 0
  %5296 = vmatprep.subr.bf16.mxu0 0
  %5297 = vmatpush1.bf16.msra.mxu0 0
  %5298 = vmatprep.subr.bf16.mxu0 0
  %5299 = vmatpush1.bf16.msra.mxu0 0
  %5300 = vmatprep.subr.bf16.mxu0 0
  %5301 = vmatpush1.bf16.msra.mxu0 0
  %5302 = vmatprep.subr.bf16.mxu0 0
  %5303 = vmatpush1.bf16.msra.mxu0 0
  %5304 = vmatprep.subr.bf16.mxu0 %v5159
  %5305 = vmatpush1.bf16.msra.mxu0 %v5156
  %5306 = vmatprep.subr.bf16.mxu0 0
  %5307 = vmatpush2.bf16.msra.mxu0 0
  %5308 = vmatprep.subr.bf16.mxu0 0
  %5309 = vmatpush2.bf16.msra.mxu0 0
  %5310 = vmatprep.subr.bf16.mxu0 0
  %5311 = vmatpush2.bf16.msra.mxu0 0
  %5312 = vmatprep.subr.bf16.mxu0 0
  %5313 = vmatpush2.bf16.msra.mxu0 0
  %5314 = vmatprep.subr.bf16.mxu0 0
  %5315 = vmatpush2.bf16.msra.mxu0 0
  %5316 = vmatprep.subr.bf16.mxu0 0
  %5317 = vmatpush2.bf16.msra.mxu0 0
  %5318 = vmatprep.subr.bf16.mxu0 0
  %5319 = vmatpush2.bf16.msra.mxu0 0
  %5320 = vmatprep.subr.bf16.mxu0 0
  %5321 = vmatpush2.bf16.msra.mxu0 0
  %5322 = vmatprep.mubr.bf16.mxu0 0
  %5323 = vmatmul.mubr.bf16.gmra.mxu0 %v5135
  %v5324 = vpop.f32.mrf.mxu0
  %v5325 = vadd.f32 0.0, %v5324
  %v5326 = vpop.f32.mrf.mxu0
  %v5327 = vadd.f32 0.0, %v5326
  %v5328 = vpop.f32.mrf.mxu0
  %v5329 = vpop.f32.mrf.mxu0
  %5330 = vdwg.mxu0
  %5331 = vmatprep.subr.bf16.mxu0 0
  %5332 = vmatpush1.bf16.msra.mxu0 0
  %5333 = vmatprep.subr.bf16.mxu0 0
  %5334 = vmatpush1.bf16.msra.mxu0 0
  %5335 = vmatprep.subr.bf16.mxu0 0
  %5336 = vmatpush1.bf16.msra.mxu0 0
  %5337 = vmatprep.subr.bf16.mxu0 0
  %5338 = vmatpush1.bf16.msra.mxu0 0
  %5339 = vmatprep.subr.bf16.mxu0 0
  %5340 = vmatpush1.bf16.msra.mxu0 0
  %5341 = vmatprep.subr.bf16.mxu0 0
  %5342 = vmatpush1.bf16.msra.mxu0 0
  %5343 = vmatprep.subr.bf16.mxu0 0
  %5344 = vmatpush1.bf16.msra.mxu0 0
  %5345 = vmatprep.subr.bf16.mxu0 %v5165
  %5346 = vmatpush1.bf16.msra.mxu0 %v5162
  %5347 = vmatprep.subr.bf16.mxu0 0
  %5348 = vmatpush2.bf16.msra.mxu0 0
  %5349 = vmatprep.subr.bf16.mxu0 0
  %5350 = vmatpush2.bf16.msra.mxu0 0
  %5351 = vmatprep.subr.bf16.mxu0 0
  %5352 = vmatpush2.bf16.msra.mxu0 0
  %5353 = vmatprep.subr.bf16.mxu0 0
  %5354 = vmatpush2.bf16.msra.mxu0 0
  %5355 = vmatprep.subr.bf16.mxu0 0
  %5356 = vmatpush2.bf16.msra.mxu0 0
  %5357 = vmatprep.subr.bf16.mxu0 0
  %5358 = vmatpush2.bf16.msra.mxu0 0
  %5359 = vmatprep.subr.bf16.mxu0 0
  %5360 = vmatpush2.bf16.msra.mxu0 0
  %5361 = vmatprep.subr.bf16.mxu0 0
  %5362 = vmatpush2.bf16.msra.mxu0 0
  %5363 = vmatprep.mubr.bf16.mxu0 0
  %5364 = vmatmul.mubr.bf16.gmra.mxu0 %v5135
  %v5365 = vpop.f32.mrf.mxu0
  %v5366 = vadd.f32 0.0, %v5365
  %v5367 = vpop.f32.mrf.mxu0
  %v5368 = vadd.f32 0.0, %v5367
  %v5369 = vpop.f32.mrf.mxu0
  %v5370 = vpop.f32.mrf.mxu0
  %5371 = vdwg.mxu0
  %v5372 = vadd.f32 %v5087, %v5202
  %v5373 = vadd.f32 %v5088, %v5204
  %v5374 = vadd.f32 %v5089, %v5243
  %v5375 = vadd.f32 %v5090, %v5245
  %v5376 = vadd.f32 %v5091, %v5284
  %v5377 = vadd.f32 %v5092, %v5286
  %v5378 = vadd.f32 %v5093, %v5325
  %v5379 = vadd.f32 %v5094, %v5327
  %v5380 = vadd.f32 %v5095, %v5366
  %v5381 = vadd.f32 %v5096, %v5368
  %5382 = vrot.lane.b32.xlu0 %v4532, 104
  %v5383 = vpop.permute.xlu0 %5382
  %5384 = vrot.lane.b32.xlu0 %v48, 55
  %v5385 = vpop.permute.xlu0 %5384
  %5386 = vrot.lane.b32.xlu0 %v49, 55
  %v5387 = vpop.permute.xlu0 %5386
  %5388 = vrot.lane.b32.xlu0 %v50, 55
  %v5389 = vpop.permute.xlu0 %5388
  %5390 = vrot.lane.b32.xlu0 %v51, 55
  %v5391 = vpop.permute.xlu0 %5390
  %5392 = vrot.lane.b32.xlu0 %v52, 55
  %v5393 = vpop.permute.xlu0 %5392
  %5394 = vrot.lane.b32.xlu0 %v53, 55
  %v5395 = vpop.permute.xlu0 %5394
  %5396 = vrot.lane.b32.xlu0 %v54, 55
  %v5397 = vpop.permute.xlu0 %5396
  %5398 = vrot.lane.b32.xlu0 %v55, 55
  %v5399 = vpop.permute.xlu0 %5398
  %5400 = vrot.lane.b32.xlu0 %v56, 55
  %v5401 = vpop.permute.xlu0 %5400
  %5402 = vrot.lane.b32.xlu0 %v57, 55
  %v5403 = vpop.permute.xlu0 %5402
  %5404 = vrot.lane.b32.xlu0 %v5100, 55
  %v5405 = vpop.permute.xlu0 %5404
  %vm5406 = vcmask 449536
  %v5407 = vsel %vm5406, %v5385, %v5387
  %v5408 = vsel %vm5406, %v5387, %v5389
  %v5409 = vsel %vm5406, %v5389, %v5391
  %v5410 = vsel %vm5406, %v5391, %v5393
  %v5411 = vsel %vm5406, %v5393, %v5395
  %v5412 = vsel %vm5406, %v5395, %v5397
  %v5413 = vsel %vm5406, %v5397, %v5399
  %v5414 = vsel %vm5406, %v5399, %v5401
  %v5415 = vsel %vm5406, %v5401, %v5403
  %v5416 = vsel %vm5406, %v5403, %v5405
  %v5418 = vsel %vm91, %v5383, 0
  %v5421 = vsel %vm95, %v5407, 0
  %v5424 = vsel %vm95, %v5408, 0
  %v5427 = vsel %vm95, %v5409, 0
  %v5430 = vsel %vm95, %v5410, 0
  %v5433 = vsel %vm95, %v5411, 0
  %v5436 = vsel %vm95, %v5412, 0
  %v5439 = vsel %vm95, %v5413, 0
  %v5442 = vsel %vm95, %v5414, 0
  %v5445 = vsel %vm95, %v5415, 0
  %v5448 = vsel %vm95, %v5416, 0
  %5450 = vmatprep.subr.bf16.mxu0 0
  %5451 = vmatpush1.bf16.msra.mxu0 0
  %5452 = vmatprep.subr.bf16.mxu0 0
  %5453 = vmatpush1.bf16.msra.mxu0 0
  %5454 = vmatprep.subr.bf16.mxu0 0
  %5455 = vmatpush1.bf16.msra.mxu0 0
  %5456 = vmatprep.subr.bf16.mxu0 0
  %5457 = vmatpush1.bf16.msra.mxu0 0
  %5458 = vmatprep.subr.bf16.mxu0 0
  %5459 = vmatpush1.bf16.msra.mxu0 0
  %5460 = vmatprep.subr.bf16.mxu0 0
  %5461 = vmatpush1.bf16.msra.mxu0 0
  %5462 = vmatprep.subr.bf16.mxu0 0
  %5463 = vmatpush1.bf16.msra.mxu0 0
  %5464 = vmatprep.subr.bf16.mxu0 %v5424
  %5465 = vmatpush1.bf16.msra.mxu0 %v5421
  %5466 = vmatprep.subr.bf16.mxu0 0
  %5467 = vmatpush2.bf16.msra.mxu0 0
  %5468 = vmatprep.subr.bf16.mxu0 0
  %5469 = vmatpush2.bf16.msra.mxu0 0
  %5470 = vmatprep.subr.bf16.mxu0 0
  %5471 = vmatpush2.bf16.msra.mxu0 0
  %5472 = vmatprep.subr.bf16.mxu0 0
  %5473 = vmatpush2.bf16.msra.mxu0 0
  %5474 = vmatprep.subr.bf16.mxu0 0
  %5475 = vmatpush2.bf16.msra.mxu0 0
  %5476 = vmatprep.subr.bf16.mxu0 0
  %5477 = vmatpush2.bf16.msra.mxu0 0
  %5478 = vmatprep.subr.bf16.mxu0 0
  %5479 = vmatpush2.bf16.msra.mxu0 0
  %5480 = vmatprep.subr.bf16.mxu0 0
  %5481 = vmatpush2.bf16.msra.mxu0 0
  %5482 = vmatprep.mubr.bf16.mxu0 0
  %5483 = vmatmul.mubr.bf16.gmra.mxu0 %v5418
  %v5484 = vpop.f32.mrf.mxu0
  %v5485 = vadd.f32 0.0, %v5484
  %v5486 = vpop.f32.mrf.mxu0
  %v5487 = vadd.f32 0.0, %v5486
  %v5488 = vpop.f32.mrf.mxu0
  %v5489 = vpop.f32.mrf.mxu0
  %5490 = vdwg.mxu0
  %5491 = vmatprep.subr.bf16.mxu0 0
  %5492 = vmatpush1.bf16.msra.mxu0 0
  %5493 = vmatprep.subr.bf16.mxu0 0
  %5494 = vmatpush1.bf16.msra.mxu0 0
  %5495 = vmatprep.subr.bf16.mxu0 0
  %5496 = vmatpush1.bf16.msra.mxu0 0
  %5497 = vmatprep.subr.bf16.mxu0 0
  %5498 = vmatpush1.bf16.msra.mxu0 0
  %5499 = vmatprep.subr.bf16.mxu0 0
  %5500 = vmatpush1.bf16.msra.mxu0 0
  %5501 = vmatprep.subr.bf16.mxu0 0
  %5502 = vmatpush1.bf16.msra.mxu0 0
  %5503 = vmatprep.subr.bf16.mxu0 0
  %5504 = vmatpush1.bf16.msra.mxu0 0
  %5505 = vmatprep.subr.bf16.mxu0 %v5430
  %5506 = vmatpush1.bf16.msra.mxu0 %v5427
  %5507 = vmatprep.subr.bf16.mxu0 0
  %5508 = vmatpush2.bf16.msra.mxu0 0
  %5509 = vmatprep.subr.bf16.mxu0 0
  %5510 = vmatpush2.bf16.msra.mxu0 0
  %5511 = vmatprep.subr.bf16.mxu0 0
  %5512 = vmatpush2.bf16.msra.mxu0 0
  %5513 = vmatprep.subr.bf16.mxu0 0
  %5514 = vmatpush2.bf16.msra.mxu0 0
  %5515 = vmatprep.subr.bf16.mxu0 0
  %5516 = vmatpush2.bf16.msra.mxu0 0
  %5517 = vmatprep.subr.bf16.mxu0 0
  %5518 = vmatpush2.bf16.msra.mxu0 0
  %5519 = vmatprep.subr.bf16.mxu0 0
  %5520 = vmatpush2.bf16.msra.mxu0 0
  %5521 = vmatprep.subr.bf16.mxu0 0
  %5522 = vmatpush2.bf16.msra.mxu0 0
  %5523 = vmatprep.mubr.bf16.mxu0 0
  %5524 = vmatmul.mubr.bf16.gmra.mxu0 %v5418
  %v5525 = vpop.f32.mrf.mxu0
  %v5526 = vadd.f32 0.0, %v5525
  %v5527 = vpop.f32.mrf.mxu0
  %v5528 = vadd.f32 0.0, %v5527
  %v5529 = vpop.f32.mrf.mxu0
  %v5530 = vpop.f32.mrf.mxu0
  %5531 = vdwg.mxu0
  %5532 = vmatprep.subr.bf16.mxu0 0
  %5533 = vmatpush1.bf16.msra.mxu0 0
  %5534 = vmatprep.subr.bf16.mxu0 0
  %5535 = vmatpush1.bf16.msra.mxu0 0
  %5536 = vmatprep.subr.bf16.mxu0 0
  %5537 = vmatpush1.bf16.msra.mxu0 0
  %5538 = vmatprep.subr.bf16.mxu0 0
  %5539 = vmatpush1.bf16.msra.mxu0 0
  %5540 = vmatprep.subr.bf16.mxu0 0
  %5541 = vmatpush1.bf16.msra.mxu0 0
  %5542 = vmatprep.subr.bf16.mxu0 0
  %5543 = vmatpush1.bf16.msra.mxu0 0
  %5544 = vmatprep.subr.bf16.mxu0 0
  %5545 = vmatpush1.bf16.msra.mxu0 0
  %5546 = vmatprep.subr.bf16.mxu0 %v5436
  %5547 = vmatpush1.bf16.msra.mxu0 %v5433
  %5548 = vmatprep.subr.bf16.mxu0 0
  %5549 = vmatpush2.bf16.msra.mxu0 0
  %5550 = vmatprep.subr.bf16.mxu0 0
  %5551 = vmatpush2.bf16.msra.mxu0 0
  %5552 = vmatprep.subr.bf16.mxu0 0
  %5553 = vmatpush2.bf16.msra.mxu0 0
  %5554 = vmatprep.subr.bf16.mxu0 0
  %5555 = vmatpush2.bf16.msra.mxu0 0
  %5556 = vmatprep.subr.bf16.mxu0 0
  %5557 = vmatpush2.bf16.msra.mxu0 0
  %5558 = vmatprep.subr.bf16.mxu0 0
  %5559 = vmatpush2.bf16.msra.mxu0 0
  %5560 = vmatprep.subr.bf16.mxu0 0
  %5561 = vmatpush2.bf16.msra.mxu0 0
  %5562 = vmatprep.subr.bf16.mxu0 0
  %5563 = vmatpush2.bf16.msra.mxu0 0
  %5564 = vmatprep.mubr.bf16.mxu0 0
  %5565 = vmatmul.mubr.bf16.gmra.mxu0 %v5418
  %v5566 = vpop.f32.mrf.mxu0
  %v5567 = vadd.f32 0.0, %v5566
  %v5568 = vpop.f32.mrf.mxu0
  %v5569 = vadd.f32 0.0, %v5568
  %v5570 = vpop.f32.mrf.mxu0
  %v5571 = vpop.f32.mrf.mxu0
  %5572 = vdwg.mxu0
  %5573 = vmatprep.subr.bf16.mxu0 0
  %5574 = vmatpush1.bf16.msra.mxu0 0
  %5575 = vmatprep.subr.bf16.mxu0 0
  %5576 = vmatpush1.bf16.msra.mxu0 0
  %5577 = vmatprep.subr.bf16.mxu0 0
  %5578 = vmatpush1.bf16.msra.mxu0 0
  %5579 = vmatprep.subr.bf16.mxu0 0
  %5580 = vmatpush1.bf16.msra.mxu0 0
  %5581 = vmatprep.subr.bf16.mxu0 0
  %5582 = vmatpush1.bf16.msra.mxu0 0
  %5583 = vmatprep.subr.bf16.mxu0 0
  %5584 = vmatpush1.bf16.msra.mxu0 0
  %5585 = vmatprep.subr.bf16.mxu0 0
  %5586 = vmatpush1.bf16.msra.mxu0 0
  %5587 = vmatprep.subr.bf16.mxu0 %v5442
  %5588 = vmatpush1.bf16.msra.mxu0 %v5439
  %5589 = vmatprep.subr.bf16.mxu0 0
  %5590 = vmatpush2.bf16.msra.mxu0 0
  %5591 = vmatprep.subr.bf16.mxu0 0
  %5592 = vmatpush2.bf16.msra.mxu0 0
  %5593 = vmatprep.subr.bf16.mxu0 0
  %5594 = vmatpush2.bf16.msra.mxu0 0
  %5595 = vmatprep.subr.bf16.mxu0 0
  %5596 = vmatpush2.bf16.msra.mxu0 0
  %5597 = vmatprep.subr.bf16.mxu0 0
  %5598 = vmatpush2.bf16.msra.mxu0 0
  %5599 = vmatprep.subr.bf16.mxu0 0
  %5600 = vmatpush2.bf16.msra.mxu0 0
  %5601 = vmatprep.subr.bf16.mxu0 0
  %5602 = vmatpush2.bf16.msra.mxu0 0
  %5603 = vmatprep.subr.bf16.mxu0 0
  %5604 = vmatpush2.bf16.msra.mxu0 0
  %5605 = vmatprep.mubr.bf16.mxu0 0
  %5606 = vmatmul.mubr.bf16.gmra.mxu0 %v5418
  %v5607 = vpop.f32.mrf.mxu0
  %v5608 = vadd.f32 0.0, %v5607
  %v5609 = vpop.f32.mrf.mxu0
  %v5610 = vadd.f32 0.0, %v5609
  %v5611 = vpop.f32.mrf.mxu0
  %v5612 = vpop.f32.mrf.mxu0
  %5613 = vdwg.mxu0
  %5614 = vmatprep.subr.bf16.mxu0 0
  %5615 = vmatpush1.bf16.msra.mxu0 0
  %5616 = vmatprep.subr.bf16.mxu0 0
  %5617 = vmatpush1.bf16.msra.mxu0 0
  %5618 = vmatprep.subr.bf16.mxu0 0
  %5619 = vmatpush1.bf16.msra.mxu0 0
  %5620 = vmatprep.subr.bf16.mxu0 0
  %5621 = vmatpush1.bf16.msra.mxu0 0
  %5622 = vmatprep.subr.bf16.mxu0 0
  %5623 = vmatpush1.bf16.msra.mxu0 0
  %5624 = vmatprep.subr.bf16.mxu0 0
  %5625 = vmatpush1.bf16.msra.mxu0 0
  %5626 = vmatprep.subr.bf16.mxu0 0
  %5627 = vmatpush1.bf16.msra.mxu0 0
  %5628 = vmatprep.subr.bf16.mxu0 %v5448
  %5629 = vmatpush1.bf16.msra.mxu0 %v5445
  %5630 = vmatprep.subr.bf16.mxu0 0
  %5631 = vmatpush2.bf16.msra.mxu0 0
  %5632 = vmatprep.subr.bf16.mxu0 0
  %5633 = vmatpush2.bf16.msra.mxu0 0
  %5634 = vmatprep.subr.bf16.mxu0 0
  %5635 = vmatpush2.bf16.msra.mxu0 0
  %5636 = vmatprep.subr.bf16.mxu0 0
  %5637 = vmatpush2.bf16.msra.mxu0 0
  %5638 = vmatprep.subr.bf16.mxu0 0
  %5639 = vmatpush2.bf16.msra.mxu0 0
  %5640 = vmatprep.subr.bf16.mxu0 0
  %5641 = vmatpush2.bf16.msra.mxu0 0
  %5642 = vmatprep.subr.bf16.mxu0 0
  %5643 = vmatpush2.bf16.msra.mxu0 0
  %5644 = vmatprep.subr.bf16.mxu0 0
  %5645 = vmatpush2.bf16.msra.mxu0 0
  %5646 = vmatprep.mubr.bf16.mxu0 0
  %5647 = vmatmul.mubr.bf16.gmra.mxu0 %v5418
  %v5648 = vpop.f32.mrf.mxu0
  %v5649 = vadd.f32 0.0, %v5648
  %v5650 = vpop.f32.mrf.mxu0
  %v5651 = vadd.f32 0.0, %v5650
  %v5652 = vpop.f32.mrf.mxu0
  %v5653 = vpop.f32.mrf.mxu0
  %5654 = vdwg.mxu0
  %v5655 = vadd.f32 %v5372, %v5485
  %v5656 = vadd.f32 %v5373, %v5487
  %v5657 = vadd.f32 %v5374, %v5526
  %v5658 = vadd.f32 %v5375, %v5528
  %v5659 = vadd.f32 %v5376, %v5567
  %v5660 = vadd.f32 %v5377, %v5569
  %v5661 = vadd.f32 %v5378, %v5608
  %v5662 = vadd.f32 %v5379, %v5610
  %v5663 = vadd.f32 %v5380, %v5649
  %v5664 = vadd.f32 %v5381, %v5651
  %5665 = vrot.lane.b32.xlu0 %v4532, 96
  %v5666 = vpop.permute.xlu0 %5665
  %5667 = vrot.lane.b32.xlu0 %v48, 54
  %v5668 = vpop.permute.xlu0 %5667
  %5669 = vrot.lane.b32.xlu0 %v49, 54
  %v5670 = vpop.permute.xlu0 %5669
  %5671 = vrot.lane.b32.xlu0 %v50, 54
  %v5672 = vpop.permute.xlu0 %5671
  %5673 = vrot.lane.b32.xlu0 %v51, 54
  %v5674 = vpop.permute.xlu0 %5673
  %5675 = vrot.lane.b32.xlu0 %v52, 54
  %v5676 = vpop.permute.xlu0 %5675
  %5677 = vrot.lane.b32.xlu0 %v53, 54
  %v5678 = vpop.permute.xlu0 %5677
  %5679 = vrot.lane.b32.xlu0 %v54, 54
  %v5680 = vpop.permute.xlu0 %5679
  %5681 = vrot.lane.b32.xlu0 %v55, 54
  %v5682 = vpop.permute.xlu0 %5681
  %5683 = vrot.lane.b32.xlu0 %v56, 54
  %v5684 = vpop.permute.xlu0 %5683
  %5685 = vrot.lane.b32.xlu0 %v57, 54
  %v5686 = vpop.permute.xlu0 %5685
  %5687 = vrot.lane.b32.xlu0 %v5100, 54
  %v5688 = vpop.permute.xlu0 %5687
  %vm5689 = vcmask 441344
  %v5690 = vsel %vm5689, %v5668, %v5670
  %v5691 = vsel %vm5689, %v5670, %v5672
  %v5692 = vsel %vm5689, %v5672, %v5674
  %v5693 = vsel %vm5689, %v5674, %v5676
  %v5694 = vsel %vm5689, %v5676, %v5678
  %v5695 = vsel %vm5689, %v5678, %v5680
  %v5696 = vsel %vm5689, %v5680, %v5682
  %v5697 = vsel %vm5689, %v5682, %v5684
  %v5698 = vsel %vm5689, %v5684, %v5686
  %v5699 = vsel %vm5689, %v5686, %v5688
  %v5701 = vsel %vm91, %v5666, 0
  %v5704 = vsel %vm95, %v5690, 0
  %v5707 = vsel %vm95, %v5691, 0
  %v5710 = vsel %vm95, %v5692, 0
  %v5713 = vsel %vm95, %v5693, 0
  %v5716 = vsel %vm95, %v5694, 0
  %v5719 = vsel %vm95, %v5695, 0
  %v5722 = vsel %vm95, %v5696, 0
  %v5725 = vsel %vm95, %v5697, 0
  %v5728 = vsel %vm95, %v5698, 0
  %v5731 = vsel %vm95, %v5699, 0
  %5733 = vmatprep.subr.bf16.mxu0 0
  %5734 = vmatpush1.bf16.msra.mxu0 0
  %5735 = vmatprep.subr.bf16.mxu0 0
  %5736 = vmatpush1.bf16.msra.mxu0 0
  %5737 = vmatprep.subr.bf16.mxu0 0
  %5738 = vmatpush1.bf16.msra.mxu0 0
  %5739 = vmatprep.subr.bf16.mxu0 0
  %5740 = vmatpush1.bf16.msra.mxu0 0
  %5741 = vmatprep.subr.bf16.mxu0 0
  %5742 = vmatpush1.bf16.msra.mxu0 0
  %5743 = vmatprep.subr.bf16.mxu0 0
  %5744 = vmatpush1.bf16.msra.mxu0 0
  %5745 = vmatprep.subr.bf16.mxu0 0
  %5746 = vmatpush1.bf16.msra.mxu0 0
  %5747 = vmatprep.subr.bf16.mxu0 %v5707
  %5748 = vmatpush1.bf16.msra.mxu0 %v5704
  %5749 = vmatprep.subr.bf16.mxu0 0
  %5750 = vmatpush2.bf16.msra.mxu0 0
  %5751 = vmatprep.subr.bf16.mxu0 0
  %5752 = vmatpush2.bf16.msra.mxu0 0
  %5753 = vmatprep.subr.bf16.mxu0 0
  %5754 = vmatpush2.bf16.msra.mxu0 0
  %5755 = vmatprep.subr.bf16.mxu0 0
  %5756 = vmatpush2.bf16.msra.mxu0 0
  %5757 = vmatprep.subr.bf16.mxu0 0
  %5758 = vmatpush2.bf16.msra.mxu0 0
  %5759 = vmatprep.subr.bf16.mxu0 0
  %5760 = vmatpush2.bf16.msra.mxu0 0
  %5761 = vmatprep.subr.bf16.mxu0 0
  %5762 = vmatpush2.bf16.msra.mxu0 0
  %5763 = vmatprep.subr.bf16.mxu0 0
  %5764 = vmatpush2.bf16.msra.mxu0 0
  %5765 = vmatprep.mubr.bf16.mxu0 0
  %5766 = vmatmul.mubr.bf16.gmra.mxu0 %v5701
  %v5767 = vpop.f32.mrf.mxu0
  %v5768 = vadd.f32 0.0, %v5767
  %v5769 = vpop.f32.mrf.mxu0
  %v5770 = vadd.f32 0.0, %v5769
  %v5771 = vpop.f32.mrf.mxu0
  %v5772 = vpop.f32.mrf.mxu0
  %5773 = vdwg.mxu0
  %5774 = vmatprep.subr.bf16.mxu0 0
  %5775 = vmatpush1.bf16.msra.mxu0 0
  %5776 = vmatprep.subr.bf16.mxu0 0
  %5777 = vmatpush1.bf16.msra.mxu0 0
  %5778 = vmatprep.subr.bf16.mxu0 0
  %5779 = vmatpush1.bf16.msra.mxu0 0
  %5780 = vmatprep.subr.bf16.mxu0 0
  %5781 = vmatpush1.bf16.msra.mxu0 0
  %5782 = vmatprep.subr.bf16.mxu0 0
  %5783 = vmatpush1.bf16.msra.mxu0 0
  %5784 = vmatprep.subr.bf16.mxu0 0
  %5785 = vmatpush1.bf16.msra.mxu0 0
  %5786 = vmatprep.subr.bf16.mxu0 0
  %5787 = vmatpush1.bf16.msra.mxu0 0
  %5788 = vmatprep.subr.bf16.mxu0 %v5713
  %5789 = vmatpush1.bf16.msra.mxu0 %v5710
  %5790 = vmatprep.subr.bf16.mxu0 0
  %5791 = vmatpush2.bf16.msra.mxu0 0
  %5792 = vmatprep.subr.bf16.mxu0 0
  %5793 = vmatpush2.bf16.msra.mxu0 0
  %5794 = vmatprep.subr.bf16.mxu0 0
  %5795 = vmatpush2.bf16.msra.mxu0 0
  %5796 = vmatprep.subr.bf16.mxu0 0
  %5797 = vmatpush2.bf16.msra.mxu0 0
  %5798 = vmatprep.subr.bf16.mxu0 0
  %5799 = vmatpush2.bf16.msra.mxu0 0
  %5800 = vmatprep.subr.bf16.mxu0 0
  %5801 = vmatpush2.bf16.msra.mxu0 0
  %5802 = vmatprep.subr.bf16.mxu0 0
  %5803 = vmatpush2.bf16.msra.mxu0 0
  %5804 = vmatprep.subr.bf16.mxu0 0
  %5805 = vmatpush2.bf16.msra.mxu0 0
  %5806 = vmatprep.mubr.bf16.mxu0 0
  %5807 = vmatmul.mubr.bf16.gmra.mxu0 %v5701
  %v5808 = vpop.f32.mrf.mxu0
  %v5809 = vadd.f32 0.0, %v5808
  %v5810 = vpop.f32.mrf.mxu0
  %v5811 = vadd.f32 0.0, %v5810
  %v5812 = vpop.f32.mrf.mxu0
  %v5813 = vpop.f32.mrf.mxu0
  %5814 = vdwg.mxu0
  %5815 = vmatprep.subr.bf16.mxu0 0
  %5816 = vmatpush1.bf16.msra.mxu0 0
  %5817 = vmatprep.subr.bf16.mxu0 0
  %5818 = vmatpush1.bf16.msra.mxu0 0
  %5819 = vmatprep.subr.bf16.mxu0 0
  %5820 = vmatpush1.bf16.msra.mxu0 0
  %5821 = vmatprep.subr.bf16.mxu0 0
  %5822 = vmatpush1.bf16.msra.mxu0 0
  %5823 = vmatprep.subr.bf16.mxu0 0
  %5824 = vmatpush1.bf16.msra.mxu0 0
  %5825 = vmatprep.subr.bf16.mxu0 0
  %5826 = vmatpush1.bf16.msra.mxu0 0
  %5827 = vmatprep.subr.bf16.mxu0 0
  %5828 = vmatpush1.bf16.msra.mxu0 0
  %5829 = vmatprep.subr.bf16.mxu0 %v5719
  %5830 = vmatpush1.bf16.msra.mxu0 %v5716
  %5831 = vmatprep.subr.bf16.mxu0 0
  %5832 = vmatpush2.bf16.msra.mxu0 0
  %5833 = vmatprep.subr.bf16.mxu0 0
  %5834 = vmatpush2.bf16.msra.mxu0 0
  %5835 = vmatprep.subr.bf16.mxu0 0
  %5836 = vmatpush2.bf16.msra.mxu0 0
  %5837 = vmatprep.subr.bf16.mxu0 0
  %5838 = vmatpush2.bf16.msra.mxu0 0
  %5839 = vmatprep.subr.bf16.mxu0 0
  %5840 = vmatpush2.bf16.msra.mxu0 0
  %5841 = vmatprep.subr.bf16.mxu0 0
  %5842 = vmatpush2.bf16.msra.mxu0 0
  %5843 = vmatprep.subr.bf16.mxu0 0
  %5844 = vmatpush2.bf16.msra.mxu0 0
  %5845 = vmatprep.subr.bf16.mxu0 0
  %5846 = vmatpush2.bf16.msra.mxu0 0
  %5847 = vmatprep.mubr.bf16.mxu0 0
  %5848 = vmatmul.mubr.bf16.gmra.mxu0 %v5701
  %v5849 = vpop.f32.mrf.mxu0
  %v5850 = vadd.f32 0.0, %v5849
  %v5851 = vpop.f32.mrf.mxu0
  %v5852 = vadd.f32 0.0, %v5851
  %v5853 = vpop.f32.mrf.mxu0
  %v5854 = vpop.f32.mrf.mxu0
  %5855 = vdwg.mxu0
  %5856 = vmatprep.subr.bf16.mxu0 0
  %5857 = vmatpush1.bf16.msra.mxu0 0
  %5858 = vmatprep.subr.bf16.mxu0 0
  %5859 = vmatpush1.bf16.msra.mxu0 0
  %5860 = vmatprep.subr.bf16.mxu0 0
  %5861 = vmatpush1.bf16.msra.mxu0 0
  %5862 = vmatprep.subr.bf16.mxu0 0
  %5863 = vmatpush1.bf16.msra.mxu0 0
  %5864 = vmatprep.subr.bf16.mxu0 0
  %5865 = vmatpush1.bf16.msra.mxu0 0
  %5866 = vmatprep.subr.bf16.mxu0 0
  %5867 = vmatpush1.bf16.msra.mxu0 0
  %5868 = vmatprep.subr.bf16.mxu0 0
  %5869 = vmatpush1.bf16.msra.mxu0 0
  %5870 = vmatprep.subr.bf16.mxu0 %v5725
  %5871 = vmatpush1.bf16.msra.mxu0 %v5722
  %5872 = vmatprep.subr.bf16.mxu0 0
  %5873 = vmatpush2.bf16.msra.mxu0 0
  %5874 = vmatprep.subr.bf16.mxu0 0
  %5875 = vmatpush2.bf16.msra.mxu0 0
  %5876 = vmatprep.subr.bf16.mxu0 0
  %5877 = vmatpush2.bf16.msra.mxu0 0
  %5878 = vmatprep.subr.bf16.mxu0 0
  %5879 = vmatpush2.bf16.msra.mxu0 0
  %5880 = vmatprep.subr.bf16.mxu0 0
  %5881 = vmatpush2.bf16.msra.mxu0 0
  %5882 = vmatprep.subr.bf16.mxu0 0
  %5883 = vmatpush2.bf16.msra.mxu0 0
  %5884 = vmatprep.subr.bf16.mxu0 0
  %5885 = vmatpush2.bf16.msra.mxu0 0
  %5886 = vmatprep.subr.bf16.mxu0 0
  %5887 = vmatpush2.bf16.msra.mxu0 0
  %5888 = vmatprep.mubr.bf16.mxu0 0
  %5889 = vmatmul.mubr.bf16.gmra.mxu0 %v5701
  %v5890 = vpop.f32.mrf.mxu0
  %v5891 = vadd.f32 0.0, %v5890
  %v5892 = vpop.f32.mrf.mxu0
  %v5893 = vadd.f32 0.0, %v5892
  %v5894 = vpop.f32.mrf.mxu0
  %v5895 = vpop.f32.mrf.mxu0
  %5896 = vdwg.mxu0
  %5897 = vmatprep.subr.bf16.mxu0 0
  %5898 = vmatpush1.bf16.msra.mxu0 0
  %5899 = vmatprep.subr.bf16.mxu0 0
  %5900 = vmatpush1.bf16.msra.mxu0 0
  %5901 = vmatprep.subr.bf16.mxu0 0
  %5902 = vmatpush1.bf16.msra.mxu0 0
  %5903 = vmatprep.subr.bf16.mxu0 0
  %5904 = vmatpush1.bf16.msra.mxu0 0
  %5905 = vmatprep.subr.bf16.mxu0 0
  %5906 = vmatpush1.bf16.msra.mxu0 0
  %5907 = vmatprep.subr.bf16.mxu0 0
  %5908 = vmatpush1.bf16.msra.mxu0 0
  %5909 = vmatprep.subr.bf16.mxu0 0
  %5910 = vmatpush1.bf16.msra.mxu0 0
  %5911 = vmatprep.subr.bf16.mxu0 %v5731
  %5912 = vmatpush1.bf16.msra.mxu0 %v5728
  %5913 = vmatprep.subr.bf16.mxu0 0
  %5914 = vmatpush2.bf16.msra.mxu0 0
  %5915 = vmatprep.subr.bf16.mxu0 0
  %5916 = vmatpush2.bf16.msra.mxu0 0
  %5917 = vmatprep.subr.bf16.mxu0 0
  %5918 = vmatpush2.bf16.msra.mxu0 0
  %5919 = vmatprep.subr.bf16.mxu0 0
  %5920 = vmatpush2.bf16.msra.mxu0 0
  %5921 = vmatprep.subr.bf16.mxu0 0
  %5922 = vmatpush2.bf16.msra.mxu0 0
  %5923 = vmatprep.subr.bf16.mxu0 0
  %5924 = vmatpush2.bf16.msra.mxu0 0
  %5925 = vmatprep.subr.bf16.mxu0 0
  %5926 = vmatpush2.bf16.msra.mxu0 0
  %5927 = vmatprep.subr.bf16.mxu0 0
  %5928 = vmatpush2.bf16.msra.mxu0 0
  %5929 = vmatprep.mubr.bf16.mxu0 0
  %5930 = vmatmul.mubr.bf16.gmra.mxu0 %v5701
  %v5931 = vpop.f32.mrf.mxu0
  %v5932 = vadd.f32 0.0, %v5931
  %v5933 = vpop.f32.mrf.mxu0
  %v5934 = vadd.f32 0.0, %v5933
  %v5935 = vpop.f32.mrf.mxu0
  %v5936 = vpop.f32.mrf.mxu0
  %5937 = vdwg.mxu0
  %v5938 = vadd.f32 %v5655, %v5768
  %v5939 = vadd.f32 %v5656, %v5770
  %v5940 = vadd.f32 %v5657, %v5809
  %v5941 = vadd.f32 %v5658, %v5811
  %v5942 = vadd.f32 %v5659, %v5850
  %v5943 = vadd.f32 %v5660, %v5852
  %v5944 = vadd.f32 %v5661, %v5891
  %v5945 = vadd.f32 %v5662, %v5893
  %v5946 = vadd.f32 %v5663, %v5932
  %v5947 = vadd.f32 %v5664, %v5934
  %5948 = vrot.lane.b32.xlu0 %v4532, 88
  %v5949 = vpop.permute.xlu0 %5948
  %5950 = vrot.lane.b32.xlu0 %v48, 46
  %v5951 = vpop.permute.xlu0 %5950
  %5952 = vrot.lane.b32.xlu0 %v49, 46
  %v5953 = vpop.permute.xlu0 %5952
  %5954 = vrot.lane.b32.xlu0 %v50, 46
  %v5955 = vpop.permute.xlu0 %5954
  %5956 = vrot.lane.b32.xlu0 %v51, 46
  %v5957 = vpop.permute.xlu0 %5956
  %5958 = vrot.lane.b32.xlu0 %v52, 46
  %v5959 = vpop.permute.xlu0 %5958
  %5960 = vrot.lane.b32.xlu0 %v53, 46
  %v5961 = vpop.permute.xlu0 %5960
  %5962 = vrot.lane.b32.xlu0 %v54, 46
  %v5963 = vpop.permute.xlu0 %5962
  %5964 = vrot.lane.b32.xlu0 %v55, 46
  %v5965 = vpop.permute.xlu0 %5964
  %5966 = vrot.lane.b32.xlu0 %v56, 46
  %v5967 = vpop.permute.xlu0 %5966
  %5968 = vrot.lane.b32.xlu0 %v57, 46
  %v5969 = vpop.permute.xlu0 %5968
  %5970 = vrot.lane.b32.xlu0 %v5100, 46
  %v5971 = vpop.permute.xlu0 %5970
  %vm5972 = vcmask 375808
  %v5973 = vsel %vm5972, %v5951, %v5953
  %v5974 = vsel %vm5972, %v5953, %v5955
  %v5975 = vsel %vm5972, %v5955, %v5957
  %v5976 = vsel %vm5972, %v5957, %v5959
  %v5977 = vsel %vm5972, %v5959, %v5961
  %v5978 = vsel %vm5972, %v5961, %v5963
  %v5979 = vsel %vm5972, %v5963, %v5965
  %v5980 = vsel %vm5972, %v5965, %v5967
  %v5981 = vsel %vm5972, %v5967, %v5969
  %v5982 = vsel %vm5972, %v5969, %v5971
  %v5984 = vsel %vm91, %v5949, 0
  %v5987 = vsel %vm95, %v5973, 0
  %v5990 = vsel %vm95, %v5974, 0
  %v5993 = vsel %vm95, %v5975, 0
  %v5996 = vsel %vm95, %v5976, 0
  %v5999 = vsel %vm95, %v5977, 0
  %v6002 = vsel %vm95, %v5978, 0
  %v6005 = vsel %vm95, %v5979, 0
  %v6008 = vsel %vm95, %v5980, 0
  %v6011 = vsel %vm95, %v5981, 0
  %v6014 = vsel %vm95, %v5982, 0
  %6016 = vmatprep.subr.bf16.mxu0 0
  %6017 = vmatpush1.bf16.msra.mxu0 0
  %6018 = vmatprep.subr.bf16.mxu0 0
  %6019 = vmatpush1.bf16.msra.mxu0 0
  %6020 = vmatprep.subr.bf16.mxu0 0
  %6021 = vmatpush1.bf16.msra.mxu0 0
  %6022 = vmatprep.subr.bf16.mxu0 0
  %6023 = vmatpush1.bf16.msra.mxu0 0
  %6024 = vmatprep.subr.bf16.mxu0 0
  %6025 = vmatpush1.bf16.msra.mxu0 0
  %6026 = vmatprep.subr.bf16.mxu0 0
  %6027 = vmatpush1.bf16.msra.mxu0 0
  %6028 = vmatprep.subr.bf16.mxu0 0
  %6029 = vmatpush1.bf16.msra.mxu0 0
  %6030 = vmatprep.subr.bf16.mxu0 %v5990
  %6031 = vmatpush1.bf16.msra.mxu0 %v5987
  %6032 = vmatprep.subr.bf16.mxu0 0
  %6033 = vmatpush2.bf16.msra.mxu0 0
  %6034 = vmatprep.subr.bf16.mxu0 0
  %6035 = vmatpush2.bf16.msra.mxu0 0
  %6036 = vmatprep.subr.bf16.mxu0 0
  %6037 = vmatpush2.bf16.msra.mxu0 0
  %6038 = vmatprep.subr.bf16.mxu0 0
  %6039 = vmatpush2.bf16.msra.mxu0 0
  %6040 = vmatprep.subr.bf16.mxu0 0
  %6041 = vmatpush2.bf16.msra.mxu0 0
  %6042 = vmatprep.subr.bf16.mxu0 0
  %6043 = vmatpush2.bf16.msra.mxu0 0
  %6044 = vmatprep.subr.bf16.mxu0 0
  %6045 = vmatpush2.bf16.msra.mxu0 0
  %6046 = vmatprep.subr.bf16.mxu0 0
  %6047 = vmatpush2.bf16.msra.mxu0 0
  %6048 = vmatprep.mubr.bf16.mxu0 0
  %6049 = vmatmul.mubr.bf16.gmra.mxu0 %v5984
  %v6050 = vpop.f32.mrf.mxu0
  %v6051 = vadd.f32 0.0, %v6050
  %v6052 = vpop.f32.mrf.mxu0
  %v6053 = vadd.f32 0.0, %v6052
  %v6054 = vpop.f32.mrf.mxu0
  %v6055 = vpop.f32.mrf.mxu0
  %6056 = vdwg.mxu0
  %6057 = vmatprep.subr.bf16.mxu0 0
  %6058 = vmatpush1.bf16.msra.mxu0 0
  %6059 = vmatprep.subr.bf16.mxu0 0
  %6060 = vmatpush1.bf16.msra.mxu0 0
  %6061 = vmatprep.subr.bf16.mxu0 0
  %6062 = vmatpush1.bf16.msra.mxu0 0
  %6063 = vmatprep.subr.bf16.mxu0 0
  %6064 = vmatpush1.bf16.msra.mxu0 0
  %6065 = vmatprep.subr.bf16.mxu0 0
  %6066 = vmatpush1.bf16.msra.mxu0 0
  %6067 = vmatprep.subr.bf16.mxu0 0
  %6068 = vmatpush1.bf16.msra.mxu0 0
  %6069 = vmatprep.subr.bf16.mxu0 0
  %6070 = vmatpush1.bf16.msra.mxu0 0
  %6071 = vmatprep.subr.bf16.mxu0 %v5996
  %6072 = vmatpush1.bf16.msra.mxu0 %v5993
  %6073 = vmatprep.subr.bf16.mxu0 0
  %6074 = vmatpush2.bf16.msra.mxu0 0
  %6075 = vmatprep.subr.bf16.mxu0 0
  %6076 = vmatpush2.bf16.msra.mxu0 0
  %6077 = vmatprep.subr.bf16.mxu0 0
  %6078 = vmatpush2.bf16.msra.mxu0 0
  %6079 = vmatprep.subr.bf16.mxu0 0
  %6080 = vmatpush2.bf16.msra.mxu0 0
  %6081 = vmatprep.subr.bf16.mxu0 0
  %6082 = vmatpush2.bf16.msra.mxu0 0
  %6083 = vmatprep.subr.bf16.mxu0 0
  %6084 = vmatpush2.bf16.msra.mxu0 0
  %6085 = vmatprep.subr.bf16.mxu0 0
  %6086 = vmatpush2.bf16.msra.mxu0 0
  %6087 = vmatprep.subr.bf16.mxu0 0
  %6088 = vmatpush2.bf16.msra.mxu0 0
  %6089 = vmatprep.mubr.bf16.mxu0 0
  %6090 = vmatmul.mubr.bf16.gmra.mxu0 %v5984
  %v6091 = vpop.f32.mrf.mxu0
  %v6092 = vadd.f32 0.0, %v6091
  %v6093 = vpop.f32.mrf.mxu0
  %v6094 = vadd.f32 0.0, %v6093
  %v6095 = vpop.f32.mrf.mxu0
  %v6096 = vpop.f32.mrf.mxu0
  %6097 = vdwg.mxu0
  %6098 = vmatprep.subr.bf16.mxu0 0
  %6099 = vmatpush1.bf16.msra.mxu0 0
  %6100 = vmatprep.subr.bf16.mxu0 0
  %6101 = vmatpush1.bf16.msra.mxu0 0
  %6102 = vmatprep.subr.bf16.mxu0 0
  %6103 = vmatpush1.bf16.msra.mxu0 0
  %6104 = vmatprep.subr.bf16.mxu0 0
  %6105 = vmatpush1.bf16.msra.mxu0 0
  %6106 = vmatprep.subr.bf16.mxu0 0
  %6107 = vmatpush1.bf16.msra.mxu0 0
  %6108 = vmatprep.subr.bf16.mxu0 0
  %6109 = vmatpush1.bf16.msra.mxu0 0
  %6110 = vmatprep.subr.bf16.mxu0 0
  %6111 = vmatpush1.bf16.msra.mxu0 0
  %6112 = vmatprep.subr.bf16.mxu0 %v6002
  %6113 = vmatpush1.bf16.msra.mxu0 %v5999
  %6114 = vmatprep.subr.bf16.mxu0 0
  %6115 = vmatpush2.bf16.msra.mxu0 0
  %6116 = vmatprep.subr.bf16.mxu0 0
  %6117 = vmatpush2.bf16.msra.mxu0 0
  %6118 = vmatprep.subr.bf16.mxu0 0
  %6119 = vmatpush2.bf16.msra.mxu0 0
  %6120 = vmatprep.subr.bf16.mxu0 0
  %6121 = vmatpush2.bf16.msra.mxu0 0
  %6122 = vmatprep.subr.bf16.mxu0 0
  %6123 = vmatpush2.bf16.msra.mxu0 0
  %6124 = vmatprep.subr.bf16.mxu0 0
  %6125 = vmatpush2.bf16.msra.mxu0 0
  %6126 = vmatprep.subr.bf16.mxu0 0
  %6127 = vmatpush2.bf16.msra.mxu0 0
  %6128 = vmatprep.subr.bf16.mxu0 0
  %6129 = vmatpush2.bf16.msra.mxu0 0
  %6130 = vmatprep.mubr.bf16.mxu0 0
  %6131 = vmatmul.mubr.bf16.gmra.mxu0 %v5984
  %v6132 = vpop.f32.mrf.mxu0
  %v6133 = vadd.f32 0.0, %v6132
  %v6134 = vpop.f32.mrf.mxu0
  %v6135 = vadd.f32 0.0, %v6134
  %v6136 = vpop.f32.mrf.mxu0
  %v6137 = vpop.f32.mrf.mxu0
  %6138 = vdwg.mxu0
  %6139 = vmatprep.subr.bf16.mxu0 0
  %6140 = vmatpush1.bf16.msra.mxu0 0
  %6141 = vmatprep.subr.bf16.mxu0 0
  %6142 = vmatpush1.bf16.msra.mxu0 0
  %6143 = vmatprep.subr.bf16.mxu0 0
  %6144 = vmatpush1.bf16.msra.mxu0 0
  %6145 = vmatprep.subr.bf16.mxu0 0
  %6146 = vmatpush1.bf16.msra.mxu0 0
  %6147 = vmatprep.subr.bf16.mxu0 0
  %6148 = vmatpush1.bf16.msra.mxu0 0
  %6149 = vmatprep.subr.bf16.mxu0 0
  %6150 = vmatpush1.bf16.msra.mxu0 0
  %6151 = vmatprep.subr.bf16.mxu0 0
  %6152 = vmatpush1.bf16.msra.mxu0 0
  %6153 = vmatprep.subr.bf16.mxu0 %v6008
  %6154 = vmatpush1.bf16.msra.mxu0 %v6005
  %6155 = vmatprep.subr.bf16.mxu0 0
  %6156 = vmatpush2.bf16.msra.mxu0 0
  %6157 = vmatprep.subr.bf16.mxu0 0
  %6158 = vmatpush2.bf16.msra.mxu0 0
  %6159 = vmatprep.subr.bf16.mxu0 0
  %6160 = vmatpush2.bf16.msra.mxu0 0
  %6161 = vmatprep.subr.bf16.mxu0 0
  %6162 = vmatpush2.bf16.msra.mxu0 0
  %6163 = vmatprep.subr.bf16.mxu0 0
  %6164 = vmatpush2.bf16.msra.mxu0 0
  %6165 = vmatprep.subr.bf16.mxu0 0
  %6166 = vmatpush2.bf16.msra.mxu0 0
  %6167 = vmatprep.subr.bf16.mxu0 0
  %6168 = vmatpush2.bf16.msra.mxu0 0
  %6169 = vmatprep.subr.bf16.mxu0 0
  %6170 = vmatpush2.bf16.msra.mxu0 0
  %6171 = vmatprep.mubr.bf16.mxu0 0
  %6172 = vmatmul.mubr.bf16.gmra.mxu0 %v5984
  %v6173 = vpop.f32.mrf.mxu0
  %v6174 = vadd.f32 0.0, %v6173
  %v6175 = vpop.f32.mrf.mxu0
  %v6176 = vadd.f32 0.0, %v6175
  %v6177 = vpop.f32.mrf.mxu0
  %v6178 = vpop.f32.mrf.mxu0
  %6179 = vdwg.mxu0
  %6180 = vmatprep.subr.bf16.mxu0 0
  %6181 = vmatpush1.bf16.msra.mxu0 0
  %6182 = vmatprep.subr.bf16.mxu0 0
  %6183 = vmatpush1.bf16.msra.mxu0 0
  %6184 = vmatprep.subr.bf16.mxu0 0
  %6185 = vmatpush1.bf16.msra.mxu0 0
  %6186 = vmatprep.subr.bf16.mxu0 0
  %6187 = vmatpush1.bf16.msra.mxu0 0
  %6188 = vmatprep.subr.bf16.mxu0 0
  %6189 = vmatpush1.bf16.msra.mxu0 0
  %6190 = vmatprep.subr.bf16.mxu0 0
  %6191 = vmatpush1.bf16.msra.mxu0 0
  %6192 = vmatprep.subr.bf16.mxu0 0
  %6193 = vmatpush1.bf16.msra.mxu0 0
  %6194 = vmatprep.subr.bf16.mxu0 %v6014
  %6195 = vmatpush1.bf16.msra.mxu0 %v6011
  %6196 = vmatprep.subr.bf16.mxu0 0
  %6197 = vmatpush2.bf16.msra.mxu0 0
  %6198 = vmatprep.subr.bf16.mxu0 0
  %6199 = vmatpush2.bf16.msra.mxu0 0
  %6200 = vmatprep.subr.bf16.mxu0 0
  %6201 = vmatpush2.bf16.msra.mxu0 0
  %6202 = vmatprep.subr.bf16.mxu0 0
  %6203 = vmatpush2.bf16.msra.mxu0 0
  %6204 = vmatprep.subr.bf16.mxu0 0
  %6205 = vmatpush2.bf16.msra.mxu0 0
  %6206 = vmatprep.subr.bf16.mxu0 0
  %6207 = vmatpush2.bf16.msra.mxu0 0
  %6208 = vmatprep.subr.bf16.mxu0 0
  %6209 = vmatpush2.bf16.msra.mxu0 0
  %6210 = vmatprep.subr.bf16.mxu0 0
  %6211 = vmatpush2.bf16.msra.mxu0 0
  %6212 = vmatprep.mubr.bf16.mxu0 0
  %6213 = vmatmul.mubr.bf16.gmra.mxu0 %v5984
  %v6214 = vpop.f32.mrf.mxu0
  %v6215 = vadd.f32 0.0, %v6214
  %v6216 = vpop.f32.mrf.mxu0
  %v6217 = vadd.f32 0.0, %v6216
  %v6218 = vpop.f32.mrf.mxu0
  %v6219 = vpop.f32.mrf.mxu0
  %6220 = vdwg.mxu0
  %v6221 = vadd.f32 %v5938, %v6051
  %v6222 = vadd.f32 %v5939, %v6053
  %v6223 = vadd.f32 %v5940, %v6092
  %v6224 = vadd.f32 %v5941, %v6094
  %v6225 = vadd.f32 %v5942, %v6133
  %v6226 = vadd.f32 %v5943, %v6135
  %v6227 = vadd.f32 %v5944, %v6174
  %v6228 = vadd.f32 %v5945, %v6176
  %v6229 = vadd.f32 %v5946, %v6215
  %v6230 = vadd.f32 %v5947, %v6217
  %6231 = vrot.lane.b32.xlu0 %v4532, 80
  %v6232 = vpop.permute.xlu0 %6231
  %6233 = vrot.lane.b32.xlu0 %v48, 45
  %v6234 = vpop.permute.xlu0 %6233
  %6235 = vrot.lane.b32.xlu0 %v49, 45
  %v6236 = vpop.permute.xlu0 %6235
  %6237 = vrot.lane.b32.xlu0 %v50, 45
  %v6238 = vpop.permute.xlu0 %6237
  %6239 = vrot.lane.b32.xlu0 %v51, 45
  %v6240 = vpop.permute.xlu0 %6239
  %6241 = vrot.lane.b32.xlu0 %v52, 45
  %v6242 = vpop.permute.xlu0 %6241
  %6243 = vrot.lane.b32.xlu0 %v53, 45
  %v6244 = vpop.permute.xlu0 %6243
  %6245 = vrot.lane.b32.xlu0 %v54, 45
  %v6246 = vpop.permute.xlu0 %6245
  %6247 = vrot.lane.b32.xlu0 %v55, 45
  %v6248 = vpop.permute.xlu0 %6247
  %6249 = vrot.lane.b32.xlu0 %v56, 45
  %v6250 = vpop.permute.xlu0 %6249
  %6251 = vrot.lane.b32.xlu0 %v57, 45
  %v6252 = vpop.permute.xlu0 %6251
  %6253 = vrot.lane.b32.xlu0 %v5100, 45
  %v6254 = vpop.permute.xlu0 %6253
  %vm6255 = vcmask 367616
  %v6256 = vsel %vm6255, %v6234, %v6236
  %v6257 = vsel %vm6255, %v6236, %v6238
  %v6258 = vsel %vm6255, %v6238, %v6240
  %v6259 = vsel %vm6255, %v6240, %v6242
  %v6260 = vsel %vm6255, %v6242, %v6244
  %v6261 = vsel %vm6255, %v6244, %v6246
  %v6262 = vsel %vm6255, %v6246, %v6248
  %v6263 = vsel %vm6255, %v6248, %v6250
  %v6264 = vsel %vm6255, %v6250, %v6252
  %v6265 = vsel %vm6255, %v6252, %v6254
  %v6267 = vsel %vm91, %v6232, 0
  %v6270 = vsel %vm95, %v6256, 0
  %v6273 = vsel %vm95, %v6257, 0
  %v6276 = vsel %vm95, %v6258, 0
  %v6279 = vsel %vm95, %v6259, 0
  %v6282 = vsel %vm95, %v6260, 0
  %v6285 = vsel %vm95, %v6261, 0
  %v6288 = vsel %vm95, %v6262, 0
  %v6291 = vsel %vm95, %v6263, 0
  %v6294 = vsel %vm95, %v6264, 0
  %v6297 = vsel %vm95, %v6265, 0
  %6299 = vmatprep.subr.bf16.mxu0 0
  %6300 = vmatpush1.bf16.msra.mxu0 0
  %6301 = vmatprep.subr.bf16.mxu0 0
  %6302 = vmatpush1.bf16.msra.mxu0 0
  %6303 = vmatprep.subr.bf16.mxu0 0
  %6304 = vmatpush1.bf16.msra.mxu0 0
  %6305 = vmatprep.subr.bf16.mxu0 0
  %6306 = vmatpush1.bf16.msra.mxu0 0
  %6307 = vmatprep.subr.bf16.mxu0 0
  %6308 = vmatpush1.bf16.msra.mxu0 0
  %6309 = vmatprep.subr.bf16.mxu0 0
  %6310 = vmatpush1.bf16.msra.mxu0 0
  %6311 = vmatprep.subr.bf16.mxu0 0
  %6312 = vmatpush1.bf16.msra.mxu0 0
  %6313 = vmatprep.subr.bf16.mxu0 %v6273
  %6314 = vmatpush1.bf16.msra.mxu0 %v6270
  %6315 = vmatprep.subr.bf16.mxu0 0
  %6316 = vmatpush2.bf16.msra.mxu0 0
  %6317 = vmatprep.subr.bf16.mxu0 0
  %6318 = vmatpush2.bf16.msra.mxu0 0
  %6319 = vmatprep.subr.bf16.mxu0 0
  %6320 = vmatpush2.bf16.msra.mxu0 0
  %6321 = vmatprep.subr.bf16.mxu0 0
  %6322 = vmatpush2.bf16.msra.mxu0 0
  %6323 = vmatprep.subr.bf16.mxu0 0
  %6324 = vmatpush2.bf16.msra.mxu0 0
  %6325 = vmatprep.subr.bf16.mxu0 0
  %6326 = vmatpush2.bf16.msra.mxu0 0
  %6327 = vmatprep.subr.bf16.mxu0 0
  %6328 = vmatpush2.bf16.msra.mxu0 0
  %6329 = vmatprep.subr.bf16.mxu0 0
  %6330 = vmatpush2.bf16.msra.mxu0 0
  %6331 = vmatprep.mubr.bf16.mxu0 0
  %6332 = vmatmul.mubr.bf16.gmra.mxu0 %v6267
  %v6333 = vpop.f32.mrf.mxu0
  %v6334 = vadd.f32 0.0, %v6333
  %v6335 = vpop.f32.mrf.mxu0
  %v6336 = vadd.f32 0.0, %v6335
  %v6337 = vpop.f32.mrf.mxu0
  %v6338 = vpop.f32.mrf.mxu0
  %6339 = vdwg.mxu0
  %6340 = vmatprep.subr.bf16.mxu0 0
  %6341 = vmatpush1.bf16.msra.mxu0 0
  %6342 = vmatprep.subr.bf16.mxu0 0
  %6343 = vmatpush1.bf16.msra.mxu0 0
  %6344 = vmatprep.subr.bf16.mxu0 0
  %6345 = vmatpush1.bf16.msra.mxu0 0
  %6346 = vmatprep.subr.bf16.mxu0 0
  %6347 = vmatpush1.bf16.msra.mxu0 0
  %6348 = vmatprep.subr.bf16.mxu0 0
  %6349 = vmatpush1.bf16.msra.mxu0 0
  %6350 = vmatprep.subr.bf16.mxu0 0
  %6351 = vmatpush1.bf16.msra.mxu0 0
  %6352 = vmatprep.subr.bf16.mxu0 0
  %6353 = vmatpush1.bf16.msra.mxu0 0
  %6354 = vmatprep.subr.bf16.mxu0 %v6279
  %6355 = vmatpush1.bf16.msra.mxu0 %v6276
  %6356 = vmatprep.subr.bf16.mxu0 0
  %6357 = vmatpush2.bf16.msra.mxu0 0
  %6358 = vmatprep.subr.bf16.mxu0 0
  %6359 = vmatpush2.bf16.msra.mxu0 0
  %6360 = vmatprep.subr.bf16.mxu0 0
  %6361 = vmatpush2.bf16.msra.mxu0 0
  %6362 = vmatprep.subr.bf16.mxu0 0
  %6363 = vmatpush2.bf16.msra.mxu0 0
  %6364 = vmatprep.subr.bf16.mxu0 0
  %6365 = vmatpush2.bf16.msra.mxu0 0
  %6366 = vmatprep.subr.bf16.mxu0 0
  %6367 = vmatpush2.bf16.msra.mxu0 0
  %6368 = vmatprep.subr.bf16.mxu0 0
  %6369 = vmatpush2.bf16.msra.mxu0 0
  %6370 = vmatprep.subr.bf16.mxu0 0
  %6371 = vmatpush2.bf16.msra.mxu0 0
  %6372 = vmatprep.mubr.bf16.mxu0 0
  %6373 = vmatmul.mubr.bf16.gmra.mxu0 %v6267
  %v6374 = vpop.f32.mrf.mxu0
  %v6375 = vadd.f32 0.0, %v6374
  %v6376 = vpop.f32.mrf.mxu0
  %v6377 = vadd.f32 0.0, %v6376
  %v6378 = vpop.f32.mrf.mxu0
  %v6379 = vpop.f32.mrf.mxu0
  %6380 = vdwg.mxu0
  %6381 = vmatprep.subr.bf16.mxu0 0
  %6382 = vmatpush1.bf16.msra.mxu0 0
  %6383 = vmatprep.subr.bf16.mxu0 0
  %6384 = vmatpush1.bf16.msra.mxu0 0
  %6385 = vmatprep.subr.bf16.mxu0 0
  %6386 = vmatpush1.bf16.msra.mxu0 0
  %6387 = vmatprep.subr.bf16.mxu0 0
  %6388 = vmatpush1.bf16.msra.mxu0 0
  %6389 = vmatprep.subr.bf16.mxu0 0
  %6390 = vmatpush1.bf16.msra.mxu0 0
  %6391 = vmatprep.subr.bf16.mxu0 0
  %6392 = vmatpush1.bf16.msra.mxu0 0
  %6393 = vmatprep.subr.bf16.mxu0 0
  %6394 = vmatpush1.bf16.msra.mxu0 0
  %6395 = vmatprep.subr.bf16.mxu0 %v6285
  %6396 = vmatpush1.bf16.msra.mxu0 %v6282
  %6397 = vmatprep.subr.bf16.mxu0 0
  %6398 = vmatpush2.bf16.msra.mxu0 0
  %6399 = vmatprep.subr.bf16.mxu0 0
  %6400 = vmatpush2.bf16.msra.mxu0 0
  %6401 = vmatprep.subr.bf16.mxu0 0
  %6402 = vmatpush2.bf16.msra.mxu0 0
  %6403 = vmatprep.subr.bf16.mxu0 0
  %6404 = vmatpush2.bf16.msra.mxu0 0
  %6405 = vmatprep.subr.bf16.mxu0 0
  %6406 = vmatpush2.bf16.msra.mxu0 0
  %6407 = vmatprep.subr.bf16.mxu0 0
  %6408 = vmatpush2.bf16.msra.mxu0 0
  %6409 = vmatprep.subr.bf16.mxu0 0
  %6410 = vmatpush2.bf16.msra.mxu0 0
  %6411 = vmatprep.subr.bf16.mxu0 0
  %6412 = vmatpush2.bf16.msra.mxu0 0
  %6413 = vmatprep.mubr.bf16.mxu0 0
  %6414 = vmatmul.mubr.bf16.gmra.mxu0 %v6267
  %v6415 = vpop.f32.mrf.mxu0
  %v6416 = vadd.f32 0.0, %v6415
  %v6417 = vpop.f32.mrf.mxu0
  %v6418 = vadd.f32 0.0, %v6417
  %v6419 = vpop.f32.mrf.mxu0
  %v6420 = vpop.f32.mrf.mxu0
  %6421 = vdwg.mxu0
  %6422 = vmatprep.subr.bf16.mxu0 0
  %6423 = vmatpush1.bf16.msra.mxu0 0
  %6424 = vmatprep.subr.bf16.mxu0 0
  %6425 = vmatpush1.bf16.msra.mxu0 0
  %6426 = vmatprep.subr.bf16.mxu0 0
  %6427 = vmatpush1.bf16.msra.mxu0 0
  %6428 = vmatprep.subr.bf16.mxu0 0
  %6429 = vmatpush1.bf16.msra.mxu0 0
  %6430 = vmatprep.subr.bf16.mxu0 0
  %6431 = vmatpush1.bf16.msra.mxu0 0
  %6432 = vmatprep.subr.bf16.mxu0 0
  %6433 = vmatpush1.bf16.msra.mxu0 0
  %6434 = vmatprep.subr.bf16.mxu0 0
  %6435 = vmatpush1.bf16.msra.mxu0 0
  %6436 = vmatprep.subr.bf16.mxu0 %v6291
  %6437 = vmatpush1.bf16.msra.mxu0 %v6288
  %6438 = vmatprep.subr.bf16.mxu0 0
  %6439 = vmatpush2.bf16.msra.mxu0 0
  %6440 = vmatprep.subr.bf16.mxu0 0
  %6441 = vmatpush2.bf16.msra.mxu0 0
  %6442 = vmatprep.subr.bf16.mxu0 0
  %6443 = vmatpush2.bf16.msra.mxu0 0
  %6444 = vmatprep.subr.bf16.mxu0 0
  %6445 = vmatpush2.bf16.msra.mxu0 0
  %6446 = vmatprep.subr.bf16.mxu0 0
  %6447 = vmatpush2.bf16.msra.mxu0 0
  %6448 = vmatprep.subr.bf16.mxu0 0
  %6449 = vmatpush2.bf16.msra.mxu0 0
  %6450 = vmatprep.subr.bf16.mxu0 0
  %6451 = vmatpush2.bf16.msra.mxu0 0
  %6452 = vmatprep.subr.bf16.mxu0 0
  %6453 = vmatpush2.bf16.msra.mxu0 0
  %6454 = vmatprep.mubr.bf16.mxu0 0
  %6455 = vmatmul.mubr.bf16.gmra.mxu0 %v6267
  %v6456 = vpop.f32.mrf.mxu0
  %v6457 = vadd.f32 0.0, %v6456
  %v6458 = vpop.f32.mrf.mxu0
  %v6459 = vadd.f32 0.0, %v6458
  %v6460 = vpop.f32.mrf.mxu0
  %v6461 = vpop.f32.mrf.mxu0
  %6462 = vdwg.mxu0
  %6463 = vmatprep.subr.bf16.mxu0 0
  %6464 = vmatpush1.bf16.msra.mxu0 0
  %6465 = vmatprep.subr.bf16.mxu0 0
  %6466 = vmatpush1.bf16.msra.mxu0 0
  %6467 = vmatprep.subr.bf16.mxu0 0
  %6468 = vmatpush1.bf16.msra.mxu0 0
  %6469 = vmatprep.subr.bf16.mxu0 0
  %6470 = vmatpush1.bf16.msra.mxu0 0
  %6471 = vmatprep.subr.bf16.mxu0 0
  %6472 = vmatpush1.bf16.msra.mxu0 0
  %6473 = vmatprep.subr.bf16.mxu0 0
  %6474 = vmatpush1.bf16.msra.mxu0 0
  %6475 = vmatprep.subr.bf16.mxu0 0
  %6476 = vmatpush1.bf16.msra.mxu0 0
  %6477 = vmatprep.subr.bf16.mxu0 %v6297
  %6478 = vmatpush1.bf16.msra.mxu0 %v6294
  %6479 = vmatprep.subr.bf16.mxu0 0
  %6480 = vmatpush2.bf16.msra.mxu0 0
  %6481 = vmatprep.subr.bf16.mxu0 0
  %6482 = vmatpush2.bf16.msra.mxu0 0
  %6483 = vmatprep.subr.bf16.mxu0 0
  %6484 = vmatpush2.bf16.msra.mxu0 0
  %6485 = vmatprep.subr.bf16.mxu0 0
  %6486 = vmatpush2.bf16.msra.mxu0 0
  %6487 = vmatprep.subr.bf16.mxu0 0
  %6488 = vmatpush2.bf16.msra.mxu0 0
  %6489 = vmatprep.subr.bf16.mxu0 0
  %6490 = vmatpush2.bf16.msra.mxu0 0
  %6491 = vmatprep.subr.bf16.mxu0 0
  %6492 = vmatpush2.bf16.msra.mxu0 0
  %6493 = vmatprep.subr.bf16.mxu0 0
  %6494 = vmatpush2.bf16.msra.mxu0 0
  %6495 = vmatprep.mubr.bf16.mxu0 0
  %6496 = vmatmul.mubr.bf16.gmra.mxu0 %v6267
  %v6497 = vpop.f32.mrf.mxu0
  %v6498 = vadd.f32 0.0, %v6497
  %v6499 = vpop.f32.mrf.mxu0
  %v6500 = vadd.f32 0.0, %v6499
  %v6501 = vpop.f32.mrf.mxu0
  %v6502 = vpop.f32.mrf.mxu0
  %6503 = vdwg.mxu0
  %v6504 = vadd.f32 %v6221, %v6334
  %v6505 = vadd.f32 %v6222, %v6336
  %v6506 = vadd.f32 %v6223, %v6375
  %v6507 = vadd.f32 %v6224, %v6377
  %v6508 = vadd.f32 %v6225, %v6416
  %v6509 = vadd.f32 %v6226, %v6418
  %v6510 = vadd.f32 %v6227, %v6457
  %v6511 = vadd.f32 %v6228, %v6459
  %v6512 = vadd.f32 %v6229, %v6498
  %v6513 = vadd.f32 %v6230, %v6500
  %6514 = vrot.lane.b32.xlu0 %v4532, 72
  %v6515 = vpop.permute.xlu0 %6514
  %6516 = vrot.lane.b32.xlu0 %v48, 44
  %v6517 = vpop.permute.xlu0 %6516
  %6518 = vrot.lane.b32.xlu0 %v49, 44
  %v6519 = vpop.permute.xlu0 %6518
  %6520 = vrot.lane.b32.xlu0 %v50, 44
  %v6521 = vpop.permute.xlu0 %6520
  %6522 = vrot.lane.b32.xlu0 %v51, 44
  %v6523 = vpop.permute.xlu0 %6522
  %6524 = vrot.lane.b32.xlu0 %v52, 44
  %v6525 = vpop.permute.xlu0 %6524
  %6526 = vrot.lane.b32.xlu0 %v53, 44
  %v6527 = vpop.permute.xlu0 %6526
  %6528 = vrot.lane.b32.xlu0 %v54, 44
  %v6529 = vpop.permute.xlu0 %6528
  %6530 = vrot.lane.b32.xlu0 %v55, 44
  %v6531 = vpop.permute.xlu0 %6530
  %6532 = vrot.lane.b32.xlu0 %v56, 44
  %v6533 = vpop.permute.xlu0 %6532
  %6534 = vrot.lane.b32.xlu0 %v57, 44
  %v6535 = vpop.permute.xlu0 %6534
  %6536 = vrot.lane.b32.xlu0 %v5100, 44
  %v6537 = vpop.permute.xlu0 %6536
  %vm6538 = vcmask 359424
  %v6539 = vsel %vm6538, %v6517, %v6519
  %v6540 = vsel %vm6538, %v6519, %v6521
  %v6541 = vsel %vm6538, %v6521, %v6523
  %v6542 = vsel %vm6538, %v6523, %v6525
  %v6543 = vsel %vm6538, %v6525, %v6527
  %v6544 = vsel %vm6538, %v6527, %v6529
  %v6545 = vsel %vm6538, %v6529, %v6531
  %v6546 = vsel %vm6538, %v6531, %v6533
  %v6547 = vsel %vm6538, %v6533, %v6535
  %v6548 = vsel %vm6538, %v6535, %v6537
  %v6550 = vsel %vm91, %v6515, 0
  %v6553 = vsel %vm95, %v6539, 0
  %v6556 = vsel %vm95, %v6540, 0
  %v6559 = vsel %vm95, %v6541, 0
  %v6562 = vsel %vm95, %v6542, 0
  %v6565 = vsel %vm95, %v6543, 0
  %v6568 = vsel %vm95, %v6544, 0
  %v6571 = vsel %vm95, %v6545, 0
  %v6574 = vsel %vm95, %v6546, 0
  %v6577 = vsel %vm95, %v6547, 0
  %v6580 = vsel %vm95, %v6548, 0
  %6582 = vmatprep.subr.bf16.mxu0 0
  %6583 = vmatpush1.bf16.msra.mxu0 0
  %6584 = vmatprep.subr.bf16.mxu0 0
  %6585 = vmatpush1.bf16.msra.mxu0 0
  %6586 = vmatprep.subr.bf16.mxu0 0
  %6587 = vmatpush1.bf16.msra.mxu0 0
  %6588 = vmatprep.subr.bf16.mxu0 0
  %6589 = vmatpush1.bf16.msra.mxu0 0
  %6590 = vmatprep.subr.bf16.mxu0 0
  %6591 = vmatpush1.bf16.msra.mxu0 0
  %6592 = vmatprep.subr.bf16.mxu0 0
  %6593 = vmatpush1.bf16.msra.mxu0 0
  %6594 = vmatprep.subr.bf16.mxu0 0
  %6595 = vmatpush1.bf16.msra.mxu0 0
  %6596 = vmatprep.subr.bf16.mxu0 %v6556
  %6597 = vmatpush1.bf16.msra.mxu0 %v6553
  %6598 = vmatprep.subr.bf16.mxu0 0
  %6599 = vmatpush2.bf16.msra.mxu0 0
  %6600 = vmatprep.subr.bf16.mxu0 0
  %6601 = vmatpush2.bf16.msra.mxu0 0
  %6602 = vmatprep.subr.bf16.mxu0 0
  %6603 = vmatpush2.bf16.msra.mxu0 0
  %6604 = vmatprep.subr.bf16.mxu0 0
  %6605 = vmatpush2.bf16.msra.mxu0 0
  %6606 = vmatprep.subr.bf16.mxu0 0
  %6607 = vmatpush2.bf16.msra.mxu0 0
  %6608 = vmatprep.subr.bf16.mxu0 0
  %6609 = vmatpush2.bf16.msra.mxu0 0
  %6610 = vmatprep.subr.bf16.mxu0 0
  %6611 = vmatpush2.bf16.msra.mxu0 0
  %6612 = vmatprep.subr.bf16.mxu0 0
  %6613 = vmatpush2.bf16.msra.mxu0 0
  %6614 = vmatprep.mubr.bf16.mxu0 0
  %6615 = vmatmul.mubr.bf16.gmra.mxu0 %v6550
  %v6616 = vpop.f32.mrf.mxu0
  %v6617 = vadd.f32 0.0, %v6616
  %v6618 = vpop.f32.mrf.mxu0
  %v6619 = vadd.f32 0.0, %v6618
  %v6620 = vpop.f32.mrf.mxu0
  %v6621 = vpop.f32.mrf.mxu0
  %6622 = vdwg.mxu0
  %6623 = vmatprep.subr.bf16.mxu0 0
  %6624 = vmatpush1.bf16.msra.mxu0 0
  %6625 = vmatprep.subr.bf16.mxu0 0
  %6626 = vmatpush1.bf16.msra.mxu0 0
  %6627 = vmatprep.subr.bf16.mxu0 0
  %6628 = vmatpush1.bf16.msra.mxu0 0
  %6629 = vmatprep.subr.bf16.mxu0 0
  %6630 = vmatpush1.bf16.msra.mxu0 0
  %6631 = vmatprep.subr.bf16.mxu0 0
  %6632 = vmatpush1.bf16.msra.mxu0 0
  %6633 = vmatprep.subr.bf16.mxu0 0
  %6634 = vmatpush1.bf16.msra.mxu0 0
  %6635 = vmatprep.subr.bf16.mxu0 0
  %6636 = vmatpush1.bf16.msra.mxu0 0
  %6637 = vmatprep.subr.bf16.mxu0 %v6562
  %6638 = vmatpush1.bf16.msra.mxu0 %v6559
  %6639 = vmatprep.subr.bf16.mxu0 0
  %6640 = vmatpush2.bf16.msra.mxu0 0
  %6641 = vmatprep.subr.bf16.mxu0 0
  %6642 = vmatpush2.bf16.msra.mxu0 0
  %6643 = vmatprep.subr.bf16.mxu0 0
  %6644 = vmatpush2.bf16.msra.mxu0 0
  %6645 = vmatprep.subr.bf16.mxu0 0
  %6646 = vmatpush2.bf16.msra.mxu0 0
  %6647 = vmatprep.subr.bf16.mxu0 0
  %6648 = vmatpush2.bf16.msra.mxu0 0
  %6649 = vmatprep.subr.bf16.mxu0 0
  %6650 = vmatpush2.bf16.msra.mxu0 0
  %6651 = vmatprep.subr.bf16.mxu0 0
  %6652 = vmatpush2.bf16.msra.mxu0 0
  %6653 = vmatprep.subr.bf16.mxu0 0
  %6654 = vmatpush2.bf16.msra.mxu0 0
  %6655 = vmatprep.mubr.bf16.mxu0 0
  %6656 = vmatmul.mubr.bf16.gmra.mxu0 %v6550
  %v6657 = vpop.f32.mrf.mxu0
  %v6658 = vadd.f32 0.0, %v6657
  %v6659 = vpop.f32.mrf.mxu0
  %v6660 = vadd.f32 0.0, %v6659
  %v6661 = vpop.f32.mrf.mxu0
  %v6662 = vpop.f32.mrf.mxu0
  %6663 = vdwg.mxu0
  %6664 = vmatprep.subr.bf16.mxu0 0
  %6665 = vmatpush1.bf16.msra.mxu0 0
  %6666 = vmatprep.subr.bf16.mxu0 0
  %6667 = vmatpush1.bf16.msra.mxu0 0
  %6668 = vmatprep.subr.bf16.mxu0 0
  %6669 = vmatpush1.bf16.msra.mxu0 0
  %6670 = vmatprep.subr.bf16.mxu0 0
  %6671 = vmatpush1.bf16.msra.mxu0 0
  %6672 = vmatprep.subr.bf16.mxu0 0
  %6673 = vmatpush1.bf16.msra.mxu0 0
  %6674 = vmatprep.subr.bf16.mxu0 0
  %6675 = vmatpush1.bf16.msra.mxu0 0
  %6676 = vmatprep.subr.bf16.mxu0 0
  %6677 = vmatpush1.bf16.msra.mxu0 0
  %6678 = vmatprep.subr.bf16.mxu0 %v6568
  %6679 = vmatpush1.bf16.msra.mxu0 %v6565
  %6680 = vmatprep.subr.bf16.mxu0 0
  %6681 = vmatpush2.bf16.msra.mxu0 0
  %6682 = vmatprep.subr.bf16.mxu0 0
  %6683 = vmatpush2.bf16.msra.mxu0 0
  %6684 = vmatprep.subr.bf16.mxu0 0
  %6685 = vmatpush2.bf16.msra.mxu0 0
  %6686 = vmatprep.subr.bf16.mxu0 0
  %6687 = vmatpush2.bf16.msra.mxu0 0
  %6688 = vmatprep.subr.bf16.mxu0 0
  %6689 = vmatpush2.bf16.msra.mxu0 0
  %6690 = vmatprep.subr.bf16.mxu0 0
  %6691 = vmatpush2.bf16.msra.mxu0 0
  %6692 = vmatprep.subr.bf16.mxu0 0
  %6693 = vmatpush2.bf16.msra.mxu0 0
  %6694 = vmatprep.subr.bf16.mxu0 0
  %6695 = vmatpush2.bf16.msra.mxu0 0
  %6696 = vmatprep.mubr.bf16.mxu0 0
  %6697 = vmatmul.mubr.bf16.gmra.mxu0 %v6550
  %v6698 = vpop.f32.mrf.mxu0
  %v6699 = vadd.f32 0.0, %v6698
  %v6700 = vpop.f32.mrf.mxu0
  %v6701 = vadd.f32 0.0, %v6700
  %v6702 = vpop.f32.mrf.mxu0
  %v6703 = vpop.f32.mrf.mxu0
  %6704 = vdwg.mxu0
  %6705 = vmatprep.subr.bf16.mxu0 0
  %6706 = vmatpush1.bf16.msra.mxu0 0
  %6707 = vmatprep.subr.bf16.mxu0 0
  %6708 = vmatpush1.bf16.msra.mxu0 0
  %6709 = vmatprep.subr.bf16.mxu0 0
  %6710 = vmatpush1.bf16.msra.mxu0 0
  %6711 = vmatprep.subr.bf16.mxu0 0
  %6712 = vmatpush1.bf16.msra.mxu0 0
  %6713 = vmatprep.subr.bf16.mxu0 0
  %6714 = vmatpush1.bf16.msra.mxu0 0
  %6715 = vmatprep.subr.bf16.mxu0 0
  %6716 = vmatpush1.bf16.msra.mxu0 0
  %6717 = vmatprep.subr.bf16.mxu0 0
  %6718 = vmatpush1.bf16.msra.mxu0 0
  %6719 = vmatprep.subr.bf16.mxu0 %v6574
  %6720 = vmatpush1.bf16.msra.mxu0 %v6571
  %6721 = vmatprep.subr.bf16.mxu0 0
  %6722 = vmatpush2.bf16.msra.mxu0 0
  %6723 = vmatprep.subr.bf16.mxu0 0
  %6724 = vmatpush2.bf16.msra.mxu0 0
  %6725 = vmatprep.subr.bf16.mxu0 0
  %6726 = vmatpush2.bf16.msra.mxu0 0
  %6727 = vmatprep.subr.bf16.mxu0 0
  %6728 = vmatpush2.bf16.msra.mxu0 0
  %6729 = vmatprep.subr.bf16.mxu0 0
  %6730 = vmatpush2.bf16.msra.mxu0 0
  %6731 = vmatprep.subr.bf16.mxu0 0
  %6732 = vmatpush2.bf16.msra.mxu0 0
  %6733 = vmatprep.subr.bf16.mxu0 0
  %6734 = vmatpush2.bf16.msra.mxu0 0
  %6735 = vmatprep.subr.bf16.mxu0 0
  %6736 = vmatpush2.bf16.msra.mxu0 0
  %6737 = vmatprep.mubr.bf16.mxu0 0
  %6738 = vmatmul.mubr.bf16.gmra.mxu0 %v6550
  %v6739 = vpop.f32.mrf.mxu0
  %v6740 = vadd.f32 0.0, %v6739
  %v6741 = vpop.f32.mrf.mxu0
  %v6742 = vadd.f32 0.0, %v6741
  %v6743 = vpop.f32.mrf.mxu0
  %v6744 = vpop.f32.mrf.mxu0
  %6745 = vdwg.mxu0
  %6746 = vmatprep.subr.bf16.mxu0 0
  %6747 = vmatpush1.bf16.msra.mxu0 0
  %6748 = vmatprep.subr.bf16.mxu0 0
  %6749 = vmatpush1.bf16.msra.mxu0 0
  %6750 = vmatprep.subr.bf16.mxu0 0
  %6751 = vmatpush1.bf16.msra.mxu0 0
  %6752 = vmatprep.subr.bf16.mxu0 0
  %6753 = vmatpush1.bf16.msra.mxu0 0
  %6754 = vmatprep.subr.bf16.mxu0 0
  %6755 = vmatpush1.bf16.msra.mxu0 0
  %6756 = vmatprep.subr.bf16.mxu0 0
  %6757 = vmatpush1.bf16.msra.mxu0 0
  %6758 = vmatprep.subr.bf16.mxu0 0
  %6759 = vmatpush1.bf16.msra.mxu0 0
  %6760 = vmatprep.subr.bf16.mxu0 %v6580
  %6761 = vmatpush1.bf16.msra.mxu0 %v6577
  %6762 = vmatprep.subr.bf16.mxu0 0
  %6763 = vmatpush2.bf16.msra.mxu0 0
  %6764 = vmatprep.subr.bf16.mxu0 0
  %6765 = vmatpush2.bf16.msra.mxu0 0
  %6766 = vmatprep.subr.bf16.mxu0 0
  %6767 = vmatpush2.bf16.msra.mxu0 0
  %6768 = vmatprep.subr.bf16.mxu0 0
  %6769 = vmatpush2.bf16.msra.mxu0 0
  %6770 = vmatprep.subr.bf16.mxu0 0
  %6771 = vmatpush2.bf16.msra.mxu0 0
  %6772 = vmatprep.subr.bf16.mxu0 0
  %6773 = vmatpush2.bf16.msra.mxu0 0
  %6774 = vmatprep.subr.bf16.mxu0 0
  %6775 = vmatpush2.bf16.msra.mxu0 0
  %6776 = vmatprep.subr.bf16.mxu0 0
  %6777 = vmatpush2.bf16.msra.mxu0 0
  %6778 = vmatprep.mubr.bf16.mxu0 0
  %6779 = vmatmul.mubr.bf16.gmra.mxu0 %v6550
  %v6780 = vpop.f32.mrf.mxu0
  %v6781 = vadd.f32 0.0, %v6780
  %v6782 = vpop.f32.mrf.mxu0
  %v6783 = vadd.f32 0.0, %v6782
  %v6784 = vpop.f32.mrf.mxu0
  %v6785 = vpop.f32.mrf.mxu0
  %6786 = vdwg.mxu0
  %v6787 = vadd.f32 %v6504, %v6617
  %v6788 = vadd.f32 %v6505, %v6619
  %v6789 = vadd.f32 %v6506, %v6658
  %v6790 = vadd.f32 %v6507, %v6660
  %v6791 = vadd.f32 %v6508, %v6699
  %v6792 = vadd.f32 %v6509, %v6701
  %v6793 = vadd.f32 %v6510, %v6740
  %v6794 = vadd.f32 %v6511, %v6742
  %v6795 = vadd.f32 %v6512, %v6781
  %v6796 = vadd.f32 %v6513, %v6783
  %6797 = vrot.lane.b32.xlu0 %v4532, 64
  %v6798 = vpop.permute.xlu0 %6797
  %6799 = vrot.lane.b32.xlu0 %v48, 36
  %v6800 = vpop.permute.xlu0 %6799
  %6801 = vrot.lane.b32.xlu0 %v49, 36
  %v6802 = vpop.permute.xlu0 %6801
  %6803 = vrot.lane.b32.xlu0 %v50, 36
  %v6804 = vpop.permute.xlu0 %6803
  %6805 = vrot.lane.b32.xlu0 %v51, 36
  %v6806 = vpop.permute.xlu0 %6805
  %6807 = vrot.lane.b32.xlu0 %v52, 36
  %v6808 = vpop.permute.xlu0 %6807
  %6809 = vrot.lane.b32.xlu0 %v53, 36
  %v6810 = vpop.permute.xlu0 %6809
  %6811 = vrot.lane.b32.xlu0 %v54, 36
  %v6812 = vpop.permute.xlu0 %6811
  %6813 = vrot.lane.b32.xlu0 %v55, 36
  %v6814 = vpop.permute.xlu0 %6813
  %6815 = vrot.lane.b32.xlu0 %v56, 36
  %v6816 = vpop.permute.xlu0 %6815
  %6817 = vrot.lane.b32.xlu0 %v57, 36
  %v6818 = vpop.permute.xlu0 %6817
  %6819 = vrot.lane.b32.xlu0 %v5100, 36
  %v6820 = vpop.permute.xlu0 %6819
  %vm6821 = vcmask 293888
  %v6822 = vsel %vm6821, %v6800, %v6802
  %v6823 = vsel %vm6821, %v6802, %v6804
  %v6824 = vsel %vm6821, %v6804, %v6806
  %v6825 = vsel %vm6821, %v6806, %v6808
  %v6826 = vsel %vm6821, %v6808, %v6810
  %v6827 = vsel %vm6821, %v6810, %v6812
  %v6828 = vsel %vm6821, %v6812, %v6814
  %v6829 = vsel %vm6821, %v6814, %v6816
  %v6830 = vsel %vm6821, %v6816, %v6818
  %v6831 = vsel %vm6821, %v6818, %v6820
  %v6833 = vsel %vm91, %v6798, 0
  %v6836 = vsel %vm95, %v6822, 0
  %v6839 = vsel %vm95, %v6823, 0
  %v6842 = vsel %vm95, %v6824, 0
  %v6845 = vsel %vm95, %v6825, 0
  %v6848 = vsel %vm95, %v6826, 0
  %v6851 = vsel %vm95, %v6827, 0
  %v6854 = vsel %vm95, %v6828, 0
  %v6857 = vsel %vm95, %v6829, 0
  %v6860 = vsel %vm95, %v6830, 0
  %v6863 = vsel %vm95, %v6831, 0
  %6865 = vmatprep.subr.bf16.mxu0 0
  %6866 = vmatpush1.bf16.msra.mxu0 0
  %6867 = vmatprep.subr.bf16.mxu0 0
  %6868 = vmatpush1.bf16.msra.mxu0 0
  %6869 = vmatprep.subr.bf16.mxu0 0
  %6870 = vmatpush1.bf16.msra.mxu0 0
  %6871 = vmatprep.subr.bf16.mxu0 0
  %6872 = vmatpush1.bf16.msra.mxu0 0
  %6873 = vmatprep.subr.bf16.mxu0 0
  %6874 = vmatpush1.bf16.msra.mxu0 0
  %6875 = vmatprep.subr.bf16.mxu0 0
  %6876 = vmatpush1.bf16.msra.mxu0 0
  %6877 = vmatprep.subr.bf16.mxu0 0
  %6878 = vmatpush1.bf16.msra.mxu0 0
  %6879 = vmatprep.subr.bf16.mxu0 %v6839
  %6880 = vmatpush1.bf16.msra.mxu0 %v6836
  %6881 = vmatprep.subr.bf16.mxu0 0
  %6882 = vmatpush2.bf16.msra.mxu0 0
  %6883 = vmatprep.subr.bf16.mxu0 0
  %6884 = vmatpush2.bf16.msra.mxu0 0
  %6885 = vmatprep.subr.bf16.mxu0 0
  %6886 = vmatpush2.bf16.msra.mxu0 0
  %6887 = vmatprep.subr.bf16.mxu0 0
  %6888 = vmatpush2.bf16.msra.mxu0 0
  %6889 = vmatprep.subr.bf16.mxu0 0
  %6890 = vmatpush2.bf16.msra.mxu0 0
  %6891 = vmatprep.subr.bf16.mxu0 0
  %6892 = vmatpush2.bf16.msra.mxu0 0
  %6893 = vmatprep.subr.bf16.mxu0 0
  %6894 = vmatpush2.bf16.msra.mxu0 0
  %6895 = vmatprep.subr.bf16.mxu0 0
  %6896 = vmatpush2.bf16.msra.mxu0 0
  %6897 = vmatprep.mubr.bf16.mxu0 0
  %6898 = vmatmul.mubr.bf16.gmra.mxu0 %v6833
  %v6899 = vpop.f32.mrf.mxu0
  %v6900 = vadd.f32 0.0, %v6899
  %v6901 = vpop.f32.mrf.mxu0
  %v6902 = vadd.f32 0.0, %v6901
  %v6903 = vpop.f32.mrf.mxu0
  %v6904 = vpop.f32.mrf.mxu0
  %6905 = vdwg.mxu0
  %6906 = vmatprep.subr.bf16.mxu0 0
  %6907 = vmatpush1.bf16.msra.mxu0 0
  %6908 = vmatprep.subr.bf16.mxu0 0
  %6909 = vmatpush1.bf16.msra.mxu0 0
  %6910 = vmatprep.subr.bf16.mxu0 0
  %6911 = vmatpush1.bf16.msra.mxu0 0
  %6912 = vmatprep.subr.bf16.mxu0 0
  %6913 = vmatpush1.bf16.msra.mxu0 0
  %6914 = vmatprep.subr.bf16.mxu0 0
  %6915 = vmatpush1.bf16.msra.mxu0 0
  %6916 = vmatprep.subr.bf16.mxu0 0
  %6917 = vmatpush1.bf16.msra.mxu0 0
  %6918 = vmatprep.subr.bf16.mxu0 0
  %6919 = vmatpush1.bf16.msra.mxu0 0
  %6920 = vmatprep.subr.bf16.mxu0 %v6845
  %6921 = vmatpush1.bf16.msra.mxu0 %v6842
  %6922 = vmatprep.subr.bf16.mxu0 0
  %6923 = vmatpush2.bf16.msra.mxu0 0
  %6924 = vmatprep.subr.bf16.mxu0 0
  %6925 = vmatpush2.bf16.msra.mxu0 0
  %6926 = vmatprep.subr.bf16.mxu0 0
  %6927 = vmatpush2.bf16.msra.mxu0 0
  %6928 = vmatprep.subr.bf16.mxu0 0
  %6929 = vmatpush2.bf16.msra.mxu0 0
  %6930 = vmatprep.subr.bf16.mxu0 0
  %6931 = vmatpush2.bf16.msra.mxu0 0
  %6932 = vmatprep.subr.bf16.mxu0 0
  %6933 = vmatpush2.bf16.msra.mxu0 0
  %6934 = vmatprep.subr.bf16.mxu0 0
  %6935 = vmatpush2.bf16.msra.mxu0 0
  %6936 = vmatprep.subr.bf16.mxu0 0
  %6937 = vmatpush2.bf16.msra.mxu0 0
  %6938 = vmatprep.mubr.bf16.mxu0 0
  %6939 = vmatmul.mubr.bf16.gmra.mxu0 %v6833
  %v6940 = vpop.f32.mrf.mxu0
  %v6941 = vadd.f32 0.0, %v6940
  %v6942 = vpop.f32.mrf.mxu0
  %v6943 = vadd.f32 0.0, %v6942
  %v6944 = vpop.f32.mrf.mxu0
  %v6945 = vpop.f32.mrf.mxu0
  %6946 = vdwg.mxu0
  %6947 = vmatprep.subr.bf16.mxu0 0
  %6948 = vmatpush1.bf16.msra.mxu0 0
  %6949 = vmatprep.subr.bf16.mxu0 0
  %6950 = vmatpush1.bf16.msra.mxu0 0
  %6951 = vmatprep.subr.bf16.mxu0 0
  %6952 = vmatpush1.bf16.msra.mxu0 0
  %6953 = vmatprep.subr.bf16.mxu0 0
  %6954 = vmatpush1.bf16.msra.mxu0 0
  %6955 = vmatprep.subr.bf16.mxu0 0
  %6956 = vmatpush1.bf16.msra.mxu0 0
  %6957 = vmatprep.subr.bf16.mxu0 0
  %6958 = vmatpush1.bf16.msra.mxu0 0
  %6959 = vmatprep.subr.bf16.mxu0 0
  %6960 = vmatpush1.bf16.msra.mxu0 0
  %6961 = vmatprep.subr.bf16.mxu0 %v6851
  %6962 = vmatpush1.bf16.msra.mxu0 %v6848
  %6963 = vmatprep.subr.bf16.mxu0 0
  %6964 = vmatpush2.bf16.msra.mxu0 0
  %6965 = vmatprep.subr.bf16.mxu0 0
  %6966 = vmatpush2.bf16.msra.mxu0 0
  %6967 = vmatprep.subr.bf16.mxu0 0
  %6968 = vmatpush2.bf16.msra.mxu0 0
  %6969 = vmatprep.subr.bf16.mxu0 0
  %6970 = vmatpush2.bf16.msra.mxu0 0
  %6971 = vmatprep.subr.bf16.mxu0 0
  %6972 = vmatpush2.bf16.msra.mxu0 0
  %6973 = vmatprep.subr.bf16.mxu0 0
  %6974 = vmatpush2.bf16.msra.mxu0 0
  %6975 = vmatprep.subr.bf16.mxu0 0
  %6976 = vmatpush2.bf16.msra.mxu0 0
  %6977 = vmatprep.subr.bf16.mxu0 0
  %6978 = vmatpush2.bf16.msra.mxu0 0
  %6979 = vmatprep.mubr.bf16.mxu0 0
  %6980 = vmatmul.mubr.bf16.gmra.mxu0 %v6833
  %v6981 = vpop.f32.mrf.mxu0
  %v6982 = vadd.f32 0.0, %v6981
  %v6983 = vpop.f32.mrf.mxu0
  %v6984 = vadd.f32 0.0, %v6983
  %v6985 = vpop.f32.mrf.mxu0
  %v6986 = vpop.f32.mrf.mxu0
  %6987 = vdwg.mxu0
  %6988 = vmatprep.subr.bf16.mxu0 0
  %6989 = vmatpush1.bf16.msra.mxu0 0
  %6990 = vmatprep.subr.bf16.mxu0 0
  %6991 = vmatpush1.bf16.msra.mxu0 0
  %6992 = vmatprep.subr.bf16.mxu0 0
  %6993 = vmatpush1.bf16.msra.mxu0 0
  %6994 = vmatprep.subr.bf16.mxu0 0
  %6995 = vmatpush1.bf16.msra.mxu0 0
  %6996 = vmatprep.subr.bf16.mxu0 0
  %6997 = vmatpush1.bf16.msra.mxu0 0
  %6998 = vmatprep.subr.bf16.mxu0 0
  %6999 = vmatpush1.bf16.msra.mxu0 0
  %7000 = vmatprep.subr.bf16.mxu0 0
  %7001 = vmatpush1.bf16.msra.mxu0 0
  %7002 = vmatprep.subr.bf16.mxu0 %v6857
  %7003 = vmatpush1.bf16.msra.mxu0 %v6854
  %7004 = vmatprep.subr.bf16.mxu0 0
  %7005 = vmatpush2.bf16.msra.mxu0 0
  %7006 = vmatprep.subr.bf16.mxu0 0
  %7007 = vmatpush2.bf16.msra.mxu0 0
  %7008 = vmatprep.subr.bf16.mxu0 0
  %7009 = vmatpush2.bf16.msra.mxu0 0
  %7010 = vmatprep.subr.bf16.mxu0 0
  %7011 = vmatpush2.bf16.msra.mxu0 0
  %7012 = vmatprep.subr.bf16.mxu0 0
  %7013 = vmatpush2.bf16.msra.mxu0 0
  %7014 = vmatprep.subr.bf16.mxu0 0
  %7015 = vmatpush2.bf16.msra.mxu0 0
  %7016 = vmatprep.subr.bf16.mxu0 0
  %7017 = vmatpush2.bf16.msra.mxu0 0
  %7018 = vmatprep.subr.bf16.mxu0 0
  %7019 = vmatpush2.bf16.msra.mxu0 0
  %7020 = vmatprep.mubr.bf16.mxu0 0
  %7021 = vmatmul.mubr.bf16.gmra.mxu0 %v6833
  %v7022 = vpop.f32.mrf.mxu0
  %v7023 = vadd.f32 0.0, %v7022
  %v7024 = vpop.f32.mrf.mxu0
  %v7025 = vadd.f32 0.0, %v7024
  %v7026 = vpop.f32.mrf.mxu0
  %v7027 = vpop.f32.mrf.mxu0
  %7028 = vdwg.mxu0
  %7029 = vmatprep.subr.bf16.mxu0 0
  %7030 = vmatpush1.bf16.msra.mxu0 0
  %7031 = vmatprep.subr.bf16.mxu0 0
  %7032 = vmatpush1.bf16.msra.mxu0 0
  %7033 = vmatprep.subr.bf16.mxu0 0
  %7034 = vmatpush1.bf16.msra.mxu0 0
  %7035 = vmatprep.subr.bf16.mxu0 0
  %7036 = vmatpush1.bf16.msra.mxu0 0
  %7037 = vmatprep.subr.bf16.mxu0 0
  %7038 = vmatpush1.bf16.msra.mxu0 0
  %7039 = vmatprep.subr.bf16.mxu0 0
  %7040 = vmatpush1.bf16.msra.mxu0 0
  %7041 = vmatprep.subr.bf16.mxu0 0
  %7042 = vmatpush1.bf16.msra.mxu0 0
  %7043 = vmatprep.subr.bf16.mxu0 %v6863
  %7044 = vmatpush1.bf16.msra.mxu0 %v6860
  %7045 = vmatprep.subr.bf16.mxu0 0
  %7046 = vmatpush2.bf16.msra.mxu0 0
  %7047 = vmatprep.subr.bf16.mxu0 0
  %7048 = vmatpush2.bf16.msra.mxu0 0
  %7049 = vmatprep.subr.bf16.mxu0 0
  %7050 = vmatpush2.bf16.msra.mxu0 0
  %7051 = vmatprep.subr.bf16.mxu0 0
  %7052 = vmatpush2.bf16.msra.mxu0 0
  %7053 = vmatprep.subr.bf16.mxu0 0
  %7054 = vmatpush2.bf16.msra.mxu0 0
  %7055 = vmatprep.subr.bf16.mxu0 0
  %7056 = vmatpush2.bf16.msra.mxu0 0
  %7057 = vmatprep.subr.bf16.mxu0 0
  %7058 = vmatpush2.bf16.msra.mxu0 0
  %7059 = vmatprep.subr.bf16.mxu0 0
  %7060 = vmatpush2.bf16.msra.mxu0 0
  %7061 = vmatprep.mubr.bf16.mxu0 0
  %7062 = vmatmul.mubr.bf16.gmra.mxu0 %v6833
  %v7063 = vpop.f32.mrf.mxu0
  %v7064 = vadd.f32 0.0, %v7063
  %v7065 = vpop.f32.mrf.mxu0
  %v7066 = vadd.f32 0.0, %v7065
  %v7067 = vpop.f32.mrf.mxu0
  %v7068 = vpop.f32.mrf.mxu0
  %7069 = vdwg.mxu0
  %v7070 = vadd.f32 %v6787, %v6900
  %v7071 = vadd.f32 %v6788, %v6902
  %v7072 = vadd.f32 %v6789, %v6941
  %v7073 = vadd.f32 %v6790, %v6943
  %v7074 = vadd.f32 %v6791, %v6982
  %v7075 = vadd.f32 %v6792, %v6984
  %v7076 = vadd.f32 %v6793, %v7023
  %v7077 = vadd.f32 %v6794, %v7025
  %v7078 = vadd.f32 %v6795, %v7064
  %v7079 = vadd.f32 %v6796, %v7066
  %7080 = vrot.lane.b32.xlu0 %v4532, 56
  %v7081 = vpop.permute.xlu0 %7080
  %7082 = vrot.lane.b32.xlu0 %v48, 35
  %v7083 = vpop.permute.xlu0 %7082
  %7084 = vrot.lane.b32.xlu0 %v49, 35
  %v7085 = vpop.permute.xlu0 %7084
  %7086 = vrot.lane.b32.xlu0 %v50, 35
  %v7087 = vpop.permute.xlu0 %7086
  %7088 = vrot.lane.b32.xlu0 %v51, 35
  %v7089 = vpop.permute.xlu0 %7088
  %7090 = vrot.lane.b32.xlu0 %v52, 35
  %v7091 = vpop.permute.xlu0 %7090
  %7092 = vrot.lane.b32.xlu0 %v53, 35
  %v7093 = vpop.permute.xlu0 %7092
  %7094 = vrot.lane.b32.xlu0 %v54, 35
  %v7095 = vpop.permute.xlu0 %7094
  %7096 = vrot.lane.b32.xlu0 %v55, 35
  %v7097 = vpop.permute.xlu0 %7096
  %7098 = vrot.lane.b32.xlu0 %v56, 35
  %v7099 = vpop.permute.xlu0 %7098
  %7100 = vrot.lane.b32.xlu0 %v57, 35
  %v7101 = vpop.permute.xlu0 %7100
  %7102 = vrot.lane.b32.xlu0 %v5100, 35
  %v7103 = vpop.permute.xlu0 %7102
  %vm7104 = vcmask 285696
  %v7105 = vsel %vm7104, %v7083, %v7085
  %v7106 = vsel %vm7104, %v7085, %v7087
  %v7107 = vsel %vm7104, %v7087, %v7089
  %v7108 = vsel %vm7104, %v7089, %v7091
  %v7109 = vsel %vm7104, %v7091, %v7093
  %v7110 = vsel %vm7104, %v7093, %v7095
  %v7111 = vsel %vm7104, %v7095, %v7097
  %v7112 = vsel %vm7104, %v7097, %v7099
  %v7113 = vsel %vm7104, %v7099, %v7101
  %v7114 = vsel %vm7104, %v7101, %v7103
  %v7116 = vsel %vm91, %v7081, 0
  %v7119 = vsel %vm95, %v7105, 0
  %v7122 = vsel %vm95, %v7106, 0
  %v7125 = vsel %vm95, %v7107, 0
  %v7128 = vsel %vm95, %v7108, 0
  %v7131 = vsel %vm95, %v7109, 0
  %v7134 = vsel %vm95, %v7110, 0
  %v7137 = vsel %vm95, %v7111, 0
  %v7140 = vsel %vm95, %v7112, 0
  %v7143 = vsel %vm95, %v7113, 0
  %v7146 = vsel %vm95, %v7114, 0
  %7148 = vmatprep.subr.bf16.mxu0 0
  %7149 = vmatpush1.bf16.msra.mxu0 0
  %7150 = vmatprep.subr.bf16.mxu0 0
  %7151 = vmatpush1.bf16.msra.mxu0 0
  %7152 = vmatprep.subr.bf16.mxu0 0
  %7153 = vmatpush1.bf16.msra.mxu0 0
  %7154 = vmatprep.subr.bf16.mxu0 0
  %7155 = vmatpush1.bf16.msra.mxu0 0
  %7156 = vmatprep.subr.bf16.mxu0 0
  %7157 = vmatpush1.bf16.msra.mxu0 0
  %7158 = vmatprep.subr.bf16.mxu0 0
  %7159 = vmatpush1.bf16.msra.mxu0 0
  %7160 = vmatprep.subr.bf16.mxu0 0
  %7161 = vmatpush1.bf16.msra.mxu0 0
  %7162 = vmatprep.subr.bf16.mxu0 %v7122
  %7163 = vmatpush1.bf16.msra.mxu0 %v7119
  %7164 = vmatprep.subr.bf16.mxu0 0
  %7165 = vmatpush2.bf16.msra.mxu0 0
  %7166 = vmatprep.subr.bf16.mxu0 0
  %7167 = vmatpush2.bf16.msra.mxu0 0
  %7168 = vmatprep.subr.bf16.mxu0 0
  %7169 = vmatpush2.bf16.msra.mxu0 0
  %7170 = vmatprep.subr.bf16.mxu0 0
  %7171 = vmatpush2.bf16.msra.mxu0 0
  %7172 = vmatprep.subr.bf16.mxu0 0
  %7173 = vmatpush2.bf16.msra.mxu0 0
  %7174 = vmatprep.subr.bf16.mxu0 0
  %7175 = vmatpush2.bf16.msra.mxu0 0
  %7176 = vmatprep.subr.bf16.mxu0 0
  %7177 = vmatpush2.bf16.msra.mxu0 0
  %7178 = vmatprep.subr.bf16.mxu0 0
  %7179 = vmatpush2.bf16.msra.mxu0 0
  %7180 = vmatprep.mubr.bf16.mxu0 0
  %7181 = vmatmul.mubr.bf16.gmra.mxu0 %v7116
  %v7182 = vpop.f32.mrf.mxu0
  %v7183 = vadd.f32 0.0, %v7182
  %v7184 = vpop.f32.mrf.mxu0
  %v7185 = vadd.f32 0.0, %v7184
  %v7186 = vpop.f32.mrf.mxu0
  %v7187 = vpop.f32.mrf.mxu0
  %7188 = vdwg.mxu0
  %7189 = vmatprep.subr.bf16.mxu0 0
  %7190 = vmatpush1.bf16.msra.mxu0 0
  %7191 = vmatprep.subr.bf16.mxu0 0
  %7192 = vmatpush1.bf16.msra.mxu0 0
  %7193 = vmatprep.subr.bf16.mxu0 0
  %7194 = vmatpush1.bf16.msra.mxu0 0
  %7195 = vmatprep.subr.bf16.mxu0 0
  %7196 = vmatpush1.bf16.msra.mxu0 0
  %7197 = vmatprep.subr.bf16.mxu0 0
  %7198 = vmatpush1.bf16.msra.mxu0 0
  %7199 = vmatprep.subr.bf16.mxu0 0
  %7200 = vmatpush1.bf16.msra.mxu0 0
  %7201 = vmatprep.subr.bf16.mxu0 0
  %7202 = vmatpush1.bf16.msra.mxu0 0
  %7203 = vmatprep.subr.bf16.mxu0 %v7128
  %7204 = vmatpush1.bf16.msra.mxu0 %v7125
  %7205 = vmatprep.subr.bf16.mxu0 0
  %7206 = vmatpush2.bf16.msra.mxu0 0
  %7207 = vmatprep.subr.bf16.mxu0 0
  %7208 = vmatpush2.bf16.msra.mxu0 0
  %7209 = vmatprep.subr.bf16.mxu0 0
  %7210 = vmatpush2.bf16.msra.mxu0 0
  %7211 = vmatprep.subr.bf16.mxu0 0
  %7212 = vmatpush2.bf16.msra.mxu0 0
  %7213 = vmatprep.subr.bf16.mxu0 0
  %7214 = vmatpush2.bf16.msra.mxu0 0
  %7215 = vmatprep.subr.bf16.mxu0 0
  %7216 = vmatpush2.bf16.msra.mxu0 0
  %7217 = vmatprep.subr.bf16.mxu0 0
  %7218 = vmatpush2.bf16.msra.mxu0 0
  %7219 = vmatprep.subr.bf16.mxu0 0
  %7220 = vmatpush2.bf16.msra.mxu0 0
  %7221 = vmatprep.mubr.bf16.mxu0 0
  %7222 = vmatmul.mubr.bf16.gmra.mxu0 %v7116
  %v7223 = vpop.f32.mrf.mxu0
  %v7224 = vadd.f32 0.0, %v7223
  %v7225 = vpop.f32.mrf.mxu0
  %v7226 = vadd.f32 0.0, %v7225
  %v7227 = vpop.f32.mrf.mxu0
  %v7228 = vpop.f32.mrf.mxu0
  %7229 = vdwg.mxu0
  %7230 = vmatprep.subr.bf16.mxu0 0
  %7231 = vmatpush1.bf16.msra.mxu0 0
  %7232 = vmatprep.subr.bf16.mxu0 0
  %7233 = vmatpush1.bf16.msra.mxu0 0
  %7234 = vmatprep.subr.bf16.mxu0 0
  %7235 = vmatpush1.bf16.msra.mxu0 0
  %7236 = vmatprep.subr.bf16.mxu0 0
  %7237 = vmatpush1.bf16.msra.mxu0 0
  %7238 = vmatprep.subr.bf16.mxu0 0
  %7239 = vmatpush1.bf16.msra.mxu0 0
  %7240 = vmatprep.subr.bf16.mxu0 0
  %7241 = vmatpush1.bf16.msra.mxu0 0
  %7242 = vmatprep.subr.bf16.mxu0 0
  %7243 = vmatpush1.bf16.msra.mxu0 0
  %7244 = vmatprep.subr.bf16.mxu0 %v7134
  %7245 = vmatpush1.bf16.msra.mxu0 %v7131
  %7246 = vmatprep.subr.bf16.mxu0 0
  %7247 = vmatpush2.bf16.msra.mxu0 0
  %7248 = vmatprep.subr.bf16.mxu0 0
  %7249 = vmatpush2.bf16.msra.mxu0 0
  %7250 = vmatprep.subr.bf16.mxu0 0
  %7251 = vmatpush2.bf16.msra.mxu0 0
  %7252 = vmatprep.subr.bf16.mxu0 0
  %7253 = vmatpush2.bf16.msra.mxu0 0
  %7254 = vmatprep.subr.bf16.mxu0 0
  %7255 = vmatpush2.bf16.msra.mxu0 0
  %7256 = vmatprep.subr.bf16.mxu0 0
  %7257 = vmatpush2.bf16.msra.mxu0 0
  %7258 = vmatprep.subr.bf16.mxu0 0
  %7259 = vmatpush2.bf16.msra.mxu0 0
  %7260 = vmatprep.subr.bf16.mxu0 0
  %7261 = vmatpush2.bf16.msra.mxu0 0
  %7262 = vmatprep.mubr.bf16.mxu0 0
  %7263 = vmatmul.mubr.bf16.gmra.mxu0 %v7116
  %v7264 = vpop.f32.mrf.mxu0
  %v7265 = vadd.f32 0.0, %v7264
  %v7266 = vpop.f32.mrf.mxu0
  %v7267 = vadd.f32 0.0, %v7266
  %v7268 = vpop.f32.mrf.mxu0
  %v7269 = vpop.f32.mrf.mxu0
  %7270 = vdwg.mxu0
  %7271 = vmatprep.subr.bf16.mxu0 0
  %7272 = vmatpush1.bf16.msra.mxu0 0
  %7273 = vmatprep.subr.bf16.mxu0 0
  %7274 = vmatpush1.bf16.msra.mxu0 0
  %7275 = vmatprep.subr.bf16.mxu0 0
  %7276 = vmatpush1.bf16.msra.mxu0 0
  %7277 = vmatprep.subr.bf16.mxu0 0
  %7278 = vmatpush1.bf16.msra.mxu0 0
  %7279 = vmatprep.subr.bf16.mxu0 0
  %7280 = vmatpush1.bf16.msra.mxu0 0
  %7281 = vmatprep.subr.bf16.mxu0 0
  %7282 = vmatpush1.bf16.msra.mxu0 0
  %7283 = vmatprep.subr.bf16.mxu0 0
  %7284 = vmatpush1.bf16.msra.mxu0 0
  %7285 = vmatprep.subr.bf16.mxu0 %v7140
  %7286 = vmatpush1.bf16.msra.mxu0 %v7137
  %7287 = vmatprep.subr.bf16.mxu0 0
  %7288 = vmatpush2.bf16.msra.mxu0 0
  %7289 = vmatprep.subr.bf16.mxu0 0
  %7290 = vmatpush2.bf16.msra.mxu0 0
  %7291 = vmatprep.subr.bf16.mxu0 0
  %7292 = vmatpush2.bf16.msra.mxu0 0
  %7293 = vmatprep.subr.bf16.mxu0 0
  %7294 = vmatpush2.bf16.msra.mxu0 0
  %7295 = vmatprep.subr.bf16.mxu0 0
  %7296 = vmatpush2.bf16.msra.mxu0 0
  %7297 = vmatprep.subr.bf16.mxu0 0
  %7298 = vmatpush2.bf16.msra.mxu0 0
  %7299 = vmatprep.subr.bf16.mxu0 0
  %7300 = vmatpush2.bf16.msra.mxu0 0
  %7301 = vmatprep.subr.bf16.mxu0 0
  %7302 = vmatpush2.bf16.msra.mxu0 0
  %7303 = vmatprep.mubr.bf16.mxu0 0
  %7304 = vmatmul.mubr.bf16.gmra.mxu0 %v7116
  %v7305 = vpop.f32.mrf.mxu0
  %v7306 = vadd.f32 0.0, %v7305
  %v7307 = vpop.f32.mrf.mxu0
  %v7308 = vadd.f32 0.0, %v7307
  %v7309 = vpop.f32.mrf.mxu0
  %v7310 = vpop.f32.mrf.mxu0
  %7311 = vdwg.mxu0
  %7312 = vmatprep.subr.bf16.mxu0 0
  %7313 = vmatpush1.bf16.msra.mxu0 0
  %7314 = vmatprep.subr.bf16.mxu0 0
  %7315 = vmatpush1.bf16.msra.mxu0 0
  %7316 = vmatprep.subr.bf16.mxu0 0
  %7317 = vmatpush1.bf16.msra.mxu0 0
  %7318 = vmatprep.subr.bf16.mxu0 0
  %7319 = vmatpush1.bf16.msra.mxu0 0
  %7320 = vmatprep.subr.bf16.mxu0 0
  %7321 = vmatpush1.bf16.msra.mxu0 0
  %7322 = vmatprep.subr.bf16.mxu0 0
  %7323 = vmatpush1.bf16.msra.mxu0 0
  %7324 = vmatprep.subr.bf16.mxu0 0
  %7325 = vmatpush1.bf16.msra.mxu0 0
  %7326 = vmatprep.subr.bf16.mxu0 %v7146
  %7327 = vmatpush1.bf16.msra.mxu0 %v7143
  %7328 = vmatprep.subr.bf16.mxu0 0
  %7329 = vmatpush2.bf16.msra.mxu0 0
  %7330 = vmatprep.subr.bf16.mxu0 0
  %7331 = vmatpush2.bf16.msra.mxu0 0
  %7332 = vmatprep.subr.bf16.mxu0 0
  %7333 = vmatpush2.bf16.msra.mxu0 0
  %7334 = vmatprep.subr.bf16.mxu0 0
  %7335 = vmatpush2.bf16.msra.mxu0 0
  %7336 = vmatprep.subr.bf16.mxu0 0
  %7337 = vmatpush2.bf16.msra.mxu0 0
  %7338 = vmatprep.subr.bf16.mxu0 0
  %7339 = vmatpush2.bf16.msra.mxu0 0
  %7340 = vmatprep.subr.bf16.mxu0 0
  %7341 = vmatpush2.bf16.msra.mxu0 0
  %7342 = vmatprep.subr.bf16.mxu0 0
  %7343 = vmatpush2.bf16.msra.mxu0 0
  %7344 = vmatprep.mubr.bf16.mxu0 0
  %7345 = vmatmul.mubr.bf16.gmra.mxu0 %v7116
  %v7346 = vpop.f32.mrf.mxu0
  %v7347 = vadd.f32 0.0, %v7346
  %v7348 = vpop.f32.mrf.mxu0
  %v7349 = vadd.f32 0.0, %v7348
  %v7350 = vpop.f32.mrf.mxu0
  %v7351 = vpop.f32.mrf.mxu0
  %7352 = vdwg.mxu0
  %v7353 = vadd.f32 %v7070, %v7183
  %v7354 = vadd.f32 %v7071, %v7185
  %v7355 = vadd.f32 %v7072, %v7224
  %v7356 = vadd.f32 %v7073, %v7226
  %v7357 = vadd.f32 %v7074, %v7265
  %v7358 = vadd.f32 %v7075, %v7267
  %v7359 = vadd.f32 %v7076, %v7306
  %v7360 = vadd.f32 %v7077, %v7308
  %v7361 = vadd.f32 %v7078, %v7347
  %v7362 = vadd.f32 %v7079, %v7349
  %7363 = vrot.lane.b32.xlu0 %v4532, 48
  %v7364 = vpop.permute.xlu0 %7363
  %7365 = vrot.lane.b32.xlu0 %v48, 34
  %v7366 = vpop.permute.xlu0 %7365
  %7367 = vrot.lane.b32.xlu0 %v49, 34
  %v7368 = vpop.permute.xlu0 %7367
  %7369 = vrot.lane.b32.xlu0 %v50, 34
  %v7370 = vpop.permute.xlu0 %7369
  %7371 = vrot.lane.b32.xlu0 %v51, 34
  %v7372 = vpop.permute.xlu0 %7371
  %7373 = vrot.lane.b32.xlu0 %v52, 34
  %v7374 = vpop.permute.xlu0 %7373
  %7375 = vrot.lane.b32.xlu0 %v53, 34
  %v7376 = vpop.permute.xlu0 %7375
  %7377 = vrot.lane.b32.xlu0 %v54, 34
  %v7378 = vpop.permute.xlu0 %7377
  %7379 = vrot.lane.b32.xlu0 %v55, 34
  %v7380 = vpop.permute.xlu0 %7379
  %7381 = vrot.lane.b32.xlu0 %v56, 34
  %v7382 = vpop.permute.xlu0 %7381
  %7383 = vrot.lane.b32.xlu0 %v57, 34
  %v7384 = vpop.permute.xlu0 %7383
  %7385 = vrot.lane.b32.xlu0 %v5100, 34
  %v7386 = vpop.permute.xlu0 %7385
  %vm7387 = vcmask 277504
  %v7388 = vsel %vm7387, %v7366, %v7368
  %v7389 = vsel %vm7387, %v7368, %v7370
  %v7390 = vsel %vm7387, %v7370, %v7372
  %v7391 = vsel %vm7387, %v7372, %v7374
  %v7392 = vsel %vm7387, %v7374, %v7376
  %v7393 = vsel %vm7387, %v7376, %v7378
  %v7394 = vsel %vm7387, %v7378, %v7380
  %v7395 = vsel %vm7387, %v7380, %v7382
  %v7396 = vsel %vm7387, %v7382, %v7384
  %v7397 = vsel %vm7387, %v7384, %v7386
  %v7399 = vsel %vm91, %v7364, 0
  %v7402 = vsel %vm95, %v7388, 0
  %v7405 = vsel %vm95, %v7389, 0
  %v7408 = vsel %vm95, %v7390, 0
  %v7411 = vsel %vm95, %v7391, 0
  %v7414 = vsel %vm95, %v7392, 0
  %v7417 = vsel %vm95, %v7393, 0
  %v7420 = vsel %vm95, %v7394, 0
  %v7423 = vsel %vm95, %v7395, 0
  %v7426 = vsel %vm95, %v7396, 0
  %v7429 = vsel %vm95, %v7397, 0
  %7431 = vmatprep.subr.bf16.mxu0 0
  %7432 = vmatpush1.bf16.msra.mxu0 0
  %7433 = vmatprep.subr.bf16.mxu0 0
  %7434 = vmatpush1.bf16.msra.mxu0 0
  %7435 = vmatprep.subr.bf16.mxu0 0
  %7436 = vmatpush1.bf16.msra.mxu0 0
  %7437 = vmatprep.subr.bf16.mxu0 0
  %7438 = vmatpush1.bf16.msra.mxu0 0
  %7439 = vmatprep.subr.bf16.mxu0 0
  %7440 = vmatpush1.bf16.msra.mxu0 0
  %7441 = vmatprep.subr.bf16.mxu0 0
  %7442 = vmatpush1.bf16.msra.mxu0 0
  %7443 = vmatprep.subr.bf16.mxu0 0
  %7444 = vmatpush1.bf16.msra.mxu0 0
  %7445 = vmatprep.subr.bf16.mxu0 %v7405
  %7446 = vmatpush1.bf16.msra.mxu0 %v7402
  %7447 = vmatprep.subr.bf16.mxu0 0
  %7448 = vmatpush2.bf16.msra.mxu0 0
  %7449 = vmatprep.subr.bf16.mxu0 0
  %7450 = vmatpush2.bf16.msra.mxu0 0
  %7451 = vmatprep.subr.bf16.mxu0 0
  %7452 = vmatpush2.bf16.msra.mxu0 0
  %7453 = vmatprep.subr.bf16.mxu0 0
  %7454 = vmatpush2.bf16.msra.mxu0 0
  %7455 = vmatprep.subr.bf16.mxu0 0
  %7456 = vmatpush2.bf16.msra.mxu0 0
  %7457 = vmatprep.subr.bf16.mxu0 0
  %7458 = vmatpush2.bf16.msra.mxu0 0
  %7459 = vmatprep.subr.bf16.mxu0 0
  %7460 = vmatpush2.bf16.msra.mxu0 0
  %7461 = vmatprep.subr.bf16.mxu0 0
  %7462 = vmatpush2.bf16.msra.mxu0 0
  %7463 = vmatprep.mubr.bf16.mxu0 0
  %7464 = vmatmul.mubr.bf16.gmra.mxu0 %v7399
  %v7465 = vpop.f32.mrf.mxu0
  %v7466 = vadd.f32 0.0, %v7465
  %v7467 = vpop.f32.mrf.mxu0
  %v7468 = vadd.f32 0.0, %v7467
  %v7469 = vpop.f32.mrf.mxu0
  %v7470 = vpop.f32.mrf.mxu0
  %7471 = vdwg.mxu0
  %7472 = vmatprep.subr.bf16.mxu0 0
  %7473 = vmatpush1.bf16.msra.mxu0 0
  %7474 = vmatprep.subr.bf16.mxu0 0
  %7475 = vmatpush1.bf16.msra.mxu0 0
  %7476 = vmatprep.subr.bf16.mxu0 0
  %7477 = vmatpush1.bf16.msra.mxu0 0
  %7478 = vmatprep.subr.bf16.mxu0 0
  %7479 = vmatpush1.bf16.msra.mxu0 0
  %7480 = vmatprep.subr.bf16.mxu0 0
  %7481 = vmatpush1.bf16.msra.mxu0 0
  %7482 = vmatprep.subr.bf16.mxu0 0
  %7483 = vmatpush1.bf16.msra.mxu0 0
  %7484 = vmatprep.subr.bf16.mxu0 0
  %7485 = vmatpush1.bf16.msra.mxu0 0
  %7486 = vmatprep.subr.bf16.mxu0 %v7411
  %7487 = vmatpush1.bf16.msra.mxu0 %v7408
  %7488 = vmatprep.subr.bf16.mxu0 0
  %7489 = vmatpush2.bf16.msra.mxu0 0
  %7490 = vmatprep.subr.bf16.mxu0 0
  %7491 = vmatpush2.bf16.msra.mxu0 0
  %7492 = vmatprep.subr.bf16.mxu0 0
  %7493 = vmatpush2.bf16.msra.mxu0 0
  %7494 = vmatprep.subr.bf16.mxu0 0
  %7495 = vmatpush2.bf16.msra.mxu0 0
  %7496 = vmatprep.subr.bf16.mxu0 0
  %7497 = vmatpush2.bf16.msra.mxu0 0
  %7498 = vmatprep.subr.bf16.mxu0 0
  %7499 = vmatpush2.bf16.msra.mxu0 0
  %7500 = vmatprep.subr.bf16.mxu0 0
  %7501 = vmatpush2.bf16.msra.mxu0 0
  %7502 = vmatprep.subr.bf16.mxu0 0
  %7503 = vmatpush2.bf16.msra.mxu0 0
  %7504 = vmatprep.mubr.bf16.mxu0 0
  %7505 = vmatmul.mubr.bf16.gmra.mxu0 %v7399
  %v7506 = vpop.f32.mrf.mxu0
  %v7507 = vadd.f32 0.0, %v7506
  %v7508 = vpop.f32.mrf.mxu0
  %v7509 = vadd.f32 0.0, %v7508
  %v7510 = vpop.f32.mrf.mxu0
  %v7511 = vpop.f32.mrf.mxu0
  %7512 = vdwg.mxu0
  %7513 = vmatprep.subr.bf16.mxu0 0
  %7514 = vmatpush1.bf16.msra.mxu0 0
  %7515 = vmatprep.subr.bf16.mxu0 0
  %7516 = vmatpush1.bf16.msra.mxu0 0
  %7517 = vmatprep.subr.bf16.mxu0 0
  %7518 = vmatpush1.bf16.msra.mxu0 0
  %7519 = vmatprep.subr.bf16.mxu0 0
  %7520 = vmatpush1.bf16.msra.mxu0 0
  %7521 = vmatprep.subr.bf16.mxu0 0
  %7522 = vmatpush1.bf16.msra.mxu0 0
  %7523 = vmatprep.subr.bf16.mxu0 0
  %7524 = vmatpush1.bf16.msra.mxu0 0
  %7525 = vmatprep.subr.bf16.mxu0 0
  %7526 = vmatpush1.bf16.msra.mxu0 0
  %7527 = vmatprep.subr.bf16.mxu0 %v7417
  %7528 = vmatpush1.bf16.msra.mxu0 %v7414
  %7529 = vmatprep.subr.bf16.mxu0 0
  %7530 = vmatpush2.bf16.msra.mxu0 0
  %7531 = vmatprep.subr.bf16.mxu0 0
  %7532 = vmatpush2.bf16.msra.mxu0 0
  %7533 = vmatprep.subr.bf16.mxu0 0
  %7534 = vmatpush2.bf16.msra.mxu0 0
  %7535 = vmatprep.subr.bf16.mxu0 0
  %7536 = vmatpush2.bf16.msra.mxu0 0
  %7537 = vmatprep.subr.bf16.mxu0 0
  %7538 = vmatpush2.bf16.msra.mxu0 0
  %7539 = vmatprep.subr.bf16.mxu0 0
  %7540 = vmatpush2.bf16.msra.mxu0 0
  %7541 = vmatprep.subr.bf16.mxu0 0
  %7542 = vmatpush2.bf16.msra.mxu0 0
  %7543 = vmatprep.subr.bf16.mxu0 0
  %7544 = vmatpush2.bf16.msra.mxu0 0
  %7545 = vmatprep.mubr.bf16.mxu0 0
  %7546 = vmatmul.mubr.bf16.gmra.mxu0 %v7399
  %v7547 = vpop.f32.mrf.mxu0
  %v7548 = vadd.f32 0.0, %v7547
  %v7549 = vpop.f32.mrf.mxu0
  %v7550 = vadd.f32 0.0, %v7549
  %v7551 = vpop.f32.mrf.mxu0
  %v7552 = vpop.f32.mrf.mxu0
  %7553 = vdwg.mxu0
  %7554 = vmatprep.subr.bf16.mxu0 0
  %7555 = vmatpush1.bf16.msra.mxu0 0
  %7556 = vmatprep.subr.bf16.mxu0 0
  %7557 = vmatpush1.bf16.msra.mxu0 0
  %7558 = vmatprep.subr.bf16.mxu0 0
  %7559 = vmatpush1.bf16.msra.mxu0 0
  %7560 = vmatprep.subr.bf16.mxu0 0
  %7561 = vmatpush1.bf16.msra.mxu0 0
  %7562 = vmatprep.subr.bf16.mxu0 0
  %7563 = vmatpush1.bf16.msra.mxu0 0
  %7564 = vmatprep.subr.bf16.mxu0 0
  %7565 = vmatpush1.bf16.msra.mxu0 0
  %7566 = vmatprep.subr.bf16.mxu0 0
  %7567 = vmatpush1.bf16.msra.mxu0 0
  %7568 = vmatprep.subr.bf16.mxu0 %v7423
  %7569 = vmatpush1.bf16.msra.mxu0 %v7420
  %7570 = vmatprep.subr.bf16.mxu0 0
  %7571 = vmatpush2.bf16.msra.mxu0 0
  %7572 = vmatprep.subr.bf16.mxu0 0
  %7573 = vmatpush2.bf16.msra.mxu0 0
  %7574 = vmatprep.subr.bf16.mxu0 0
  %7575 = vmatpush2.bf16.msra.mxu0 0
  %7576 = vmatprep.subr.bf16.mxu0 0
  %7577 = vmatpush2.bf16.msra.mxu0 0
  %7578 = vmatprep.subr.bf16.mxu0 0
  %7579 = vmatpush2.bf16.msra.mxu0 0
  %7580 = vmatprep.subr.bf16.mxu0 0
  %7581 = vmatpush2.bf16.msra.mxu0 0
  %7582 = vmatprep.subr.bf16.mxu0 0
  %7583 = vmatpush2.bf16.msra.mxu0 0
  %7584 = vmatprep.subr.bf16.mxu0 0
  %7585 = vmatpush2.bf16.msra.mxu0 0
  %7586 = vmatprep.mubr.bf16.mxu0 0
  %7587 = vmatmul.mubr.bf16.gmra.mxu0 %v7399
  %v7588 = vpop.f32.mrf.mxu0
  %v7589 = vadd.f32 0.0, %v7588
  %v7590 = vpop.f32.mrf.mxu0
  %v7591 = vadd.f32 0.0, %v7590
  %v7592 = vpop.f32.mrf.mxu0
  %v7593 = vpop.f32.mrf.mxu0
  %7594 = vdwg.mxu0
  %7595 = vmatprep.subr.bf16.mxu0 0
  %7596 = vmatpush1.bf16.msra.mxu0 0
  %7597 = vmatprep.subr.bf16.mxu0 0
  %7598 = vmatpush1.bf16.msra.mxu0 0
  %7599 = vmatprep.subr.bf16.mxu0 0
  %7600 = vmatpush1.bf16.msra.mxu0 0
  %7601 = vmatprep.subr.bf16.mxu0 0
  %7602 = vmatpush1.bf16.msra.mxu0 0
  %7603 = vmatprep.subr.bf16.mxu0 0
  %7604 = vmatpush1.bf16.msra.mxu0 0
  %7605 = vmatprep.subr.bf16.mxu0 0
  %7606 = vmatpush1.bf16.msra.mxu0 0
  %7607 = vmatprep.subr.bf16.mxu0 0
  %7608 = vmatpush1.bf16.msra.mxu0 0
  %7609 = vmatprep.subr.bf16.mxu0 %v7429
  %7610 = vmatpush1.bf16.msra.mxu0 %v7426
  %7611 = vmatprep.subr.bf16.mxu0 0
  %7612 = vmatpush2.bf16.msra.mxu0 0
  %7613 = vmatprep.subr.bf16.mxu0 0
  %7614 = vmatpush2.bf16.msra.mxu0 0
  %7615 = vmatprep.subr.bf16.mxu0 0
  %7616 = vmatpush2.bf16.msra.mxu0 0
  %7617 = vmatprep.subr.bf16.mxu0 0
  %7618 = vmatpush2.bf16.msra.mxu0 0
  %7619 = vmatprep.subr.bf16.mxu0 0
  %7620 = vmatpush2.bf16.msra.mxu0 0
  %7621 = vmatprep.subr.bf16.mxu0 0
  %7622 = vmatpush2.bf16.msra.mxu0 0
  %7623 = vmatprep.subr.bf16.mxu0 0
  %7624 = vmatpush2.bf16.msra.mxu0 0
  %7625 = vmatprep.subr.bf16.mxu0 0
  %7626 = vmatpush2.bf16.msra.mxu0 0
  %7627 = vmatprep.mubr.bf16.mxu0 0
  %7628 = vmatmul.mubr.bf16.gmra.mxu0 %v7399
  %v7629 = vpop.f32.mrf.mxu0
  %v7630 = vadd.f32 0.0, %v7629
  %v7631 = vpop.f32.mrf.mxu0
  %v7632 = vadd.f32 0.0, %v7631
  %v7633 = vpop.f32.mrf.mxu0
  %v7634 = vpop.f32.mrf.mxu0
  %7635 = vdwg.mxu0
  %v7636 = vadd.f32 %v7353, %v7466
  %v7637 = vadd.f32 %v7354, %v7468
  %v7638 = vadd.f32 %v7355, %v7507
  %v7639 = vadd.f32 %v7356, %v7509
  %v7640 = vadd.f32 %v7357, %v7548
  %v7641 = vadd.f32 %v7358, %v7550
  %v7642 = vadd.f32 %v7359, %v7589
  %v7643 = vadd.f32 %v7360, %v7591
  %v7644 = vadd.f32 %v7361, %v7630
  %v7645 = vadd.f32 %v7362, %v7632
  %v7646 = vld [vmem:[%s3] sm:$0xff]
  %7648 = vset.pattern.permute.xlu0 0
  %7649 = vperm.xlu0 %7648, %v7646
  %v7650 = vpop.permute.xlu0 %7649
  %v7652 = vadd.f32 %v7636, %v7650
  %v7653 = vadd.f32 %v7637, %v7650
  %v7654 = vadd.f32 %v7638, %v7650
  %v7655 = vadd.f32 %v7639, %v7650
  %v7656 = vadd.f32 %v7640, %v7650
  %v7657 = vadd.f32 %v7641, %v7650
  %v7658 = vadd.f32 %v7642, %v7650
  %v7659 = vadd.f32 %v7643, %v7650
  %v7660 = vadd.f32 %v7644, %v7650
  %v7661 = vadd.f32 %v7645, %v7650
  %v7662 = vld [vmem:[%s2] sm:$0xff]
  %v7663 = vld [vmem:[%s2 + $0x8] sm:$0x3]
  %v7666 = vlaneseq
  %v7667 = vshrl.u32 %v7666, 7
  %v7668 = vsub.s32 0, %v7667
  %v7669 = vrot.slane %v7662, %v7668
  %v7670 = vlaneseq
  %v7671 = vshrl.u32 %v7670, 7
  %v7672 = vsub.s32 1, %v7671
  %v7673 = vrot.slane %v7662, %v7672
  %v7674 = vlaneseq
  %v7675 = vshrl.u32 %v7674, 7
  %v7676 = vsub.s32 2, %v7675
  %v7677 = vrot.slane %v7662, %v7676
  %v7678 = vlaneseq
  %v7679 = vshrl.u32 %v7678, 7
  %v7680 = vsub.s32 3, %v7679
  %v7681 = vrot.slane %v7662, %v7680
  %v7682 = vlaneseq
  %v7683 = vshrl.u32 %v7682, 7
  %v7684 = vsub.s32 4, %v7683
  %v7685 = vrot.slane %v7662, %v7684
  %v7686 = vlaneseq
  %v7687 = vshrl.u32 %v7686, 7
  %v7688 = vsub.s32 5, %v7687
  %v7689 = vrot.slane %v7662, %v7688
  %v7690 = vlaneseq
  %v7691 = vshrl.u32 %v7690, 7
  %v7692 = vsub.s32 6, %v7691
  %v7693 = vrot.slane %v7662, %v7692
  %v7694 = vlaneseq
  %v7695 = vshrl.u32 %v7694, 7
  %v7696 = vsub.s32 7, %v7695
  %v7697 = vrot.slane %v7662, %v7696
  %v7698 = vlaneseq
  %v7699 = vshrl.u32 %v7698, 7
  %v7700 = vsub.s32 0, %v7699
  %v7701 = vrot.slane %v7663, %v7700
  %v7702 = vlaneseq
  %v7703 = vshrl.u32 %v7702, 7
  %v7704 = vsub.s32 1, %v7703
  %v7705 = vrot.slane %v7663, %v7704
  %v7716 = vmul.f32 %v7652, %v7669
  %v7717 = vmul.f32 %v7653, %v7673
  %v7718 = vmul.f32 %v7654, %v7677
  %v7719 = vmul.f32 %v7655, %v7681
  %v7720 = vmul.f32 %v7656, %v7685
  %v7721 = vmul.f32 %v7657, %v7689
  %v7722 = vmul.f32 %v7658, %v7693
  %v7723 = vmul.f32 %v7659, %v7697
  %v7724 = vmul.f32 %v7660, %v7701
  %v7725 = vmul.f32 %v7661, %v7705
  %v7726 = vadd.f32 %v7716, %v7717
  %v7727 = vadd.f32 %v7726, %v7718
  %v7728 = vadd.f32 %v7727, %v7719
  %v7729 = vadd.f32 %v7728, %v7720
  %v7730 = vadd.f32 %v7729, %v7721
  %v7731 = vadd.f32 %v7730, %v7722
  %v7732 = vadd.f32 %v7731, %v7723
  %v7733 = vadd.f32 %v7732, %v7724
  %v7734 = vadd.f32 %v7733, %v7725
  %7735 = vadd.xlane.f32.xlu0 %v7734
  %v7736 = vpop.xlane.xlu0 %7735
  %v7737 = vmul.f32 %v7736, 0.001953125
  %v7738 = vmul.f32 %v7716, %v7716
  %v7739 = vmul.f32 %v7717, %v7717
  %v7740 = vmul.f32 %v7718, %v7718
  %v7741 = vmul.f32 %v7719, %v7719
  %v7742 = vmul.f32 %v7720, %v7720
  %v7743 = vmul.f32 %v7721, %v7721
  %v7744 = vmul.f32 %v7722, %v7722
  %v7745 = vmul.f32 %v7723, %v7723
  %v7746 = vmul.f32 %v7724, %v7724
  %v7747 = vmul.f32 %v7725, %v7725
  %v7748 = vadd.f32 %v7738, %v7739
  %v7749 = vadd.f32 %v7748, %v7740
  %v7750 = vadd.f32 %v7749, %v7741
  %v7751 = vadd.f32 %v7750, %v7742
  %v7752 = vadd.f32 %v7751, %v7743
  %v7753 = vadd.f32 %v7752, %v7744
  %v7754 = vadd.f32 %v7753, %v7745
  %v7755 = vadd.f32 %v7754, %v7746
  %v7756 = vadd.f32 %v7755, %v7747
  %7757 = vadd.xlane.f32.xlu0 %v7756
  %v7758 = vpop.xlane.xlu0 %7757
  %v7759 = vmul.f32 %v7758, 0.001953125
  %v7760 = vmul.f32 %v7737, %v7737
  %v7761 = vsub.f32 %v7759, %v7760
  %v7762 = vmax.f32 %v7761, 0.0
  %v7763 = vadd.f32 %v7762, 1e-05
  %v7764 = vrsqrt.pop %v7763
  %v7765 = vmul.f32 %v7646, %v7764
  %v7766 = vsub.f32 %v7652, %v7737
  %v7767 = vsub.f32 %v7653, %v7737
  %v7768 = vsub.f32 %v7654, %v7737
  %v7769 = vsub.f32 %v7655, %v7737
  %v7770 = vsub.f32 %v7656, %v7737
  %v7771 = vsub.f32 %v7657, %v7737
  %v7772 = vsub.f32 %v7658, %v7737
  %v7773 = vsub.f32 %v7659, %v7737
  %v7774 = vsub.f32 %v7660, %v7737
  %v7775 = vsub.f32 %v7661, %v7737
  %7777 = vset.pattern.permute.xlu0 1
  %7778 = vperm.xlu0 %7777, %v7765
  %v7779 = vpop.permute.xlu0 %7778
  %v7781 = vmul.f32 %v7766, %v7779
  %v7782 = vmul.f32 %v7767, %v7779
  %v7783 = vmul.f32 %v7768, %v7779
  %v7784 = vmul.f32 %v7769, %v7779
  %v7785 = vmul.f32 %v7770, %v7779
  %v7786 = vmul.f32 %v7771, %v7779
  %v7787 = vmul.f32 %v7772, %v7779
  %v7788 = vmul.f32 %v7773, %v7779
  %v7789 = vmul.f32 %v7774, %v7779
  %v7790 = vmul.f32 %v7775, %v7779
  %7791 = vset.pattern.permute.xlu0 2
  %7792 = vperm.xlu0 %7791, %v7646
  %v7793 = vpop.permute.xlu0 %7792
  %v7795 = vadd.f32 %v7781, %v7793
  %v7796 = vadd.f32 %v7782, %v7793
  %v7797 = vadd.f32 %v7783, %v7793
  %v7798 = vadd.f32 %v7784, %v7793
  %v7799 = vadd.f32 %v7785, %v7793
  %v7800 = vadd.f32 %v7786, %v7793
  %v7801 = vadd.f32 %v7787, %v7793
  %v7802 = vadd.f32 %v7788, %v7793
  %v7803 = vadd.f32 %v7789, %v7793
  %v7804 = vadd.f32 %v7790, %v7793
  %v7805 = vmax.f32 %v7795, 0.0
  %v7806 = vmax.f32 %v7796, 0.0
  %v7807 = vmax.f32 %v7797, 0.0
  %v7808 = vmax.f32 %v7798, 0.0
  %v7809 = vmax.f32 %v7799, 0.0
  %v7810 = vmax.f32 %v7800, 0.0
  %v7811 = vmax.f32 %v7801, 0.0
  %v7812 = vmax.f32 %v7802, 0.0
  %v7813 = vmax.f32 %v7803, 0.0
  %v7814 = vmax.f32 %v7804, 0.0
  %7815 = vst [vmem:[%s4] sm:$0xff] %v7805
  %7816 = vst [vmem:[%s4 + $0x8] sm:$0xff] %v7806
  %7817 = vst [vmem:[%s4 + $0x10] sm:$0xff] %v7807
  %7818 = vst [vmem:[%s4 + $0x18] sm:$0xff] %v7808
  %7819 = vst [vmem:[%s4 + $0x20] sm:$0xff] %v7809
  %7820 = vst [vmem:[%s4 + $0x28] sm:$0xff] %v7810
  %7821 = vst [vmem:[%s4 + $0x30] sm:$0xff] %v7811
  %7822 = vst [vmem:[%s4 + $0x38] sm:$0xff] %v7812
  %7823 = vst [vmem:[%s4 + $0x40] sm:$0xff] %v7813
  %7824 = vst [vmem:[%s4 + $0x48] sm:$0xff] %v7814
  // Predicated region
  $region18: #{conv_layer_forward.1} parent=0 // pred_check
    _
  $region19: #{conv_layer_forward.1} parent=0 // pred_check_branch
    %7826 = sbr.rel (0) target = $region21
  $region20: #{conv_layer_forward.1} parent=0 // pred_region
    _
  $region21: #{conv_layer_forward.1} parent=0 // pred_fallthru
    _
  // Predicated region
  $region22: #{conv_layer_forward.1} parent=0 // pred_check
    _
  $region23: #{conv_layer_forward.1} parent=0 // pred_check_branch
    %7828 = sbr.rel (0) target = $region25
  $region24: #{conv_layer_forward.1} parent=0 // pred_region
    _
  $region25: #{conv_layer_forward.1} parent=0 // pred_fallthru
    _

</llo_original>
